<compile_context>
chip_gen: v7x
topology: tpu7x:2x2x1
jax: 0.10.0
libtpu: 0.0.40
codegen_flags: <defaults>
</compile_context>

<pallas_src>
import jax
import jax.numpy as jnp
from jax import lax
from jax.experimental import pallas as pl
from jax.experimental.pallas import tpu as pltpu

# ---- hyperparameters (from the PyTorch module) ----
n_embd = 64
n_head = 4
n_layer = 4
block_size = 256
vocab_size = 65          # chars = sorted(set(text)); synthetic deterministic choice
head_size = n_embd // n_head
LN_EPS = 1e-5            # torch.nn.LayerNorm default eps
VOCAB_PAD = 128          # lane-dense logits: pad 65 -> 128, slice in wrapper
MM_DTYPE = jnp.bfloat16  # matmul operand dtype (accumulation stays f32)
NEG_INF = -1e30          # finite additive causal bias (avoids inf-inf NaN hazard)
# dropout = 0.0 in the reference module -> all Dropout layers are identity.


def _layernorm(x, g, b):
    mu = jnp.mean(x, axis=-1, keepdims=True)
    var = jnp.mean((x - mu) ** 2, axis=-1, keepdims=True)
    return (x - mu) * lax.rsqrt(var + LN_EPS) * g + b


# ----------------------------- Pallas kernel -------------------------------

def _model_kernel(x_ref,
                  ln1g_ref, ln1b_ref, wq_ref, wk_ref, wv_ref, wp_ref, bp_ref,
                  ln2g_ref, ln2b_ref, w1_ref, b1_ref, w2_ref, b2_ref,
                  lnfg_ref, lnfb_ref, lmw_ref, lmb_ref,
                  o_ref):
    """All transformer blocks + final LN + lm_head for Bb batch rows."""
    Bb, T, C = x_ref.shape
    N = Bb * T
    x = x_ref[...].astype(jnp.float32).reshape(N, C)          # (N, C) f32

    # causal additive bias, hoisted out of the layer/head loops; kept (1,T,T)
    # and broadcast implicitly against (Bb,T,T) scores (no materialized copy)
    row = lax.broadcasted_iota(jnp.int32, (T, T), 0)
    col = lax.broadcasted_iota(jnp.int32, (T, T), 1)
    bias = jnp.where(col <= row, 0.0, NEG_INF).astype(jnp.float32)[None]  # (1,T,T)

    # NOTE: torch reference scale (n_embd**-0.5) is folded into wq at init time.

    for l in range(n_layer):
        # ---- multi-head causal self-attention on ln1(x) ----
        h = _layernorm(x, ln1g_ref[l], ln1b_ref[l]).astype(MM_DTYPE)
        q = jnp.dot(h, wq_ref[l], preferred_element_type=jnp.float32)     # (N, C)
        k = jnp.dot(h, wk_ref[l], preferred_element_type=jnp.float32)
        v = jnp.dot(h, wv_ref[l], preferred_element_type=jnp.float32)
        q = q.reshape(Bb, T, C).astype(MM_DTYPE)
        k = k.reshape(Bb, T, C).astype(MM_DTYPE)
        v = v.reshape(Bb, T, C).astype(MM_DTYPE)

        wp_l = wp_ref[l]                                       # (C, C) bf16
        att = jnp.zeros((N, C), jnp.float32)
        for hd in range(n_head):
            sl = slice(hd * head_size, (hd + 1) * head_size)
            qh, kh, vh = q[:, :, sl], k[:, :, sl], v[:, :, sl]  # (Bb, T, hs)
            wei = jnp.einsum('bqd,bkd->bqk', qh, kh,
                             preferred_element_type=jnp.float32) + bias    # (Bb,T,T)
            wei = wei - jnp.max(wei, axis=-1, keepdims=True)
            e = jnp.exp(wei)
            p = e * pl.reciprocal(jnp.sum(e, axis=-1, keepdims=True), approx=True)
            oh = jnp.einsum('bqk,bkd->bqd', p.astype(MM_DTYPE), vh,
                            preferred_element_type=jnp.float32)            # (Bb, T, hs)
            # fold the output projection for this head's slice
            # (mathematically identical to concat-then-proj, no lane concat)
            att = att + jnp.dot(oh.reshape(N, head_size).astype(MM_DTYPE),
                                wp_l[sl, :], preferred_element_type=jnp.float32)
        x = x + att + bp_ref[l]                                 # residual

        # ---- feed-forward on ln2(x) ----
        h2 = _layernorm(x, ln2g_ref[l], ln2b_ref[l]).astype(MM_DTYPE)
        y = jnp.dot(h2, w1_ref[l], preferred_element_type=jnp.float32) + b1_ref[l]
        y = jnp.maximum(y, 0.0).astype(MM_DTYPE)               # ReLU
        y = jnp.dot(y, w2_ref[l], preferred_element_type=jnp.float32) + b2_ref[l]
        x = x + y                                               # residual

    # ---- final LayerNorm + lm_head (lane-padded to VOCAB_PAD) ----
    hf = _layernorm(x, lnfg_ref[...], lnfb_ref[...]).astype(MM_DTYPE)
    logits = jnp.dot(hf, lmw_ref[...], preferred_element_type=jnp.float32) + lmb_ref[...]
    o_ref[...] = logits.reshape(Bb, T, VOCAB_PAD).astype(o_ref.dtype)


# ------------------------------ wrapper ------------------------------------

def _full_spec(shape):
    nd = len(shape)
    return pl.BlockSpec(shape, lambda b, _z=(0,) * nd: _z)


def _pick_block_batch(B):
    """Largest Bb (<=16) dividing B such that the grid has >= 2 steps.

    >= 2 grid steps keeps both v7x TensorCores busy under
    dimension_semantics=("parallel",); v5e/v6e (1 TC) are unaffected.
    """
    for bb in (16, 8, 4, 2, 1):
        if bb <= B and B % bb == 0 and (B // bb >= 2 or B == 1):
            return bb
    return 1


def fused_forward_call(x, p):
    """One pallas_call: n_layer transformer blocks + final LN + lm_head."""
    B, T, C = x.shape
    Bb = _pick_block_batch(B)
    weights = [p['ln1_g'], p['ln1_b'], p['wq'], p['wk'], p['wv'], p['wp'], p['bp'],
               p['ln2_g'], p['ln2_b'], p['w1'], p['b1'], p['w2'], p['b2'],
               p['ln_f_g'], p['ln_f_b'], p['lm_w'], p['lm_b']]
    in_specs = ([pl.BlockSpec((Bb, T, C), lambda b: (b, 0, 0))]
                + [_full_spec(w.shape) for w in weights])
    return pl.pallas_call(
        _model_kernel,
        out_shape=jax.ShapeDtypeStruct((B, T, VOCAB_PAD), jnp.bfloat16),
        grid=(B // Bb,),
        in_specs=in_specs,
        out_specs=pl.BlockSpec((Bb, T, VOCAB_PAD), lambda b: (b, 0, 0)),
        compiler_params=pltpu.CompilerParams(
            dimension_semantics=("parallel",),          # batch axis -> both TCs on v7x
            vmem_limit_bytes=48 * 1024 * 1024),          # > v5e 16MiB default, < v7x 64MiB
    )(x, *weights)


# --------------------------- params & forward ------------------------------

def init_params(key):
    keys = jax.random.split(key, 10)

    def nrm(k, shape, s=0.02, dtype=jnp.float32):
        return (jax.random.normal(k, shape, jnp.float32) * s).astype(dtype)

    L, C, H4 = n_layer, n_embd, 4 * n_embd
    attn_scale = n_embd ** (-0.5)   # torch code: q @ k.T * C**-0.5 with C = n_embd
    lm_w = nrm(keys[6], (C, vocab_size))
    lm_b = jnp.zeros((1, vocab_size), jnp.float32)
    params = {
        'tok_emb': nrm(keys[0], (vocab_size, C)),
        'pos_emb': nrm(keys[1], (block_size, C)),
        # stacked per-layer weights (layer axis first)
        'ln1_g': jnp.ones((L, 1, C), jnp.float32),
        'ln1_b': jnp.zeros((L, 1, C), jnp.float32),
        # attention scale folded into the query weights (free at init time)
        'wq': nrm(keys[2], (L, C, C), s=0.02 * attn_scale, dtype=MM_DTYPE),
        'wk': nrm(keys[7], (L, C, C), dtype=MM_DTYPE),
        'wv': nrm(keys[8], (L, C, C), dtype=MM_DTYPE),
        'wp': nrm(keys[3], (L, C, C), dtype=MM_DTYPE),
        'bp': jnp.zeros((L, 1, C), jnp.float32),
        'ln2_g': jnp.ones((L, 1, C), jnp.float32),
        'ln2_b': jnp.zeros((L, 1, C), jnp.float32),
        'w1':   nrm(keys[4], (L, C, H4), dtype=MM_DTYPE),
        'b1':   jnp.zeros((L, 1, H4), jnp.float32),
        'w2':   nrm(keys[5], (L, H4, C), dtype=MM_DTYPE),
        'b2':   jnp.zeros((L, 1, C), jnp.float32),
        # final LN + lm_head (lane-padded to VOCAB_PAD)
        'ln_f_g': jnp.ones((1, C), jnp.float32),
        'ln_f_b': jnp.zeros((1, C), jnp.float32),
        'lm_w': jnp.pad(lm_w, ((0, 0), (0, VOCAB_PAD - vocab_size))).astype(MM_DTYPE),
        'lm_b': jnp.pad(lm_b, ((0, 0), (0, VOCAB_PAD - vocab_size))),
    }
    return params


def bigram_lm_forward(idx, params, targets=None):
    """Mirrors BigramLanguageModel.forward: returns (logits, loss)."""
    B, T = idx.shape
    tok_emb = jnp.take(params['tok_emb'], idx, axis=0)        # (B, T, C) embedding gather (glue)
    pos_emb = params['pos_emb'][:T]                           # (T, C)
    x = (tok_emb + pos_emb[None, :, :]).astype(MM_DTYPE)      # bf16 kernel input (halves DMA)
    logits_pad = fused_forward_call(x, params)                # (B, T, VOCAB_PAD) bf16
    logits = logits_pad[:, :, :vocab_size].astype(jnp.float32)  # drop padded lanes, upcast
    if targets is None:
        loss = None
    else:
        # cross-entropy in plain JAX glue (same semantics as F.cross_entropy)
        lp = jax.nn.log_softmax(logits.reshape(B * T, vocab_size), axis=-1)
        loss = -jnp.mean(jnp.take_along_axis(lp, targets.reshape(B * T, 1), axis=1))
    return logits, loss


# TODO(synk): generate() (autoregressive multinomial sampling loop) is host-side
# control flow in the reference and is not implemented here; forward only.


if __name__ == "__main__":
    key = jax.random.PRNGKey(0)
    pkey, ikey = jax.random.split(key)
    params = init_params(pkey)

    B, T = 2, 8                                               # T <= block_size
    idx = jax.random.randint(ikey, (B, T), 0, vocab_size, dtype=jnp.int32)

    logits, loss = bigram_lm_forward(idx, params)
    logits = jax.block_until_ready(logits)
    assert logits.shape == (B, T, vocab_size)
    assert loss is None
    assert bool(jnp.all(jnp.isfinite(logits)))
    print("KERNEL_OK")
</pallas_src>

<mosaic_0001>
module attributes {stable_mosaic.version = 11 : i64} {
  func.func @_model_kernel(%arg0: i32, %arg1: memref<1x8x64xbf16, #tpu.memory_space<vmem>>, %arg2: memref<4x1x64xf32, #tpu.memory_space<vmem>>, %arg3: memref<4x1x64xf32, #tpu.memory_space<vmem>>, %arg4: memref<4x64x64xbf16, #tpu.memory_space<vmem>>, %arg5: memref<4x64x64xbf16, #tpu.memory_space<vmem>>, %arg6: memref<4x64x64xbf16, #tpu.memory_space<vmem>>, %arg7: memref<4x64x64xbf16, #tpu.memory_space<vmem>>, %arg8: memref<4x1x64xf32, #tpu.memory_space<vmem>>, %arg9: memref<4x1x64xf32, #tpu.memory_space<vmem>>, %arg10: memref<4x1x64xf32, #tpu.memory_space<vmem>>, %arg11: memref<4x64x256xbf16, #tpu.memory_space<vmem>>, %arg12: memref<4x1x256xf32, #tpu.memory_space<vmem>>, %arg13: memref<4x256x64xbf16, #tpu.memory_space<vmem>>, %arg14: memref<4x1x64xf32, #tpu.memory_space<vmem>>, %arg15: memref<1x64xf32, #tpu.memory_space<vmem>>, %arg16: memref<1x64xf32, #tpu.memory_space<vmem>>, %arg17: memref<64x128xbf16, #tpu.memory_space<vmem>>, %arg18: memref<1x128xf32, #tpu.memory_space<vmem>>, %arg19: memref<1x8x128xbf16, #tpu.memory_space<vmem>>) attributes {dimension_semantics = [#tpu.dimension_semantics<parallel>], iteration_bounds = array<i64: 2>, scalar_prefetch = 0 : i64, scratch_operands = 0 : i64, tpu.core_type = #tpu.core_type<tc>, window_params = [{transform_indices = @transform_0, window_bounds = array<i64: 1, 8, 64>}, {pipeline_mode = #tpu.pipeline_mode<synchronous>, transform_indices = @transform_1, window_bounds = array<i64: 4, 1, 64>}, {pipeline_mode = #tpu.pipeline_mode<synchronous>, transform_indices = @transform_2, window_bounds = array<i64: 4, 1, 64>}, {pipeline_mode = #tpu.pipeline_mode<synchronous>, transform_indices = @transform_3, window_bounds = array<i64: 4, 64, 64>}, {pipeline_mode = #tpu.pipeline_mode<synchronous>, transform_indices = @transform_4, window_bounds = array<i64: 4, 64, 64>}, {pipeline_mode = #tpu.pipeline_mode<synchronous>, transform_indices = @transform_5, window_bounds = array<i64: 4, 64, 64>}, {pipeline_mode = #tpu.pipeline_mode<synchronous>, transform_indices = @transform_6, window_bounds = array<i64: 4, 64, 64>}, {pipeline_mode = #tpu.pipeline_mode<synchronous>, transform_indices = @transform_7, window_bounds = array<i64: 4, 1, 64>}, {pipeline_mode = #tpu.pipeline_mode<synchronous>, transform_indices = @transform_8, window_bounds = array<i64: 4, 1, 64>}, {pipeline_mode = #tpu.pipeline_mode<synchronous>, transform_indices = @transform_9, window_bounds = array<i64: 4, 1, 64>}, {pipeline_mode = #tpu.pipeline_mode<synchronous>, transform_indices = @transform_10, window_bounds = array<i64: 4, 64, 256>}, {pipeline_mode = #tpu.pipeline_mode<synchronous>, transform_indices = @transform_11, window_bounds = array<i64: 4, 1, 256>}, {pipeline_mode = #tpu.pipeline_mode<synchronous>, transform_indices = @transform_12, window_bounds = array<i64: 4, 256, 64>}, {pipeline_mode = #tpu.pipeline_mode<synchronous>, transform_indices = @transform_13, window_bounds = array<i64: 4, 1, 64>}, {pipeline_mode = #tpu.pipeline_mode<synchronous>, transform_indices = @transform_14, window_bounds = array<i64: 1, 64>}, {pipeline_mode = #tpu.pipeline_mode<synchronous>, transform_indices = @transform_15, window_bounds = array<i64: 1, 64>}, {pipeline_mode = #tpu.pipeline_mode<synchronous>, transform_indices = @transform_16, window_bounds = array<i64: 64, 128>}, {pipeline_mode = #tpu.pipeline_mode<synchronous>, transform_indices = @transform_17, window_bounds = array<i64: 1, 128>}, {transform_indices = @transform_18, window_bounds = array<i64: 1, 8, 128>}]} {
    %c0 = arith.constant 0 : index
    %c0_0 = arith.constant 0 : index
    %c0_1 = arith.constant 0 : index
    %0 = vector.load %arg1[%c0, %c0_0, %c0_1] : memref<1x8x64xbf16, #tpu.memory_space<vmem>>, vector<1x8x64xbf16>
    %1 = arith.extf %0 : vector<1x8x64xbf16> to vector<1x8x64xf32>
    %2 = vector.shape_cast %1 : vector<1x8x64xf32> to vector<8x64xf32>
    %3 = tpu.iota {dimensions = array<i32: 0>} : vector<8x8xi32>
    %4 = tpu.iota {dimensions = array<i32: 1>} : vector<8x8xi32>
    %5 = arith.cmpi sle, %4, %3 : vector<8x8xi32>
    %cst = arith.constant 0.000000e+00 : f32
    %cst_2 = arith.constant -1.000000e+30 : f32
    %6 = vector.broadcast %cst : f32 to vector<8x8xf32>
    %7 = vector.broadcast %cst_2 : f32 to vector<8x8xf32>
    %8 = arith.select %5, %6, %7 : vector<8x8xi1>, vector<8x8xf32>
    %9 = vector.shape_cast %8 : vector<8x8xf32> to vector<1x8x8xf32>
    %c0_3 = arith.constant 0 : index
    %c0_4 = arith.constant 0 : index
    %c0_5 = arith.constant 0 : index
    %10 = vector.load %arg2[%c0_3, %c0_4, %c0_5] : memref<4x1x64xf32, #tpu.memory_space<vmem>>, vector<1x1x64xf32>
    %11 = vector.shape_cast %10 : vector<1x1x64xf32> to vector<1x64xf32>
    %c0_6 = arith.constant 0 : index
    %c0_7 = arith.constant 0 : index
    %c0_8 = arith.constant 0 : index
    %12 = vector.load %arg3[%c0_6, %c0_7, %c0_8] : memref<4x1x64xf32, #tpu.memory_space<vmem>>, vector<1x1x64xf32>
    %13 = vector.shape_cast %12 : vector<1x1x64xf32> to vector<1x64xf32>
    %cst_9 = arith.constant dense<0.000000e+00> : vector<8xf32>
    %14 = vector.multi_reduction <add>, %2, %cst_9 [1] : vector<8x64xf32> to vector<8xf32>
    %15 = vector.shape_cast %14 : vector<8xf32> to vector<8x1xf32>
    %cst_10 = arith.constant 6.400000e+01 : f32
    %16 = vector.broadcast %cst_10 : f32 to vector<8x1xf32>
    %17 = arith.divf %15, %16 : vector<8x1xf32>
    %18 = vector.broadcast %17 : vector<8x1xf32> to vector<8x64xf32>
    %19 = arith.subf %2, %18 : vector<8x64xf32>
    %20 = arith.mulf %19, %19 : vector<8x64xf32>
    %cst_11 = arith.constant dense<0.000000e+00> : vector<8xf32>
    %21 = vector.multi_reduction <add>, %20, %cst_11 [1] : vector<8x64xf32> to vector<8xf32>
    %22 = vector.shape_cast %21 : vector<8xf32> to vector<8x1xf32>
    %cst_12 = arith.constant 6.400000e+01 : f32
    %23 = vector.broadcast %cst_12 : f32 to vector<8x1xf32>
    %24 = arith.divf %22, %23 : vector<8x1xf32>
    %25 = vector.broadcast %17 : vector<8x1xf32> to vector<8x64xf32>
    %26 = arith.subf %2, %25 : vector<8x64xf32>
    %cst_13 = arith.constant 9.99999974E-6 : f32
    %27 = vector.broadcast %cst_13 : f32 to vector<8x1xf32>
    %28 = arith.addf %24, %27 : vector<8x1xf32>
    %29 = math.rsqrt %28 : vector<8x1xf32>
    %30 = vector.broadcast %29 : vector<8x1xf32> to vector<8x64xf32>
    %31 = arith.mulf %26, %30 : vector<8x64xf32>
    %32 = vector.broadcast %11 : vector<1x64xf32> to vector<8x64xf32>
    %33 = arith.mulf %31, %32 : vector<8x64xf32>
    %34 = vector.broadcast %13 : vector<1x64xf32> to vector<8x64xf32>
    %35 = arith.addf %33, %34 : vector<8x64xf32>
    %36 = arith.truncf %35 : vector<8x64xf32> to vector<8x64xbf16>
    %c0_14 = arith.constant 0 : index
    %c0_15 = arith.constant 0 : index
    %c0_16 = arith.constant 0 : index
    %37 = vector.load %arg4[%c0_14, %c0_15, %c0_16] : memref<4x64x64xbf16, #tpu.memory_space<vmem>>, vector<1x64x64xbf16>
    %38 = vector.shape_cast %37 : vector<1x64x64xbf16> to vector<64x64xbf16>
    %cst_17 = arith.constant dense<0.000000e+00> : vector<8x64xf32>
    %39 = tpu.matmul %36, %38, %cst_17 {dimension_numbers = #tpu.dot_dimension_numbers<[1], [0], [0], [1], [0, 0, 1, 1], [], []>} : vector<8x64xbf16>, vector<64x64xbf16>, vector<8x64xf32> -> vector<8x64xf32>
    %c0_18 = arith.constant 0 : index
    %c0_19 = arith.constant 0 : index
    %c0_20 = arith.constant 0 : index
    %40 = vector.load %arg5[%c0_18, %c0_19, %c0_20] : memref<4x64x64xbf16, #tpu.memory_space<vmem>>, vector<1x64x64xbf16>
    %41 = vector.shape_cast %40 : vector<1x64x64xbf16> to vector<64x64xbf16>
    %cst_21 = arith.constant dense<0.000000e+00> : vector<8x64xf32>
    %42 = tpu.matmul %36, %41, %cst_21 {dimension_numbers = #tpu.dot_dimension_numbers<[1], [0], [0], [1], [0, 0, 1, 1], [], []>} : vector<8x64xbf16>, vector<64x64xbf16>, vector<8x64xf32> -> vector<8x64xf32>
    %c0_22 = arith.constant 0 : index
    %c0_23 = arith.constant 0 : index
    %c0_24 = arith.constant 0 : index
    %43 = vector.load %arg6[%c0_22, %c0_23, %c0_24] : memref<4x64x64xbf16, #tpu.memory_space<vmem>>, vector<1x64x64xbf16>
    %44 = vector.shape_cast %43 : vector<1x64x64xbf16> to vector<64x64xbf16>
    %cst_25 = arith.constant dense<0.000000e+00> : vector<8x64xf32>
    %45 = tpu.matmul %36, %44, %cst_25 {dimension_numbers = #tpu.dot_dimension_numbers<[1], [0], [0], [1], [0, 0, 1, 1], [], []>} : vector<8x64xbf16>, vector<64x64xbf16>, vector<8x64xf32> -> vector<8x64xf32>
    %46 = vector.shape_cast %39 : vector<8x64xf32> to vector<1x8x64xf32>
    %47 = arith.truncf %46 : vector<1x8x64xf32> to vector<1x8x64xbf16>
    %48 = vector.shape_cast %42 : vector<8x64xf32> to vector<1x8x64xf32>
    %49 = arith.truncf %48 : vector<1x8x64xf32> to vector<1x8x64xbf16>
    %50 = vector.shape_cast %45 : vector<8x64xf32> to vector<1x8x64xf32>
    %51 = arith.truncf %50 : vector<1x8x64xf32> to vector<1x8x64xbf16>
    %c0_26 = arith.constant 0 : index
    %c0_27 = arith.constant 0 : index
    %c0_28 = arith.constant 0 : index
    %52 = vector.load %arg7[%c0_26, %c0_27, %c0_28] : memref<4x64x64xbf16, #tpu.memory_space<vmem>>, vector<1x64x64xbf16>
    %53 = vector.shape_cast %52 : vector<1x64x64xbf16> to vector<64x64xbf16>
    %cst_29 = arith.constant 0.000000e+00 : f32
    %54 = vector.broadcast %cst_29 : f32 to vector<8x64xf32>
    %55 = vector.extract_strided_slice %47 {offsets = [0, 0, 0], sizes = [1, 8, 16], strides = [1, 1, 1]} : vector<1x8x64xbf16> to vector<1x8x16xbf16>
    %56 = vector.extract_strided_slice %49 {offsets = [0, 0, 0], sizes = [1, 8, 16], strides = [1, 1, 1]} : vector<1x8x64xbf16> to vector<1x8x16xbf16>
    %57 = vector.extract_strided_slice %51 {offsets = [0, 0, 0], sizes = [1, 8, 16], strides = [1, 1, 1]} : vector<1x8x64xbf16> to vector<1x8x16xbf16>
    "tpu.trace_start"() <{level = 10 : i32, message = "bqd,bkd->bqk"}> : () -> ()
    %cst_30 = arith.constant dense<0.000000e+00> : vector<1x8x8xf32>
    %58 = tpu.matmul %55, %56, %cst_30 {dimension_numbers = #tpu.dot_dimension_numbers<[2], [2], [1], [1], [0, 0, 0, 1, 1, 1], [0], [0]>} : vector<1x8x16xbf16>, vector<1x8x16xbf16>, vector<1x8x8xf32> -> vector<1x8x8xf32>
    "tpu.trace_stop"() : () -> ()
    %59 = arith.addf %58, %9 : vector<1x8x8xf32>
    %cst_31 = arith.constant dense<0xFF800000> : vector<1x8xf32>
    %60 = vector.multi_reduction <maximumf>, %59, %cst_31 [2] : vector<1x8x8xf32> to vector<1x8xf32>
    %61 = vector.shape_cast %60 : vector<1x8xf32> to vector<1x8x1xf32>
    %62 = vector.broadcast %61 : vector<1x8x1xf32> to vector<1x8x8xf32>
    %63 = arith.subf %59, %62 : vector<1x8x8xf32>
    %64 = math.exp %63 : vector<1x8x8xf32>
    %cst_32 = arith.constant dense<0.000000e+00> : vector<1x8xf32>
    %65 = vector.multi_reduction <add>, %64, %cst_32 [2] : vector<1x8x8xf32> to vector<1x8xf32>
    %66 = vector.shape_cast %65 : vector<1x8xf32> to vector<1x8x1xf32>
    %67 = tpu.reciprocal %66 {approx = true} : vector<1x8x1xf32> -> vector<1x8x1xf32>
    %68 = vector.broadcast %67 : vector<1x8x1xf32> to vector<1x8x8xf32>
    %69 = arith.mulf %64, %68 : vector<1x8x8xf32>
    %70 = arith.truncf %69 : vector<1x8x8xf32> to vector<1x8x8xbf16>
    "tpu.trace_start"() <{level = 10 : i32, message = "bqk,bkd->bqd"}> : () -> ()
    %cst_33 = arith.constant dense<0.000000e+00> : vector<1x8x16xf32>
    %71 = tpu.matmul %70, %57, %cst_33 {dimension_numbers = #tpu.dot_dimension_numbers<[2], [1], [1], [2], [0, 0, 0, 1, 1, 2], [0], [0]>} : vector<1x8x8xbf16>, vector<1x8x16xbf16>, vector<1x8x16xf32> -> vector<1x8x16xf32>
    "tpu.trace_stop"() : () -> ()
    %72 = vector.shape_cast %71 : vector<1x8x16xf32> to vector<8x16xf32>
    %73 = arith.truncf %72 : vector<8x16xf32> to vector<8x16xbf16>
    %74 = vector.extract_strided_slice %53 {offsets = [0, 0], sizes = [16, 64], strides = [1, 1]} : vector<64x64xbf16> to vector<16x64xbf16>
    %cst_34 = arith.constant dense<0.000000e+00> : vector<8x64xf32>
    %75 = tpu.matmul %73, %74, %cst_34 {dimension_numbers = #tpu.dot_dimension_numbers<[1], [0], [0], [1], [0, 0, 1, 1], [], []>} : vector<8x16xbf16>, vector<16x64xbf16>, vector<8x64xf32> -> vector<8x64xf32>
    %76 = arith.addf %54, %75 : vector<8x64xf32>
    %77 = vector.extract_strided_slice %47 {offsets = [0, 0, 16], sizes = [1, 8, 16], strides = [1, 1, 1]} : vector<1x8x64xbf16> to vector<1x8x16xbf16>
    %78 = vector.extract_strided_slice %49 {offsets = [0, 0, 16], sizes = [1, 8, 16], strides = [1, 1, 1]} : vector<1x8x64xbf16> to vector<1x8x16xbf16>
    %79 = vector.extract_strided_slice %51 {offsets = [0, 0, 16], sizes = [1, 8, 16], strides = [1, 1, 1]} : vector<1x8x64xbf16> to vector<1x8x16xbf16>
    "tpu.trace_start"() <{level = 10 : i32, message = "bqd,bkd->bqk"}> : () -> ()
    %cst_35 = arith.constant dense<0.000000e+00> : vector<1x8x8xf32>
    %80 = tpu.matmul %77, %78, %cst_35 {dimension_numbers = #tpu.dot_dimension_numbers<[2], [2], [1], [1], [0, 0, 0, 1, 1, 1], [0], [0]>} : vector<1x8x16xbf16>, vector<1x8x16xbf16>, vector<1x8x8xf32> -> vector<1x8x8xf32>
    "tpu.trace_stop"() : () -> ()
    %81 = arith.addf %80, %9 : vector<1x8x8xf32>
    %cst_36 = arith.constant dense<0xFF800000> : vector<1x8xf32>
    %82 = vector.multi_reduction <maximumf>, %81, %cst_36 [2] : vector<1x8x8xf32> to vector<1x8xf32>
    %83 = vector.shape_cast %82 : vector<1x8xf32> to vector<1x8x1xf32>
    %84 = vector.broadcast %83 : vector<1x8x1xf32> to vector<1x8x8xf32>
    %85 = arith.subf %81, %84 : vector<1x8x8xf32>
    %86 = math.exp %85 : vector<1x8x8xf32>
    %cst_37 = arith.constant dense<0.000000e+00> : vector<1x8xf32>
    %87 = vector.multi_reduction <add>, %86, %cst_37 [2] : vector<1x8x8xf32> to vector<1x8xf32>
    %88 = vector.shape_cast %87 : vector<1x8xf32> to vector<1x8x1xf32>
    %89 = tpu.reciprocal %88 {approx = true} : vector<1x8x1xf32> -> vector<1x8x1xf32>
    %90 = vector.broadcast %89 : vector<1x8x1xf32> to vector<1x8x8xf32>
    %91 = arith.mulf %86, %90 : vector<1x8x8xf32>
    %92 = arith.truncf %91 : vector<1x8x8xf32> to vector<1x8x8xbf16>
    "tpu.trace_start"() <{level = 10 : i32, message = "bqk,bkd->bqd"}> : () -> ()
    %cst_38 = arith.constant dense<0.000000e+00> : vector<1x8x16xf32>
    %93 = tpu.matmul %92, %79, %cst_38 {dimension_numbers = #tpu.dot_dimension_numbers<[2], [1], [1], [2], [0, 0, 0, 1, 1, 2], [0], [0]>} : vector<1x8x8xbf16>, vector<1x8x16xbf16>, vector<1x8x16xf32> -> vector<1x8x16xf32>
    "tpu.trace_stop"() : () -> ()
    %94 = vector.shape_cast %93 : vector<1x8x16xf32> to vector<8x16xf32>
    %95 = arith.truncf %94 : vector<8x16xf32> to vector<8x16xbf16>
    %96 = vector.extract_strided_slice %53 {offsets = [16, 0], sizes = [16, 64], strides = [1, 1]} : vector<64x64xbf16> to vector<16x64xbf16>
    %cst_39 = arith.constant dense<0.000000e+00> : vector<8x64xf32>
    %97 = tpu.matmul %95, %96, %cst_39 {dimension_numbers = #tpu.dot_dimension_numbers<[1], [0], [0], [1], [0, 0, 1, 1], [], []>} : vector<8x16xbf16>, vector<16x64xbf16>, vector<8x64xf32> -> vector<8x64xf32>
    %98 = arith.addf %76, %97 : vector<8x64xf32>
    %99 = vector.extract_strided_slice %47 {offsets = [0, 0, 32], sizes = [1, 8, 16], strides = [1, 1, 1]} : vector<1x8x64xbf16> to vector<1x8x16xbf16>
    %100 = vector.extract_strided_slice %49 {offsets = [0, 0, 32], sizes = [1, 8, 16], strides = [1, 1, 1]} : vector<1x8x64xbf16> to vector<1x8x16xbf16>
    %101 = vector.extract_strided_slice %51 {offsets = [0, 0, 32], sizes = [1, 8, 16], strides = [1, 1, 1]} : vector<1x8x64xbf16> to vector<1x8x16xbf16>
    "tpu.trace_start"() <{level = 10 : i32, message = "bqd,bkd->bqk"}> : () -> ()
    %cst_40 = arith.constant dense<0.000000e+00> : vector<1x8x8xf32>
    %102 = tpu.matmul %99, %100, %cst_40 {dimension_numbers = #tpu.dot_dimension_numbers<[2], [2], [1], [1], [0, 0, 0, 1, 1, 1], [0], [0]>} : vector<1x8x16xbf16>, vector<1x8x16xbf16>, vector<1x8x8xf32> -> vector<1x8x8xf32>
    "tpu.trace_stop"() : () -> ()
    %103 = arith.addf %102, %9 : vector<1x8x8xf32>
    %cst_41 = arith.constant dense<0xFF800000> : vector<1x8xf32>
    %104 = vector.multi_reduction <maximumf>, %103, %cst_41 [2] : vector<1x8x8xf32> to vector<1x8xf32>
    %105 = vector.shape_cast %104 : vector<1x8xf32> to vector<1x8x1xf32>
    %106 = vector.broadcast %105 : vector<1x8x1xf32> to vector<1x8x8xf32>
    %107 = arith.subf %103, %106 : vector<1x8x8xf32>
    %108 = math.exp %107 : vector<1x8x8xf32>
    %cst_42 = arith.constant dense<0.000000e+00> : vector<1x8xf32>
    %109 = vector.multi_reduction <add>, %108, %cst_42 [2] : vector<1x8x8xf32> to vector<1x8xf32>
    %110 = vector.shape_cast %109 : vector<1x8xf32> to vector<1x8x1xf32>
    %111 = tpu.reciprocal %110 {approx = true} : vector<1x8x1xf32> -> vector<1x8x1xf32>
    %112 = vector.broadcast %111 : vector<1x8x1xf32> to vector<1x8x8xf32>
    %113 = arith.mulf %108, %112 : vector<1x8x8xf32>
    %114 = arith.truncf %113 : vector<1x8x8xf32> to vector<1x8x8xbf16>
    "tpu.trace_start"() <{level = 10 : i32, message = "bqk,bkd->bqd"}> : () -> ()
    %cst_43 = arith.constant dense<0.000000e+00> : vector<1x8x16xf32>
    %115 = tpu.matmul %114, %101, %cst_43 {dimension_numbers = #tpu.dot_dimension_numbers<[2], [1], [1], [2], [0, 0, 0, 1, 1, 2], [0], [0]>} : vector<1x8x8xbf16>, vector<1x8x16xbf16>, vector<1x8x16xf32> -> vector<1x8x16xf32>
    "tpu.trace_stop"() : () -> ()
    %116 = vector.shape_cast %115 : vector<1x8x16xf32> to vector<8x16xf32>
    %117 = arith.truncf %116 : vector<8x16xf32> to vector<8x16xbf16>
    %118 = vector.extract_strided_slice %53 {offsets = [32, 0], sizes = [16, 64], strides = [1, 1]} : vector<64x64xbf16> to vector<16x64xbf16>
    %cst_44 = arith.constant dense<0.000000e+00> : vector<8x64xf32>
    %119 = tpu.matmul %117, %118, %cst_44 {dimension_numbers = #tpu.dot_dimension_numbers<[1], [0], [0], [1], [0, 0, 1, 1], [], []>} : vector<8x16xbf16>, vector<16x64xbf16>, vector<8x64xf32> -> vector<8x64xf32>
    %120 = arith.addf %98, %119 : vector<8x64xf32>
    %121 = vector.extract_strided_slice %47 {offsets = [0, 0, 48], sizes = [1, 8, 16], strides = [1, 1, 1]} : vector<1x8x64xbf16> to vector<1x8x16xbf16>
    %122 = vector.extract_strided_slice %49 {offsets = [0, 0, 48], sizes = [1, 8, 16], strides = [1, 1, 1]} : vector<1x8x64xbf16> to vector<1x8x16xbf16>
    %123 = vector.extract_strided_slice %51 {offsets = [0, 0, 48], sizes = [1, 8, 16], strides = [1, 1, 1]} : vector<1x8x64xbf16> to vector<1x8x16xbf16>
    "tpu.trace_start"() <{level = 10 : i32, message = "bqd,bkd->bqk"}> : () -> ()
    %cst_45 = arith.constant dense<0.000000e+00> : vector<1x8x8xf32>
    %124 = tpu.matmul %121, %122, %cst_45 {dimension_numbers = #tpu.dot_dimension_numbers<[2], [2], [1], [1], [0, 0, 0, 1, 1, 1], [0], [0]>} : vector<1x8x16xbf16>, vector<1x8x16xbf16>, vector<1x8x8xf32> -> vector<1x8x8xf32>
    "tpu.trace_stop"() : () -> ()
    %125 = arith.addf %124, %9 : vector<1x8x8xf32>
    %cst_46 = arith.constant dense<0xFF800000> : vector<1x8xf32>
    %126 = vector.multi_reduction <maximumf>, %125, %cst_46 [2] : vector<1x8x8xf32> to vector<1x8xf32>
    %127 = vector.shape_cast %126 : vector<1x8xf32> to vector<1x8x1xf32>
    %128 = vector.broadcast %127 : vector<1x8x1xf32> to vector<1x8x8xf32>
    %129 = arith.subf %125, %128 : vector<1x8x8xf32>
    %130 = math.exp %129 : vector<1x8x8xf32>
    %cst_47 = arith.constant dense<0.000000e+00> : vector<1x8xf32>
    %131 = vector.multi_reduction <add>, %130, %cst_47 [2] : vector<1x8x8xf32> to vector<1x8xf32>
    %132 = vector.shape_cast %131 : vector<1x8xf32> to vector<1x8x1xf32>
    %133 = tpu.reciprocal %132 {approx = true} : vector<1x8x1xf32> -> vector<1x8x1xf32>
    %134 = vector.broadcast %133 : vector<1x8x1xf32> to vector<1x8x8xf32>
    %135 = arith.mulf %130, %134 : vector<1x8x8xf32>
    %136 = arith.truncf %135 : vector<1x8x8xf32> to vector<1x8x8xbf16>
    "tpu.trace_start"() <{level = 10 : i32, message = "bqk,bkd->bqd"}> : () -> ()
    %cst_48 = arith.constant dense<0.000000e+00> : vector<1x8x16xf32>
    %137 = tpu.matmul %136, %123, %cst_48 {dimension_numbers = #tpu.dot_dimension_numbers<[2], [1], [1], [2], [0, 0, 0, 1, 1, 2], [0], [0]>} : vector<1x8x8xbf16>, vector<1x8x16xbf16>, vector<1x8x16xf32> -> vector<1x8x16xf32>
    "tpu.trace_stop"() : () -> ()
    %138 = vector.shape_cast %137 : vector<1x8x16xf32> to vector<8x16xf32>
    %139 = arith.truncf %138 : vector<8x16xf32> to vector<8x16xbf16>
    %140 = vector.extract_strided_slice %53 {offsets = [48, 0], sizes = [16, 64], strides = [1, 1]} : vector<64x64xbf16> to vector<16x64xbf16>
    %cst_49 = arith.constant dense<0.000000e+00> : vector<8x64xf32>
    %141 = tpu.matmul %139, %140, %cst_49 {dimension_numbers = #tpu.dot_dimension_numbers<[1], [0], [0], [1], [0, 0, 1, 1], [], []>} : vector<8x16xbf16>, vector<16x64xbf16>, vector<8x64xf32> -> vector<8x64xf32>
    %142 = arith.addf %120, %141 : vector<8x64xf32>
    %143 = arith.addf %2, %142 : vector<8x64xf32>
    %c0_50 = arith.constant 0 : index
    %c0_51 = arith.constant 0 : index
    %c0_52 = arith.constant 0 : index
    %144 = vector.load %arg8[%c0_50, %c0_51, %c0_52] : memref<4x1x64xf32, #tpu.memory_space<vmem>>, vector<1x1x64xf32>
    %145 = vector.shape_cast %144 : vector<1x1x64xf32> to vector<1x64xf32>
    %146 = vector.broadcast %145 : vector<1x64xf32> to vector<8x64xf32>
    %147 = arith.addf %143, %146 : vector<8x64xf32>
    %c0_53 = arith.constant 0 : index
    %c0_54 = arith.constant 0 : index
    %c0_55 = arith.constant 0 : index
    %148 = vector.load %arg9[%c0_53, %c0_54, %c0_55] : memref<4x1x64xf32, #tpu.memory_space<vmem>>, vector<1x1x64xf32>
    %149 = vector.shape_cast %148 : vector<1x1x64xf32> to vector<1x64xf32>
    %c0_56 = arith.constant 0 : index
    %c0_57 = arith.constant 0 : index
    %c0_58 = arith.constant 0 : index
    %150 = vector.load %arg10[%c0_56, %c0_57, %c0_58] : memref<4x1x64xf32, #tpu.memory_space<vmem>>, vector<1x1x64xf32>
    %151 = vector.shape_cast %150 : vector<1x1x64xf32> to vector<1x64xf32>
    %cst_59 = arith.constant dense<0.000000e+00> : vector<8xf32>
    %152 = vector.multi_reduction <add>, %147, %cst_59 [1] : vector<8x64xf32> to vector<8xf32>
    %153 = vector.shape_cast %152 : vector<8xf32> to vector<8x1xf32>
    %cst_60 = arith.constant 6.400000e+01 : f32
    %154 = vector.broadcast %cst_60 : f32 to vector<8x1xf32>
    %155 = arith.divf %153, %154 : vector<8x1xf32>
    %156 = vector.broadcast %155 : vector<8x1xf32> to vector<8x64xf32>
    %157 = arith.subf %147, %156 : vector<8x64xf32>
    %158 = arith.mulf %157, %157 : vector<8x64xf32>
    %cst_61 = arith.constant dense<0.000000e+00> : vector<8xf32>
    %159 = vector.multi_reduction <add>, %158, %cst_61 [1] : vector<8x64xf32> to vector<8xf32>
    %160 = vector.shape_cast %159 : vector<8xf32> to vector<8x1xf32>
    %cst_62 = arith.constant 6.400000e+01 : f32
    %161 = vector.broadcast %cst_62 : f32 to vector<8x1xf32>
    %162 = arith.divf %160, %161 : vector<8x1xf32>
    %163 = vector.broadcast %155 : vector<8x1xf32> to vector<8x64xf32>
    %164 = arith.subf %147, %163 : vector<8x64xf32>
    %cst_63 = arith.constant 9.99999974E-6 : f32
    %165 = vector.broadcast %cst_63 : f32 to vector<8x1xf32>
    %166 = arith.addf %162, %165 : vector<8x1xf32>
    %167 = math.rsqrt %166 : vector<8x1xf32>
    %168 = vector.broadcast %167 : vector<8x1xf32> to vector<8x64xf32>
    %169 = arith.mulf %164, %168 : vector<8x64xf32>
    %170 = vector.broadcast %149 : vector<1x64xf32> to vector<8x64xf32>
    %171 = arith.mulf %169, %170 : vector<8x64xf32>
    %172 = vector.broadcast %151 : vector<1x64xf32> to vector<8x64xf32>
    %173 = arith.addf %171, %172 : vector<8x64xf32>
    %174 = arith.truncf %173 : vector<8x64xf32> to vector<8x64xbf16>
    %c0_64 = arith.constant 0 : index
    %c0_65 = arith.constant 0 : index
    %c0_66 = arith.constant 0 : index
    %175 = vector.load %arg11[%c0_64, %c0_65, %c0_66] : memref<4x64x256xbf16, #tpu.memory_space<vmem>>, vector<1x64x256xbf16>
    %176 = vector.shape_cast %175 : vector<1x64x256xbf16> to vector<64x256xbf16>
    %cst_67 = arith.constant dense<0.000000e+00> : vector<8x256xf32>
    %177 = tpu.matmul %174, %176, %cst_67 {dimension_numbers = #tpu.dot_dimension_numbers<[1], [0], [0], [1], [0, 0, 1, 1], [], []>} : vector<8x64xbf16>, vector<64x256xbf16>, vector<8x256xf32> -> vector<8x256xf32>
    %c0_68 = arith.constant 0 : index
    %c0_69 = arith.constant 0 : index
    %c0_70 = arith.constant 0 : index
    %178 = vector.load %arg12[%c0_68, %c0_69, %c0_70] : memref<4x1x256xf32, #tpu.memory_space<vmem>>, vector<1x1x256xf32>
    %179 = vector.shape_cast %178 : vector<1x1x256xf32> to vector<1x256xf32>
    %180 = vector.broadcast %179 : vector<1x256xf32> to vector<8x256xf32>
    %181 = arith.addf %177, %180 : vector<8x256xf32>
    %cst_71 = arith.constant 0.000000e+00 : f32
    %182 = vector.broadcast %cst_71 : f32 to vector<8x256xf32>
    %183 = arith.maximumf %181, %182 : vector<8x256xf32>
    %184 = arith.truncf %183 : vector<8x256xf32> to vector<8x256xbf16>
    %c0_72 = arith.constant 0 : index
    %c0_73 = arith.constant 0 : index
    %c0_74 = arith.constant 0 : index
    %185 = vector.load %arg13[%c0_72, %c0_73, %c0_74] : memref<4x256x64xbf16, #tpu.memory_space<vmem>>, vector<1x256x64xbf16>
    %186 = vector.shape_cast %185 : vector<1x256x64xbf16> to vector<256x64xbf16>
    %cst_75 = arith.constant dense<0.000000e+00> : vector<8x64xf32>
    %187 = tpu.matmul %184, %186, %cst_75 {dimension_numbers = #tpu.dot_dimension_numbers<[1], [0], [0], [1], [0, 0, 1, 1], [], []>} : vector<8x256xbf16>, vector<256x64xbf16>, vector<8x64xf32> -> vector<8x64xf32>
    %c0_76 = arith.constant 0 : index
    %c0_77 = arith.constant 0 : index
    %c0_78 = arith.constant 0 : index
    %188 = vector.load %arg14[%c0_76, %c0_77, %c0_78] : memref<4x1x64xf32, #tpu.memory_space<vmem>>, vector<1x1x64xf32>
    %189 = vector.shape_cast %188 : vector<1x1x64xf32> to vector<1x64xf32>
    %190 = vector.broadcast %189 : vector<1x64xf32> to vector<8x64xf32>
    %191 = arith.addf %187, %190 : vector<8x64xf32>
    %192 = arith.addf %147, %191 : vector<8x64xf32>
    %c1 = arith.constant 1 : index
    %c0_79 = arith.constant 0 : index
    %c0_80 = arith.constant 0 : index
    %193 = vector.load %arg2[%c1, %c0_79, %c0_80] : memref<4x1x64xf32, #tpu.memory_space<vmem>>, vector<1x1x64xf32>
    %194 = vector.shape_cast %193 : vector<1x1x64xf32> to vector<1x64xf32>
    %c1_81 = arith.constant 1 : index
    %c0_82 = arith.constant 0 : index
    %c0_83 = arith.constant 0 : index
    %195 = vector.load %arg3[%c1_81, %c0_82, %c0_83] : memref<4x1x64xf32, #tpu.memory_space<vmem>>, vector<1x1x64xf32>
    %196 = vector.shape_cast %195 : vector<1x1x64xf32> to vector<1x64xf32>
    %cst_84 = arith.constant dense<0.000000e+00> : vector<8xf32>
    %197 = vector.multi_reduction <add>, %192, %cst_84 [1] : vector<8x64xf32> to vector<8xf32>
    %198 = vector.shape_cast %197 : vector<8xf32> to vector<8x1xf32>
    %cst_85 = arith.constant 6.400000e+01 : f32
    %199 = vector.broadcast %cst_85 : f32 to vector<8x1xf32>
    %200 = arith.divf %198, %199 : vector<8x1xf32>
    %201 = vector.broadcast %200 : vector<8x1xf32> to vector<8x64xf32>
    %202 = arith.subf %192, %201 : vector<8x64xf32>
    %203 = arith.mulf %202, %202 : vector<8x64xf32>
    %cst_86 = arith.constant dense<0.000000e+00> : vector<8xf32>
    %204 = vector.multi_reduction <add>, %203, %cst_86 [1] : vector<8x64xf32> to vector<8xf32>
    %205 = vector.shape_cast %204 : vector<8xf32> to vector<8x1xf32>
    %cst_87 = arith.constant 6.400000e+01 : f32
    %206 = vector.broadcast %cst_87 : f32 to vector<8x1xf32>
    %207 = arith.divf %205, %206 : vector<8x1xf32>
    %208 = vector.broadcast %200 : vector<8x1xf32> to vector<8x64xf32>
    %209 = arith.subf %192, %208 : vector<8x64xf32>
    %cst_88 = arith.constant 9.99999974E-6 : f32
    %210 = vector.broadcast %cst_88 : f32 to vector<8x1xf32>
    %211 = arith.addf %207, %210 : vector<8x1xf32>
    %212 = math.rsqrt %211 : vector<8x1xf32>
    %213 = vector.broadcast %212 : vector<8x1xf32> to vector<8x64xf32>
    %214 = arith.mulf %209, %213 : vector<8x64xf32>
    %215 = vector.broadcast %194 : vector<1x64xf32> to vector<8x64xf32>
    %216 = arith.mulf %214, %215 : vector<8x64xf32>
    %217 = vector.broadcast %196 : vector<1x64xf32> to vector<8x64xf32>
    %218 = arith.addf %216, %217 : vector<8x64xf32>
    %219 = arith.truncf %218 : vector<8x64xf32> to vector<8x64xbf16>
    %c1_89 = arith.constant 1 : index
    %c0_90 = arith.constant 0 : index
    %c0_91 = arith.constant 0 : index
    %220 = vector.load %arg4[%c1_89, %c0_90, %c0_91] : memref<4x64x64xbf16, #tpu.memory_space<vmem>>, vector<1x64x64xbf16>
    %221 = vector.shape_cast %220 : vector<1x64x64xbf16> to vector<64x64xbf16>
    %cst_92 = arith.constant dense<0.000000e+00> : vector<8x64xf32>
    %222 = tpu.matmul %219, %221, %cst_92 {dimension_numbers = #tpu.dot_dimension_numbers<[1], [0], [0], [1], [0, 0, 1, 1], [], []>} : vector<8x64xbf16>, vector<64x64xbf16>, vector<8x64xf32> -> vector<8x64xf32>
    %c1_93 = arith.constant 1 : index
    %c0_94 = arith.constant 0 : index
    %c0_95 = arith.constant 0 : index
    %223 = vector.load %arg5[%c1_93, %c0_94, %c0_95] : memref<4x64x64xbf16, #tpu.memory_space<vmem>>, vector<1x64x64xbf16>
    %224 = vector.shape_cast %223 : vector<1x64x64xbf16> to vector<64x64xbf16>
    %cst_96 = arith.constant dense<0.000000e+00> : vector<8x64xf32>
    %225 = tpu.matmul %219, %224, %cst_96 {dimension_numbers = #tpu.dot_dimension_numbers<[1], [0], [0], [1], [0, 0, 1, 1], [], []>} : vector<8x64xbf16>, vector<64x64xbf16>, vector<8x64xf32> -> vector<8x64xf32>
    %c1_97 = arith.constant 1 : index
    %c0_98 = arith.constant 0 : index
    %c0_99 = arith.constant 0 : index
    %226 = vector.load %arg6[%c1_97, %c0_98, %c0_99] : memref<4x64x64xbf16, #tpu.memory_space<vmem>>, vector<1x64x64xbf16>
    %227 = vector.shape_cast %226 : vector<1x64x64xbf16> to vector<64x64xbf16>
    %cst_100 = arith.constant dense<0.000000e+00> : vector<8x64xf32>
    %228 = tpu.matmul %219, %227, %cst_100 {dimension_numbers = #tpu.dot_dimension_numbers<[1], [0], [0], [1], [0, 0, 1, 1], [], []>} : vector<8x64xbf16>, vector<64x64xbf16>, vector<8x64xf32> -> vector<8x64xf32>
    %229 = vector.shape_cast %222 : vector<8x64xf32> to vector<1x8x64xf32>
    %230 = arith.truncf %229 : vector<1x8x64xf32> to vector<1x8x64xbf16>
    %231 = vector.shape_cast %225 : vector<8x64xf32> to vector<1x8x64xf32>
    %232 = arith.truncf %231 : vector<1x8x64xf32> to vector<1x8x64xbf16>
    %233 = vector.shape_cast %228 : vector<8x64xf32> to vector<1x8x64xf32>
    %234 = arith.truncf %233 : vector<1x8x64xf32> to vector<1x8x64xbf16>
    %c1_101 = arith.constant 1 : index
    %c0_102 = arith.constant 0 : index
    %c0_103 = arith.constant 0 : index
    %235 = vector.load %arg7[%c1_101, %c0_102, %c0_103] : memref<4x64x64xbf16, #tpu.memory_space<vmem>>, vector<1x64x64xbf16>
    %236 = vector.shape_cast %235 : vector<1x64x64xbf16> to vector<64x64xbf16>
    %cst_104 = arith.constant 0.000000e+00 : f32
    %237 = vector.broadcast %cst_104 : f32 to vector<8x64xf32>
    %238 = vector.extract_strided_slice %230 {offsets = [0, 0, 0], sizes = [1, 8, 16], strides = [1, 1, 1]} : vector<1x8x64xbf16> to vector<1x8x16xbf16>
    %239 = vector.extract_strided_slice %232 {offsets = [0, 0, 0], sizes = [1, 8, 16], strides = [1, 1, 1]} : vector<1x8x64xbf16> to vector<1x8x16xbf16>
    %240 = vector.extract_strided_slice %234 {offsets = [0, 0, 0], sizes = [1, 8, 16], strides = [1, 1, 1]} : vector<1x8x64xbf16> to vector<1x8x16xbf16>
    "tpu.trace_start"() <{level = 10 : i32, message = "bqd,bkd->bqk"}> : () -> ()
    %cst_105 = arith.constant dense<0.000000e+00> : vector<1x8x8xf32>
    %241 = tpu.matmul %238, %239, %cst_105 {dimension_numbers = #tpu.dot_dimension_numbers<[2], [2], [1], [1], [0, 0, 0, 1, 1, 1], [0], [0]>} : vector<1x8x16xbf16>, vector<1x8x16xbf16>, vector<1x8x8xf32> -> vector<1x8x8xf32>
    "tpu.trace_stop"() : () -> ()
    %242 = arith.addf %241, %9 : vector<1x8x8xf32>
    %cst_106 = arith.constant dense<0xFF800000> : vector<1x8xf32>
    %243 = vector.multi_reduction <maximumf>, %242, %cst_106 [2] : vector<1x8x8xf32> to vector<1x8xf32>
    %244 = vector.shape_cast %243 : vector<1x8xf32> to vector<1x8x1xf32>
    %245 = vector.broadcast %244 : vector<1x8x1xf32> to vector<1x8x8xf32>
    %246 = arith.subf %242, %245 : vector<1x8x8xf32>
    %247 = math.exp %246 : vector<1x8x8xf32>
    %cst_107 = arith.constant dense<0.000000e+00> : vector<1x8xf32>
    %248 = vector.multi_reduction <add>, %247, %cst_107 [2] : vector<1x8x8xf32> to vector<1x8xf32>
    %249 = vector.shape_cast %248 : vector<1x8xf32> to vector<1x8x1xf32>
    %250 = tpu.reciprocal %249 {approx = true} : vector<1x8x1xf32> -> vector<1x8x1xf32>
    %251 = vector.broadcast %250 : vector<1x8x1xf32> to vector<1x8x8xf32>
    %252 = arith.mulf %247, %251 : vector<1x8x8xf32>
    %253 = arith.truncf %252 : vector<1x8x8xf32> to vector<1x8x8xbf16>
    "tpu.trace_start"() <{level = 10 : i32, message = "bqk,bkd->bqd"}> : () -> ()
    %cst_108 = arith.constant dense<0.000000e+00> : vector<1x8x16xf32>
    %254 = tpu.matmul %253, %240, %cst_108 {dimension_numbers = #tpu.dot_dimension_numbers<[2], [1], [1], [2], [0, 0, 0, 1, 1, 2], [0], [0]>} : vector<1x8x8xbf16>, vector<1x8x16xbf16>, vector<1x8x16xf32> -> vector<1x8x16xf32>
    "tpu.trace_stop"() : () -> ()
    %255 = vector.shape_cast %254 : vector<1x8x16xf32> to vector<8x16xf32>
    %256 = arith.truncf %255 : vector<8x16xf32> to vector<8x16xbf16>
    %257 = vector.extract_strided_slice %236 {offsets = [0, 0], sizes = [16, 64], strides = [1, 1]} : vector<64x64xbf16> to vector<16x64xbf16>
    %cst_109 = arith.constant dense<0.000000e+00> : vector<8x64xf32>
    %258 = tpu.matmul %256, %257, %cst_109 {dimension_numbers = #tpu.dot_dimension_numbers<[1], [0], [0], [1], [0, 0, 1, 1], [], []>} : vector<8x16xbf16>, vector<16x64xbf16>, vector<8x64xf32> -> vector<8x64xf32>
    %259 = arith.addf %237, %258 : vector<8x64xf32>
    %260 = vector.extract_strided_slice %230 {offsets = [0, 0, 16], sizes = [1, 8, 16], strides = [1, 1, 1]} : vector<1x8x64xbf16> to vector<1x8x16xbf16>
    %261 = vector.extract_strided_slice %232 {offsets = [0, 0, 16], sizes = [1, 8, 16], strides = [1, 1, 1]} : vector<1x8x64xbf16> to vector<1x8x16xbf16>
    %262 = vector.extract_strided_slice %234 {offsets = [0, 0, 16], sizes = [1, 8, 16], strides = [1, 1, 1]} : vector<1x8x64xbf16> to vector<1x8x16xbf16>
    "tpu.trace_start"() <{level = 10 : i32, message = "bqd,bkd->bqk"}> : () -> ()
    %cst_110 = arith.constant dense<0.000000e+00> : vector<1x8x8xf32>
    %263 = tpu.matmul %260, %261, %cst_110 {dimension_numbers = #tpu.dot_dimension_numbers<[2], [2], [1], [1], [0, 0, 0, 1, 1, 1], [0], [0]>} : vector<1x8x16xbf16>, vector<1x8x16xbf16>, vector<1x8x8xf32> -> vector<1x8x8xf32>
    "tpu.trace_stop"() : () -> ()
    %264 = arith.addf %263, %9 : vector<1x8x8xf32>
    %cst_111 = arith.constant dense<0xFF800000> : vector<1x8xf32>
    %265 = vector.multi_reduction <maximumf>, %264, %cst_111 [2] : vector<1x8x8xf32> to vector<1x8xf32>
    %266 = vector.shape_cast %265 : vector<1x8xf32> to vector<1x8x1xf32>
    %267 = vector.broadcast %266 : vector<1x8x1xf32> to vector<1x8x8xf32>
    %268 = arith.subf %264, %267 : vector<1x8x8xf32>
    %269 = math.exp %268 : vector<1x8x8xf32>
    %cst_112 = arith.constant dense<0.000000e+00> : vector<1x8xf32>
    %270 = vector.multi_reduction <add>, %269, %cst_112 [2] : vector<1x8x8xf32> to vector<1x8xf32>
    %271 = vector.shape_cast %270 : vector<1x8xf32> to vector<1x8x1xf32>
    %272 = tpu.reciprocal %271 {approx = true} : vector<1x8x1xf32> -> vector<1x8x1xf32>
    %273 = vector.broadcast %272 : vector<1x8x1xf32> to vector<1x8x8xf32>
    %274 = arith.mulf %269, %273 : vector<1x8x8xf32>
    %275 = arith.truncf %274 : vector<1x8x8xf32> to vector<1x8x8xbf16>
    "tpu.trace_start"() <{level = 10 : i32, message = "bqk,bkd->bqd"}> : () -> ()
    %cst_113 = arith.constant dense<0.000000e+00> : vector<1x8x16xf32>
    %276 = tpu.matmul %275, %262, %cst_113 {dimension_numbers = #tpu.dot_dimension_numbers<[2], [1], [1], [2], [0, 0, 0, 1, 1, 2], [0], [0]>} : vector<1x8x8xbf16>, vector<1x8x16xbf16>, vector<1x8x16xf32> -> vector<1x8x16xf32>
    "tpu.trace_stop"() : () -> ()
    %277 = vector.shape_cast %276 : vector<1x8x16xf32> to vector<8x16xf32>
    %278 = arith.truncf %277 : vector<8x16xf32> to vector<8x16xbf16>
    %279 = vector.extract_strided_slice %236 {offsets = [16, 0], sizes = [16, 64], strides = [1, 1]} : vector<64x64xbf16> to vector<16x64xbf16>
    %cst_114 = arith.constant dense<0.000000e+00> : vector<8x64xf32>
    %280 = tpu.matmul %278, %279, %cst_114 {dimension_numbers = #tpu.dot_dimension_numbers<[1], [0], [0], [1], [0, 0, 1, 1], [], []>} : vector<8x16xbf16>, vector<16x64xbf16>, vector<8x64xf32> -> vector<8x64xf32>
    %281 = arith.addf %259, %280 : vector<8x64xf32>
    %282 = vector.extract_strided_slice %230 {offsets = [0, 0, 32], sizes = [1, 8, 16], strides = [1, 1, 1]} : vector<1x8x64xbf16> to vector<1x8x16xbf16>
    %283 = vector.extract_strided_slice %232 {offsets = [0, 0, 32], sizes = [1, 8, 16], strides = [1, 1, 1]} : vector<1x8x64xbf16> to vector<1x8x16xbf16>
    %284 = vector.extract_strided_slice %234 {offsets = [0, 0, 32], sizes = [1, 8, 16], strides = [1, 1, 1]} : vector<1x8x64xbf16> to vector<1x8x16xbf16>
    "tpu.trace_start"() <{level = 10 : i32, message = "bqd,bkd->bqk"}> : () -> ()
    %cst_115 = arith.constant dense<0.000000e+00> : vector<1x8x8xf32>
    %285 = tpu.matmul %282, %283, %cst_115 {dimension_numbers = #tpu.dot_dimension_numbers<[2], [2], [1], [1], [0, 0, 0, 1, 1, 1], [0], [0]>} : vector<1x8x16xbf16>, vector<1x8x16xbf16>, vector<1x8x8xf32> -> vector<1x8x8xf32>
    "tpu.trace_stop"() : () -> ()
    %286 = arith.addf %285, %9 : vector<1x8x8xf32>
    %cst_116 = arith.constant dense<0xFF800000> : vector<1x8xf32>
    %287 = vector.multi_reduction <maximumf>, %286, %cst_116 [2] : vector<1x8x8xf32> to vector<1x8xf32>
    %288 = vector.shape_cast %287 : vector<1x8xf32> to vector<1x8x1xf32>
    %289 = vector.broadcast %288 : vector<1x8x1xf32> to vector<1x8x8xf32>
    %290 = arith.subf %286, %289 : vector<1x8x8xf32>
    %291 = math.exp %290 : vector<1x8x8xf32>
    %cst_117 = arith.constant dense<0.000000e+00> : vector<1x8xf32>
    %292 = vector.multi_reduction <add>, %291, %cst_117 [2] : vector<1x8x8xf32> to vector<1x8xf32>
    %293 = vector.shape_cast %292 : vector<1x8xf32> to vector<1x8x1xf32>
    %294 = tpu.reciprocal %293 {approx = true} : vector<1x8x1xf32> -> vector<1x8x1xf32>
    %295 = vector.broadcast %294 : vector<1x8x1xf32> to vector<1x8x8xf32>
    %296 = arith.mulf %291, %295 : vector<1x8x8xf32>
    %297 = arith.truncf %296 : vector<1x8x8xf32> to vector<1x8x8xbf16>
    "tpu.trace_start"() <{level = 10 : i32, message = "bqk,bkd->bqd"}> : () -> ()
    %cst_118 = arith.constant dense<0.000000e+00> : vector<1x8x16xf32>
    %298 = tpu.matmul %297, %284, %cst_118 {dimension_numbers = #tpu.dot_dimension_numbers<[2], [1], [1], [2], [0, 0, 0, 1, 1, 2], [0], [0]>} : vector<1x8x8xbf16>, vector<1x8x16xbf16>, vector<1x8x16xf32> -> vector<1x8x16xf32>
    "tpu.trace_stop"() : () -> ()
    %299 = vector.shape_cast %298 : vector<1x8x16xf32> to vector<8x16xf32>
    %300 = arith.truncf %299 : vector<8x16xf32> to vector<8x16xbf16>
    %301 = vector.extract_strided_slice %236 {offsets = [32, 0], sizes = [16, 64], strides = [1, 1]} : vector<64x64xbf16> to vector<16x64xbf16>
    %cst_119 = arith.constant dense<0.000000e+00> : vector<8x64xf32>
    %302 = tpu.matmul %300, %301, %cst_119 {dimension_numbers = #tpu.dot_dimension_numbers<[1], [0], [0], [1], [0, 0, 1, 1], [], []>} : vector<8x16xbf16>, vector<16x64xbf16>, vector<8x64xf32> -> vector<8x64xf32>
    %303 = arith.addf %281, %302 : vector<8x64xf32>
    %304 = vector.extract_strided_slice %230 {offsets = [0, 0, 48], sizes = [1, 8, 16], strides = [1, 1, 1]} : vector<1x8x64xbf16> to vector<1x8x16xbf16>
    %305 = vector.extract_strided_slice %232 {offsets = [0, 0, 48], sizes = [1, 8, 16], strides = [1, 1, 1]} : vector<1x8x64xbf16> to vector<1x8x16xbf16>
    %306 = vector.extract_strided_slice %234 {offsets = [0, 0, 48], sizes = [1, 8, 16], strides = [1, 1, 1]} : vector<1x8x64xbf16> to vector<1x8x16xbf16>
    "tpu.trace_start"() <{level = 10 : i32, message = "bqd,bkd->bqk"}> : () -> ()
    %cst_120 = arith.constant dense<0.000000e+00> : vector<1x8x8xf32>
    %307 = tpu.matmul %304, %305, %cst_120 {dimension_numbers = #tpu.dot_dimension_numbers<[2], [2], [1], [1], [0, 0, 0, 1, 1, 1], [0], [0]>} : vector<1x8x16xbf16>, vector<1x8x16xbf16>, vector<1x8x8xf32> -> vector<1x8x8xf32>
    "tpu.trace_stop"() : () -> ()
    %308 = arith.addf %307, %9 : vector<1x8x8xf32>
    %cst_121 = arith.constant dense<0xFF800000> : vector<1x8xf32>
    %309 = vector.multi_reduction <maximumf>, %308, %cst_121 [2] : vector<1x8x8xf32> to vector<1x8xf32>
    %310 = vector.shape_cast %309 : vector<1x8xf32> to vector<1x8x1xf32>
    %311 = vector.broadcast %310 : vector<1x8x1xf32> to vector<1x8x8xf32>
    %312 = arith.subf %308, %311 : vector<1x8x8xf32>
    %313 = math.exp %312 : vector<1x8x8xf32>
    %cst_122 = arith.constant dense<0.000000e+00> : vector<1x8xf32>
    %314 = vector.multi_reduction <add>, %313, %cst_122 [2] : vector<1x8x8xf32> to vector<1x8xf32>
    %315 = vector.shape_cast %314 : vector<1x8xf32> to vector<1x8x1xf32>
    %316 = tpu.reciprocal %315 {approx = true} : vector<1x8x1xf32> -> vector<1x8x1xf32>
    %317 = vector.broadcast %316 : vector<1x8x1xf32> to vector<1x8x8xf32>
    %318 = arith.mulf %313, %317 : vector<1x8x8xf32>
    %319 = arith.truncf %318 : vector<1x8x8xf32> to vector<1x8x8xbf16>
    "tpu.trace_start"() <{level = 10 : i32, message = "bqk,bkd->bqd"}> : () -> ()
    %cst_123 = arith.constant dense<0.000000e+00> : vector<1x8x16xf32>
    %320 = tpu.matmul %319, %306, %cst_123 {dimension_numbers = #tpu.dot_dimension_numbers<[2], [1], [1], [2], [0, 0, 0, 1, 1, 2], [0], [0]>} : vector<1x8x8xbf16>, vector<1x8x16xbf16>, vector<1x8x16xf32> -> vector<1x8x16xf32>
    "tpu.trace_stop"() : () -> ()
    %321 = vector.shape_cast %320 : vector<1x8x16xf32> to vector<8x16xf32>
    %322 = arith.truncf %321 : vector<8x16xf32> to vector<8x16xbf16>
    %323 = vector.extract_strided_slice %236 {offsets = [48, 0], sizes = [16, 64], strides = [1, 1]} : vector<64x64xbf16> to vector<16x64xbf16>
    %cst_124 = arith.constant dense<0.000000e+00> : vector<8x64xf32>
    %324 = tpu.matmul %322, %323, %cst_124 {dimension_numbers = #tpu.dot_dimension_numbers<[1], [0], [0], [1], [0, 0, 1, 1], [], []>} : vector<8x16xbf16>, vector<16x64xbf16>, vector<8x64xf32> -> vector<8x64xf32>
    %325 = arith.addf %303, %324 : vector<8x64xf32>
    %326 = arith.addf %192, %325 : vector<8x64xf32>
    %c1_125 = arith.constant 1 : index
    %c0_126 = arith.constant 0 : index
    %c0_127 = arith.constant 0 : index
    %327 = vector.load %arg8[%c1_125, %c0_126, %c0_127] : memref<4x1x64xf32, #tpu.memory_space<vmem>>, vector<1x1x64xf32>
    %328 = vector.shape_cast %327 : vector<1x1x64xf32> to vector<1x64xf32>
    %329 = vector.broadcast %328 : vector<1x64xf32> to vector<8x64xf32>
    %330 = arith.addf %326, %329 : vector<8x64xf32>
    %c1_128 = arith.constant 1 : index
    %c0_129 = arith.constant 0 : index
    %c0_130 = arith.constant 0 : index
    %331 = vector.load %arg9[%c1_128, %c0_129, %c0_130] : memref<4x1x64xf32, #tpu.memory_space<vmem>>, vector<1x1x64xf32>
    %332 = vector.shape_cast %331 : vector<1x1x64xf32> to vector<1x64xf32>
    %c1_131 = arith.constant 1 : index
    %c0_132 = arith.constant 0 : index
    %c0_133 = arith.constant 0 : index
    %333 = vector.load %arg10[%c1_131, %c0_132, %c0_133] : memref<4x1x64xf32, #tpu.memory_space<vmem>>, vector<1x1x64xf32>
    %334 = vector.shape_cast %333 : vector<1x1x64xf32> to vector<1x64xf32>
    %cst_134 = arith.constant dense<0.000000e+00> : vector<8xf32>
    %335 = vector.multi_reduction <add>, %330, %cst_134 [1] : vector<8x64xf32> to vector<8xf32>
    %336 = vector.shape_cast %335 : vector<8xf32> to vector<8x1xf32>
    %cst_135 = arith.constant 6.400000e+01 : f32
    %337 = vector.broadcast %cst_135 : f32 to vector<8x1xf32>
    %338 = arith.divf %336, %337 : vector<8x1xf32>
    %339 = vector.broadcast %338 : vector<8x1xf32> to vector<8x64xf32>
    %340 = arith.subf %330, %339 : vector<8x64xf32>
    %341 = arith.mulf %340, %340 : vector<8x64xf32>
    %cst_136 = arith.constant dense<0.000000e+00> : vector<8xf32>
    %342 = vector.multi_reduction <add>, %341, %cst_136 [1] : vector<8x64xf32> to vector<8xf32>
    %343 = vector.shape_cast %342 : vector<8xf32> to vector<8x1xf32>
    %cst_137 = arith.constant 6.400000e+01 : f32
    %344 = vector.broadcast %cst_137 : f32 to vector<8x1xf32>
    %345 = arith.divf %343, %344 : vector<8x1xf32>
    %346 = vector.broadcast %338 : vector<8x1xf32> to vector<8x64xf32>
    %347 = arith.subf %330, %346 : vector<8x64xf32>
    %cst_138 = arith.constant 9.99999974E-6 : f32
    %348 = vector.broadcast %cst_138 : f32 to vector<8x1xf32>
    %349 = arith.addf %345, %348 : vector<8x1xf32>
    %350 = math.rsqrt %349 : vector<8x1xf32>
    %351 = vector.broadcast %350 : vector<8x1xf32> to vector<8x64xf32>
    %352 = arith.mulf %347, %351 : vector<8x64xf32>
    %353 = vector.broadcast %332 : vector<1x64xf32> to vector<8x64xf32>
    %354 = arith.mulf %352, %353 : vector<8x64xf32>
    %355 = vector.broadcast %334 : vector<1x64xf32> to vector<8x64xf32>
    %356 = arith.addf %354, %355 : vector<8x64xf32>
    %357 = arith.truncf %356 : vector<8x64xf32> to vector<8x64xbf16>
    %c1_139 = arith.constant 1 : index
    %c0_140 = arith.constant 0 : index
    %c0_141 = arith.constant 0 : index
    %358 = vector.load %arg11[%c1_139, %c0_140, %c0_141] : memref<4x64x256xbf16, #tpu.memory_space<vmem>>, vector<1x64x256xbf16>
    %359 = vector.shape_cast %358 : vector<1x64x256xbf16> to vector<64x256xbf16>
    %cst_142 = arith.constant dense<0.000000e+00> : vector<8x256xf32>
    %360 = tpu.matmul %357, %359, %cst_142 {dimension_numbers = #tpu.dot_dimension_numbers<[1], [0], [0], [1], [0, 0, 1, 1], [], []>} : vector<8x64xbf16>, vector<64x256xbf16>, vector<8x256xf32> -> vector<8x256xf32>
    %c1_143 = arith.constant 1 : index
    %c0_144 = arith.constant 0 : index
    %c0_145 = arith.constant 0 : index
    %361 = vector.load %arg12[%c1_143, %c0_144, %c0_145] : memref<4x1x256xf32, #tpu.memory_space<vmem>>, vector<1x1x256xf32>
    %362 = vector.shape_cast %361 : vector<1x1x256xf32> to vector<1x256xf32>
    %363 = vector.broadcast %362 : vector<1x256xf32> to vector<8x256xf32>
    %364 = arith.addf %360, %363 : vector<8x256xf32>
    %cst_146 = arith.constant 0.000000e+00 : f32
    %365 = vector.broadcast %cst_146 : f32 to vector<8x256xf32>
    %366 = arith.maximumf %364, %365 : vector<8x256xf32>
    %367 = arith.truncf %366 : vector<8x256xf32> to vector<8x256xbf16>
    %c1_147 = arith.constant 1 : index
    %c0_148 = arith.constant 0 : index
    %c0_149 = arith.constant 0 : index
    %368 = vector.load %arg13[%c1_147, %c0_148, %c0_149] : memref<4x256x64xbf16, #tpu.memory_space<vmem>>, vector<1x256x64xbf16>
    %369 = vector.shape_cast %368 : vector<1x256x64xbf16> to vector<256x64xbf16>
    %cst_150 = arith.constant dense<0.000000e+00> : vector<8x64xf32>
    %370 = tpu.matmul %367, %369, %cst_150 {dimension_numbers = #tpu.dot_dimension_numbers<[1], [0], [0], [1], [0, 0, 1, 1], [], []>} : vector<8x256xbf16>, vector<256x64xbf16>, vector<8x64xf32> -> vector<8x64xf32>
    %c1_151 = arith.constant 1 : index
    %c0_152 = arith.constant 0 : index
    %c0_153 = arith.constant 0 : index
    %371 = vector.load %arg14[%c1_151, %c0_152, %c0_153] : memref<4x1x64xf32, #tpu.memory_space<vmem>>, vector<1x1x64xf32>
    %372 = vector.shape_cast %371 : vector<1x1x64xf32> to vector<1x64xf32>
    %373 = vector.broadcast %372 : vector<1x64xf32> to vector<8x64xf32>
    %374 = arith.addf %370, %373 : vector<8x64xf32>
    %375 = arith.addf %330, %374 : vector<8x64xf32>
    %c2 = arith.constant 2 : index
    %c0_154 = arith.constant 0 : index
    %c0_155 = arith.constant 0 : index
    %376 = vector.load %arg2[%c2, %c0_154, %c0_155] : memref<4x1x64xf32, #tpu.memory_space<vmem>>, vector<1x1x64xf32>
    %377 = vector.shape_cast %376 : vector<1x1x64xf32> to vector<1x64xf32>
    %c2_156 = arith.constant 2 : index
    %c0_157 = arith.constant 0 : index
    %c0_158 = arith.constant 0 : index
    %378 = vector.load %arg3[%c2_156, %c0_157, %c0_158] : memref<4x1x64xf32, #tpu.memory_space<vmem>>, vector<1x1x64xf32>
    %379 = vector.shape_cast %378 : vector<1x1x64xf32> to vector<1x64xf32>
    %cst_159 = arith.constant dense<0.000000e+00> : vector<8xf32>
    %380 = vector.multi_reduction <add>, %375, %cst_159 [1] : vector<8x64xf32> to vector<8xf32>
    %381 = vector.shape_cast %380 : vector<8xf32> to vector<8x1xf32>
    %cst_160 = arith.constant 6.400000e+01 : f32
    %382 = vector.broadcast %cst_160 : f32 to vector<8x1xf32>
    %383 = arith.divf %381, %382 : vector<8x1xf32>
    %384 = vector.broadcast %383 : vector<8x1xf32> to vector<8x64xf32>
    %385 = arith.subf %375, %384 : vector<8x64xf32>
    %386 = arith.mulf %385, %385 : vector<8x64xf32>
    %cst_161 = arith.constant dense<0.000000e+00> : vector<8xf32>
    %387 = vector.multi_reduction <add>, %386, %cst_161 [1] : vector<8x64xf32> to vector<8xf32>
    %388 = vector.shape_cast %387 : vector<8xf32> to vector<8x1xf32>
    %cst_162 = arith.constant 6.400000e+01 : f32
    %389 = vector.broadcast %cst_162 : f32 to vector<8x1xf32>
    %390 = arith.divf %388, %389 : vector<8x1xf32>
    %391 = vector.broadcast %383 : vector<8x1xf32> to vector<8x64xf32>
    %392 = arith.subf %375, %391 : vector<8x64xf32>
    %cst_163 = arith.constant 9.99999974E-6 : f32
    %393 = vector.broadcast %cst_163 : f32 to vector<8x1xf32>
    %394 = arith.addf %390, %393 : vector<8x1xf32>
    %395 = math.rsqrt %394 : vector<8x1xf32>
    %396 = vector.broadcast %395 : vector<8x1xf32> to vector<8x64xf32>
    %397 = arith.mulf %392, %396 : vector<8x64xf32>
    %398 = vector.broadcast %377 : vector<1x64xf32> to vector<8x64xf32>
    %399 = arith.mulf %397, %398 : vector<8x64xf32>
    %400 = vector.broadcast %379 : vector<1x64xf32> to vector<8x64xf32>
    %401 = arith.addf %399, %400 : vector<8x64xf32>
    %402 = arith.truncf %401 : vector<8x64xf32> to vector<8x64xbf16>
    %c2_164 = arith.constant 2 : index
    %c0_165 = arith.constant 0 : index
    %c0_166 = arith.constant 0 : index
    %403 = vector.load %arg4[%c2_164, %c0_165, %c0_166] : memref<4x64x64xbf16, #tpu.memory_space<vmem>>, vector<1x64x64xbf16>
    %404 = vector.shape_cast %403 : vector<1x64x64xbf16> to vector<64x64xbf16>
    %cst_167 = arith.constant dense<0.000000e+00> : vector<8x64xf32>
    %405 = tpu.matmul %402, %404, %cst_167 {dimension_numbers = #tpu.dot_dimension_numbers<[1], [0], [0], [1], [0, 0, 1, 1], [], []>} : vector<8x64xbf16>, vector<64x64xbf16>, vector<8x64xf32> -> vector<8x64xf32>
    %c2_168 = arith.constant 2 : index
    %c0_169 = arith.constant 0 : index
    %c0_170 = arith.constant 0 : index
    %406 = vector.load %arg5[%c2_168, %c0_169, %c0_170] : memref<4x64x64xbf16, #tpu.memory_space<vmem>>, vector<1x64x64xbf16>
    %407 = vector.shape_cast %406 : vector<1x64x64xbf16> to vector<64x64xbf16>
    %cst_171 = arith.constant dense<0.000000e+00> : vector<8x64xf32>
    %408 = tpu.matmul %402, %407, %cst_171 {dimension_numbers = #tpu.dot_dimension_numbers<[1], [0], [0], [1], [0, 0, 1, 1], [], []>} : vector<8x64xbf16>, vector<64x64xbf16>, vector<8x64xf32> -> vector<8x64xf32>
    %c2_172 = arith.constant 2 : index
    %c0_173 = arith.constant 0 : index
    %c0_174 = arith.constant 0 : index
    %409 = vector.load %arg6[%c2_172, %c0_173, %c0_174] : memref<4x64x64xbf16, #tpu.memory_space<vmem>>, vector<1x64x64xbf16>
    %410 = vector.shape_cast %409 : vector<1x64x64xbf16> to vector<64x64xbf16>
    %cst_175 = arith.constant dense<0.000000e+00> : vector<8x64xf32>
    %411 = tpu.matmul %402, %410, %cst_175 {dimension_numbers = #tpu.dot_dimension_numbers<[1], [0], [0], [1], [0, 0, 1, 1], [], []>} : vector<8x64xbf16>, vector<64x64xbf16>, vector<8x64xf32> -> vector<8x64xf32>
    %412 = vector.shape_cast %405 : vector<8x64xf32> to vector<1x8x64xf32>
    %413 = arith.truncf %412 : vector<1x8x64xf32> to vector<1x8x64xbf16>
    %414 = vector.shape_cast %408 : vector<8x64xf32> to vector<1x8x64xf32>
    %415 = arith.truncf %414 : vector<1x8x64xf32> to vector<1x8x64xbf16>
    %416 = vector.shape_cast %411 : vector<8x64xf32> to vector<1x8x64xf32>
    %417 = arith.truncf %416 : vector<1x8x64xf32> to vector<1x8x64xbf16>
    %c2_176 = arith.constant 2 : index
    %c0_177 = arith.constant 0 : index
    %c0_178 = arith.constant 0 : index
    %418 = vector.load %arg7[%c2_176, %c0_177, %c0_178] : memref<4x64x64xbf16, #tpu.memory_space<vmem>>, vector<1x64x64xbf16>
    %419 = vector.shape_cast %418 : vector<1x64x64xbf16> to vector<64x64xbf16>
    %cst_179 = arith.constant 0.000000e+00 : f32
    %420 = vector.broadcast %cst_179 : f32 to vector<8x64xf32>
    %421 = vector.extract_strided_slice %413 {offsets = [0, 0, 0], sizes = [1, 8, 16], strides = [1, 1, 1]} : vector<1x8x64xbf16> to vector<1x8x16xbf16>
    %422 = vector.extract_strided_slice %415 {offsets = [0, 0, 0], sizes = [1, 8, 16], strides = [1, 1, 1]} : vector<1x8x64xbf16> to vector<1x8x16xbf16>
    %423 = vector.extract_strided_slice %417 {offsets = [0, 0, 0], sizes = [1, 8, 16], strides = [1, 1, 1]} : vector<1x8x64xbf16> to vector<1x8x16xbf16>
    "tpu.trace_start"() <{level = 10 : i32, message = "bqd,bkd->bqk"}> : () -> ()
    %cst_180 = arith.constant dense<0.000000e+00> : vector<1x8x8xf32>
    %424 = tpu.matmul %421, %422, %cst_180 {dimension_numbers = #tpu.dot_dimension_numbers<[2], [2], [1], [1], [0, 0, 0, 1, 1, 1], [0], [0]>} : vector<1x8x16xbf16>, vector<1x8x16xbf16>, vector<1x8x8xf32> -> vector<1x8x8xf32>
    "tpu.trace_stop"() : () -> ()
    %425 = arith.addf %424, %9 : vector<1x8x8xf32>
    %cst_181 = arith.constant dense<0xFF800000> : vector<1x8xf32>
    %426 = vector.multi_reduction <maximumf>, %425, %cst_181 [2] : vector<1x8x8xf32> to vector<1x8xf32>
    %427 = vector.shape_cast %426 : vector<1x8xf32> to vector<1x8x1xf32>
    %428 = vector.broadcast %427 : vector<1x8x1xf32> to vector<1x8x8xf32>
    %429 = arith.subf %425, %428 : vector<1x8x8xf32>
    %430 = math.exp %429 : vector<1x8x8xf32>
    %cst_182 = arith.constant dense<0.000000e+00> : vector<1x8xf32>
    %431 = vector.multi_reduction <add>, %430, %cst_182 [2] : vector<1x8x8xf32> to vector<1x8xf32>
    %432 = vector.shape_cast %431 : vector<1x8xf32> to vector<1x8x1xf32>
    %433 = tpu.reciprocal %432 {approx = true} : vector<1x8x1xf32> -> vector<1x8x1xf32>
    %434 = vector.broadcast %433 : vector<1x8x1xf32> to vector<1x8x8xf32>
    %435 = arith.mulf %430, %434 : vector<1x8x8xf32>
    %436 = arith.truncf %435 : vector<1x8x8xf32> to vector<1x8x8xbf16>
    "tpu.trace_start"() <{level = 10 : i32, message = "bqk,bkd->bqd"}> : () -> ()
    %cst_183 = arith.constant dense<0.000000e+00> : vector<1x8x16xf32>
    %437 = tpu.matmul %436, %423, %cst_183 {dimension_numbers = #tpu.dot_dimension_numbers<[2], [1], [1], [2], [0, 0, 0, 1, 1, 2], [0], [0]>} : vector<1x8x8xbf16>, vector<1x8x16xbf16>, vector<1x8x16xf32> -> vector<1x8x16xf32>
    "tpu.trace_stop"() : () -> ()
    %438 = vector.shape_cast %437 : vector<1x8x16xf32> to vector<8x16xf32>
    %439 = arith.truncf %438 : vector<8x16xf32> to vector<8x16xbf16>
    %440 = vector.extract_strided_slice %419 {offsets = [0, 0], sizes = [16, 64], strides = [1, 1]} : vector<64x64xbf16> to vector<16x64xbf16>
    %cst_184 = arith.constant dense<0.000000e+00> : vector<8x64xf32>
    %441 = tpu.matmul %439, %440, %cst_184 {dimension_numbers = #tpu.dot_dimension_numbers<[1], [0], [0], [1], [0, 0, 1, 1], [], []>} : vector<8x16xbf16>, vector<16x64xbf16>, vector<8x64xf32> -> vector<8x64xf32>
    %442 = arith.addf %420, %441 : vector<8x64xf32>
    %443 = vector.extract_strided_slice %413 {offsets = [0, 0, 16], sizes = [1, 8, 16], strides = [1, 1, 1]} : vector<1x8x64xbf16> to vector<1x8x16xbf16>
    %444 = vector.extract_strided_slice %415 {offsets = [0, 0, 16], sizes = [1, 8, 16], strides = [1, 1, 1]} : vector<1x8x64xbf16> to vector<1x8x16xbf16>
    %445 = vector.extract_strided_slice %417 {offsets = [0, 0, 16], sizes = [1, 8, 16], strides = [1, 1, 1]} : vector<1x8x64xbf16> to vector<1x8x16xbf16>
    "tpu.trace_start"() <{level = 10 : i32, message = "bqd,bkd->bqk"}> : () -> ()
    %cst_185 = arith.constant dense<0.000000e+00> : vector<1x8x8xf32>
    %446 = tpu.matmul %443, %444, %cst_185 {dimension_numbers = #tpu.dot_dimension_numbers<[2], [2], [1], [1], [0, 0, 0, 1, 1, 1], [0], [0]>} : vector<1x8x16xbf16>, vector<1x8x16xbf16>, vector<1x8x8xf32> -> vector<1x8x8xf32>
    "tpu.trace_stop"() : () -> ()
    %447 = arith.addf %446, %9 : vector<1x8x8xf32>
    %cst_186 = arith.constant dense<0xFF800000> : vector<1x8xf32>
    %448 = vector.multi_reduction <maximumf>, %447, %cst_186 [2] : vector<1x8x8xf32> to vector<1x8xf32>
    %449 = vector.shape_cast %448 : vector<1x8xf32> to vector<1x8x1xf32>
    %450 = vector.broadcast %449 : vector<1x8x1xf32> to vector<1x8x8xf32>
    %451 = arith.subf %447, %450 : vector<1x8x8xf32>
    %452 = math.exp %451 : vector<1x8x8xf32>
    %cst_187 = arith.constant dense<0.000000e+00> : vector<1x8xf32>
    %453 = vector.multi_reduction <add>, %452, %cst_187 [2] : vector<1x8x8xf32> to vector<1x8xf32>
    %454 = vector.shape_cast %453 : vector<1x8xf32> to vector<1x8x1xf32>
    %455 = tpu.reciprocal %454 {approx = true} : vector<1x8x1xf32> -> vector<1x8x1xf32>
    %456 = vector.broadcast %455 : vector<1x8x1xf32> to vector<1x8x8xf32>
    %457 = arith.mulf %452, %456 : vector<1x8x8xf32>
    %458 = arith.truncf %457 : vector<1x8x8xf32> to vector<1x8x8xbf16>
    "tpu.trace_start"() <{level = 10 : i32, message = "bqk,bkd->bqd"}> : () -> ()
    %cst_188 = arith.constant dense<0.000000e+00> : vector<1x8x16xf32>
    %459 = tpu.matmul %458, %445, %cst_188 {dimension_numbers = #tpu.dot_dimension_numbers<[2], [1], [1], [2], [0, 0, 0, 1, 1, 2], [0], [0]>} : vector<1x8x8xbf16>, vector<1x8x16xbf16>, vector<1x8x16xf32> -> vector<1x8x16xf32>
    "tpu.trace_stop"() : () -> ()
    %460 = vector.shape_cast %459 : vector<1x8x16xf32> to vector<8x16xf32>
    %461 = arith.truncf %460 : vector<8x16xf32> to vector<8x16xbf16>
    %462 = vector.extract_strided_slice %419 {offsets = [16, 0], sizes = [16, 64], strides = [1, 1]} : vector<64x64xbf16> to vector<16x64xbf16>
    %cst_189 = arith.constant dense<0.000000e+00> : vector<8x64xf32>
    %463 = tpu.matmul %461, %462, %cst_189 {dimension_numbers = #tpu.dot_dimension_numbers<[1], [0], [0], [1], [0, 0, 1, 1], [], []>} : vector<8x16xbf16>, vector<16x64xbf16>, vector<8x64xf32> -> vector<8x64xf32>
    %464 = arith.addf %442, %463 : vector<8x64xf32>
    %465 = vector.extract_strided_slice %413 {offsets = [0, 0, 32], sizes = [1, 8, 16], strides = [1, 1, 1]} : vector<1x8x64xbf16> to vector<1x8x16xbf16>
    %466 = vector.extract_strided_slice %415 {offsets = [0, 0, 32], sizes = [1, 8, 16], strides = [1, 1, 1]} : vector<1x8x64xbf16> to vector<1x8x16xbf16>
    %467 = vector.extract_strided_slice %417 {offsets = [0, 0, 32], sizes = [1, 8, 16], strides = [1, 1, 1]} : vector<1x8x64xbf16> to vector<1x8x16xbf16>
    "tpu.trace_start"() <{level = 10 : i32, message = "bqd,bkd->bqk"}> : () -> ()
    %cst_190 = arith.constant dense<0.000000e+00> : vector<1x8x8xf32>
    %468 = tpu.matmul %465, %466, %cst_190 {dimension_numbers = #tpu.dot_dimension_numbers<[2], [2], [1], [1], [0, 0, 0, 1, 1, 1], [0], [0]>} : vector<1x8x16xbf16>, vector<1x8x16xbf16>, vector<1x8x8xf32> -> vector<1x8x8xf32>
    "tpu.trace_stop"() : () -> ()
    %469 = arith.addf %468, %9 : vector<1x8x8xf32>
    %cst_191 = arith.constant dense<0xFF800000> : vector<1x8xf32>
    %470 = vector.multi_reduction <maximumf>, %469, %cst_191 [2] : vector<1x8x8xf32> to vector<1x8xf32>
    %471 = vector.shape_cast %470 : vector<1x8xf32> to vector<1x8x1xf32>
    %472 = vector.broadcast %471 : vector<1x8x1xf32> to vector<1x8x8xf32>
    %473 = arith.subf %469, %472 : vector<1x8x8xf32>
    %474 = math.exp %473 : vector<1x8x8xf32>
    %cst_192 = arith.constant dense<0.000000e+00> : vector<1x8xf32>
    %475 = vector.multi_reduction <add>, %474, %cst_192 [2] : vector<1x8x8xf32> to vector<1x8xf32>
    %476 = vector.shape_cast %475 : vector<1x8xf32> to vector<1x8x1xf32>
    %477 = tpu.reciprocal %476 {approx = true} : vector<1x8x1xf32> -> vector<1x8x1xf32>
    %478 = vector.broadcast %477 : vector<1x8x1xf32> to vector<1x8x8xf32>
    %479 = arith.mulf %474, %478 : vector<1x8x8xf32>
    %480 = arith.truncf %479 : vector<1x8x8xf32> to vector<1x8x8xbf16>
    "tpu.trace_start"() <{level = 10 : i32, message = "bqk,bkd->bqd"}> : () -> ()
    %cst_193 = arith.constant dense<0.000000e+00> : vector<1x8x16xf32>
    %481 = tpu.matmul %480, %467, %cst_193 {dimension_numbers = #tpu.dot_dimension_numbers<[2], [1], [1], [2], [0, 0, 0, 1, 1, 2], [0], [0]>} : vector<1x8x8xbf16>, vector<1x8x16xbf16>, vector<1x8x16xf32> -> vector<1x8x16xf32>
    "tpu.trace_stop"() : () -> ()
    %482 = vector.shape_cast %481 : vector<1x8x16xf32> to vector<8x16xf32>
    %483 = arith.truncf %482 : vector<8x16xf32> to vector<8x16xbf16>
    %484 = vector.extract_strided_slice %419 {offsets = [32, 0], sizes = [16, 64], strides = [1, 1]} : vector<64x64xbf16> to vector<16x64xbf16>
    %cst_194 = arith.constant dense<0.000000e+00> : vector<8x64xf32>
    %485 = tpu.matmul %483, %484, %cst_194 {dimension_numbers = #tpu.dot_dimension_numbers<[1], [0], [0], [1], [0, 0, 1, 1], [], []>} : vector<8x16xbf16>, vector<16x64xbf16>, vector<8x64xf32> -> vector<8x64xf32>
    %486 = arith.addf %464, %485 : vector<8x64xf32>
    %487 = vector.extract_strided_slice %413 {offsets = [0, 0, 48], sizes = [1, 8, 16], strides = [1, 1, 1]} : vector<1x8x64xbf16> to vector<1x8x16xbf16>
    %488 = vector.extract_strided_slice %415 {offsets = [0, 0, 48], sizes = [1, 8, 16], strides = [1, 1, 1]} : vector<1x8x64xbf16> to vector<1x8x16xbf16>
    %489 = vector.extract_strided_slice %417 {offsets = [0, 0, 48], sizes = [1, 8, 16], strides = [1, 1, 1]} : vector<1x8x64xbf16> to vector<1x8x16xbf16>
    "tpu.trace_start"() <{level = 10 : i32, message = "bqd,bkd->bqk"}> : () -> ()
    %cst_195 = arith.constant dense<0.000000e+00> : vector<1x8x8xf32>
    %490 = tpu.matmul %487, %488, %cst_195 {dimension_numbers = #tpu.dot_dimension_numbers<[2], [2], [1], [1], [0, 0, 0, 1, 1, 1], [0], [0]>} : vector<1x8x16xbf16>, vector<1x8x16xbf16>, vector<1x8x8xf32> -> vector<1x8x8xf32>
    "tpu.trace_stop"() : () -> ()
    %491 = arith.addf %490, %9 : vector<1x8x8xf32>
    %cst_196 = arith.constant dense<0xFF800000> : vector<1x8xf32>
    %492 = vector.multi_reduction <maximumf>, %491, %cst_196 [2] : vector<1x8x8xf32> to vector<1x8xf32>
    %493 = vector.shape_cast %492 : vector<1x8xf32> to vector<1x8x1xf32>
    %494 = vector.broadcast %493 : vector<1x8x1xf32> to vector<1x8x8xf32>
    %495 = arith.subf %491, %494 : vector<1x8x8xf32>
    %496 = math.exp %495 : vector<1x8x8xf32>
    %cst_197 = arith.constant dense<0.000000e+00> : vector<1x8xf32>
    %497 = vector.multi_reduction <add>, %496, %cst_197 [2] : vector<1x8x8xf32> to vector<1x8xf32>
    %498 = vector.shape_cast %497 : vector<1x8xf32> to vector<1x8x1xf32>
    %499 = tpu.reciprocal %498 {approx = true} : vector<1x8x1xf32> -> vector<1x8x1xf32>
    %500 = vector.broadcast %499 : vector<1x8x1xf32> to vector<1x8x8xf32>
    %501 = arith.mulf %496, %500 : vector<1x8x8xf32>
    %502 = arith.truncf %501 : vector<1x8x8xf32> to vector<1x8x8xbf16>
    "tpu.trace_start"() <{level = 10 : i32, message = "bqk,bkd->bqd"}> : () -> ()
    %cst_198 = arith.constant dense<0.000000e+00> : vector<1x8x16xf32>
    %503 = tpu.matmul %502, %489, %cst_198 {dimension_numbers = #tpu.dot_dimension_numbers<[2], [1], [1], [2], [0, 0, 0, 1, 1, 2], [0], [0]>} : vector<1x8x8xbf16>, vector<1x8x16xbf16>, vector<1x8x16xf32> -> vector<1x8x16xf32>
    "tpu.trace_stop"() : () -> ()
    %504 = vector.shape_cast %503 : vector<1x8x16xf32> to vector<8x16xf32>
    %505 = arith.truncf %504 : vector<8x16xf32> to vector<8x16xbf16>
    %506 = vector.extract_strided_slice %419 {offsets = [48, 0], sizes = [16, 64], strides = [1, 1]} : vector<64x64xbf16> to vector<16x64xbf16>
    %cst_199 = arith.constant dense<0.000000e+00> : vector<8x64xf32>
    %507 = tpu.matmul %505, %506, %cst_199 {dimension_numbers = #tpu.dot_dimension_numbers<[1], [0], [0], [1], [0, 0, 1, 1], [], []>} : vector<8x16xbf16>, vector<16x64xbf16>, vector<8x64xf32> -> vector<8x64xf32>
    %508 = arith.addf %486, %507 : vector<8x64xf32>
    %509 = arith.addf %375, %508 : vector<8x64xf32>
    %c2_200 = arith.constant 2 : index
    %c0_201 = arith.constant 0 : index
    %c0_202 = arith.constant 0 : index
    %510 = vector.load %arg8[%c2_200, %c0_201, %c0_202] : memref<4x1x64xf32, #tpu.memory_space<vmem>>, vector<1x1x64xf32>
    %511 = vector.shape_cast %510 : vector<1x1x64xf32> to vector<1x64xf32>
    %512 = vector.broadcast %511 : vector<1x64xf32> to vector<8x64xf32>
    %513 = arith.addf %509, %512 : vector<8x64xf32>
    %c2_203 = arith.constant 2 : index
    %c0_204 = arith.constant 0 : index
    %c0_205 = arith.constant 0 : index
    %514 = vector.load %arg9[%c2_203, %c0_204, %c0_205] : memref<4x1x64xf32, #tpu.memory_space<vmem>>, vector<1x1x64xf32>
    %515 = vector.shape_cast %514 : vector<1x1x64xf32> to vector<1x64xf32>
    %c2_206 = arith.constant 2 : index
    %c0_207 = arith.constant 0 : index
    %c0_208 = arith.constant 0 : index
    %516 = vector.load %arg10[%c2_206, %c0_207, %c0_208] : memref<4x1x64xf32, #tpu.memory_space<vmem>>, vector<1x1x64xf32>
    %517 = vector.shape_cast %516 : vector<1x1x64xf32> to vector<1x64xf32>
    %cst_209 = arith.constant dense<0.000000e+00> : vector<8xf32>
    %518 = vector.multi_reduction <add>, %513, %cst_209 [1] : vector<8x64xf32> to vector<8xf32>
    %519 = vector.shape_cast %518 : vector<8xf32> to vector<8x1xf32>
    %cst_210 = arith.constant 6.400000e+01 : f32
    %520 = vector.broadcast %cst_210 : f32 to vector<8x1xf32>
    %521 = arith.divf %519, %520 : vector<8x1xf32>
    %522 = vector.broadcast %521 : vector<8x1xf32> to vector<8x64xf32>
    %523 = arith.subf %513, %522 : vector<8x64xf32>
    %524 = arith.mulf %523, %523 : vector<8x64xf32>
    %cst_211 = arith.constant dense<0.000000e+00> : vector<8xf32>
    %525 = vector.multi_reduction <add>, %524, %cst_211 [1] : vector<8x64xf32> to vector<8xf32>
    %526 = vector.shape_cast %525 : vector<8xf32> to vector<8x1xf32>
    %cst_212 = arith.constant 6.400000e+01 : f32
    %527 = vector.broadcast %cst_212 : f32 to vector<8x1xf32>
    %528 = arith.divf %526, %527 : vector<8x1xf32>
    %529 = vector.broadcast %521 : vector<8x1xf32> to vector<8x64xf32>
    %530 = arith.subf %513, %529 : vector<8x64xf32>
    %cst_213 = arith.constant 9.99999974E-6 : f32
    %531 = vector.broadcast %cst_213 : f32 to vector<8x1xf32>
    %532 = arith.addf %528, %531 : vector<8x1xf32>
    %533 = math.rsqrt %532 : vector<8x1xf32>
    %534 = vector.broadcast %533 : vector<8x1xf32> to vector<8x64xf32>
    %535 = arith.mulf %530, %534 : vector<8x64xf32>
    %536 = vector.broadcast %515 : vector<1x64xf32> to vector<8x64xf32>
    %537 = arith.mulf %535, %536 : vector<8x64xf32>
    %538 = vector.broadcast %517 : vector<1x64xf32> to vector<8x64xf32>
    %539 = arith.addf %537, %538 : vector<8x64xf32>
    %540 = arith.truncf %539 : vector<8x64xf32> to vector<8x64xbf16>
    %c2_214 = arith.constant 2 : index
    %c0_215 = arith.constant 0 : index
    %c0_216 = arith.constant 0 : index
    %541 = vector.load %arg11[%c2_214, %c0_215, %c0_216] : memref<4x64x256xbf16, #tpu.memory_space<vmem>>, vector<1x64x256xbf16>
    %542 = vector.shape_cast %541 : vector<1x64x256xbf16> to vector<64x256xbf16>
    %cst_217 = arith.constant dense<0.000000e+00> : vector<8x256xf32>
    %543 = tpu.matmul %540, %542, %cst_217 {dimension_numbers = #tpu.dot_dimension_numbers<[1], [0], [0], [1], [0, 0, 1, 1], [], []>} : vector<8x64xbf16>, vector<64x256xbf16>, vector<8x256xf32> -> vector<8x256xf32>
    %c2_218 = arith.constant 2 : index
    %c0_219 = arith.constant 0 : index
    %c0_220 = arith.constant 0 : index
    %544 = vector.load %arg12[%c2_218, %c0_219, %c0_220] : memref<4x1x256xf32, #tpu.memory_space<vmem>>, vector<1x1x256xf32>
    %545 = vector.shape_cast %544 : vector<1x1x256xf32> to vector<1x256xf32>
    %546 = vector.broadcast %545 : vector<1x256xf32> to vector<8x256xf32>
    %547 = arith.addf %543, %546 : vector<8x256xf32>
    %cst_221 = arith.constant 0.000000e+00 : f32
    %548 = vector.broadcast %cst_221 : f32 to vector<8x256xf32>
    %549 = arith.maximumf %547, %548 : vector<8x256xf32>
    %550 = arith.truncf %549 : vector<8x256xf32> to vector<8x256xbf16>
    %c2_222 = arith.constant 2 : index
    %c0_223 = arith.constant 0 : index
    %c0_224 = arith.constant 0 : index
    %551 = vector.load %arg13[%c2_222, %c0_223, %c0_224] : memref<4x256x64xbf16, #tpu.memory_space<vmem>>, vector<1x256x64xbf16>
    %552 = vector.shape_cast %551 : vector<1x256x64xbf16> to vector<256x64xbf16>
    %cst_225 = arith.constant dense<0.000000e+00> : vector<8x64xf32>
    %553 = tpu.matmul %550, %552, %cst_225 {dimension_numbers = #tpu.dot_dimension_numbers<[1], [0], [0], [1], [0, 0, 1, 1], [], []>} : vector<8x256xbf16>, vector<256x64xbf16>, vector<8x64xf32> -> vector<8x64xf32>
    %c2_226 = arith.constant 2 : index
    %c0_227 = arith.constant 0 : index
    %c0_228 = arith.constant 0 : index
    %554 = vector.load %arg14[%c2_226, %c0_227, %c0_228] : memref<4x1x64xf32, #tpu.memory_space<vmem>>, vector<1x1x64xf32>
    %555 = vector.shape_cast %554 : vector<1x1x64xf32> to vector<1x64xf32>
    %556 = vector.broadcast %555 : vector<1x64xf32> to vector<8x64xf32>
    %557 = arith.addf %553, %556 : vector<8x64xf32>
    %558 = arith.addf %513, %557 : vector<8x64xf32>
    %c3 = arith.constant 3 : index
    %c0_229 = arith.constant 0 : index
    %c0_230 = arith.constant 0 : index
    %559 = vector.load %arg2[%c3, %c0_229, %c0_230] : memref<4x1x64xf32, #tpu.memory_space<vmem>>, vector<1x1x64xf32>
    %560 = vector.shape_cast %559 : vector<1x1x64xf32> to vector<1x64xf32>
    %c3_231 = arith.constant 3 : index
    %c0_232 = arith.constant 0 : index
    %c0_233 = arith.constant 0 : index
    %561 = vector.load %arg3[%c3_231, %c0_232, %c0_233] : memref<4x1x64xf32, #tpu.memory_space<vmem>>, vector<1x1x64xf32>
    %562 = vector.shape_cast %561 : vector<1x1x64xf32> to vector<1x64xf32>
    %cst_234 = arith.constant dense<0.000000e+00> : vector<8xf32>
    %563 = vector.multi_reduction <add>, %558, %cst_234 [1] : vector<8x64xf32> to vector<8xf32>
    %564 = vector.shape_cast %563 : vector<8xf32> to vector<8x1xf32>
    %cst_235 = arith.constant 6.400000e+01 : f32
    %565 = vector.broadcast %cst_235 : f32 to vector<8x1xf32>
    %566 = arith.divf %564, %565 : vector<8x1xf32>
    %567 = vector.broadcast %566 : vector<8x1xf32> to vector<8x64xf32>
    %568 = arith.subf %558, %567 : vector<8x64xf32>
    %569 = arith.mulf %568, %568 : vector<8x64xf32>
    %cst_236 = arith.constant dense<0.000000e+00> : vector<8xf32>
    %570 = vector.multi_reduction <add>, %569, %cst_236 [1] : vector<8x64xf32> to vector<8xf32>
    %571 = vector.shape_cast %570 : vector<8xf32> to vector<8x1xf32>
    %cst_237 = arith.constant 6.400000e+01 : f32
    %572 = vector.broadcast %cst_237 : f32 to vector<8x1xf32>
    %573 = arith.divf %571, %572 : vector<8x1xf32>
    %574 = vector.broadcast %566 : vector<8x1xf32> to vector<8x64xf32>
    %575 = arith.subf %558, %574 : vector<8x64xf32>
    %cst_238 = arith.constant 9.99999974E-6 : f32
    %576 = vector.broadcast %cst_238 : f32 to vector<8x1xf32>
    %577 = arith.addf %573, %576 : vector<8x1xf32>
    %578 = math.rsqrt %577 : vector<8x1xf32>
    %579 = vector.broadcast %578 : vector<8x1xf32> to vector<8x64xf32>
    %580 = arith.mulf %575, %579 : vector<8x64xf32>
    %581 = vector.broadcast %560 : vector<1x64xf32> to vector<8x64xf32>
    %582 = arith.mulf %580, %581 : vector<8x64xf32>
    %583 = vector.broadcast %562 : vector<1x64xf32> to vector<8x64xf32>
    %584 = arith.addf %582, %583 : vector<8x64xf32>
    %585 = arith.truncf %584 : vector<8x64xf32> to vector<8x64xbf16>
    %c3_239 = arith.constant 3 : index
    %c0_240 = arith.constant 0 : index
    %c0_241 = arith.constant 0 : index
    %586 = vector.load %arg4[%c3_239, %c0_240, %c0_241] : memref<4x64x64xbf16, #tpu.memory_space<vmem>>, vector<1x64x64xbf16>
    %587 = vector.shape_cast %586 : vector<1x64x64xbf16> to vector<64x64xbf16>
    %cst_242 = arith.constant dense<0.000000e+00> : vector<8x64xf32>
    %588 = tpu.matmul %585, %587, %cst_242 {dimension_numbers = #tpu.dot_dimension_numbers<[1], [0], [0], [1], [0, 0, 1, 1], [], []>} : vector<8x64xbf16>, vector<64x64xbf16>, vector<8x64xf32> -> vector<8x64xf32>
    %c3_243 = arith.constant 3 : index
    %c0_244 = arith.constant 0 : index
    %c0_245 = arith.constant 0 : index
    %589 = vector.load %arg5[%c3_243, %c0_244, %c0_245] : memref<4x64x64xbf16, #tpu.memory_space<vmem>>, vector<1x64x64xbf16>
    %590 = vector.shape_cast %589 : vector<1x64x64xbf16> to vector<64x64xbf16>
    %cst_246 = arith.constant dense<0.000000e+00> : vector<8x64xf32>
    %591 = tpu.matmul %585, %590, %cst_246 {dimension_numbers = #tpu.dot_dimension_numbers<[1], [0], [0], [1], [0, 0, 1, 1], [], []>} : vector<8x64xbf16>, vector<64x64xbf16>, vector<8x64xf32> -> vector<8x64xf32>
    %c3_247 = arith.constant 3 : index
    %c0_248 = arith.constant 0 : index
    %c0_249 = arith.constant 0 : index
    %592 = vector.load %arg6[%c3_247, %c0_248, %c0_249] : memref<4x64x64xbf16, #tpu.memory_space<vmem>>, vector<1x64x64xbf16>
    %593 = vector.shape_cast %592 : vector<1x64x64xbf16> to vector<64x64xbf16>
    %cst_250 = arith.constant dense<0.000000e+00> : vector<8x64xf32>
    %594 = tpu.matmul %585, %593, %cst_250 {dimension_numbers = #tpu.dot_dimension_numbers<[1], [0], [0], [1], [0, 0, 1, 1], [], []>} : vector<8x64xbf16>, vector<64x64xbf16>, vector<8x64xf32> -> vector<8x64xf32>
    %595 = vector.shape_cast %588 : vector<8x64xf32> to vector<1x8x64xf32>
    %596 = arith.truncf %595 : vector<1x8x64xf32> to vector<1x8x64xbf16>
    %597 = vector.shape_cast %591 : vector<8x64xf32> to vector<1x8x64xf32>
    %598 = arith.truncf %597 : vector<1x8x64xf32> to vector<1x8x64xbf16>
    %599 = vector.shape_cast %594 : vector<8x64xf32> to vector<1x8x64xf32>
    %600 = arith.truncf %599 : vector<1x8x64xf32> to vector<1x8x64xbf16>
    %c3_251 = arith.constant 3 : index
    %c0_252 = arith.constant 0 : index
    %c0_253 = arith.constant 0 : index
    %601 = vector.load %arg7[%c3_251, %c0_252, %c0_253] : memref<4x64x64xbf16, #tpu.memory_space<vmem>>, vector<1x64x64xbf16>
    %602 = vector.shape_cast %601 : vector<1x64x64xbf16> to vector<64x64xbf16>
    %cst_254 = arith.constant 0.000000e+00 : f32
    %603 = vector.broadcast %cst_254 : f32 to vector<8x64xf32>
    %604 = vector.extract_strided_slice %596 {offsets = [0, 0, 0], sizes = [1, 8, 16], strides = [1, 1, 1]} : vector<1x8x64xbf16> to vector<1x8x16xbf16>
    %605 = vector.extract_strided_slice %598 {offsets = [0, 0, 0], sizes = [1, 8, 16], strides = [1, 1, 1]} : vector<1x8x64xbf16> to vector<1x8x16xbf16>
    %606 = vector.extract_strided_slice %600 {offsets = [0, 0, 0], sizes = [1, 8, 16], strides = [1, 1, 1]} : vector<1x8x64xbf16> to vector<1x8x16xbf16>
    "tpu.trace_start"() <{level = 10 : i32, message = "bqd,bkd->bqk"}> : () -> ()
    %cst_255 = arith.constant dense<0.000000e+00> : vector<1x8x8xf32>
    %607 = tpu.matmul %604, %605, %cst_255 {dimension_numbers = #tpu.dot_dimension_numbers<[2], [2], [1], [1], [0, 0, 0, 1, 1, 1], [0], [0]>} : vector<1x8x16xbf16>, vector<1x8x16xbf16>, vector<1x8x8xf32> -> vector<1x8x8xf32>
    "tpu.trace_stop"() : () -> ()
    %608 = arith.addf %607, %9 : vector<1x8x8xf32>
    %cst_256 = arith.constant dense<0xFF800000> : vector<1x8xf32>
    %609 = vector.multi_reduction <maximumf>, %608, %cst_256 [2] : vector<1x8x8xf32> to vector<1x8xf32>
    %610 = vector.shape_cast %609 : vector<1x8xf32> to vector<1x8x1xf32>
    %611 = vector.broadcast %610 : vector<1x8x1xf32> to vector<1x8x8xf32>
    %612 = arith.subf %608, %611 : vector<1x8x8xf32>
    %613 = math.exp %612 : vector<1x8x8xf32>
    %cst_257 = arith.constant dense<0.000000e+00> : vector<1x8xf32>
    %614 = vector.multi_reduction <add>, %613, %cst_257 [2] : vector<1x8x8xf32> to vector<1x8xf32>
    %615 = vector.shape_cast %614 : vector<1x8xf32> to vector<1x8x1xf32>
    %616 = tpu.reciprocal %615 {approx = true} : vector<1x8x1xf32> -> vector<1x8x1xf32>
    %617 = vector.broadcast %616 : vector<1x8x1xf32> to vector<1x8x8xf32>
    %618 = arith.mulf %613, %617 : vector<1x8x8xf32>
    %619 = arith.truncf %618 : vector<1x8x8xf32> to vector<1x8x8xbf16>
    "tpu.trace_start"() <{level = 10 : i32, message = "bqk,bkd->bqd"}> : () -> ()
    %cst_258 = arith.constant dense<0.000000e+00> : vector<1x8x16xf32>
    %620 = tpu.matmul %619, %606, %cst_258 {dimension_numbers = #tpu.dot_dimension_numbers<[2], [1], [1], [2], [0, 0, 0, 1, 1, 2], [0], [0]>} : vector<1x8x8xbf16>, vector<1x8x16xbf16>, vector<1x8x16xf32> -> vector<1x8x16xf32>
    "tpu.trace_stop"() : () -> ()
    %621 = vector.shape_cast %620 : vector<1x8x16xf32> to vector<8x16xf32>
    %622 = arith.truncf %621 : vector<8x16xf32> to vector<8x16xbf16>
    %623 = vector.extract_strided_slice %602 {offsets = [0, 0], sizes = [16, 64], strides = [1, 1]} : vector<64x64xbf16> to vector<16x64xbf16>
    %cst_259 = arith.constant dense<0.000000e+00> : vector<8x64xf32>
    %624 = tpu.matmul %622, %623, %cst_259 {dimension_numbers = #tpu.dot_dimension_numbers<[1], [0], [0], [1], [0, 0, 1, 1], [], []>} : vector<8x16xbf16>, vector<16x64xbf16>, vector<8x64xf32> -> vector<8x64xf32>
    %625 = arith.addf %603, %624 : vector<8x64xf32>
    %626 = vector.extract_strided_slice %596 {offsets = [0, 0, 16], sizes = [1, 8, 16], strides = [1, 1, 1]} : vector<1x8x64xbf16> to vector<1x8x16xbf16>
    %627 = vector.extract_strided_slice %598 {offsets = [0, 0, 16], sizes = [1, 8, 16], strides = [1, 1, 1]} : vector<1x8x64xbf16> to vector<1x8x16xbf16>
    %628 = vector.extract_strided_slice %600 {offsets = [0, 0, 16], sizes = [1, 8, 16], strides = [1, 1, 1]} : vector<1x8x64xbf16> to vector<1x8x16xbf16>
    "tpu.trace_start"() <{level = 10 : i32, message = "bqd,bkd->bqk"}> : () -> ()
    %cst_260 = arith.constant dense<0.000000e+00> : vector<1x8x8xf32>
    %629 = tpu.matmul %626, %627, %cst_260 {dimension_numbers = #tpu.dot_dimension_numbers<[2], [2], [1], [1], [0, 0, 0, 1, 1, 1], [0], [0]>} : vector<1x8x16xbf16>, vector<1x8x16xbf16>, vector<1x8x8xf32> -> vector<1x8x8xf32>
    "tpu.trace_stop"() : () -> ()
    %630 = arith.addf %629, %9 : vector<1x8x8xf32>
    %cst_261 = arith.constant dense<0xFF800000> : vector<1x8xf32>
    %631 = vector.multi_reduction <maximumf>, %630, %cst_261 [2] : vector<1x8x8xf32> to vector<1x8xf32>
    %632 = vector.shape_cast %631 : vector<1x8xf32> to vector<1x8x1xf32>
    %633 = vector.broadcast %632 : vector<1x8x1xf32> to vector<1x8x8xf32>
    %634 = arith.subf %630, %633 : vector<1x8x8xf32>
    %635 = math.exp %634 : vector<1x8x8xf32>
    %cst_262 = arith.constant dense<0.000000e+00> : vector<1x8xf32>
    %636 = vector.multi_reduction <add>, %635, %cst_262 [2] : vector<1x8x8xf32> to vector<1x8xf32>
    %637 = vector.shape_cast %636 : vector<1x8xf32> to vector<1x8x1xf32>
    %638 = tpu.reciprocal %637 {approx = true} : vector<1x8x1xf32> -> vector<1x8x1xf32>
    %639 = vector.broadcast %638 : vector<1x8x1xf32> to vector<1x8x8xf32>
    %640 = arith.mulf %635, %639 : vector<1x8x8xf32>
    %641 = arith.truncf %640 : vector<1x8x8xf32> to vector<1x8x8xbf16>
    "tpu.trace_start"() <{level = 10 : i32, message = "bqk,bkd->bqd"}> : () -> ()
    %cst_263 = arith.constant dense<0.000000e+00> : vector<1x8x16xf32>
    %642 = tpu.matmul %641, %628, %cst_263 {dimension_numbers = #tpu.dot_dimension_numbers<[2], [1], [1], [2], [0, 0, 0, 1, 1, 2], [0], [0]>} : vector<1x8x8xbf16>, vector<1x8x16xbf16>, vector<1x8x16xf32> -> vector<1x8x16xf32>
    "tpu.trace_stop"() : () -> ()
    %643 = vector.shape_cast %642 : vector<1x8x16xf32> to vector<8x16xf32>
    %644 = arith.truncf %643 : vector<8x16xf32> to vector<8x16xbf16>
    %645 = vector.extract_strided_slice %602 {offsets = [16, 0], sizes = [16, 64], strides = [1, 1]} : vector<64x64xbf16> to vector<16x64xbf16>
    %cst_264 = arith.constant dense<0.000000e+00> : vector<8x64xf32>
    %646 = tpu.matmul %644, %645, %cst_264 {dimension_numbers = #tpu.dot_dimension_numbers<[1], [0], [0], [1], [0, 0, 1, 1], [], []>} : vector<8x16xbf16>, vector<16x64xbf16>, vector<8x64xf32> -> vector<8x64xf32>
    %647 = arith.addf %625, %646 : vector<8x64xf32>
    %648 = vector.extract_strided_slice %596 {offsets = [0, 0, 32], sizes = [1, 8, 16], strides = [1, 1, 1]} : vector<1x8x64xbf16> to vector<1x8x16xbf16>
    %649 = vector.extract_strided_slice %598 {offsets = [0, 0, 32], sizes = [1, 8, 16], strides = [1, 1, 1]} : vector<1x8x64xbf16> to vector<1x8x16xbf16>
    %650 = vector.extract_strided_slice %600 {offsets = [0, 0, 32], sizes = [1, 8, 16], strides = [1, 1, 1]} : vector<1x8x64xbf16> to vector<1x8x16xbf16>
    "tpu.trace_start"() <{level = 10 : i32, message = "bqd,bkd->bqk"}> : () -> ()
    %cst_265 = arith.constant dense<0.000000e+00> : vector<1x8x8xf32>
    %651 = tpu.matmul %648, %649, %cst_265 {dimension_numbers = #tpu.dot_dimension_numbers<[2], [2], [1], [1], [0, 0, 0, 1, 1, 1], [0], [0]>} : vector<1x8x16xbf16>, vector<1x8x16xbf16>, vector<1x8x8xf32> -> vector<1x8x8xf32>
    "tpu.trace_stop"() : () -> ()
    %652 = arith.addf %651, %9 : vector<1x8x8xf32>
    %cst_266 = arith.constant dense<0xFF800000> : vector<1x8xf32>
    %653 = vector.multi_reduction <maximumf>, %652, %cst_266 [2] : vector<1x8x8xf32> to vector<1x8xf32>
    %654 = vector.shape_cast %653 : vector<1x8xf32> to vector<1x8x1xf32>
    %655 = vector.broadcast %654 : vector<1x8x1xf32> to vector<1x8x8xf32>
    %656 = arith.subf %652, %655 : vector<1x8x8xf32>
    %657 = math.exp %656 : vector<1x8x8xf32>
    %cst_267 = arith.constant dense<0.000000e+00> : vector<1x8xf32>
    %658 = vector.multi_reduction <add>, %657, %cst_267 [2] : vector<1x8x8xf32> to vector<1x8xf32>
    %659 = vector.shape_cast %658 : vector<1x8xf32> to vector<1x8x1xf32>
    %660 = tpu.reciprocal %659 {approx = true} : vector<1x8x1xf32> -> vector<1x8x1xf32>
    %661 = vector.broadcast %660 : vector<1x8x1xf32> to vector<1x8x8xf32>
    %662 = arith.mulf %657, %661 : vector<1x8x8xf32>
    %663 = arith.truncf %662 : vector<1x8x8xf32> to vector<1x8x8xbf16>
    "tpu.trace_start"() <{level = 10 : i32, message = "bqk,bkd->bqd"}> : () -> ()
    %cst_268 = arith.constant dense<0.000000e+00> : vector<1x8x16xf32>
    %664 = tpu.matmul %663, %650, %cst_268 {dimension_numbers = #tpu.dot_dimension_numbers<[2], [1], [1], [2], [0, 0, 0, 1, 1, 2], [0], [0]>} : vector<1x8x8xbf16>, vector<1x8x16xbf16>, vector<1x8x16xf32> -> vector<1x8x16xf32>
    "tpu.trace_stop"() : () -> ()
    %665 = vector.shape_cast %664 : vector<1x8x16xf32> to vector<8x16xf32>
    %666 = arith.truncf %665 : vector<8x16xf32> to vector<8x16xbf16>
    %667 = vector.extract_strided_slice %602 {offsets = [32, 0], sizes = [16, 64], strides = [1, 1]} : vector<64x64xbf16> to vector<16x64xbf16>
    %cst_269 = arith.constant dense<0.000000e+00> : vector<8x64xf32>
    %668 = tpu.matmul %666, %667, %cst_269 {dimension_numbers = #tpu.dot_dimension_numbers<[1], [0], [0], [1], [0, 0, 1, 1], [], []>} : vector<8x16xbf16>, vector<16x64xbf16>, vector<8x64xf32> -> vector<8x64xf32>
    %669 = arith.addf %647, %668 : vector<8x64xf32>
    %670 = vector.extract_strided_slice %596 {offsets = [0, 0, 48], sizes = [1, 8, 16], strides = [1, 1, 1]} : vector<1x8x64xbf16> to vector<1x8x16xbf16>
    %671 = vector.extract_strided_slice %598 {offsets = [0, 0, 48], sizes = [1, 8, 16], strides = [1, 1, 1]} : vector<1x8x64xbf16> to vector<1x8x16xbf16>
    %672 = vector.extract_strided_slice %600 {offsets = [0, 0, 48], sizes = [1, 8, 16], strides = [1, 1, 1]} : vector<1x8x64xbf16> to vector<1x8x16xbf16>
    "tpu.trace_start"() <{level = 10 : i32, message = "bqd,bkd->bqk"}> : () -> ()
    %cst_270 = arith.constant dense<0.000000e+00> : vector<1x8x8xf32>
    %673 = tpu.matmul %670, %671, %cst_270 {dimension_numbers = #tpu.dot_dimension_numbers<[2], [2], [1], [1], [0, 0, 0, 1, 1, 1], [0], [0]>} : vector<1x8x16xbf16>, vector<1x8x16xbf16>, vector<1x8x8xf32> -> vector<1x8x8xf32>
    "tpu.trace_stop"() : () -> ()
    %674 = arith.addf %673, %9 : vector<1x8x8xf32>
    %cst_271 = arith.constant dense<0xFF800000> : vector<1x8xf32>
    %675 = vector.multi_reduction <maximumf>, %674, %cst_271 [2] : vector<1x8x8xf32> to vector<1x8xf32>
    %676 = vector.shape_cast %675 : vector<1x8xf32> to vector<1x8x1xf32>
    %677 = vector.broadcast %676 : vector<1x8x1xf32> to vector<1x8x8xf32>
    %678 = arith.subf %674, %677 : vector<1x8x8xf32>
    %679 = math.exp %678 : vector<1x8x8xf32>
    %cst_272 = arith.constant dense<0.000000e+00> : vector<1x8xf32>
    %680 = vector.multi_reduction <add>, %679, %cst_272 [2] : vector<1x8x8xf32> to vector<1x8xf32>
    %681 = vector.shape_cast %680 : vector<1x8xf32> to vector<1x8x1xf32>
    %682 = tpu.reciprocal %681 {approx = true} : vector<1x8x1xf32> -> vector<1x8x1xf32>
    %683 = vector.broadcast %682 : vector<1x8x1xf32> to vector<1x8x8xf32>
    %684 = arith.mulf %679, %683 : vector<1x8x8xf32>
    %685 = arith.truncf %684 : vector<1x8x8xf32> to vector<1x8x8xbf16>
    "tpu.trace_start"() <{level = 10 : i32, message = "bqk,bkd->bqd"}> : () -> ()
    %cst_273 = arith.constant dense<0.000000e+00> : vector<1x8x16xf32>
    %686 = tpu.matmul %685, %672, %cst_273 {dimension_numbers = #tpu.dot_dimension_numbers<[2], [1], [1], [2], [0, 0, 0, 1, 1, 2], [0], [0]>} : vector<1x8x8xbf16>, vector<1x8x16xbf16>, vector<1x8x16xf32> -> vector<1x8x16xf32>
    "tpu.trace_stop"() : () -> ()
    %687 = vector.shape_cast %686 : vector<1x8x16xf32> to vector<8x16xf32>
    %688 = arith.truncf %687 : vector<8x16xf32> to vector<8x16xbf16>
    %689 = vector.extract_strided_slice %602 {offsets = [48, 0], sizes = [16, 64], strides = [1, 1]} : vector<64x64xbf16> to vector<16x64xbf16>
    %cst_274 = arith.constant dense<0.000000e+00> : vector<8x64xf32>
    %690 = tpu.matmul %688, %689, %cst_274 {dimension_numbers = #tpu.dot_dimension_numbers<[1], [0], [0], [1], [0, 0, 1, 1], [], []>} : vector<8x16xbf16>, vector<16x64xbf16>, vector<8x64xf32> -> vector<8x64xf32>
    %691 = arith.addf %669, %690 : vector<8x64xf32>
    %692 = arith.addf %558, %691 : vector<8x64xf32>
    %c3_275 = arith.constant 3 : index
    %c0_276 = arith.constant 0 : index
    %c0_277 = arith.constant 0 : index
    %693 = vector.load %arg8[%c3_275, %c0_276, %c0_277] : memref<4x1x64xf32, #tpu.memory_space<vmem>>, vector<1x1x64xf32>
    %694 = vector.shape_cast %693 : vector<1x1x64xf32> to vector<1x64xf32>
    %695 = vector.broadcast %694 : vector<1x64xf32> to vector<8x64xf32>
    %696 = arith.addf %692, %695 : vector<8x64xf32>
    %c3_278 = arith.constant 3 : index
    %c0_279 = arith.constant 0 : index
    %c0_280 = arith.constant 0 : index
    %697 = vector.load %arg9[%c3_278, %c0_279, %c0_280] : memref<4x1x64xf32, #tpu.memory_space<vmem>>, vector<1x1x64xf32>
    %698 = vector.shape_cast %697 : vector<1x1x64xf32> to vector<1x64xf32>
    %c3_281 = arith.constant 3 : index
    %c0_282 = arith.constant 0 : index
    %c0_283 = arith.constant 0 : index
    %699 = vector.load %arg10[%c3_281, %c0_282, %c0_283] : memref<4x1x64xf32, #tpu.memory_space<vmem>>, vector<1x1x64xf32>
    %700 = vector.shape_cast %699 : vector<1x1x64xf32> to vector<1x64xf32>
    %cst_284 = arith.constant dense<0.000000e+00> : vector<8xf32>
    %701 = vector.multi_reduction <add>, %696, %cst_284 [1] : vector<8x64xf32> to vector<8xf32>
    %702 = vector.shape_cast %701 : vector<8xf32> to vector<8x1xf32>
    %cst_285 = arith.constant 6.400000e+01 : f32
    %703 = vector.broadcast %cst_285 : f32 to vector<8x1xf32>
    %704 = arith.divf %702, %703 : vector<8x1xf32>
    %705 = vector.broadcast %704 : vector<8x1xf32> to vector<8x64xf32>
    %706 = arith.subf %696, %705 : vector<8x64xf32>
    %707 = arith.mulf %706, %706 : vector<8x64xf32>
    %cst_286 = arith.constant dense<0.000000e+00> : vector<8xf32>
    %708 = vector.multi_reduction <add>, %707, %cst_286 [1] : vector<8x64xf32> to vector<8xf32>
    %709 = vector.shape_cast %708 : vector<8xf32> to vector<8x1xf32>
    %cst_287 = arith.constant 6.400000e+01 : f32
    %710 = vector.broadcast %cst_287 : f32 to vector<8x1xf32>
    %711 = arith.divf %709, %710 : vector<8x1xf32>
    %712 = vector.broadcast %704 : vector<8x1xf32> to vector<8x64xf32>
    %713 = arith.subf %696, %712 : vector<8x64xf32>
    %cst_288 = arith.constant 9.99999974E-6 : f32
    %714 = vector.broadcast %cst_288 : f32 to vector<8x1xf32>
    %715 = arith.addf %711, %714 : vector<8x1xf32>
    %716 = math.rsqrt %715 : vector<8x1xf32>
    %717 = vector.broadcast %716 : vector<8x1xf32> to vector<8x64xf32>
    %718 = arith.mulf %713, %717 : vector<8x64xf32>
    %719 = vector.broadcast %698 : vector<1x64xf32> to vector<8x64xf32>
    %720 = arith.mulf %718, %719 : vector<8x64xf32>
    %721 = vector.broadcast %700 : vector<1x64xf32> to vector<8x64xf32>
    %722 = arith.addf %720, %721 : vector<8x64xf32>
    %723 = arith.truncf %722 : vector<8x64xf32> to vector<8x64xbf16>
    %c3_289 = arith.constant 3 : index
    %c0_290 = arith.constant 0 : index
    %c0_291 = arith.constant 0 : index
    %724 = vector.load %arg11[%c3_289, %c0_290, %c0_291] : memref<4x64x256xbf16, #tpu.memory_space<vmem>>, vector<1x64x256xbf16>
    %725 = vector.shape_cast %724 : vector<1x64x256xbf16> to vector<64x256xbf16>
    %cst_292 = arith.constant dense<0.000000e+00> : vector<8x256xf32>
    %726 = tpu.matmul %723, %725, %cst_292 {dimension_numbers = #tpu.dot_dimension_numbers<[1], [0], [0], [1], [0, 0, 1, 1], [], []>} : vector<8x64xbf16>, vector<64x256xbf16>, vector<8x256xf32> -> vector<8x256xf32>
    %c3_293 = arith.constant 3 : index
    %c0_294 = arith.constant 0 : index
    %c0_295 = arith.constant 0 : index
    %727 = vector.load %arg12[%c3_293, %c0_294, %c0_295] : memref<4x1x256xf32, #tpu.memory_space<vmem>>, vector<1x1x256xf32>
    %728 = vector.shape_cast %727 : vector<1x1x256xf32> to vector<1x256xf32>
    %729 = vector.broadcast %728 : vector<1x256xf32> to vector<8x256xf32>
    %730 = arith.addf %726, %729 : vector<8x256xf32>
    %cst_296 = arith.constant 0.000000e+00 : f32
    %731 = vector.broadcast %cst_296 : f32 to vector<8x256xf32>
    %732 = arith.maximumf %730, %731 : vector<8x256xf32>
    %733 = arith.truncf %732 : vector<8x256xf32> to vector<8x256xbf16>
    %c3_297 = arith.constant 3 : index
    %c0_298 = arith.constant 0 : index
    %c0_299 = arith.constant 0 : index
    %734 = vector.load %arg13[%c3_297, %c0_298, %c0_299] : memref<4x256x64xbf16, #tpu.memory_space<vmem>>, vector<1x256x64xbf16>
    %735 = vector.shape_cast %734 : vector<1x256x64xbf16> to vector<256x64xbf16>
    %cst_300 = arith.constant dense<0.000000e+00> : vector<8x64xf32>
    %736 = tpu.matmul %733, %735, %cst_300 {dimension_numbers = #tpu.dot_dimension_numbers<[1], [0], [0], [1], [0, 0, 1, 1], [], []>} : vector<8x256xbf16>, vector<256x64xbf16>, vector<8x64xf32> -> vector<8x64xf32>
    %c3_301 = arith.constant 3 : index
    %c0_302 = arith.constant 0 : index
    %c0_303 = arith.constant 0 : index
    %737 = vector.load %arg14[%c3_301, %c0_302, %c0_303] : memref<4x1x64xf32, #tpu.memory_space<vmem>>, vector<1x1x64xf32>
    %738 = vector.shape_cast %737 : vector<1x1x64xf32> to vector<1x64xf32>
    %739 = vector.broadcast %738 : vector<1x64xf32> to vector<8x64xf32>
    %740 = arith.addf %736, %739 : vector<8x64xf32>
    %741 = arith.addf %696, %740 : vector<8x64xf32>
    %c0_304 = arith.constant 0 : index
    %c0_305 = arith.constant 0 : index
    %742 = vector.load %arg15[%c0_304, %c0_305] : memref<1x64xf32, #tpu.memory_space<vmem>>, vector<1x64xf32>
    %c0_306 = arith.constant 0 : index
    %c0_307 = arith.constant 0 : index
    %743 = vector.load %arg16[%c0_306, %c0_307] : memref<1x64xf32, #tpu.memory_space<vmem>>, vector<1x64xf32>
    %cst_308 = arith.constant dense<0.000000e+00> : vector<8xf32>
    %744 = vector.multi_reduction <add>, %741, %cst_308 [1] : vector<8x64xf32> to vector<8xf32>
    %745 = vector.shape_cast %744 : vector<8xf32> to vector<8x1xf32>
    %cst_309 = arith.constant 6.400000e+01 : f32
    %746 = vector.broadcast %cst_309 : f32 to vector<8x1xf32>
    %747 = arith.divf %745, %746 : vector<8x1xf32>
    %748 = vector.broadcast %747 : vector<8x1xf32> to vector<8x64xf32>
    %749 = arith.subf %741, %748 : vector<8x64xf32>
    %750 = arith.mulf %749, %749 : vector<8x64xf32>
    %cst_310 = arith.constant dense<0.000000e+00> : vector<8xf32>
    %751 = vector.multi_reduction <add>, %750, %cst_310 [1] : vector<8x64xf32> to vector<8xf32>
    %752 = vector.shape_cast %751 : vector<8xf32> to vector<8x1xf32>
    %cst_311 = arith.constant 6.400000e+01 : f32
    %753 = vector.broadcast %cst_311 : f32 to vector<8x1xf32>
    %754 = arith.divf %752, %753 : vector<8x1xf32>
    %755 = vector.broadcast %747 : vector<8x1xf32> to vector<8x64xf32>
    %756 = arith.subf %741, %755 : vector<8x64xf32>
    %cst_312 = arith.constant 9.99999974E-6 : f32
    %757 = vector.broadcast %cst_312 : f32 to vector<8x1xf32>
    %758 = arith.addf %754, %757 : vector<8x1xf32>
    %759 = math.rsqrt %758 : vector<8x1xf32>
    %760 = vector.broadcast %759 : vector<8x1xf32> to vector<8x64xf32>
    %761 = arith.mulf %756, %760 : vector<8x64xf32>
    %762 = vector.broadcast %742 : vector<1x64xf32> to vector<8x64xf32>
    %763 = arith.mulf %761, %762 : vector<8x64xf32>
    %764 = vector.broadcast %743 : vector<1x64xf32> to vector<8x64xf32>
    %765 = arith.addf %763, %764 : vector<8x64xf32>
    %766 = arith.truncf %765 : vector<8x64xf32> to vector<8x64xbf16>
    %c0_313 = arith.constant 0 : index
    %c0_314 = arith.constant 0 : index
    %767 = vector.load %arg17[%c0_313, %c0_314] : memref<64x128xbf16, #tpu.memory_space<vmem>>, vector<64x128xbf16>
    %cst_315 = arith.constant dense<0.000000e+00> : vector<8x128xf32>
    %768 = tpu.matmul %766, %767, %cst_315 {dimension_numbers = #tpu.dot_dimension_numbers<[1], [0], [0], [1], [0, 0, 1, 1], [], []>} : vector<8x64xbf16>, vector<64x128xbf16>, vector<8x128xf32> -> vector<8x128xf32>
    %c0_316 = arith.constant 0 : index
    %c0_317 = arith.constant 0 : index
    %769 = vector.load %arg18[%c0_316, %c0_317] : memref<1x128xf32, #tpu.memory_space<vmem>>, vector<1x128xf32>
    %770 = vector.broadcast %769 : vector<1x128xf32> to vector<8x128xf32>
    %771 = arith.addf %768, %770 : vector<8x128xf32>
    %772 = vector.shape_cast %771 : vector<8x128xf32> to vector<1x8x128xf32>
    %773 = arith.truncf %772 : vector<1x8x128xf32> to vector<1x8x128xbf16>
    %c0_318 = arith.constant 0 : index
    %c0_319 = arith.constant 0 : index
    %c0_320 = arith.constant 0 : index
    %774 = vector.load %arg19[%c0_318, %c0_319, %c0_320] : memref<1x8x128xbf16, #tpu.memory_space<vmem>>, vector<1x8x128xbf16>
    tpu.vector_store %arg19[%c0_318, %c0_319, %c0_320], %773 {strides = array<i32>} : memref<1x8x128xbf16, #tpu.memory_space<vmem>>, vector<1x8x128xbf16>,
    return
  }
  func.func @transform_0(%arg0: i32) -> (i32, i32, i32) {
    %c0_i32 = arith.constant 0 : i32
    %c0_i32_0 = arith.constant 0 : i32
    %c0_i32_1 = arith.constant 0 : i32
    return %arg0, %c0_i32, %c0_i32_0 : i32, i32, i32
  }
  func.func @transform_1(%arg0: i32) -> (i32, i32, i32) {
    %c0_i32 = arith.constant 0 : i32
    %c0_i32_0 = arith.constant 0 : i32
    %c0_i32_1 = arith.constant 0 : i32
    %c0_i32_2 = arith.constant 0 : i32
    return %c0_i32, %c0_i32_0, %c0_i32_1 : i32, i32, i32
  }
  func.func @transform_2(%arg0: i32) -> (i32, i32, i32) {
    %c0_i32 = arith.constant 0 : i32
    %c0_i32_0 = arith.constant 0 : i32
    %c0_i32_1 = arith.constant 0 : i32
    %c0_i32_2 = arith.constant 0 : i32
    return %c0_i32, %c0_i32_0, %c0_i32_1 : i32, i32, i32
  }
  func.func @transform_3(%arg0: i32) -> (i32, i32, i32) {
    %c0_i32 = arith.constant 0 : i32
    %c0_i32_0 = arith.constant 0 : i32
    %c0_i32_1 = arith.constant 0 : i32
    %c0_i32_2 = arith.constant 0 : i32
    return %c0_i32, %c0_i32_0, %c0_i32_1 : i32, i32, i32
  }
  func.func @transform_4(%arg0: i32) -> (i32, i32, i32) {
    %c0_i32 = arith.constant 0 : i32
    %c0_i32_0 = arith.constant 0 : i32
    %c0_i32_1 = arith.constant 0 : i32
    %c0_i32_2 = arith.constant 0 : i32
    return %c0_i32, %c0_i32_0, %c0_i32_1 : i32, i32, i32
  }
  func.func @transform_5(%arg0: i32) -> (i32, i32, i32) {
    %c0_i32 = arith.constant 0 : i32
    %c0_i32_0 = arith.constant 0 : i32
    %c0_i32_1 = arith.constant 0 : i32
    %c0_i32_2 = arith.constant 0 : i32
    return %c0_i32, %c0_i32_0, %c0_i32_1 : i32, i32, i32
  }
  func.func @transform_6(%arg0: i32) -> (i32, i32, i32) {
    %c0_i32 = arith.constant 0 : i32
    %c0_i32_0 = arith.constant 0 : i32
    %c0_i32_1 = arith.constant 0 : i32
    %c0_i32_2 = arith.constant 0 : i32
    return %c0_i32, %c0_i32_0, %c0_i32_1 : i32, i32, i32
  }
  func.func @transform_7(%arg0: i32) -> (i32, i32, i32) {
    %c0_i32 = arith.constant 0 : i32
    %c0_i32_0 = arith.constant 0 : i32
    %c0_i32_1 = arith.constant 0 : i32
    %c0_i32_2 = arith.constant 0 : i32
    return %c0_i32, %c0_i32_0, %c0_i32_1 : i32, i32, i32
  }
  func.func @transform_8(%arg0: i32) -> (i32, i32, i32) {
    %c0_i32 = arith.constant 0 : i32
    %c0_i32_0 = arith.constant 0 : i32
    %c0_i32_1 = arith.constant 0 : i32
    %c0_i32_2 = arith.constant 0 : i32
    return %c0_i32, %c0_i32_0, %c0_i32_1 : i32, i32, i32
  }
  func.func @transform_9(%arg0: i32) -> (i32, i32, i32) {
    %c0_i32 = arith.constant 0 : i32
    %c0_i32_0 = arith.constant 0 : i32
    %c0_i32_1 = arith.constant 0 : i32
    %c0_i32_2 = arith.constant 0 : i32
    return %c0_i32, %c0_i32_0, %c0_i32_1 : i32, i32, i32
  }
  func.func @transform_10(%arg0: i32) -> (i32, i32, i32) {
    %c0_i32 = arith.constant 0 : i32
    %c0_i32_0 = arith.constant 0 : i32
    %c0_i32_1 = arith.constant 0 : i32
    %c0_i32_2 = arith.constant 0 : i32
    return %c0_i32, %c0_i32_0, %c0_i32_1 : i32, i32, i32
  }
  func.func @transform_11(%arg0: i32) -> (i32, i32, i32) {
    %c0_i32 = arith.constant 0 : i32
    %c0_i32_0 = arith.constant 0 : i32
    %c0_i32_1 = arith.constant 0 : i32
    %c0_i32_2 = arith.constant 0 : i32
    return %c0_i32, %c0_i32_0, %c0_i32_1 : i32, i32, i32
  }
  func.func @transform_12(%arg0: i32) -> (i32, i32, i32) {
    %c0_i32 = arith.constant 0 : i32
    %c0_i32_0 = arith.constant 0 : i32
    %c0_i32_1 = arith.constant 0 : i32
    %c0_i32_2 = arith.constant 0 : i32
    return %c0_i32, %c0_i32_0, %c0_i32_1 : i32, i32, i32
  }
  func.func @transform_13(%arg0: i32) -> (i32, i32, i32) {
    %c0_i32 = arith.constant 0 : i32
    %c0_i32_0 = arith.constant 0 : i32
    %c0_i32_1 = arith.constant 0 : i32
    %c0_i32_2 = arith.constant 0 : i32
    return %c0_i32, %c0_i32_0, %c0_i32_1 : i32, i32, i32
  }
  func.func @transform_14(%arg0: i32) -> (i32, i32) {
    %c0_i32 = arith.constant 0 : i32
    %c0_i32_0 = arith.constant 0 : i32
    %c0_i32_1 = arith.constant 0 : i32
    return %c0_i32, %c0_i32_0 : i32, i32
  }
  func.func @transform_15(%arg0: i32) -> (i32, i32) {
    %c0_i32 = arith.constant 0 : i32
    %c0_i32_0 = arith.constant 0 : i32
    %c0_i32_1 = arith.constant 0 : i32
    return %c0_i32, %c0_i32_0 : i32, i32
  }
  func.func @transform_16(%arg0: i32) -> (i32, i32) {
    %c0_i32 = arith.constant 0 : i32
    %c0_i32_0 = arith.constant 0 : i32
    %c0_i32_1 = arith.constant 0 : i32
    return %c0_i32, %c0_i32_0 : i32, i32
  }
  func.func @transform_17(%arg0: i32) -> (i32, i32) {
    %c0_i32 = arith.constant 0 : i32
    %c0_i32_0 = arith.constant 0 : i32
    %c0_i32_1 = arith.constant 0 : i32
    return %c0_i32, %c0_i32_0 : i32, i32
  }
  func.func @transform_18(%arg0: i32) -> (i32, i32, i32) {
    %c0_i32 = arith.constant 0 : i32
    %c0_i32_0 = arith.constant 0 : i32
    %c0_i32_1 = arith.constant 0 : i32
    return %arg0, %c0_i32, %c0_i32_0 : i32, i32, i32
  }
}

</mosaic_0001>

<llo_original>
// kernel: tpu_custom_call.1
$region0: #{tpu_custom_call.1}
  #allocation0 [shape = 'u32[]', space=smem, size = 0x4, offset = 0x4, fixed_abs, tag = 'smem constant byte address 0x4 - core index']
  #allocation1 [shape = 'u32[144,128]{1,0:T(1,128)}', space=vmem, size = 0x12000, scoped, tag = 'internal scratch']
  %s0 = inlined_call_operand.hbm [shape: bf16[2,8,64], index: 0, kind: input, shape index: {}]
  %s1 = inlined_call_operand.hbm [shape: f32[4,1,64], index: 1, kind: input, shape index: {}]
  %s2 = inlined_call_operand.hbm [shape: f32[4,1,64], index: 2, kind: input, shape index: {}]
  %s3 = inlined_call_operand.vmem [shape: bf16[4,64,64], index: 3, kind: input, shape index: {}]
  %s4 = inlined_call_operand.vmem [shape: bf16[4,64,64], index: 4, kind: input, shape index: {}]
  %s5 = inlined_call_operand.vmem [shape: bf16[4,64,64], index: 5, kind: input, shape index: {}]
  %s6 = inlined_call_operand.vmem [shape: bf16[4,64,64], index: 6, kind: input, shape index: {}]
  %s7 = inlined_call_operand.hbm [shape: f32[4,1,64], index: 7, kind: input, shape index: {}]
  %s8 = inlined_call_operand.hbm [shape: f32[4,1,64], index: 8, kind: input, shape index: {}]
  %s9 = inlined_call_operand.hbm [shape: f32[4,1,64], index: 9, kind: input, shape index: {}]
  %s10 = inlined_call_operand.vmem [shape: bf16[4,64,256], index: 10, kind: input, shape index: {}]
  %s11 = inlined_call_operand.hbm [shape: f32[4,1,256], index: 11, kind: input, shape index: {}]
  %s12 = inlined_call_operand.vmem [shape: bf16[4,256,64], index: 12, kind: input, shape index: {}]
  %s13 = inlined_call_operand.vmem [shape: f32[4,1,64], index: 13, kind: input, shape index: {}]
  %s14 = inlined_call_operand.vmem [shape: f32[1,64], index: 14, kind: input, shape index: {}]
  %s15 = inlined_call_operand.vmem [shape: f32[1,64], index: 15, kind: input, shape index: {}]
  %s16 = inlined_call_operand.vmem [shape: bf16[64,128], index: 16, kind: input, shape index: {}]
  %s17 = inlined_call_operand.vmem [shape: f32[1,128], index: 17, kind: input, shape index: {}]
  %s18 = inlined_call_operand.hbm [shape: bf16[2,8,128], index: 18, kind: output, shape index: {}]
  %s19 = sld [smem:[#allocation0]]
  $region133: #{tpu_custom_call.1} parent=0
    _
  %s21 = ssub.s32 1, %s19
  %s22 = scalar_select 0, %s21, %s19
  $region1: #{tpu_custom_call.1} parent=0
    #allocation2 [shape = 'u8[4096]{0}', space=vmem, size = 0x1000, scoped, tag = 'input window, operand 0']
    #allocation3 [shape = 's32[2]{0}', space=sflag, size = 0x8, scoped, tag = 'scoped memory for tpu_custom_call.1']
    #allocation4 [shape = 's32[2]{0}', space=sflag, size = 0x8, scoped, tag = 'scoped memory for tpu_custom_call.1']
    #allocation5 [shape = 'u8[2048]{0}', space=vmem, size = 0x800, scoped, tag = 'input window, operand 1, single buffered']
    #allocation6 [shape = 's32[1]{0}', space=sflag, size = 0x4, scoped, tag = 'scoped memory for tpu_custom_call.1']
    #allocation7 [shape = 'u8[2048]{0}', space=vmem, size = 0x800, scoped, tag = 'input window, operand 2, single buffered']
    #allocation8 [shape = 'u8[2048]{0}', space=vmem, size = 0x800, scoped, tag = 'input window, operand 7, single buffered']
    #allocation9 [shape = 's32[1]{0}', space=sflag, size = 0x4, scoped, tag = 'scoped memory for tpu_custom_call.1']
    #allocation10 [shape = 'u8[2048]{0}', space=vmem, size = 0x800, scoped, tag = 'input window, operand 8, single buffered']
    #allocation11 [shape = 'u8[2048]{0}', space=vmem, size = 0x800, scoped, tag = 'input window, operand 9, single buffered']
    #allocation12 [shape = 's32[1]{0}', space=sflag, size = 0x4, scoped, tag = 'scoped memory for tpu_custom_call.1']
    #allocation13 [shape = 'u8[4096]{0}', space=vmem, size = 0x1000, scoped, tag = 'input window, operand 11, single buffered']
    #allocation14 [shape = 'u8[4096]{0}', space=vmem, size = 0x1000, scoped, tag = 'output window, operand 0']
    %23 = vsyncpa [#allocation3], 0
    %s24 = scalar_lea.sflag [#allocation3], 1
    %25 = vsyncpa %s24, 0
    %26 = vsyncpa [#allocation6], 0
    %27 = vsyncpa [#allocation9], 0
    %28 = vsyncpa [#allocation12], 0
    %29 = vsyncpa [#allocation4], 0
    %s30 = scalar_lea.sflag [#allocation4], 1
    %31 = vsyncpa %s30, 0
    loop: start=0, step=1, limit=4
    $region2: #{tpu_custom_call.1} parent=1 // loop_pre_header
      _
    $region3: #{tpu_custom_call.1} parent=1 // loop_header
      %s33 = sphi 0, %s37
      %p34 = scmp.ge.s32.totalorder %s33, 4
      %s43 = sphi 0, %s45
      %s46 = sphi 0, %s43
      %s47 = sphi 0, %s46
      %s63 = sphi 0, %s47
      %s67 = sphi 0, %s67
      %s69 = sphi 0, %s67
      %s70 = sphi 0, %s69
      %s84 = sphi 0, %s70
      %s88 = sphi 0, %s88
      %s90 = sphi 0, %s88
      %s91 = sphi 0, %s90
      %s105 = sphi 0, %s91
      %s109 = sphi 0, %s109
      %s111 = sphi 0, %s109
      %s112 = sphi 0, %s111
      %s126 = sphi 0, %s112
      %s130 = sphi 0, %s130
      %s132 = sphi 0, %s130
      %s133 = sphi 0, %s132
      %s147 = sphi 0, %s133
      %s151 = sphi 0, %s151
      %s153 = sphi 0, %s151
      %s154 = sphi 0, %s153
      %s168 = sphi 0, %s154
      %s172 = sphi 0, %s172
      %s174 = sphi 0, %s172
      %s175 = sphi 0, %s174
      %s189 = sphi 0, %s175
      %s193 = sphi 0, %s193
      %s195 = sphi 0, %s193
      %s196 = sphi 0, %s195
      %s210 = sphi 0, %s196
      %s214 = sphi 0, %s214
      %s216 = sphi 0, %s214
      %s217 = sphi 0, %s216
      %s231 = sphi 0, %s217
      %s235 = sphi 0, %s235
      %s237 = sphi 0, %s235
      %s238 = sphi 0, %s237
      %s252 = sphi 0, %s238
      %s256 = sphi 0, %s256
      %s258 = sphi 0, %s256
      %s259 = sphi 0, %s258
      %s273 = sphi 0, %s259
      %s277 = sphi 0, %s277
      %s279 = sphi 0, %s277
      %s280 = sphi 0, %s279
      %s294 = sphi 0, %s280
      %s298 = sphi 0, %s298
      %s300 = sphi 0, %s298
      %s301 = sphi 0, %s300
      %s315 = sphi 0, %s301
      %s319 = sphi 0, %s319
      %s321 = sphi 0, %s319
      %s322 = sphi 0, %s321
      %s336 = sphi 0, %s322
      %s340 = sphi 0, %s340
      %s342 = sphi 0, %s340
      %s343 = sphi 0, %s342
      %s357 = sphi 0, %s343
      %s361 = sphi 0, %s361
      %s363 = sphi 0, %s361
      %s364 = sphi 0, %s363
      %s378 = sphi 0, %s364
      %s382 = sphi 0, %s382
      %s384 = sphi 0, %s382
      %s385 = sphi 0, %s384
      %s399 = sphi 0, %s385
      %s403 = sphi 0, %s403
      %s405 = sphi 0, %s403
      %s406 = sphi 0, %s405
      %s420 = sphi 0, %s406
      %s426 = sphi 0, %s428
      %s429 = sphi 0, %s426
      %s430 = sphi 0, %s429
      %s446 = sphi 0, %s430
    $region4: #{tpu_custom_call.1} parent=1 // loop_header_branch
      %36 = sbr.rel (%p34) target = $region8
    $region5: #{tpu_custom_call.1} parent=1 // loop_body
      %s38 = ssub.s32 %s33, 1
      %s39 = ssub.s32 %s33, 2
      %s40 = sadd.s32 %s33, 1
      %s41 = ssub.s32 %s33, %s40
      %p42 = scmp.eq.s32.totalorder %s41, 0
      %s44 = sadd.s32 %s43, 1
      %s45 = scalar_select %p42, %s43, %s44
      %p48 = pneg %p42
      %p49 = scmp.eq.s32.totalorder %s33, 1
      %p50 = por %p48, %p49
      %p51 = scmp.ne.s32.totalorder %s43, %s46
      %p52 = scmp.eq.s32.totalorder %s33, 0
      %p53 = por %p51, %p52
      %p54 = scmp.ne.s32.totalorder %s43, %s46
      %p55 = scmp.eq.s32.totalorder %s38, 1
      %p56 = por %p54, %p55
      %p57 = scmp.ne.s32.totalorder %s46, %s47
      %p58 = scmp.eq.s32.totalorder %s38, 0
      %p59 = por %p57, %p58
      %p60 = scmp.ne.s32.totalorder %s46, %s47
      %p61 = scmp.eq.s32.totalorder %s39, 1
      %p62 = por %p60, %p61
      %p64 = scmp.ne.s32.totalorder %s47, %s63
      %p65 = scmp.eq.s32.totalorder %s39, 0
      %p66 = por %p64, %p65
      %s68 = sadd.s32 %s67, 1
      %p71 = scmp.eq.s32.totalorder %s33, 1
      %p72 = scmp.ne.s32.totalorder %s67, %s69
      %p73 = scmp.eq.s32.totalorder %s33, 0
      %p74 = por %p72, %p73
      %p75 = scmp.ne.s32.totalorder %s67, %s69
      %p76 = scmp.eq.s32.totalorder %s38, 1
      %p77 = por %p75, %p76
      %p78 = scmp.ne.s32.totalorder %s69, %s70
      %p79 = scmp.eq.s32.totalorder %s38, 0
      %p80 = por %p78, %p79
      %p81 = scmp.ne.s32.totalorder %s69, %s70
      %p82 = scmp.eq.s32.totalorder %s39, 1
      %p83 = por %p81, %p82
      %p85 = scmp.ne.s32.totalorder %s70, %s84
      %p86 = scmp.eq.s32.totalorder %s39, 0
      %p87 = por %p85, %p86
      %s89 = sadd.s32 %s88, 1
      %p92 = scmp.eq.s32.totalorder %s33, 1
      %p93 = scmp.ne.s32.totalorder %s88, %s90
      %p94 = scmp.eq.s32.totalorder %s33, 0
      %p95 = por %p93, %p94
      %p96 = scmp.ne.s32.totalorder %s88, %s90
      %p97 = scmp.eq.s32.totalorder %s38, 1
      %p98 = por %p96, %p97
      %p99 = scmp.ne.s32.totalorder %s90, %s91
      %p100 = scmp.eq.s32.totalorder %s38, 0
      %p101 = por %p99, %p100
      %p102 = scmp.ne.s32.totalorder %s90, %s91
      %p103 = scmp.eq.s32.totalorder %s39, 1
      %p104 = por %p102, %p103
      %p106 = scmp.ne.s32.totalorder %s91, %s105
      %p107 = scmp.eq.s32.totalorder %s39, 0
      %p108 = por %p106, %p107
      %s110 = sadd.s32 %s109, 1
      %p113 = scmp.eq.s32.totalorder %s33, 1
      %p114 = scmp.ne.s32.totalorder %s109, %s111
      %p115 = scmp.eq.s32.totalorder %s33, 0
      %p116 = por %p114, %p115
      %p117 = scmp.ne.s32.totalorder %s109, %s111
      %p118 = scmp.eq.s32.totalorder %s38, 1
      %p119 = por %p117, %p118
      %p120 = scmp.ne.s32.totalorder %s111, %s112
      %p121 = scmp.eq.s32.totalorder %s38, 0
      %p122 = por %p120, %p121
      %p123 = scmp.ne.s32.totalorder %s111, %s112
      %p124 = scmp.eq.s32.totalorder %s39, 1
      %p125 = por %p123, %p124
      %p127 = scmp.ne.s32.totalorder %s112, %s126
      %p128 = scmp.eq.s32.totalorder %s39, 0
      %p129 = por %p127, %p128
      %s131 = sadd.s32 %s130, 1
      %p134 = scmp.eq.s32.totalorder %s33, 1
      %p135 = scmp.ne.s32.totalorder %s130, %s132
      %p136 = scmp.eq.s32.totalorder %s33, 0
      %p137 = por %p135, %p136
      %p138 = scmp.ne.s32.totalorder %s130, %s132
      %p139 = scmp.eq.s32.totalorder %s38, 1
      %p140 = por %p138, %p139
      %p141 = scmp.ne.s32.totalorder %s132, %s133
      %p142 = scmp.eq.s32.totalorder %s38, 0
      %p143 = por %p141, %p142
      %p144 = scmp.ne.s32.totalorder %s132, %s133
      %p145 = scmp.eq.s32.totalorder %s39, 1
      %p146 = por %p144, %p145
      %p148 = scmp.ne.s32.totalorder %s133, %s147
      %p149 = scmp.eq.s32.totalorder %s39, 0
      %p150 = por %p148, %p149
      %s152 = sadd.s32 %s151, 1
      %p155 = scmp.eq.s32.totalorder %s33, 1
      %p156 = scmp.ne.s32.totalorder %s151, %s153
      %p157 = scmp.eq.s32.totalorder %s33, 0
      %p158 = por %p156, %p157
      %p159 = scmp.ne.s32.totalorder %s151, %s153
      %p160 = scmp.eq.s32.totalorder %s38, 1
      %p161 = por %p159, %p160
      %p162 = scmp.ne.s32.totalorder %s153, %s154
      %p163 = scmp.eq.s32.totalorder %s38, 0
      %p164 = por %p162, %p163
      %p165 = scmp.ne.s32.totalorder %s153, %s154
      %p166 = scmp.eq.s32.totalorder %s39, 1
      %p167 = por %p165, %p166
      %p169 = scmp.ne.s32.totalorder %s154, %s168
      %p170 = scmp.eq.s32.totalorder %s39, 0
      %p171 = por %p169, %p170
      %s173 = sadd.s32 %s172, 1
      %p176 = scmp.eq.s32.totalorder %s33, 1
      %p177 = scmp.ne.s32.totalorder %s172, %s174
      %p178 = scmp.eq.s32.totalorder %s33, 0
      %p179 = por %p177, %p178
      %p180 = scmp.ne.s32.totalorder %s172, %s174
      %p181 = scmp.eq.s32.totalorder %s38, 1
      %p182 = por %p180, %p181
      %p183 = scmp.ne.s32.totalorder %s174, %s175
      %p184 = scmp.eq.s32.totalorder %s38, 0
      %p185 = por %p183, %p184
      %p186 = scmp.ne.s32.totalorder %s174, %s175
      %p187 = scmp.eq.s32.totalorder %s39, 1
      %p188 = por %p186, %p187
      %p190 = scmp.ne.s32.totalorder %s175, %s189
      %p191 = scmp.eq.s32.totalorder %s39, 0
      %p192 = por %p190, %p191
      %s194 = sadd.s32 %s193, 1
      %p197 = scmp.eq.s32.totalorder %s33, 1
      %p198 = scmp.ne.s32.totalorder %s193, %s195
      %p199 = scmp.eq.s32.totalorder %s33, 0
      %p200 = por %p198, %p199
      %p201 = scmp.ne.s32.totalorder %s193, %s195
      %p202 = scmp.eq.s32.totalorder %s38, 1
      %p203 = por %p201, %p202
      %p204 = scmp.ne.s32.totalorder %s195, %s196
      %p205 = scmp.eq.s32.totalorder %s38, 0
      %p206 = por %p204, %p205
      %p207 = scmp.ne.s32.totalorder %s195, %s196
      %p208 = scmp.eq.s32.totalorder %s39, 1
      %p209 = por %p207, %p208
      %p211 = scmp.ne.s32.totalorder %s196, %s210
      %p212 = scmp.eq.s32.totalorder %s39, 0
      %p213 = por %p211, %p212
      %s215 = sadd.s32 %s214, 1
      %p218 = scmp.eq.s32.totalorder %s33, 1
      %p219 = scmp.ne.s32.totalorder %s214, %s216
      %p220 = scmp.eq.s32.totalorder %s33, 0
      %p221 = por %p219, %p220
      %p222 = scmp.ne.s32.totalorder %s214, %s216
      %p223 = scmp.eq.s32.totalorder %s38, 1
      %p224 = por %p222, %p223
      %p225 = scmp.ne.s32.totalorder %s216, %s217
      %p226 = scmp.eq.s32.totalorder %s38, 0
      %p227 = por %p225, %p226
      %p228 = scmp.ne.s32.totalorder %s216, %s217
      %p229 = scmp.eq.s32.totalorder %s39, 1
      %p230 = por %p228, %p229
      %p232 = scmp.ne.s32.totalorder %s217, %s231
      %p233 = scmp.eq.s32.totalorder %s39, 0
      %p234 = por %p232, %p233
      %s236 = sadd.s32 %s235, 1
      %p239 = scmp.eq.s32.totalorder %s33, 1
      %p240 = scmp.ne.s32.totalorder %s235, %s237
      %p241 = scmp.eq.s32.totalorder %s33, 0
      %p242 = por %p240, %p241
      %p243 = scmp.ne.s32.totalorder %s235, %s237
      %p244 = scmp.eq.s32.totalorder %s38, 1
      %p245 = por %p243, %p244
      %p246 = scmp.ne.s32.totalorder %s237, %s238
      %p247 = scmp.eq.s32.totalorder %s38, 0
      %p248 = por %p246, %p247
      %p249 = scmp.ne.s32.totalorder %s237, %s238
      %p250 = scmp.eq.s32.totalorder %s39, 1
      %p251 = por %p249, %p250
      %p253 = scmp.ne.s32.totalorder %s238, %s252
      %p254 = scmp.eq.s32.totalorder %s39, 0
      %p255 = por %p253, %p254
      %s257 = sadd.s32 %s256, 1
      %p260 = scmp.eq.s32.totalorder %s33, 1
      %p261 = scmp.ne.s32.totalorder %s256, %s258
      %p262 = scmp.eq.s32.totalorder %s33, 0
      %p263 = por %p261, %p262
      %p264 = scmp.ne.s32.totalorder %s256, %s258
      %p265 = scmp.eq.s32.totalorder %s38, 1
      %p266 = por %p264, %p265
      %p267 = scmp.ne.s32.totalorder %s258, %s259
      %p268 = scmp.eq.s32.totalorder %s38, 0
      %p269 = por %p267, %p268
      %p270 = scmp.ne.s32.totalorder %s258, %s259
      %p271 = scmp.eq.s32.totalorder %s39, 1
      %p272 = por %p270, %p271
      %p274 = scmp.ne.s32.totalorder %s259, %s273
      %p275 = scmp.eq.s32.totalorder %s39, 0
      %p276 = por %p274, %p275
      %s278 = sadd.s32 %s277, 1
      %p281 = scmp.eq.s32.totalorder %s33, 1
      %p282 = scmp.ne.s32.totalorder %s277, %s279
      %p283 = scmp.eq.s32.totalorder %s33, 0
      %p284 = por %p282, %p283
      %p285 = scmp.ne.s32.totalorder %s277, %s279
      %p286 = scmp.eq.s32.totalorder %s38, 1
      %p287 = por %p285, %p286
      %p288 = scmp.ne.s32.totalorder %s279, %s280
      %p289 = scmp.eq.s32.totalorder %s38, 0
      %p290 = por %p288, %p289
      %p291 = scmp.ne.s32.totalorder %s279, %s280
      %p292 = scmp.eq.s32.totalorder %s39, 1
      %p293 = por %p291, %p292
      %p295 = scmp.ne.s32.totalorder %s280, %s294
      %p296 = scmp.eq.s32.totalorder %s39, 0
      %p297 = por %p295, %p296
      %s299 = sadd.s32 %s298, 1
      %p302 = scmp.eq.s32.totalorder %s33, 1
      %p303 = scmp.ne.s32.totalorder %s298, %s300
      %p304 = scmp.eq.s32.totalorder %s33, 0
      %p305 = por %p303, %p304
      %p306 = scmp.ne.s32.totalorder %s298, %s300
      %p307 = scmp.eq.s32.totalorder %s38, 1
      %p308 = por %p306, %p307
      %p309 = scmp.ne.s32.totalorder %s300, %s301
      %p310 = scmp.eq.s32.totalorder %s38, 0
      %p311 = por %p309, %p310
      %p312 = scmp.ne.s32.totalorder %s300, %s301
      %p313 = scmp.eq.s32.totalorder %s39, 1
      %p314 = por %p312, %p313
      %p316 = scmp.ne.s32.totalorder %s301, %s315
      %p317 = scmp.eq.s32.totalorder %s39, 0
      %p318 = por %p316, %p317
      %s320 = sadd.s32 %s319, 1
      %p323 = scmp.eq.s32.totalorder %s33, 1
      %p324 = scmp.ne.s32.totalorder %s319, %s321
      %p325 = scmp.eq.s32.totalorder %s33, 0
      %p326 = por %p324, %p325
      %p327 = scmp.ne.s32.totalorder %s319, %s321
      %p328 = scmp.eq.s32.totalorder %s38, 1
      %p329 = por %p327, %p328
      %p330 = scmp.ne.s32.totalorder %s321, %s322
      %p331 = scmp.eq.s32.totalorder %s38, 0
      %p332 = por %p330, %p331
      %p333 = scmp.ne.s32.totalorder %s321, %s322
      %p334 = scmp.eq.s32.totalorder %s39, 1
      %p335 = por %p333, %p334
      %p337 = scmp.ne.s32.totalorder %s322, %s336
      %p338 = scmp.eq.s32.totalorder %s39, 0
      %p339 = por %p337, %p338
      %s341 = sadd.s32 %s340, 1
      %p344 = scmp.eq.s32.totalorder %s33, 1
      %p345 = scmp.ne.s32.totalorder %s340, %s342
      %p346 = scmp.eq.s32.totalorder %s33, 0
      %p347 = por %p345, %p346
      %p348 = scmp.ne.s32.totalorder %s340, %s342
      %p349 = scmp.eq.s32.totalorder %s38, 1
      %p350 = por %p348, %p349
      %p351 = scmp.ne.s32.totalorder %s342, %s343
      %p352 = scmp.eq.s32.totalorder %s38, 0
      %p353 = por %p351, %p352
      %p354 = scmp.ne.s32.totalorder %s342, %s343
      %p355 = scmp.eq.s32.totalorder %s39, 1
      %p356 = por %p354, %p355
      %p358 = scmp.ne.s32.totalorder %s343, %s357
      %p359 = scmp.eq.s32.totalorder %s39, 0
      %p360 = por %p358, %p359
      %s362 = sadd.s32 %s361, 1
      %p365 = scmp.eq.s32.totalorder %s33, 1
      %p366 = scmp.ne.s32.totalorder %s361, %s363
      %p367 = scmp.eq.s32.totalorder %s33, 0
      %p368 = por %p366, %p367
      %p369 = scmp.ne.s32.totalorder %s361, %s363
      %p370 = scmp.eq.s32.totalorder %s38, 1
      %p371 = por %p369, %p370
      %p372 = scmp.ne.s32.totalorder %s363, %s364
      %p373 = scmp.eq.s32.totalorder %s38, 0
      %p374 = por %p372, %p373
      %p375 = scmp.ne.s32.totalorder %s363, %s364
      %p376 = scmp.eq.s32.totalorder %s39, 1
      %p377 = por %p375, %p376
      %p379 = scmp.ne.s32.totalorder %s364, %s378
      %p380 = scmp.eq.s32.totalorder %s39, 0
      %p381 = por %p379, %p380
      %s383 = sadd.s32 %s382, 1
      %p386 = scmp.eq.s32.totalorder %s33, 1
      %p387 = scmp.ne.s32.totalorder %s382, %s384
      %p388 = scmp.eq.s32.totalorder %s33, 0
      %p389 = por %p387, %p388
      %p390 = scmp.ne.s32.totalorder %s382, %s384
      %p391 = scmp.eq.s32.totalorder %s38, 1
      %p392 = por %p390, %p391
      %p393 = scmp.ne.s32.totalorder %s384, %s385
      %p394 = scmp.eq.s32.totalorder %s38, 0
      %p395 = por %p393, %p394
      %p396 = scmp.ne.s32.totalorder %s384, %s385
      %p397 = scmp.eq.s32.totalorder %s39, 1
      %p398 = por %p396, %p397
      %p400 = scmp.ne.s32.totalorder %s385, %s399
      %p401 = scmp.eq.s32.totalorder %s39, 0
      %p402 = por %p400, %p401
      %s404 = sadd.s32 %s403, 1
      %p407 = scmp.eq.s32.totalorder %s33, 1
      %p408 = scmp.ne.s32.totalorder %s403, %s405
      %p409 = scmp.eq.s32.totalorder %s33, 0
      %p410 = por %p408, %p409
      %p411 = scmp.ne.s32.totalorder %s403, %s405
      %p412 = scmp.eq.s32.totalorder %s38, 1
      %p413 = por %p411, %p412
      %p414 = scmp.ne.s32.totalorder %s405, %s406
      %p415 = scmp.eq.s32.totalorder %s38, 0
      %p416 = por %p414, %p415
      %p417 = scmp.ne.s32.totalorder %s405, %s406
      %p418 = scmp.eq.s32.totalorder %s39, 1
      %p419 = por %p417, %p418
      %p421 = scmp.ne.s32.totalorder %s406, %s420
      %p422 = scmp.eq.s32.totalorder %s39, 0
      %p423 = por %p421, %p422
      %s424 = ssub.s32 %s33, %s40
      %p425 = scmp.eq.s32.totalorder %s424, 0
      %s427 = sadd.s32 %s426, 1
      %s428 = scalar_select %p425, %s426, %s427
      %p431 = pneg %p425
      %p432 = scmp.eq.s32.totalorder %s33, 1
      %p433 = por %p431, %p432
      %p434 = scmp.ne.s32.totalorder %s426, %s429
      %p435 = scmp.eq.s32.totalorder %s33, 0
      %p436 = por %p434, %p435
      %p437 = scmp.ne.s32.totalorder %s426, %s429
      %p438 = scmp.eq.s32.totalorder %s38, 1
      %p439 = por %p437, %p438
      %p440 = scmp.ne.s32.totalorder %s429, %s430
      %p441 = scmp.eq.s32.totalorder %s38, 0
      %p442 = por %p440, %p441
      %p443 = scmp.ne.s32.totalorder %s429, %s430
      %p444 = scmp.eq.s32.totalorder %s39, 1
      %p445 = por %p443, %p444
      %p447 = scmp.ne.s32.totalorder %s430, %s446
      %p448 = scmp.eq.s32.totalorder %s39, 0
      %p449 = por %p447, %p448
      %p450 = scmp.le.s32.totalorder 1, %s33
      %p451 = scmp.lt.s32.totalorder %s33, 3
      %p452 = pnand %p450, %p451
      %p453 = pneg %p452
      // Predicated region
      $region9: #{tpu_custom_call.1} parent=5 // pred_check
        _
      $region10: #{tpu_custom_call.1} parent=5 // pred_check_branch
        %455 = sbr.rel (%p452) target = $region12
      $region11: #{tpu_custom_call.1} parent=5 // pred_region
        %s456 = ssub.s32 %s33, 1
        // Predicated region
        $region13: #{tpu_custom_call.1} parent=11 // pred_check
          %p457 = pneg %p80
        $region14: #{tpu_custom_call.1} parent=11 // pred_check_branch
          %459 = sbr.rel (%p457) target = $region16
        $region15: #{tpu_custom_call.1} parent=11 // pred_region
          %s461 = ssub.s32 64, 64
          %462 = vsyncadd [#allocation6], %s461
          %s463 = sshll.u32 [#allocation5], 4
          %s464 = int_to_ptr.vmem [resolvable:$true] %s463
          %469 = dma.hbm_to_vmem [thread:$0]  %s1, 64, %s464, [#allocation6], 16, 16, 1
        $region16: #{tpu_custom_call.1} parent=11 // pred_fallthru
          _
        // Predicated region
        $region17: #{tpu_custom_call.1} parent=11 // pred_check
          %p470 = pneg %p101
        $region18: #{tpu_custom_call.1} parent=11 // pred_check_branch
          %472 = sbr.rel (%p470) target = $region20
        $region19: #{tpu_custom_call.1} parent=11 // pred_region
          %s474 = ssub.s32 64, 64
          %475 = vsyncadd [#allocation6], %s474
          %s476 = sshll.u32 [#allocation7], 4
          %s477 = int_to_ptr.vmem [resolvable:$true] %s476
          %482 = dma.hbm_to_vmem [thread:$0]  %s2, 64, %s477, [#allocation6], 16, 16, 1
        $region20: #{tpu_custom_call.1} parent=11 // pred_fallthru
          _
        // Predicated region
        $region21: #{tpu_custom_call.1} parent=11 // pred_check
          %p483 = pneg %p122
        $region22: #{tpu_custom_call.1} parent=11 // pred_check_branch
          %485 = sbr.rel (%p483) target = $region24
        $region23: #{tpu_custom_call.1} parent=11 // pred_region
          _
        $region24: #{tpu_custom_call.1} parent=11 // pred_fallthru
          _
        // Predicated region
        $region25: #{tpu_custom_call.1} parent=11 // pred_check
          %p486 = pneg %p143
        $region26: #{tpu_custom_call.1} parent=11 // pred_check_branch
          %488 = sbr.rel (%p486) target = $region28
        $region27: #{tpu_custom_call.1} parent=11 // pred_region
          _
        $region28: #{tpu_custom_call.1} parent=11 // pred_fallthru
          _
        // Predicated region
        $region29: #{tpu_custom_call.1} parent=11 // pred_check
          %p489 = pneg %p164
        $region30: #{tpu_custom_call.1} parent=11 // pred_check_branch
          %491 = sbr.rel (%p489) target = $region32
        $region31: #{tpu_custom_call.1} parent=11 // pred_region
          _
        $region32: #{tpu_custom_call.1} parent=11 // pred_fallthru
          _
        // Predicated region
        $region33: #{tpu_custom_call.1} parent=11 // pred_check
          %p492 = pneg %p185
        $region34: #{tpu_custom_call.1} parent=11 // pred_check_branch
          %494 = sbr.rel (%p492) target = $region36
        $region35: #{tpu_custom_call.1} parent=11 // pred_region
          _
        $region36: #{tpu_custom_call.1} parent=11 // pred_fallthru
          _
        // Predicated region
        $region37: #{tpu_custom_call.1} parent=11 // pred_check
          %p495 = pneg %p206
        $region38: #{tpu_custom_call.1} parent=11 // pred_check_branch
          %497 = sbr.rel (%p495) target = $region40
        $region39: #{tpu_custom_call.1} parent=11 // pred_region
          %s499 = ssub.s32 64, 64
          %500 = vsyncadd [#allocation9], %s499
          %s501 = sshll.u32 [#allocation8], 4
          %s502 = int_to_ptr.vmem [resolvable:$true] %s501
          %507 = dma.hbm_to_vmem [thread:$0]  %s7, 64, %s502, [#allocation9], 16, 16, 1
        $region40: #{tpu_custom_call.1} parent=11 // pred_fallthru
          _
        // Predicated region
        $region41: #{tpu_custom_call.1} parent=11 // pred_check
          %p508 = pneg %p227
        $region42: #{tpu_custom_call.1} parent=11 // pred_check_branch
          %510 = sbr.rel (%p508) target = $region44
        $region43: #{tpu_custom_call.1} parent=11 // pred_region
          %s512 = ssub.s32 64, 64
          %513 = vsyncadd [#allocation9], %s512
          %s514 = sshll.u32 [#allocation10], 4
          %s515 = int_to_ptr.vmem [resolvable:$true] %s514
          %520 = dma.hbm_to_vmem [thread:$0]  %s8, 64, %s515, [#allocation9], 16, 16, 1
        $region44: #{tpu_custom_call.1} parent=11 // pred_fallthru
          _
        // Predicated region
        $region45: #{tpu_custom_call.1} parent=11 // pred_check
          %p521 = pneg %p248
        $region46: #{tpu_custom_call.1} parent=11 // pred_check_branch
          %523 = sbr.rel (%p521) target = $region48
        $region47: #{tpu_custom_call.1} parent=11 // pred_region
          %s525 = ssub.s32 64, 64
          %526 = vsyncadd [#allocation12], %s525
          %s527 = sshll.u32 [#allocation11], 4
          %s528 = int_to_ptr.vmem [resolvable:$true] %s527
          %533 = dma.hbm_to_vmem [thread:$0]  %s9, 64, %s528, [#allocation12], 16, 16, 1
        $region48: #{tpu_custom_call.1} parent=11 // pred_fallthru
          _
        // Predicated region
        $region49: #{tpu_custom_call.1} parent=11 // pred_check
          %p534 = pneg %p269
        $region50: #{tpu_custom_call.1} parent=11 // pred_check_branch
          %536 = sbr.rel (%p534) target = $region52
        $region51: #{tpu_custom_call.1} parent=11 // pred_region
          _
        $region52: #{tpu_custom_call.1} parent=11 // pred_fallthru
          _
        // Predicated region
        $region53: #{tpu_custom_call.1} parent=11 // pred_check
          %p537 = pneg %p290
        $region54: #{tpu_custom_call.1} parent=11 // pred_check_branch
          %539 = sbr.rel (%p537) target = $region56
        $region55: #{tpu_custom_call.1} parent=11 // pred_region
          %s541 = ssub.s32 128, 128
          %542 = vsyncadd [#allocation12], %s541
          %s543 = sshll.u32 [#allocation13], 4
          %s544 = int_to_ptr.vmem [resolvable:$true] %s543
          %549 = dma.hbm_to_vmem [thread:$0]  %s11, 128, %s544, [#allocation12], 32, 32, 2
        $region56: #{tpu_custom_call.1} parent=11 // pred_fallthru
          _
        // Predicated region
        $region57: #{tpu_custom_call.1} parent=11 // pred_check
          %p550 = pneg %p311
        $region58: #{tpu_custom_call.1} parent=11 // pred_check_branch
          %552 = sbr.rel (%p550) target = $region60
        $region59: #{tpu_custom_call.1} parent=11 // pred_region
          _
        $region60: #{tpu_custom_call.1} parent=11 // pred_fallthru
          _
        // Predicated region
        $region61: #{tpu_custom_call.1} parent=11 // pred_check
          %p553 = pneg %p332
        $region62: #{tpu_custom_call.1} parent=11 // pred_check_branch
          %555 = sbr.rel (%p553) target = $region64
        $region63: #{tpu_custom_call.1} parent=11 // pred_region
          _
        $region64: #{tpu_custom_call.1} parent=11 // pred_fallthru
          _
        // Predicated region
        $region65: #{tpu_custom_call.1} parent=11 // pred_check
          %p556 = pneg %p353
        $region66: #{tpu_custom_call.1} parent=11 // pred_check_branch
          %558 = sbr.rel (%p556) target = $region68
        $region67: #{tpu_custom_call.1} parent=11 // pred_region
          _
        $region68: #{tpu_custom_call.1} parent=11 // pred_fallthru
          _
        // Predicated region
        $region69: #{tpu_custom_call.1} parent=11 // pred_check
          %p559 = pneg %p374
        $region70: #{tpu_custom_call.1} parent=11 // pred_check_branch
          %561 = sbr.rel (%p559) target = $region72
        $region71: #{tpu_custom_call.1} parent=11 // pred_region
          _
        $region72: #{tpu_custom_call.1} parent=11 // pred_fallthru
          _
        // Predicated region
        $region73: #{tpu_custom_call.1} parent=11 // pred_check
          %p562 = pneg %p395
        $region74: #{tpu_custom_call.1} parent=11 // pred_check_branch
          %564 = sbr.rel (%p562) target = $region76
        $region75: #{tpu_custom_call.1} parent=11 // pred_region
          _
        $region76: #{tpu_custom_call.1} parent=11 // pred_fallthru
          _
        // Predicated region
        $region77: #{tpu_custom_call.1} parent=11 // pred_check
          %p565 = pneg %p416
        $region78: #{tpu_custom_call.1} parent=11 // pred_check_branch
          %567 = sbr.rel (%p565) target = $region80
        $region79: #{tpu_custom_call.1} parent=11 // pred_region
          _
        $region80: #{tpu_custom_call.1} parent=11 // pred_fallthru
          _
      $region12: #{tpu_custom_call.1} parent=5 // pred_fallthru
        _
      %p568 = scmp.lt.s32.totalorder %s33, 2
      // Predicated region
      $region81: #{tpu_custom_call.1} parent=5 // pred_check
        %p569 = pneg %p568
      $region82: #{tpu_custom_call.1} parent=5 // pred_check_branch
        %571 = sbr.rel (%p569) target = $region84
      $region83: #{tpu_custom_call.1} parent=5 // pred_region
        // Predicated region
        $region85: #{tpu_custom_call.1} parent=83 // pred_check
          %p572 = pneg %p53
        $region86: #{tpu_custom_call.1} parent=83 // pred_check_branch
          %574 = sbr.rel (%p572) target = $region88
        $region87: #{tpu_custom_call.1} parent=83 // pred_region
          %s575 = sand.u32 %s43, 1
          %s576 = scalar_lea.sflag [#allocation3], %s575
          %s577 = sand.u32 %s43, 1
          %s578 = smul.addr %s577, 4
          %s579 = scalar_lea.vmem [#allocation2], %s578
          %s581 = ssub.s32 64, 64
          %582 = vsyncadd %s576, %s581
          %s583 = smul.addr %s33, 64
          %s584 = scalar_lea.hbm %s0, %s583
          %s586 = sshll.u32 %s579, 4
          %s587 = int_to_ptr.vmem [resolvable:$true] %s586
          %589 = dma.hbm_to_vmem [thread:$0]  %s584, 64, %s587, %s576
        $region88: #{tpu_custom_call.1} parent=83 // pred_fallthru
          _
      $region84: #{tpu_custom_call.1} parent=5 // pred_fallthru
        _
      %p590 = scmp.le.s32.totalorder 1, %s33
      %p591 = scmp.lt.s32.totalorder %s33, 3
      %p592 = pnand %p590, %p591
      %p593 = pneg %p592
      // Predicated region
      $region89: #{tpu_custom_call.1} parent=5 // pred_check
        _
      $region90: #{tpu_custom_call.1} parent=5 // pred_check_branch
        %595 = sbr.rel (%p592) target = $region92
      $region91: #{tpu_custom_call.1} parent=5 // pred_region
        %s596 = ssub.s32 %s33, 1
        %s597 = sand.u32 %s46, 1
        %s598 = scalar_lea.sflag [#allocation3], %s597
        %s599 = sand.u32 %s46, 1
        %s600 = smul.addr %s599, 4
        %s601 = scalar_lea.vmem [#allocation2], %s600
        // Predicated region
        $region93: #{tpu_custom_call.1} parent=91 // pred_check
          %p602 = pneg %p59
        $region94: #{tpu_custom_call.1} parent=91 // pred_check_branch
          %604 = sbr.rel (%p602) target = $region96
        $region95: #{tpu_custom_call.1} parent=91 // pred_region
          %605 = dma.done %s598, 64
        $region96: #{tpu_custom_call.1} parent=91 // pred_fallthru
          _
        // Predicated region
        $region97: #{tpu_custom_call.1} parent=91 // pred_check
          %p606 = pneg %p80
        $region98: #{tpu_custom_call.1} parent=91 // pred_check_branch
          %608 = sbr.rel (%p606) target = $region100
        $region99: #{tpu_custom_call.1} parent=91 // pred_region
          %609 = dma.done [#allocation6], 64
        $region100: #{tpu_custom_call.1} parent=91 // pred_fallthru
          _
        // Predicated region
        $region101: #{tpu_custom_call.1} parent=91 // pred_check
          %p610 = pneg %p101
        $region102: #{tpu_custom_call.1} parent=91 // pred_check_branch
          %612 = sbr.rel (%p610) target = $region104
        $region103: #{tpu_custom_call.1} parent=91 // pred_region
          %613 = dma.done [#allocation6], 64
        $region104: #{tpu_custom_call.1} parent=91 // pred_fallthru
          _
        // Predicated region
        $region105: #{tpu_custom_call.1} parent=91 // pred_check
          %p614 = pneg %p206
        $region106: #{tpu_custom_call.1} parent=91 // pred_check_branch
          %616 = sbr.rel (%p614) target = $region108
        $region107: #{tpu_custom_call.1} parent=91 // pred_region
          %617 = dma.done [#allocation9], 64
        $region108: #{tpu_custom_call.1} parent=91 // pred_fallthru
          _
        // Predicated region
        $region109: #{tpu_custom_call.1} parent=91 // pred_check
          %p618 = pneg %p227
        $region110: #{tpu_custom_call.1} parent=91 // pred_check_branch
          %620 = sbr.rel (%p618) target = $region112
        $region111: #{tpu_custom_call.1} parent=91 // pred_region
          %621 = dma.done [#allocation9], 64
        $region112: #{tpu_custom_call.1} parent=91 // pred_fallthru
          _
        // Predicated region
        $region113: #{tpu_custom_call.1} parent=91 // pred_check
          %p622 = pneg %p248
        $region114: #{tpu_custom_call.1} parent=91 // pred_check_branch
          %624 = sbr.rel (%p622) target = $region116
        $region115: #{tpu_custom_call.1} parent=91 // pred_region
          %625 = dma.done [#allocation12], 64
        $region116: #{tpu_custom_call.1} parent=91 // pred_fallthru
          _
        // Predicated region
        $region117: #{tpu_custom_call.1} parent=91 // pred_check
          %p626 = pneg %p290
        $region118: #{tpu_custom_call.1} parent=91 // pred_check_branch
          %628 = sbr.rel (%p626) target = $region120
        $region119: #{tpu_custom_call.1} parent=91 // pred_region
          %629 = dma.done [#allocation12], 128
        $region120: #{tpu_custom_call.1} parent=91 // pred_fallthru
          _
        %s630 = sand.u32 %s46, 1
        %s631 = scalar_lea.sflag [#allocation3], %s630
        %s632 = sand.u32 %s46, 1
        %s633 = smul.addr %s632, 4
        %s634 = scalar_lea.vmem [#allocation2], %s633
        %p635 = pneg %p59
        %p636 = pneg %p56
        %p637 = pneg %p80
        %p638 = pneg %p77
        %p639 = pneg %p101
        %p640 = pneg %p98
        %p641 = pneg %p122
        %p642 = pneg %p119
        %p643 = pneg %p143
        %p644 = pneg %p140
        %p645 = pneg %p164
        %p646 = pneg %p161
        %p647 = pneg %p185
        %p648 = pneg %p182
        %p649 = pneg %p206
        %p650 = pneg %p203
        %p651 = pneg %p227
        %p652 = pneg %p224
        %p653 = pneg %p248
        %p654 = pneg %p245
        %p655 = pneg %p269
        %p656 = pneg %p266
        %p657 = pneg %p290
        %p658 = pneg %p287
        %p659 = pneg %p311
        %p660 = pneg %p308
        %p661 = pneg %p332
        %p662 = pneg %p329
        %p663 = pneg %p353
        %p664 = pneg %p350
        %p665 = pneg %p374
        %p666 = pneg %p371
        %p667 = pneg %p395
        %p668 = pneg %p392
        %p669 = pneg %p416
        %p670 = pneg %p413
        %p671 = pneg %p442
        %p672 = pneg %p439
        %s673 = sand.u32 %s429, 1
        %s674 = scalar_lea.sflag [#allocation4], %s673
        %s675 = sand.u32 %s429, 1
        %s676 = smul.addr %s675, 4
        %s677 = scalar_lea.vmem [#allocation14], %s676
        %v679 = vld [vmem:[%s601] sm:$0xf]
        %v680 = vunpack.c.l.bf16 %v679
        %v681 = vlaneseq
        %v682 = vshrl.u32 %v681, 7
        %v683 = vlaneseq
        %v684 = vand.u32 %v683, 127
        %vm685 = vcmp.le.s32.totalorder %v684, %v682
        %v686 = vsel %vm685, 0.0, -1e+30
        %v687 = vld [vmem:[#allocation5] sm:$0x1]
        %v688 = vld [vmem:[#allocation7] sm:$0x1]
        %vm689 = vcmask 523264
        %v690 = vsel %vm689, %v680, 0.0
        %691 = vadd.xlane.f32.xlu0 %v690
        %v692 = vpop.xlane.xlu0 %691
        %v693 = vrcp.pop 64.0
        %v694 = vmul.f32 %v692, %v693
        %v695 = vsub.f32 %v680, %v694
        %v696 = vmul.f32 %v695, %v695
        %v697 = vsel %vm689, %v696, 0.0
        %698 = vadd.xlane.f32.xlu0 %v697
        %v699 = vpop.xlane.xlu0 %698
        %v700 = vmul.f32 %v699, %v693
        %v701 = vadd.f32 %v700, 1e-05
        %v702 = vrsqrt.pop %v701
        %v703 = vmul.f32 %v695, %v702
        %v705 = vlaneseq
        %v706 = vshrl.u32 %v705, 7
        %v707 = vsub.s32 0, %v706
        %v708 = vrot.slane %v687, %v707
        %v710 = vmul.f32 %v703, %v708
        %v712 = vlaneseq
        %v713 = vshrl.u32 %v712, 7
        %v714 = vsub.s32 0, %v713
        %v715 = vrot.slane %v688, %v714
        %v717 = vadd.f32 %v710, %v715
        %v718 = vpack.c.bf16 %v717, %v717
        %v719 = vld [vmem:[%s3] sm:$0xf]
        %v720 = vld [vmem:[%s3 + $0x4] sm:$0xf]
        %v721 = vld [vmem:[%s3 + $0x8] sm:$0xf]
        %v722 = vld [vmem:[%s3 + $0xc] sm:$0xf]
        %v723 = vld [vmem:[%s3 + $0x10] sm:$0xf]
        %v724 = vld [vmem:[%s3 + $0x14] sm:$0xf]
        %v725 = vld [vmem:[%s3 + $0x18] sm:$0xf]
        %v726 = vld [vmem:[%s3 + $0x1c] sm:$0xf]
        %v735 = vunpack.c.l.b16 %v719
        %v736 = vunpack.c.l.b16 %v720
        %v737 = vunpack.c.l.b16 %v721
        %v738 = vunpack.c.l.b16 %v722
        %v739 = vunpack.c.l.b16 %v723
        %v740 = vunpack.c.l.b16 %v724
        %v741 = vunpack.c.l.b16 %v725
        %v742 = vunpack.c.l.b16 %v726
        %v743 = vpack.c.b16 %v736, %v735
        %v744 = vpack.c.b16 %v738, %v737
        %v745 = vpack.c.b16 %v740, %v739
        %v746 = vpack.c.b16 %v742, %v741
        %v752 = vsel %vm689, %v718, 0
        %754 = vmatprep.subr.bf16.mxu0 0
        %755 = vmatpush1.bf16.msra.mxu0 %v743
        %756 = vmatprep.subr.bf16.mxu0 0
        %757 = vmatpush1.bf16.msra.mxu0 %v744
        %758 = vmatprep.subr.bf16.mxu0 0
        %759 = vmatpush1.bf16.msra.mxu0 %v745
        %760 = vmatprep.subr.bf16.mxu0 0
        %761 = vmatpush1.bf16.msra.mxu0 %v746
        %762 = vmatprep.subr.bf16.mxu0 0
        %763 = vmatpush1.bf16.msra.mxu0 0
        %764 = vmatprep.subr.bf16.mxu0 0
        %765 = vmatpush1.bf16.msra.mxu0 0
        %766 = vmatprep.subr.bf16.mxu0 0
        %767 = vmatpush1.bf16.msra.mxu0 0
        %768 = vmatprep.subr.bf16.mxu0 0
        %769 = vmatpush1.bf16.msra.mxu0 0
        %770 = vmatprep.subr.bf16.mxu0 0
        %771 = vmatpush1.bf16.msra.mxu0 0
        %772 = vmatprep.subr.bf16.mxu0 0
        %773 = vmatpush1.bf16.msra.mxu0 0
        %774 = vmatprep.subr.bf16.mxu0 0
        %775 = vmatpush1.bf16.msra.mxu0 0
        %776 = vmatprep.subr.bf16.mxu0 0
        %777 = vmatpush1.bf16.msra.mxu0 0
        %778 = vmatprep.subr.bf16.mxu0 0
        %779 = vmatpush1.bf16.msra.mxu0 0
        %780 = vmatprep.subr.bf16.mxu0 0
        %781 = vmatpush1.bf16.msra.mxu0 0
        %782 = vmatprep.subr.bf16.mxu0 0
        %783 = vmatpush1.bf16.msra.mxu0 0
        %784 = vmatprep.subr.bf16.mxu0 0
        %785 = vmatpush1.bf16.msra.mxu0 0
        %786 = vmatprep.mubr.bf16.mxu0 0
        %787 = vmatmul.mubr.bf16.gmra.mrb[0].mxu0 %v752
        %v788 = vpop.f32.mrb[0].mxu0
        %v789 = vadd.f32 0.0, %v788
        %v790 = vpop.f32.mrb[0].mxu0
        %v791 = vpop.f32.mrb[0].mxu0
        %v792 = vpop.f32.mrb[0].mxu0
        %793 = vdwg.mxu0
        %v794 = vld [vmem:[%s4] sm:$0xf]
        %v795 = vld [vmem:[%s4 + $0x4] sm:$0xf]
        %v796 = vld [vmem:[%s4 + $0x8] sm:$0xf]
        %v797 = vld [vmem:[%s4 + $0xc] sm:$0xf]
        %v798 = vld [vmem:[%s4 + $0x10] sm:$0xf]
        %v799 = vld [vmem:[%s4 + $0x14] sm:$0xf]
        %v800 = vld [vmem:[%s4 + $0x18] sm:$0xf]
        %v801 = vld [vmem:[%s4 + $0x1c] sm:$0xf]
        %v810 = vunpack.c.l.b16 %v794
        %v811 = vunpack.c.l.b16 %v795
        %v812 = vunpack.c.l.b16 %v796
        %v813 = vunpack.c.l.b16 %v797
        %v814 = vunpack.c.l.b16 %v798
        %v815 = vunpack.c.l.b16 %v799
        %v816 = vunpack.c.l.b16 %v800
        %v817 = vunpack.c.l.b16 %v801
        %v818 = vpack.c.b16 %v811, %v810
        %v819 = vpack.c.b16 %v813, %v812
        %v820 = vpack.c.b16 %v815, %v814
        %v821 = vpack.c.b16 %v817, %v816
        %826 = vmatprep.subr.bf16.mxu0 0
        %827 = vmatpush1.bf16.msra.mxu0 %v818
        %828 = vmatprep.subr.bf16.mxu0 0
        %829 = vmatpush1.bf16.msra.mxu0 %v819
        %830 = vmatprep.subr.bf16.mxu0 0
        %831 = vmatpush1.bf16.msra.mxu0 %v820
        %832 = vmatprep.subr.bf16.mxu0 0
        %833 = vmatpush1.bf16.msra.mxu0 %v821
        %834 = vmatprep.subr.bf16.mxu0 0
        %835 = vmatpush1.bf16.msra.mxu0 0
        %836 = vmatprep.subr.bf16.mxu0 0
        %837 = vmatpush1.bf16.msra.mxu0 0
        %838 = vmatprep.subr.bf16.mxu0 0
        %839 = vmatpush1.bf16.msra.mxu0 0
        %840 = vmatprep.subr.bf16.mxu0 0
        %841 = vmatpush1.bf16.msra.mxu0 0
        %842 = vmatprep.subr.bf16.mxu0 0
        %843 = vmatpush1.bf16.msra.mxu0 0
        %844 = vmatprep.subr.bf16.mxu0 0
        %845 = vmatpush1.bf16.msra.mxu0 0
        %846 = vmatprep.subr.bf16.mxu0 0
        %847 = vmatpush1.bf16.msra.mxu0 0
        %848 = vmatprep.subr.bf16.mxu0 0
        %849 = vmatpush1.bf16.msra.mxu0 0
        %850 = vmatprep.subr.bf16.mxu0 0
        %851 = vmatpush1.bf16.msra.mxu0 0
        %852 = vmatprep.subr.bf16.mxu0 0
        %853 = vmatpush1.bf16.msra.mxu0 0
        %854 = vmatprep.subr.bf16.mxu0 0
        %855 = vmatpush1.bf16.msra.mxu0 0
        %856 = vmatprep.subr.bf16.mxu0 0
        %857 = vmatpush1.bf16.msra.mxu0 0
        %858 = vmatprep.mubr.bf16.mxu0 0
        %859 = vmatmul.mubr.bf16.gmra.mrb[0].mxu0 %v752
        %v860 = vpop.f32.mrb[0].mxu0
        %v861 = vadd.f32 0.0, %v860
        %v862 = vpop.f32.mrb[0].mxu0
        %v863 = vpop.f32.mrb[0].mxu0
        %v864 = vpop.f32.mrb[0].mxu0
        %865 = vdwg.mxu0
        %v866 = vld [vmem:[%s5] sm:$0xf]
        %v867 = vld [vmem:[%s5 + $0x4] sm:$0xf]
        %v868 = vld [vmem:[%s5 + $0x8] sm:$0xf]
        %v869 = vld [vmem:[%s5 + $0xc] sm:$0xf]
        %v870 = vld [vmem:[%s5 + $0x10] sm:$0xf]
        %v871 = vld [vmem:[%s5 + $0x14] sm:$0xf]
        %v872 = vld [vmem:[%s5 + $0x18] sm:$0xf]
        %v873 = vld [vmem:[%s5 + $0x1c] sm:$0xf]
        %v882 = vunpack.c.l.b16 %v866
        %v883 = vunpack.c.l.b16 %v867
        %v884 = vunpack.c.l.b16 %v868
        %v885 = vunpack.c.l.b16 %v869
        %v886 = vunpack.c.l.b16 %v870
        %v887 = vunpack.c.l.b16 %v871
        %v888 = vunpack.c.l.b16 %v872
        %v889 = vunpack.c.l.b16 %v873
        %v890 = vpack.c.b16 %v883, %v882
        %v891 = vpack.c.b16 %v885, %v884
        %v892 = vpack.c.b16 %v887, %v886
        %v893 = vpack.c.b16 %v889, %v888
        %898 = vmatprep.subr.bf16.mxu0 0
        %899 = vmatpush1.bf16.msra.mxu0 %v890
        %900 = vmatprep.subr.bf16.mxu0 0
        %901 = vmatpush1.bf16.msra.mxu0 %v891
        %902 = vmatprep.subr.bf16.mxu0 0
        %903 = vmatpush1.bf16.msra.mxu0 %v892
        %904 = vmatprep.subr.bf16.mxu0 0
        %905 = vmatpush1.bf16.msra.mxu0 %v893
        %906 = vmatprep.subr.bf16.mxu0 0
        %907 = vmatpush1.bf16.msra.mxu0 0
        %908 = vmatprep.subr.bf16.mxu0 0
        %909 = vmatpush1.bf16.msra.mxu0 0
        %910 = vmatprep.subr.bf16.mxu0 0
        %911 = vmatpush1.bf16.msra.mxu0 0
        %912 = vmatprep.subr.bf16.mxu0 0
        %913 = vmatpush1.bf16.msra.mxu0 0
        %914 = vmatprep.subr.bf16.mxu0 0
        %915 = vmatpush1.bf16.msra.mxu0 0
        %916 = vmatprep.subr.bf16.mxu0 0
        %917 = vmatpush1.bf16.msra.mxu0 0
        %918 = vmatprep.subr.bf16.mxu0 0
        %919 = vmatpush1.bf16.msra.mxu0 0
        %920 = vmatprep.subr.bf16.mxu0 0
        %921 = vmatpush1.bf16.msra.mxu0 0
        %922 = vmatprep.subr.bf16.mxu0 0
        %923 = vmatpush1.bf16.msra.mxu0 0
        %924 = vmatprep.subr.bf16.mxu0 0
        %925 = vmatpush1.bf16.msra.mxu0 0
        %926 = vmatprep.subr.bf16.mxu0 0
        %927 = vmatpush1.bf16.msra.mxu0 0
        %928 = vmatprep.subr.bf16.mxu0 0
        %929 = vmatpush1.bf16.msra.mxu0 0
        %930 = vmatprep.mubr.bf16.mxu0 0
        %931 = vmatmul.mubr.bf16.gmra.mrb[0].mxu0 %v752
        %v932 = vpop.f32.mrb[0].mxu0
        %v933 = vadd.f32 0.0, %v932
        %v934 = vpop.f32.mrb[0].mxu0
        %v935 = vpop.f32.mrb[0].mxu0
        %v936 = vpop.f32.mrb[0].mxu0
        %937 = vdwg.mxu0
        %v938 = vpack.c.bf16 %v789, %v789
        %v939 = vpack.c.bf16 %v861, %v861
        %v940 = vpack.c.bf16 %v933, %v933
        %v941 = vld [vmem:[%s6] sm:$0xf]
        %v942 = vld [vmem:[%s6 + $0x4] sm:$0xf]
        %v943 = vld [vmem:[%s6 + $0x8] sm:$0xf]
        %v944 = vld [vmem:[%s6 + $0xc] sm:$0xf]
        %v945 = vld [vmem:[%s6 + $0x10] sm:$0xf]
        %v946 = vld [vmem:[%s6 + $0x14] sm:$0xf]
        %v947 = vld [vmem:[%s6 + $0x18] sm:$0xf]
        %v948 = vld [vmem:[%s6 + $0x1c] sm:$0xf]
        %vm949 = vcmask 130048
        %v951 = vsel %vm949, %v938, 0
        %v954 = vsel %vm949, %v939, 0
        %956 = vmatprep.subr.bf16.mxu0 0
        %957 = vmatpush1.bf16.xpose.msra.mxu0 %v954
        %958 = vmatprep.subr.bf16.mxu0 0
        %959 = vmatpush1.bf16.xpose.msra.mxu0 0
        %960 = vmatprep.subr.bf16.mxu0 0
        %961 = vmatpush1.bf16.xpose.msra.mxu0 0
        %962 = vmatprep.subr.bf16.mxu0 0
        %963 = vmatpush1.bf16.xpose.msra.mxu0 0
        %964 = vmatprep.subr.bf16.mxu0 0
        %965 = vmatpush1.bf16.xpose.msra.mxu0 0
        %966 = vmatprep.subr.bf16.mxu0 0
        %967 = vmatpush1.bf16.xpose.msra.mxu0 0
        %968 = vmatprep.subr.bf16.mxu0 0
        %969 = vmatpush1.bf16.xpose.msra.mxu0 0
        %970 = vmatprep.subr.bf16.mxu0 0
        %971 = vmatpush1.bf16.xpose.msra.mxu0 0
        %972 = vmatprep.subr.bf16.mxu0 0
        %973 = vmatpush1.bf16.xpose.msra.mxu0 0
        %974 = vmatprep.subr.bf16.mxu0 0
        %975 = vmatpush1.bf16.xpose.msra.mxu0 0
        %976 = vmatprep.subr.bf16.mxu0 0
        %977 = vmatpush1.bf16.xpose.msra.mxu0 0
        %978 = vmatprep.subr.bf16.mxu0 0
        %979 = vmatpush1.bf16.xpose.msra.mxu0 0
        %980 = vmatprep.subr.bf16.mxu0 0
        %981 = vmatpush1.bf16.xpose.msra.mxu0 0
        %982 = vmatprep.subr.bf16.mxu0 0
        %983 = vmatpush1.bf16.xpose.msra.mxu0 0
        %984 = vmatprep.subr.bf16.mxu0 0
        %985 = vmatpush1.bf16.xpose.msra.mxu0 0
        %986 = vmatprep.subr.bf16.mxu0 0
        %987 = vmatpush1.bf16.xpose.msra.mxu0 0
        %988 = vmatprep.mubr.bf16.mxu0 0
        %989 = vmatmul.mubr.bf16.gmra.mrb[0].mxu0 %v951
        %v990 = vpop.f32.mrb[0].mxu0
        %v991 = vadd.f32 %v686, %v990
        %v992 = vpop.f32.mrb[0].mxu0
        %v993 = vpop.f32.mrb[0].mxu0
        %v994 = vpop.f32.mrb[0].mxu0
        %995 = vdwg.mxu0
        %vm996 = vcmask 64512
        %v997 = vsel %vm996, %v991, -inf
        %998 = vmax.xlane.f32.xlu0 %v997
        %v999 = vpop.xlane.xlu0 %998
        %v1000 = vsub.f32 %v991, %v999
        %v1001 = vmul.f32 %v1000, 1.442695
        %v1002 = vpow.pop %v1001
        %v1003 = vsel %vm996, %v1002, 0.0
        %1004 = vadd.xlane.f32.xlu0 %v1003
        %v1005 = vpop.xlane.xlu0 %1004
        %v1006 = vrcp.pop %v1005
        %v1007 = vmul.f32 %v1002, %v1006
        %v1008 = vpack.c.bf16 %v1007, %v1007
        %v1010 = vsel %vm996, %v1008, 0
        %vm1012 = vcmask 1043456
        %v1014 = vsel %vm1012, %v940, 0
        %1016 = vmatprep.subr.bf16.mxu0 0
        %1017 = vmatpush1.bf16.msra.mxu0 %v1014
        %1018 = vmatprep.subr.bf16.mxu0 0
        %1019 = vmatpush1.bf16.msra.mxu0 0
        %1020 = vmatprep.subr.bf16.mxu0 0
        %1021 = vmatpush1.bf16.msra.mxu0 0
        %1022 = vmatprep.subr.bf16.mxu0 0
        %1023 = vmatpush1.bf16.msra.mxu0 0
        %1024 = vmatprep.subr.bf16.mxu0 0
        %1025 = vmatpush1.bf16.msra.mxu0 0
        %1026 = vmatprep.subr.bf16.mxu0 0
        %1027 = vmatpush1.bf16.msra.mxu0 0
        %1028 = vmatprep.subr.bf16.mxu0 0
        %1029 = vmatpush1.bf16.msra.mxu0 0
        %1030 = vmatprep.subr.bf16.mxu0 0
        %1031 = vmatpush1.bf16.msra.mxu0 0
        %1032 = vmatprep.subr.bf16.mxu0 0
        %1033 = vmatpush1.bf16.msra.mxu0 0
        %1034 = vmatprep.subr.bf16.mxu0 0
        %1035 = vmatpush1.bf16.msra.mxu0 0
        %1036 = vmatprep.subr.bf16.mxu0 0
        %1037 = vmatpush1.bf16.msra.mxu0 0
        %1038 = vmatprep.subr.bf16.mxu0 0
        %1039 = vmatpush1.bf16.msra.mxu0 0
        %1040 = vmatprep.subr.bf16.mxu0 0
        %1041 = vmatpush1.bf16.msra.mxu0 0
        %1042 = vmatprep.subr.bf16.mxu0 0
        %1043 = vmatpush1.bf16.msra.mxu0 0
        %1044 = vmatprep.subr.bf16.mxu0 0
        %1045 = vmatpush1.bf16.msra.mxu0 0
        %1046 = vmatprep.subr.bf16.mxu0 0
        %1047 = vmatpush1.bf16.msra.mxu0 0
        %1048 = vmatprep.mubr.bf16.mxu0 0
        %1049 = vmatmul.mubr.bf16.gmra.mrb[0].mxu0 %v1010
        %v1050 = vpop.f32.mrb[0].mxu0
        %v1051 = vadd.f32 0.0, %v1050
        %v1052 = vpop.f32.mrb[0].mxu0
        %v1053 = vpop.f32.mrb[0].mxu0
        %v1054 = vpop.f32.mrb[0].mxu0
        %1055 = vdwg.mxu0
        %v1056 = vpack.c.bf16 %v1051, %v1051
        %1058 = vrot.lane.b32.xlu0 %v938, 112
        %v1059 = vpop.permute.xlu0 %1058
        %1061 = vrot.lane.b32.xlu0 %v939, 112
        %v1062 = vpop.permute.xlu0 %1061
        %v1064 = vsel %vm949, %v1059, 0
        %v1067 = vsel %vm949, %v1062, 0
        %1069 = vmatprep.subr.bf16.mxu0 0
        %1070 = vmatpush1.bf16.xpose.msra.mxu0 %v1067
        %1071 = vmatprep.subr.bf16.mxu0 0
        %1072 = vmatpush1.bf16.xpose.msra.mxu0 0
        %1073 = vmatprep.subr.bf16.mxu0 0
        %1074 = vmatpush1.bf16.xpose.msra.mxu0 0
        %1075 = vmatprep.subr.bf16.mxu0 0
        %1076 = vmatpush1.bf16.xpose.msra.mxu0 0
        %1077 = vmatprep.subr.bf16.mxu0 0
        %1078 = vmatpush1.bf16.xpose.msra.mxu0 0
        %1079 = vmatprep.subr.bf16.mxu0 0
        %1080 = vmatpush1.bf16.xpose.msra.mxu0 0
        %1081 = vmatprep.subr.bf16.mxu0 0
        %1082 = vmatpush1.bf16.xpose.msra.mxu0 0
        %1083 = vmatprep.subr.bf16.mxu0 0
        %1084 = vmatpush1.bf16.xpose.msra.mxu0 0
        %1085 = vmatprep.subr.bf16.mxu0 0
        %1086 = vmatpush1.bf16.xpose.msra.mxu0 0
        %1087 = vmatprep.subr.bf16.mxu0 0
        %1088 = vmatpush1.bf16.xpose.msra.mxu0 0
        %1089 = vmatprep.subr.bf16.mxu0 0
        %1090 = vmatpush1.bf16.xpose.msra.mxu0 0
        %1091 = vmatprep.subr.bf16.mxu0 0
        %1092 = vmatpush1.bf16.xpose.msra.mxu0 0
        %1093 = vmatprep.subr.bf16.mxu0 0
        %1094 = vmatpush1.bf16.xpose.msra.mxu0 0
        %1095 = vmatprep.subr.bf16.mxu0 0
        %1096 = vmatpush1.bf16.xpose.msra.mxu0 0
        %1097 = vmatprep.subr.bf16.mxu0 0
        %1098 = vmatpush1.bf16.xpose.msra.mxu0 0
        %1099 = vmatprep.subr.bf16.mxu0 0
        %1100 = vmatpush1.bf16.xpose.msra.mxu0 0
        %1101 = vmatprep.mubr.bf16.mxu0 0
        %1102 = vmatmul.mubr.bf16.gmra.mrb[0].mxu0 %v1064
        %v1103 = vpop.f32.mrb[0].mxu0
        %v1104 = vadd.f32 %v686, %v1103
        %v1105 = vpop.f32.mrb[0].mxu0
        %v1106 = vpop.f32.mrb[0].mxu0
        %v1107 = vpop.f32.mrb[0].mxu0
        %1108 = vdwg.mxu0
        %v1109 = vsel %vm996, %v1104, -inf
        %1110 = vmax.xlane.f32.xlu0 %v1109
        %v1111 = vpop.xlane.xlu0 %1110
        %v1112 = vsub.f32 %v1104, %v1111
        %v1113 = vmul.f32 %v1112, 1.442695
        %v1114 = vpow.pop %v1113
        %v1115 = vsel %vm996, %v1114, 0.0
        %1116 = vadd.xlane.f32.xlu0 %v1115
        %v1117 = vpop.xlane.xlu0 %1116
        %v1118 = vrcp.pop %v1117
        %v1119 = vmul.f32 %v1114, %v1118
        %v1120 = vpack.c.bf16 %v1119, %v1119
        %1122 = vrot.lane.b32.xlu0 %v940, 112
        %v1123 = vpop.permute.xlu0 %1122
        %v1125 = vsel %vm996, %v1120, 0
        %v1128 = vsel %vm1012, %v1123, 0
        %1130 = vmatprep.subr.bf16.mxu0 0
        %1131 = vmatpush1.bf16.msra.mxu0 %v1128
        %1132 = vmatprep.subr.bf16.mxu0 0
        %1133 = vmatpush1.bf16.msra.mxu0 0
        %1134 = vmatprep.subr.bf16.mxu0 0
        %1135 = vmatpush1.bf16.msra.mxu0 0
        %1136 = vmatprep.subr.bf16.mxu0 0
        %1137 = vmatpush1.bf16.msra.mxu0 0
        %1138 = vmatprep.subr.bf16.mxu0 0
        %1139 = vmatpush1.bf16.msra.mxu0 0
        %1140 = vmatprep.subr.bf16.mxu0 0
        %1141 = vmatpush1.bf16.msra.mxu0 0
        %1142 = vmatprep.subr.bf16.mxu0 0
        %1143 = vmatpush1.bf16.msra.mxu0 0
        %1144 = vmatprep.subr.bf16.mxu0 0
        %1145 = vmatpush1.bf16.msra.mxu0 0
        %1146 = vmatprep.subr.bf16.mxu0 0
        %1147 = vmatpush1.bf16.msra.mxu0 0
        %1148 = vmatprep.subr.bf16.mxu0 0
        %1149 = vmatpush1.bf16.msra.mxu0 0
        %1150 = vmatprep.subr.bf16.mxu0 0
        %1151 = vmatpush1.bf16.msra.mxu0 0
        %1152 = vmatprep.subr.bf16.mxu0 0
        %1153 = vmatpush1.bf16.msra.mxu0 0
        %1154 = vmatprep.subr.bf16.mxu0 0
        %1155 = vmatpush1.bf16.msra.mxu0 0
        %1156 = vmatprep.subr.bf16.mxu0 0
        %1157 = vmatpush1.bf16.msra.mxu0 0
        %1158 = vmatprep.subr.bf16.mxu0 0
        %1159 = vmatpush1.bf16.msra.mxu0 0
        %1160 = vmatprep.subr.bf16.mxu0 0
        %1161 = vmatpush1.bf16.msra.mxu0 0
        %1162 = vmatprep.mubr.bf16.mxu0 0
        %1163 = vmatmul.mubr.bf16.gmra.mrb[0].mxu0 %v1125
        %v1164 = vpop.f32.mrb[0].mxu0
        %v1165 = vadd.f32 0.0, %v1164
        %v1166 = vpop.f32.mrb[0].mxu0
        %v1167 = vpop.f32.mrb[0].mxu0
        %v1168 = vpop.f32.mrb[0].mxu0
        %1169 = vdwg.mxu0
        %v1170 = vpack.c.bf16 %v1165, %v1165
        %v1173 = vunpack.c.l.b16 %v943
        %v1174 = vunpack.c.l.b16 %v944
        %v1175 = vpack.c.b16 %v1174, %v1173
        %v1178 = vsel %vm949, %v1170, 0
        %1180 = vmatprep.subr.bf16.mxu0 0
        %1181 = vmatpush1.bf16.msra.mxu0 %v1175
        %1182 = vmatprep.subr.bf16.mxu0 0
        %1183 = vmatpush1.bf16.msra.mxu0 0
        %1184 = vmatprep.subr.bf16.mxu0 0
        %1185 = vmatpush1.bf16.msra.mxu0 0
        %1186 = vmatprep.subr.bf16.mxu0 0
        %1187 = vmatpush1.bf16.msra.mxu0 0
        %1188 = vmatprep.subr.bf16.mxu0 0
        %1189 = vmatpush1.bf16.msra.mxu0 0
        %1190 = vmatprep.subr.bf16.mxu0 0
        %1191 = vmatpush1.bf16.msra.mxu0 0
        %1192 = vmatprep.subr.bf16.mxu0 0
        %1193 = vmatpush1.bf16.msra.mxu0 0
        %1194 = vmatprep.subr.bf16.mxu0 0
        %1195 = vmatpush1.bf16.msra.mxu0 0
        %1196 = vmatprep.subr.bf16.mxu0 0
        %1197 = vmatpush1.bf16.msra.mxu0 0
        %1198 = vmatprep.subr.bf16.mxu0 0
        %1199 = vmatpush1.bf16.msra.mxu0 0
        %1200 = vmatprep.subr.bf16.mxu0 0
        %1201 = vmatpush1.bf16.msra.mxu0 0
        %1202 = vmatprep.subr.bf16.mxu0 0
        %1203 = vmatpush1.bf16.msra.mxu0 0
        %1204 = vmatprep.subr.bf16.mxu0 0
        %1205 = vmatpush1.bf16.msra.mxu0 0
        %1206 = vmatprep.subr.bf16.mxu0 0
        %1207 = vmatpush1.bf16.msra.mxu0 0
        %1208 = vmatprep.subr.bf16.mxu0 0
        %1209 = vmatpush1.bf16.msra.mxu0 0
        %1210 = vmatprep.subr.bf16.mxu0 0
        %1211 = vmatpush1.bf16.msra.mxu0 0
        %1212 = vmatprep.mubr.bf16.mxu0 0
        %1213 = vmatmul.mubr.bf16.gmra.mrb[0].mxu0 %v1178
        %v1214 = vpop.f32.mrb[0].mxu0
        %v1215 = vadd.f32 0.0, %v1214
        %v1216 = vpop.f32.mrb[0].mxu0
        %v1217 = vpop.f32.mrb[0].mxu0
        %v1218 = vpop.f32.mrb[0].mxu0
        %1219 = vdwg.mxu0
        %v1222 = vunpack.c.l.b16 %v941
        %v1223 = vunpack.c.l.b16 %v942
        %v1224 = vpack.c.b16 %v1223, %v1222
        %v1227 = vsel %vm949, %v1056, 0
        %1229 = vmatprep.subr.bf16.mxu0 0
        %1230 = vmatpush1.bf16.msra.mxu0 %v1224
        %1231 = vmatprep.subr.bf16.mxu0 0
        %1232 = vmatpush1.bf16.msra.mxu0 0
        %1233 = vmatprep.subr.bf16.mxu0 0
        %1234 = vmatpush1.bf16.msra.mxu0 0
        %1235 = vmatprep.subr.bf16.mxu0 0
        %1236 = vmatpush1.bf16.msra.mxu0 0
        %1237 = vmatprep.subr.bf16.mxu0 0
        %1238 = vmatpush1.bf16.msra.mxu0 0
        %1239 = vmatprep.subr.bf16.mxu0 0
        %1240 = vmatpush1.bf16.msra.mxu0 0
        %1241 = vmatprep.subr.bf16.mxu0 0
        %1242 = vmatpush1.bf16.msra.mxu0 0
        %1243 = vmatprep.subr.bf16.mxu0 0
        %1244 = vmatpush1.bf16.msra.mxu0 0
        %1245 = vmatprep.subr.bf16.mxu0 0
        %1246 = vmatpush1.bf16.msra.mxu0 0
        %1247 = vmatprep.subr.bf16.mxu0 0
        %1248 = vmatpush1.bf16.msra.mxu0 0
        %1249 = vmatprep.subr.bf16.mxu0 0
        %1250 = vmatpush1.bf16.msra.mxu0 0
        %1251 = vmatprep.subr.bf16.mxu0 0
        %1252 = vmatpush1.bf16.msra.mxu0 0
        %1253 = vmatprep.subr.bf16.mxu0 0
        %1254 = vmatpush1.bf16.msra.mxu0 0
        %1255 = vmatprep.subr.bf16.mxu0 0
        %1256 = vmatpush1.bf16.msra.mxu0 0
        %1257 = vmatprep.subr.bf16.mxu0 0
        %1258 = vmatpush1.bf16.msra.mxu0 0
        %1259 = vmatprep.subr.bf16.mxu0 0
        %1260 = vmatpush1.bf16.msra.mxu0 0
        %1261 = vmatprep.mubr.bf16.mxu0 0
        %1262 = vmatmul.mubr.bf16.gmra.mrb[0].mxu0 %v1227
        %v1263 = vpop.f32.mrb[0].mxu0
        %v1264 = vadd.f32 %v1215, %v1263
        %v1265 = vpop.f32.mrb[0].mxu0
        %v1266 = vpop.f32.mrb[0].mxu0
        %v1267 = vpop.f32.mrb[0].mxu0
        %1268 = vdwg.mxu0
        %1269 = vrot.lane.b32.xlu0 %v938, 96
        %v1270 = vpop.permute.xlu0 %1269
        %1271 = vrot.lane.b32.xlu0 %v939, 96
        %v1272 = vpop.permute.xlu0 %1271
        %v1274 = vsel %vm949, %v1270, 0
        %v1277 = vsel %vm949, %v1272, 0
        %1279 = vmatprep.subr.bf16.mxu0 0
        %1280 = vmatpush1.bf16.xpose.msra.mxu0 %v1277
        %1281 = vmatprep.subr.bf16.mxu0 0
        %1282 = vmatpush1.bf16.xpose.msra.mxu0 0
        %1283 = vmatprep.subr.bf16.mxu0 0
        %1284 = vmatpush1.bf16.xpose.msra.mxu0 0
        %1285 = vmatprep.subr.bf16.mxu0 0
        %1286 = vmatpush1.bf16.xpose.msra.mxu0 0
        %1287 = vmatprep.subr.bf16.mxu0 0
        %1288 = vmatpush1.bf16.xpose.msra.mxu0 0
        %1289 = vmatprep.subr.bf16.mxu0 0
        %1290 = vmatpush1.bf16.xpose.msra.mxu0 0
        %1291 = vmatprep.subr.bf16.mxu0 0
        %1292 = vmatpush1.bf16.xpose.msra.mxu0 0
        %1293 = vmatprep.subr.bf16.mxu0 0
        %1294 = vmatpush1.bf16.xpose.msra.mxu0 0
        %1295 = vmatprep.subr.bf16.mxu0 0
        %1296 = vmatpush1.bf16.xpose.msra.mxu0 0
        %1297 = vmatprep.subr.bf16.mxu0 0
        %1298 = vmatpush1.bf16.xpose.msra.mxu0 0
        %1299 = vmatprep.subr.bf16.mxu0 0
        %1300 = vmatpush1.bf16.xpose.msra.mxu0 0
        %1301 = vmatprep.subr.bf16.mxu0 0
        %1302 = vmatpush1.bf16.xpose.msra.mxu0 0
        %1303 = vmatprep.subr.bf16.mxu0 0
        %1304 = vmatpush1.bf16.xpose.msra.mxu0 0
        %1305 = vmatprep.subr.bf16.mxu0 0
        %1306 = vmatpush1.bf16.xpose.msra.mxu0 0
        %1307 = vmatprep.subr.bf16.mxu0 0
        %1308 = vmatpush1.bf16.xpose.msra.mxu0 0
        %1309 = vmatprep.subr.bf16.mxu0 0
        %1310 = vmatpush1.bf16.xpose.msra.mxu0 0
        %1311 = vmatprep.mubr.bf16.mxu0 0
        %1312 = vmatmul.mubr.bf16.gmra.mrb[0].mxu0 %v1274
        %v1313 = vpop.f32.mrb[0].mxu0
        %v1314 = vadd.f32 %v686, %v1313
        %v1315 = vpop.f32.mrb[0].mxu0
        %v1316 = vpop.f32.mrb[0].mxu0
        %v1317 = vpop.f32.mrb[0].mxu0
        %1318 = vdwg.mxu0
        %v1319 = vsel %vm996, %v1314, -inf
        %1320 = vmax.xlane.f32.xlu0 %v1319
        %v1321 = vpop.xlane.xlu0 %1320
        %v1322 = vsub.f32 %v1314, %v1321
        %v1323 = vmul.f32 %v1322, 1.442695
        %v1324 = vpow.pop %v1323
        %v1325 = vsel %vm996, %v1324, 0.0
        %1326 = vadd.xlane.f32.xlu0 %v1325
        %v1327 = vpop.xlane.xlu0 %1326
        %v1328 = vrcp.pop %v1327
        %v1329 = vmul.f32 %v1324, %v1328
        %v1330 = vpack.c.bf16 %v1329, %v1329
        %1331 = vrot.lane.b32.xlu0 %v940, 96
        %v1332 = vpop.permute.xlu0 %1331
        %v1334 = vsel %vm996, %v1330, 0
        %v1337 = vsel %vm1012, %v1332, 0
        %1339 = vmatprep.subr.bf16.mxu0 0
        %1340 = vmatpush1.bf16.msra.mxu0 %v1337
        %1341 = vmatprep.subr.bf16.mxu0 0
        %1342 = vmatpush1.bf16.msra.mxu0 0
        %1343 = vmatprep.subr.bf16.mxu0 0
        %1344 = vmatpush1.bf16.msra.mxu0 0
        %1345 = vmatprep.subr.bf16.mxu0 0
        %1346 = vmatpush1.bf16.msra.mxu0 0
        %1347 = vmatprep.subr.bf16.mxu0 0
        %1348 = vmatpush1.bf16.msra.mxu0 0
        %1349 = vmatprep.subr.bf16.mxu0 0
        %1350 = vmatpush1.bf16.msra.mxu0 0
        %1351 = vmatprep.subr.bf16.mxu0 0
        %1352 = vmatpush1.bf16.msra.mxu0 0
        %1353 = vmatprep.subr.bf16.mxu0 0
        %1354 = vmatpush1.bf16.msra.mxu0 0
        %1355 = vmatprep.subr.bf16.mxu0 0
        %1356 = vmatpush1.bf16.msra.mxu0 0
        %1357 = vmatprep.subr.bf16.mxu0 0
        %1358 = vmatpush1.bf16.msra.mxu0 0
        %1359 = vmatprep.subr.bf16.mxu0 0
        %1360 = vmatpush1.bf16.msra.mxu0 0
        %1361 = vmatprep.subr.bf16.mxu0 0
        %1362 = vmatpush1.bf16.msra.mxu0 0
        %1363 = vmatprep.subr.bf16.mxu0 0
        %1364 = vmatpush1.bf16.msra.mxu0 0
        %1365 = vmatprep.subr.bf16.mxu0 0
        %1366 = vmatpush1.bf16.msra.mxu0 0
        %1367 = vmatprep.subr.bf16.mxu0 0
        %1368 = vmatpush1.bf16.msra.mxu0 0
        %1369 = vmatprep.subr.bf16.mxu0 0
        %1370 = vmatpush1.bf16.msra.mxu0 0
        %1371 = vmatprep.mubr.bf16.mxu0 0
        %1372 = vmatmul.mubr.bf16.gmra.mrb[0].mxu0 %v1334
        %v1373 = vpop.f32.mrb[0].mxu0
        %v1374 = vadd.f32 0.0, %v1373
        %v1375 = vpop.f32.mrb[0].mxu0
        %v1376 = vpop.f32.mrb[0].mxu0
        %v1377 = vpop.f32.mrb[0].mxu0
        %1378 = vdwg.mxu0
        %v1379 = vpack.c.bf16 %v1374, %v1374
        %v1382 = vunpack.c.l.b16 %v945
        %v1383 = vunpack.c.l.b16 %v946
        %v1384 = vpack.c.b16 %v1383, %v1382
        %v1387 = vsel %vm949, %v1379, 0
        %1389 = vmatprep.subr.bf16.mxu0 0
        %1390 = vmatpush1.bf16.msra.mxu0 %v1384
        %1391 = vmatprep.subr.bf16.mxu0 0
        %1392 = vmatpush1.bf16.msra.mxu0 0
        %1393 = vmatprep.subr.bf16.mxu0 0
        %1394 = vmatpush1.bf16.msra.mxu0 0
        %1395 = vmatprep.subr.bf16.mxu0 0
        %1396 = vmatpush1.bf16.msra.mxu0 0
        %1397 = vmatprep.subr.bf16.mxu0 0
        %1398 = vmatpush1.bf16.msra.mxu0 0
        %1399 = vmatprep.subr.bf16.mxu0 0
        %1400 = vmatpush1.bf16.msra.mxu0 0
        %1401 = vmatprep.subr.bf16.mxu0 0
        %1402 = vmatpush1.bf16.msra.mxu0 0
        %1403 = vmatprep.subr.bf16.mxu0 0
        %1404 = vmatpush1.bf16.msra.mxu0 0
        %1405 = vmatprep.subr.bf16.mxu0 0
        %1406 = vmatpush1.bf16.msra.mxu0 0
        %1407 = vmatprep.subr.bf16.mxu0 0
        %1408 = vmatpush1.bf16.msra.mxu0 0
        %1409 = vmatprep.subr.bf16.mxu0 0
        %1410 = vmatpush1.bf16.msra.mxu0 0
        %1411 = vmatprep.subr.bf16.mxu0 0
        %1412 = vmatpush1.bf16.msra.mxu0 0
        %1413 = vmatprep.subr.bf16.mxu0 0
        %1414 = vmatpush1.bf16.msra.mxu0 0
        %1415 = vmatprep.subr.bf16.mxu0 0
        %1416 = vmatpush1.bf16.msra.mxu0 0
        %1417 = vmatprep.subr.bf16.mxu0 0
        %1418 = vmatpush1.bf16.msra.mxu0 0
        %1419 = vmatprep.subr.bf16.mxu0 0
        %1420 = vmatpush1.bf16.msra.mxu0 0
        %1421 = vmatprep.mubr.bf16.mxu0 0
        %1422 = vmatmul.mubr.bf16.gmra.mrb[0].mxu0 %v1387
        %v1423 = vpop.f32.mrb[0].mxu0
        %v1424 = vadd.f32 0.0, %v1423
        %v1425 = vpop.f32.mrb[0].mxu0
        %v1426 = vpop.f32.mrb[0].mxu0
        %v1427 = vpop.f32.mrb[0].mxu0
        %1428 = vdwg.mxu0
        %v1429 = vadd.f32 %v1264, %v1424
        %1430 = vrot.lane.b32.xlu0 %v938, 80
        %v1431 = vpop.permute.xlu0 %1430
        %1432 = vrot.lane.b32.xlu0 %v939, 80
        %v1433 = vpop.permute.xlu0 %1432
        %v1435 = vsel %vm949, %v1431, 0
        %v1438 = vsel %vm949, %v1433, 0
        %1440 = vmatprep.subr.bf16.mxu0 0
        %1441 = vmatpush1.bf16.xpose.msra.mxu0 %v1438
        %1442 = vmatprep.subr.bf16.mxu0 0
        %1443 = vmatpush1.bf16.xpose.msra.mxu0 0
        %1444 = vmatprep.subr.bf16.mxu0 0
        %1445 = vmatpush1.bf16.xpose.msra.mxu0 0
        %1446 = vmatprep.subr.bf16.mxu0 0
        %1447 = vmatpush1.bf16.xpose.msra.mxu0 0
        %1448 = vmatprep.subr.bf16.mxu0 0
        %1449 = vmatpush1.bf16.xpose.msra.mxu0 0
        %1450 = vmatprep.subr.bf16.mxu0 0
        %1451 = vmatpush1.bf16.xpose.msra.mxu0 0
        %1452 = vmatprep.subr.bf16.mxu0 0
        %1453 = vmatpush1.bf16.xpose.msra.mxu0 0
        %1454 = vmatprep.subr.bf16.mxu0 0
        %1455 = vmatpush1.bf16.xpose.msra.mxu0 0
        %1456 = vmatprep.subr.bf16.mxu0 0
        %1457 = vmatpush1.bf16.xpose.msra.mxu0 0
        %1458 = vmatprep.subr.bf16.mxu0 0
        %1459 = vmatpush1.bf16.xpose.msra.mxu0 0
        %1460 = vmatprep.subr.bf16.mxu0 0
        %1461 = vmatpush1.bf16.xpose.msra.mxu0 0
        %1462 = vmatprep.subr.bf16.mxu0 0
        %1463 = vmatpush1.bf16.xpose.msra.mxu0 0
        %1464 = vmatprep.subr.bf16.mxu0 0
        %1465 = vmatpush1.bf16.xpose.msra.mxu0 0
        %1466 = vmatprep.subr.bf16.mxu0 0
        %1467 = vmatpush1.bf16.xpose.msra.mxu0 0
        %1468 = vmatprep.subr.bf16.mxu0 0
        %1469 = vmatpush1.bf16.xpose.msra.mxu0 0
        %1470 = vmatprep.subr.bf16.mxu0 0
        %1471 = vmatpush1.bf16.xpose.msra.mxu0 0
        %1472 = vmatprep.mubr.bf16.mxu0 0
        %1473 = vmatmul.mubr.bf16.gmra.mrb[0].mxu0 %v1435
        %v1474 = vpop.f32.mrb[0].mxu0
        %v1475 = vadd.f32 %v686, %v1474
        %v1476 = vpop.f32.mrb[0].mxu0
        %v1477 = vpop.f32.mrb[0].mxu0
        %v1478 = vpop.f32.mrb[0].mxu0
        %1479 = vdwg.mxu0
        %v1480 = vsel %vm996, %v1475, -inf
        %1481 = vmax.xlane.f32.xlu0 %v1480
        %v1482 = vpop.xlane.xlu0 %1481
        %v1483 = vsub.f32 %v1475, %v1482
        %v1484 = vmul.f32 %v1483, 1.442695
        %v1485 = vpow.pop %v1484
        %v1486 = vsel %vm996, %v1485, 0.0
        %1487 = vadd.xlane.f32.xlu0 %v1486
        %v1488 = vpop.xlane.xlu0 %1487
        %v1489 = vrcp.pop %v1488
        %v1490 = vmul.f32 %v1485, %v1489
        %v1491 = vpack.c.bf16 %v1490, %v1490
        %1492 = vrot.lane.b32.xlu0 %v940, 80
        %v1493 = vpop.permute.xlu0 %1492
        %v1495 = vsel %vm996, %v1491, 0
        %v1498 = vsel %vm1012, %v1493, 0
        %1500 = vmatprep.subr.bf16.mxu0 0
        %1501 = vmatpush1.bf16.msra.mxu0 %v1498
        %1502 = vmatprep.subr.bf16.mxu0 0
        %1503 = vmatpush1.bf16.msra.mxu0 0
        %1504 = vmatprep.subr.bf16.mxu0 0
        %1505 = vmatpush1.bf16.msra.mxu0 0
        %1506 = vmatprep.subr.bf16.mxu0 0
        %1507 = vmatpush1.bf16.msra.mxu0 0
        %1508 = vmatprep.subr.bf16.mxu0 0
        %1509 = vmatpush1.bf16.msra.mxu0 0
        %1510 = vmatprep.subr.bf16.mxu0 0
        %1511 = vmatpush1.bf16.msra.mxu0 0
        %1512 = vmatprep.subr.bf16.mxu0 0
        %1513 = vmatpush1.bf16.msra.mxu0 0
        %1514 = vmatprep.subr.bf16.mxu0 0
        %1515 = vmatpush1.bf16.msra.mxu0 0
        %1516 = vmatprep.subr.bf16.mxu0 0
        %1517 = vmatpush1.bf16.msra.mxu0 0
        %1518 = vmatprep.subr.bf16.mxu0 0
        %1519 = vmatpush1.bf16.msra.mxu0 0
        %1520 = vmatprep.subr.bf16.mxu0 0
        %1521 = vmatpush1.bf16.msra.mxu0 0
        %1522 = vmatprep.subr.bf16.mxu0 0
        %1523 = vmatpush1.bf16.msra.mxu0 0
        %1524 = vmatprep.subr.bf16.mxu0 0
        %1525 = vmatpush1.bf16.msra.mxu0 0
        %1526 = vmatprep.subr.bf16.mxu0 0
        %1527 = vmatpush1.bf16.msra.mxu0 0
        %1528 = vmatprep.subr.bf16.mxu0 0
        %1529 = vmatpush1.bf16.msra.mxu0 0
        %1530 = vmatprep.subr.bf16.mxu0 0
        %1531 = vmatpush1.bf16.msra.mxu0 0
        %1532 = vmatprep.mubr.bf16.mxu0 0
        %1533 = vmatmul.mubr.bf16.gmra.mrb[0].mxu0 %v1495
        %v1534 = vpop.f32.mrb[0].mxu0
        %v1535 = vadd.f32 0.0, %v1534
        %v1536 = vpop.f32.mrb[0].mxu0
        %v1537 = vpop.f32.mrb[0].mxu0
        %v1538 = vpop.f32.mrb[0].mxu0
        %1539 = vdwg.mxu0
        %v1540 = vpack.c.bf16 %v1535, %v1535
        %v1543 = vunpack.c.l.b16 %v947
        %v1544 = vunpack.c.l.b16 %v948
        %v1545 = vpack.c.b16 %v1544, %v1543
        %v1548 = vsel %vm949, %v1540, 0
        %1550 = vmatprep.subr.bf16.mxu0 0
        %1551 = vmatpush1.bf16.msra.mxu0 %v1545
        %1552 = vmatprep.subr.bf16.mxu0 0
        %1553 = vmatpush1.bf16.msra.mxu0 0
        %1554 = vmatprep.subr.bf16.mxu0 0
        %1555 = vmatpush1.bf16.msra.mxu0 0
        %1556 = vmatprep.subr.bf16.mxu0 0
        %1557 = vmatpush1.bf16.msra.mxu0 0
        %1558 = vmatprep.subr.bf16.mxu0 0
        %1559 = vmatpush1.bf16.msra.mxu0 0
        %1560 = vmatprep.subr.bf16.mxu0 0
        %1561 = vmatpush1.bf16.msra.mxu0 0
        %1562 = vmatprep.subr.bf16.mxu0 0
        %1563 = vmatpush1.bf16.msra.mxu0 0
        %1564 = vmatprep.subr.bf16.mxu0 0
        %1565 = vmatpush1.bf16.msra.mxu0 0
        %1566 = vmatprep.subr.bf16.mxu0 0
        %1567 = vmatpush1.bf16.msra.mxu0 0
        %1568 = vmatprep.subr.bf16.mxu0 0
        %1569 = vmatpush1.bf16.msra.mxu0 0
        %1570 = vmatprep.subr.bf16.mxu0 0
        %1571 = vmatpush1.bf16.msra.mxu0 0
        %1572 = vmatprep.subr.bf16.mxu0 0
        %1573 = vmatpush1.bf16.msra.mxu0 0
        %1574 = vmatprep.subr.bf16.mxu0 0
        %1575 = vmatpush1.bf16.msra.mxu0 0
        %1576 = vmatprep.subr.bf16.mxu0 0
        %1577 = vmatpush1.bf16.msra.mxu0 0
        %1578 = vmatprep.subr.bf16.mxu0 0
        %1579 = vmatpush1.bf16.msra.mxu0 0
        %1580 = vmatprep.subr.bf16.mxu0 0
        %1581 = vmatpush1.bf16.msra.mxu0 0
        %1582 = vmatprep.mubr.bf16.mxu0 0
        %1583 = vmatmul.mubr.bf16.gmra.mrb[0].mxu0 %v1548
        %v1584 = vpop.f32.mrb[0].mxu0
        %v1585 = vadd.f32 0.0, %v1584
        %v1586 = vpop.f32.mrb[0].mxu0
        %v1587 = vpop.f32.mrb[0].mxu0
        %v1588 = vpop.f32.mrb[0].mxu0
        %1589 = vdwg.mxu0
        %v1590 = vadd.f32 %v1429, %v1585
        %v1591 = vadd.f32 %v680, %v1590
        %v1592 = vld [vmem:[#allocation8] sm:$0x1]
        %v1594 = vlaneseq
        %v1595 = vshrl.u32 %v1594, 7
        %v1596 = vsub.s32 0, %v1595
        %v1597 = vrot.slane %v1592, %v1596
        %v1599 = vadd.f32 %v1591, %v1597
        %v1600 = vld [vmem:[#allocation10] sm:$0x1]
        %v1601 = vld [vmem:[#allocation11] sm:$0x1]
        %v1602 = vsel %vm689, %v1599, 0.0
        %1603 = vadd.xlane.f32.xlu0 %v1602
        %v1604 = vpop.xlane.xlu0 %1603
        %v1605 = vmul.f32 %v1604, %v693
        %v1606 = vsub.f32 %v1599, %v1605
        %v1607 = vmul.f32 %v1606, %v1606
        %v1608 = vsel %vm689, %v1607, 0.0
        %1609 = vadd.xlane.f32.xlu0 %v1608
        %v1610 = vpop.xlane.xlu0 %1609
        %v1611 = vmul.f32 %v1610, %v693
        %v1612 = vadd.f32 %v1611, 1e-05
        %v1613 = vrsqrt.pop %v1612
        %v1614 = vmul.f32 %v1606, %v1613
        %v1616 = vlaneseq
        %v1617 = vshrl.u32 %v1616, 7
        %v1618 = vsub.s32 0, %v1617
        %v1619 = vrot.slane %v1600, %v1618
        %v1621 = vmul.f32 %v1614, %v1619
        %v1623 = vlaneseq
        %v1624 = vshrl.u32 %v1623, 7
        %v1625 = vsub.s32 0, %v1624
        %v1626 = vrot.slane %v1601, %v1625
        %v1628 = vadd.f32 %v1621, %v1626
        %v1629 = vpack.c.bf16 %v1628, %v1628
        %v1630 = vld [vmem:[%s10] sm:$0xff]
        %v1631 = vld [vmem:[%s10 + $0x8] sm:$0xff]
        %v1632 = vld [vmem:[%s10 + $0x10] sm:$0xff]
        %v1633 = vld [vmem:[%s10 + $0x18] sm:$0xff]
        %v1634 = vld [vmem:[%s10 + $0x20] sm:$0xff]
        %v1635 = vld [vmem:[%s10 + $0x28] sm:$0xff]
        %v1636 = vld [vmem:[%s10 + $0x30] sm:$0xff]
        %v1637 = vld [vmem:[%s10 + $0x38] sm:$0xff]
        %v1638 = vld [vmem:[#allocation13] sm:$0x3]
        %v1640 = vlaneseq
        %v1641 = vshrl.u32 %v1640, 7
        %v1642 = vsub.s32 0, %v1641
        %v1643 = vrot.slane %v1638, %v1642
        %v1644 = vlaneseq
        %v1645 = vshrl.u32 %v1644, 7
        %v1646 = vsub.s32 1, %v1645
        %v1647 = vrot.slane %v1638, %v1646
        %v1658 = vunpack.c.l.b16 %v1630
        %v1659 = vunpack.c.h.b16 %v1630
        %v1660 = vunpack.c.l.b16 %v1631
        %v1661 = vunpack.c.h.b16 %v1631
        %v1662 = vunpack.c.l.b16 %v1632
        %v1663 = vunpack.c.h.b16 %v1632
        %v1664 = vunpack.c.l.b16 %v1633
        %v1665 = vunpack.c.h.b16 %v1633
        %v1666 = vunpack.c.l.b16 %v1634
        %v1667 = vunpack.c.h.b16 %v1634
        %v1668 = vunpack.c.l.b16 %v1635
        %v1669 = vunpack.c.h.b16 %v1635
        %v1670 = vunpack.c.l.b16 %v1636
        %v1671 = vunpack.c.h.b16 %v1636
        %v1672 = vunpack.c.l.b16 %v1637
        %v1673 = vunpack.c.h.b16 %v1637
        %v1674 = vpack.c.b16 %v1660, %v1658
        %v1675 = vpack.c.b16 %v1661, %v1659
        %v1676 = vpack.c.b16 %v1664, %v1662
        %v1677 = vpack.c.b16 %v1665, %v1663
        %v1678 = vpack.c.b16 %v1668, %v1666
        %v1679 = vpack.c.b16 %v1669, %v1667
        %v1680 = vpack.c.b16 %v1672, %v1670
        %v1681 = vpack.c.b16 %v1673, %v1671
        %v1691 = vsel %vm689, %v1629, 0
        %1693 = vmatprep.subr.bf16.mxu0 %v1675
        %1694 = vmatpush1.bf16.msra.mxu0 %v1674
        %1695 = vmatprep.subr.bf16.mxu0 %v1677
        %1696 = vmatpush1.bf16.msra.mxu0 %v1676
        %1697 = vmatprep.subr.bf16.mxu0 %v1679
        %1698 = vmatpush1.bf16.msra.mxu0 %v1678
        %1699 = vmatprep.subr.bf16.mxu0 %v1681
        %1700 = vmatpush1.bf16.msra.mxu0 %v1680
        %1701 = vmatprep.subr.bf16.mxu0 0
        %1702 = vmatpush1.bf16.msra.mxu0 0
        %1703 = vmatprep.subr.bf16.mxu0 0
        %1704 = vmatpush1.bf16.msra.mxu0 0
        %1705 = vmatprep.subr.bf16.mxu0 0
        %1706 = vmatpush1.bf16.msra.mxu0 0
        %1707 = vmatprep.subr.bf16.mxu0 0
        %1708 = vmatpush1.bf16.msra.mxu0 0
        %1709 = vmatprep.subr.bf16.mxu0 0
        %1710 = vmatpush1.bf16.msra.mxu0 0
        %1711 = vmatprep.subr.bf16.mxu0 0
        %1712 = vmatpush1.bf16.msra.mxu0 0
        %1713 = vmatprep.subr.bf16.mxu0 0
        %1714 = vmatpush1.bf16.msra.mxu0 0
        %1715 = vmatprep.subr.bf16.mxu0 0
        %1716 = vmatpush1.bf16.msra.mxu0 0
        %1717 = vmatprep.subr.bf16.mxu0 0
        %1718 = vmatpush1.bf16.msra.mxu0 0
        %1719 = vmatprep.subr.bf16.mxu0 0
        %1720 = vmatpush1.bf16.msra.mxu0 0
        %1721 = vmatprep.subr.bf16.mxu0 0
        %1722 = vmatpush1.bf16.msra.mxu0 0
        %1723 = vmatprep.subr.bf16.mxu0 0
        %1724 = vmatpush1.bf16.msra.mxu0 0
        %1725 = vmatprep.mubr.bf16.mxu0 0
        %1726 = vmatmul.mubr.bf16.gmra.mrb[0].mxu0 %v1691
        %v1727 = vpop.f32.mrb[0].mxu0
        %v1728 = vadd.f32 %v1643, %v1727
        %v1729 = vpop.f32.mrb[0].mxu0
        %v1730 = vadd.f32 %v1647, %v1729
        %v1731 = vpop.f32.mrb[0].mxu0
        %v1732 = vpop.f32.mrb[0].mxu0
        %1733 = vdwg.mxu0
        %v1734 = vmax.f32 %v1728, 0.0
        %v1735 = vmax.f32 %v1730, 0.0
        %v1736 = vpack.c.bf16 %v1734, %v1734
        %v1737 = vpack.c.bf16 %v1735, %v1735
        %v1738 = vld [vmem:[%s12] sm:$0xf]
        %v1739 = vld [vmem:[%s12 + $0x4] sm:$0xf]
        %v1740 = vld [vmem:[%s12 + $0x8] sm:$0xf]
        %v1741 = vld [vmem:[%s12 + $0xc] sm:$0xf]
        %v1742 = vld [vmem:[%s12 + $0x10] sm:$0xf]
        %v1743 = vld [vmem:[%s12 + $0x14] sm:$0xf]
        %v1744 = vld [vmem:[%s12 + $0x18] sm:$0xf]
        %v1745 = vld [vmem:[%s12 + $0x1c] sm:$0xf]
        %v1746 = vld [vmem:[%s12 + $0x20] sm:$0xf]
        %v1747 = vld [vmem:[%s12 + $0x24] sm:$0xf]
        %v1748 = vld [vmem:[%s12 + $0x28] sm:$0xf]
        %v1749 = vld [vmem:[%s12 + $0x2c] sm:$0xf]
        %v1750 = vld [vmem:[%s12 + $0x30] sm:$0xf]
        %v1751 = vld [vmem:[%s12 + $0x34] sm:$0xf]
        %v1752 = vld [vmem:[%s12 + $0x38] sm:$0xf]
        %v1753 = vld [vmem:[%s12 + $0x3c] sm:$0xf]
        %v1754 = vld [vmem:[%s12 + $0x40] sm:$0xf]
        %v1755 = vld [vmem:[%s12 + $0x44] sm:$0xf]
        %v1756 = vld [vmem:[%s12 + $0x48] sm:$0xf]
        %v1757 = vld [vmem:[%s12 + $0x4c] sm:$0xf]
        %v1758 = vld [vmem:[%s12 + $0x50] sm:$0xf]
        %v1759 = vld [vmem:[%s12 + $0x54] sm:$0xf]
        %v1760 = vld [vmem:[%s12 + $0x58] sm:$0xf]
        %v1761 = vld [vmem:[%s12 + $0x5c] sm:$0xf]
        %v1762 = vld [vmem:[%s12 + $0x60] sm:$0xf]
        %v1763 = vld [vmem:[%s12 + $0x64] sm:$0xf]
        %v1764 = vld [vmem:[%s12 + $0x68] sm:$0xf]
        %v1765 = vld [vmem:[%s12 + $0x6c] sm:$0xf]
        %v1766 = vld [vmem:[%s12 + $0x70] sm:$0xf]
        %v1767 = vld [vmem:[%s12 + $0x74] sm:$0xf]
        %v1768 = vld [vmem:[%s12 + $0x78] sm:$0xf]
        %v1769 = vld [vmem:[%s12 + $0x7c] sm:$0xf]
        %v1770 = vld [vmem:[%s13] sm:$0x1]
        %v1772 = vlaneseq
        %v1773 = vshrl.u32 %v1772, 7
        %v1774 = vsub.s32 0, %v1773
        %v1775 = vrot.slane %v1770, %v1774
        %v1809 = vunpack.c.l.b16 %v1738
        %v1810 = vunpack.c.l.b16 %v1739
        %v1811 = vunpack.c.l.b16 %v1740
        %v1812 = vunpack.c.l.b16 %v1741
        %v1813 = vunpack.c.l.b16 %v1742
        %v1814 = vunpack.c.l.b16 %v1743
        %v1815 = vunpack.c.l.b16 %v1744
        %v1816 = vunpack.c.l.b16 %v1745
        %v1817 = vunpack.c.l.b16 %v1746
        %v1818 = vunpack.c.l.b16 %v1747
        %v1819 = vunpack.c.l.b16 %v1748
        %v1820 = vunpack.c.l.b16 %v1749
        %v1821 = vunpack.c.l.b16 %v1750
        %v1822 = vunpack.c.l.b16 %v1751
        %v1823 = vunpack.c.l.b16 %v1752
        %v1824 = vunpack.c.l.b16 %v1753
        %v1825 = vunpack.c.l.b16 %v1754
        %v1826 = vunpack.c.l.b16 %v1755
        %v1827 = vunpack.c.l.b16 %v1756
        %v1828 = vunpack.c.l.b16 %v1757
        %v1829 = vunpack.c.l.b16 %v1758
        %v1830 = vunpack.c.l.b16 %v1759
        %v1831 = vunpack.c.l.b16 %v1760
        %v1832 = vunpack.c.l.b16 %v1761
        %v1833 = vunpack.c.l.b16 %v1762
        %v1834 = vunpack.c.l.b16 %v1763
        %v1835 = vunpack.c.l.b16 %v1764
        %v1836 = vunpack.c.l.b16 %v1765
        %v1837 = vunpack.c.l.b16 %v1766
        %v1838 = vunpack.c.l.b16 %v1767
        %v1839 = vunpack.c.l.b16 %v1768
        %v1840 = vunpack.c.l.b16 %v1769
        %v1841 = vpack.c.b16 %v1810, %v1809
        %v1842 = vpack.c.b16 %v1812, %v1811
        %v1843 = vpack.c.b16 %v1814, %v1813
        %v1844 = vpack.c.b16 %v1816, %v1815
        %v1845 = vpack.c.b16 %v1818, %v1817
        %v1846 = vpack.c.b16 %v1820, %v1819
        %v1847 = vpack.c.b16 %v1822, %v1821
        %v1848 = vpack.c.b16 %v1824, %v1823
        %v1849 = vpack.c.b16 %v1826, %v1825
        %v1850 = vpack.c.b16 %v1828, %v1827
        %v1851 = vpack.c.b16 %v1830, %v1829
        %v1852 = vpack.c.b16 %v1832, %v1831
        %v1853 = vpack.c.b16 %v1834, %v1833
        %v1854 = vpack.c.b16 %v1836, %v1835
        %v1855 = vpack.c.b16 %v1838, %v1837
        %v1856 = vpack.c.b16 %v1840, %v1839
        %1873 = vmatprep.subr.bf16.mxu0 0
        %1874 = vmatpush1.bf16.msra.mxu0 %v1841
        %1875 = vmatprep.subr.bf16.mxu0 0
        %1876 = vmatpush1.bf16.msra.mxu0 %v1842
        %1877 = vmatprep.subr.bf16.mxu0 0
        %1878 = vmatpush1.bf16.msra.mxu0 %v1843
        %1879 = vmatprep.subr.bf16.mxu0 0
        %1880 = vmatpush1.bf16.msra.mxu0 %v1844
        %1881 = vmatprep.subr.bf16.mxu0 0
        %1882 = vmatpush1.bf16.msra.mxu0 %v1845
        %1883 = vmatprep.subr.bf16.mxu0 0
        %1884 = vmatpush1.bf16.msra.mxu0 %v1846
        %1885 = vmatprep.subr.bf16.mxu0 0
        %1886 = vmatpush1.bf16.msra.mxu0 %v1847
        %1887 = vmatprep.subr.bf16.mxu0 0
        %1888 = vmatpush1.bf16.msra.mxu0 %v1848
        %1889 = vmatprep.subr.bf16.mxu0 0
        %1890 = vmatpush1.bf16.msra.mxu0 %v1849
        %1891 = vmatprep.subr.bf16.mxu0 0
        %1892 = vmatpush1.bf16.msra.mxu0 %v1850
        %1893 = vmatprep.subr.bf16.mxu0 0
        %1894 = vmatpush1.bf16.msra.mxu0 %v1851
        %1895 = vmatprep.subr.bf16.mxu0 0
        %1896 = vmatpush1.bf16.msra.mxu0 %v1852
        %1897 = vmatprep.subr.bf16.mxu0 0
        %1898 = vmatpush1.bf16.msra.mxu0 %v1853
        %1899 = vmatprep.subr.bf16.mxu0 0
        %1900 = vmatpush1.bf16.msra.mxu0 %v1854
        %1901 = vmatprep.subr.bf16.mxu0 0
        %1902 = vmatpush1.bf16.msra.mxu0 %v1855
        %1903 = vmatprep.subr.bf16.mxu0 0
        %1904 = vmatpush1.bf16.msra.mxu0 %v1856
        %1905 = vmatprep.mubr.bf16.mxu0 %v1737
        %1906 = vmatmul.mubr.bf16.gmra.mrb[0].mxu0 %v1736
        %v1907 = vpop.f32.mrb[0].mxu0
        %v1908 = vadd.f32 %v1775, %v1907
        %v1909 = vpop.f32.mrb[0].mxu0
        %v1910 = vpop.f32.mrb[0].mxu0
        %v1911 = vpop.f32.mrb[0].mxu0
        %1912 = vdwg.mxu0
        %v1913 = vadd.f32 %v1599, %v1908
        %s1914 = scalar_lea.vmem [#allocation5], 1
        %v1915 = vld [vmem:[%s1914] sm:$0x1]
        %s1916 = scalar_lea.vmem [#allocation7], 1
        %v1917 = vld [vmem:[%s1916] sm:$0x1]
        %v1918 = vsel %vm689, %v1913, 0.0
        %1919 = vadd.xlane.f32.xlu0 %v1918
        %v1920 = vpop.xlane.xlu0 %1919
        %v1921 = vmul.f32 %v1920, %v693
        %v1922 = vsub.f32 %v1913, %v1921
        %v1923 = vmul.f32 %v1922, %v1922
        %v1924 = vsel %vm689, %v1923, 0.0
        %1925 = vadd.xlane.f32.xlu0 %v1924
        %v1926 = vpop.xlane.xlu0 %1925
        %v1927 = vmul.f32 %v1926, %v693
        %v1928 = vadd.f32 %v1927, 1e-05
        %v1929 = vrsqrt.pop %v1928
        %v1930 = vmul.f32 %v1922, %v1929
        %v1932 = vlaneseq
        %v1933 = vshrl.u32 %v1932, 7
        %v1934 = vsub.s32 0, %v1933
        %v1935 = vrot.slane %v1915, %v1934
        %v1937 = vmul.f32 %v1930, %v1935
        %v1939 = vlaneseq
        %v1940 = vshrl.u32 %v1939, 7
        %v1941 = vsub.s32 0, %v1940
        %v1942 = vrot.slane %v1917, %v1941
        %v1944 = vadd.f32 %v1937, %v1942
        %v1945 = vpack.c.bf16 %v1944, %v1944
        %s1946 = scalar_lea.vmem %s3, 32
        %v1947 = vld [vmem:[%s1946] sm:$0xf]
        %v1948 = vld [vmem:[%s1946 + $0x4] sm:$0xf]
        %v1949 = vld [vmem:[%s1946 + $0x8] sm:$0xf]
        %v1950 = vld [vmem:[%s1946 + $0xc] sm:$0xf]
        %v1951 = vld [vmem:[%s1946 + $0x10] sm:$0xf]
        %v1952 = vld [vmem:[%s1946 + $0x14] sm:$0xf]
        %v1953 = vld [vmem:[%s1946 + $0x18] sm:$0xf]
        %v1954 = vld [vmem:[%s1946 + $0x1c] sm:$0xf]
        %v1963 = vunpack.c.l.b16 %v1947
        %v1964 = vunpack.c.l.b16 %v1948
        %v1965 = vunpack.c.l.b16 %v1949
        %v1966 = vunpack.c.l.b16 %v1950
        %v1967 = vunpack.c.l.b16 %v1951
        %v1968 = vunpack.c.l.b16 %v1952
        %v1969 = vunpack.c.l.b16 %v1953
        %v1970 = vunpack.c.l.b16 %v1954
        %v1971 = vpack.c.b16 %v1964, %v1963
        %v1972 = vpack.c.b16 %v1966, %v1965
        %v1973 = vpack.c.b16 %v1968, %v1967
        %v1974 = vpack.c.b16 %v1970, %v1969
        %v1980 = vsel %vm689, %v1945, 0
        %1982 = vmatprep.subr.bf16.mxu0 0
        %1983 = vmatpush1.bf16.msra.mxu0 %v1971
        %1984 = vmatprep.subr.bf16.mxu0 0
        %1985 = vmatpush1.bf16.msra.mxu0 %v1972
        %1986 = vmatprep.subr.bf16.mxu0 0
        %1987 = vmatpush1.bf16.msra.mxu0 %v1973
        %1988 = vmatprep.subr.bf16.mxu0 0
        %1989 = vmatpush1.bf16.msra.mxu0 %v1974
        %1990 = vmatprep.subr.bf16.mxu0 0
        %1991 = vmatpush1.bf16.msra.mxu0 0
        %1992 = vmatprep.subr.bf16.mxu0 0
        %1993 = vmatpush1.bf16.msra.mxu0 0
        %1994 = vmatprep.subr.bf16.mxu0 0
        %1995 = vmatpush1.bf16.msra.mxu0 0
        %1996 = vmatprep.subr.bf16.mxu0 0
        %1997 = vmatpush1.bf16.msra.mxu0 0
        %1998 = vmatprep.subr.bf16.mxu0 0
        %1999 = vmatpush1.bf16.msra.mxu0 0
        %2000 = vmatprep.subr.bf16.mxu0 0
        %2001 = vmatpush1.bf16.msra.mxu0 0
        %2002 = vmatprep.subr.bf16.mxu0 0
        %2003 = vmatpush1.bf16.msra.mxu0 0
        %2004 = vmatprep.subr.bf16.mxu0 0
        %2005 = vmatpush1.bf16.msra.mxu0 0
        %2006 = vmatprep.subr.bf16.mxu0 0
        %2007 = vmatpush1.bf16.msra.mxu0 0
        %2008 = vmatprep.subr.bf16.mxu0 0
        %2009 = vmatpush1.bf16.msra.mxu0 0
        %2010 = vmatprep.subr.bf16.mxu0 0
        %2011 = vmatpush1.bf16.msra.mxu0 0
        %2012 = vmatprep.subr.bf16.mxu0 0
        %2013 = vmatpush1.bf16.msra.mxu0 0
        %2014 = vmatprep.mubr.bf16.mxu0 0
        %2015 = vmatmul.mubr.bf16.gmra.mrb[0].mxu0 %v1980
        %v2016 = vpop.f32.mrb[0].mxu0
        %v2017 = vadd.f32 0.0, %v2016
        %v2018 = vpop.f32.mrb[0].mxu0
        %v2019 = vpop.f32.mrb[0].mxu0
        %v2020 = vpop.f32.mrb[0].mxu0
        %2021 = vdwg.mxu0
        %s2022 = scalar_lea.vmem %s4, 32
        %v2023 = vld [vmem:[%s2022] sm:$0xf]
        %v2024 = vld [vmem:[%s2022 + $0x4] sm:$0xf]
        %v2025 = vld [vmem:[%s2022 + $0x8] sm:$0xf]
        %v2026 = vld [vmem:[%s2022 + $0xc] sm:$0xf]
        %v2027 = vld [vmem:[%s2022 + $0x10] sm:$0xf]
        %v2028 = vld [vmem:[%s2022 + $0x14] sm:$0xf]
        %v2029 = vld [vmem:[%s2022 + $0x18] sm:$0xf]
        %v2030 = vld [vmem:[%s2022 + $0x1c] sm:$0xf]
        %v2039 = vunpack.c.l.b16 %v2023
        %v2040 = vunpack.c.l.b16 %v2024
        %v2041 = vunpack.c.l.b16 %v2025
        %v2042 = vunpack.c.l.b16 %v2026
        %v2043 = vunpack.c.l.b16 %v2027
        %v2044 = vunpack.c.l.b16 %v2028
        %v2045 = vunpack.c.l.b16 %v2029
        %v2046 = vunpack.c.l.b16 %v2030
        %v2047 = vpack.c.b16 %v2040, %v2039
        %v2048 = vpack.c.b16 %v2042, %v2041
        %v2049 = vpack.c.b16 %v2044, %v2043
        %v2050 = vpack.c.b16 %v2046, %v2045
        %2055 = vmatprep.subr.bf16.mxu0 0
        %2056 = vmatpush1.bf16.msra.mxu0 %v2047
        %2057 = vmatprep.subr.bf16.mxu0 0
        %2058 = vmatpush1.bf16.msra.mxu0 %v2048
        %2059 = vmatprep.subr.bf16.mxu0 0
        %2060 = vmatpush1.bf16.msra.mxu0 %v2049
        %2061 = vmatprep.subr.bf16.mxu0 0
        %2062 = vmatpush1.bf16.msra.mxu0 %v2050
        %2063 = vmatprep.subr.bf16.mxu0 0
        %2064 = vmatpush1.bf16.msra.mxu0 0
        %2065 = vmatprep.subr.bf16.mxu0 0
        %2066 = vmatpush1.bf16.msra.mxu0 0
        %2067 = vmatprep.subr.bf16.mxu0 0
        %2068 = vmatpush1.bf16.msra.mxu0 0
        %2069 = vmatprep.subr.bf16.mxu0 0
        %2070 = vmatpush1.bf16.msra.mxu0 0
        %2071 = vmatprep.subr.bf16.mxu0 0
        %2072 = vmatpush1.bf16.msra.mxu0 0
        %2073 = vmatprep.subr.bf16.mxu0 0
        %2074 = vmatpush1.bf16.msra.mxu0 0
        %2075 = vmatprep.subr.bf16.mxu0 0
        %2076 = vmatpush1.bf16.msra.mxu0 0
        %2077 = vmatprep.subr.bf16.mxu0 0
        %2078 = vmatpush1.bf16.msra.mxu0 0
        %2079 = vmatprep.subr.bf16.mxu0 0
        %2080 = vmatpush1.bf16.msra.mxu0 0
        %2081 = vmatprep.subr.bf16.mxu0 0
        %2082 = vmatpush1.bf16.msra.mxu0 0
        %2083 = vmatprep.subr.bf16.mxu0 0
        %2084 = vmatpush1.bf16.msra.mxu0 0
        %2085 = vmatprep.subr.bf16.mxu0 0
        %2086 = vmatpush1.bf16.msra.mxu0 0
        %2087 = vmatprep.mubr.bf16.mxu0 0
        %2088 = vmatmul.mubr.bf16.gmra.mrb[0].mxu0 %v1980
        %v2089 = vpop.f32.mrb[0].mxu0
        %v2090 = vadd.f32 0.0, %v2089
        %v2091 = vpop.f32.mrb[0].mxu0
        %v2092 = vpop.f32.mrb[0].mxu0
        %v2093 = vpop.f32.mrb[0].mxu0
        %2094 = vdwg.mxu0
        %s2095 = scalar_lea.vmem %s5, 32
        %v2096 = vld [vmem:[%s2095] sm:$0xf]
        %v2097 = vld [vmem:[%s2095 + $0x4] sm:$0xf]
        %v2098 = vld [vmem:[%s2095 + $0x8] sm:$0xf]
        %v2099 = vld [vmem:[%s2095 + $0xc] sm:$0xf]
        %v2100 = vld [vmem:[%s2095 + $0x10] sm:$0xf]
        %v2101 = vld [vmem:[%s2095 + $0x14] sm:$0xf]
        %v2102 = vld [vmem:[%s2095 + $0x18] sm:$0xf]
        %v2103 = vld [vmem:[%s2095 + $0x1c] sm:$0xf]
        %v2112 = vunpack.c.l.b16 %v2096
        %v2113 = vunpack.c.l.b16 %v2097
        %v2114 = vunpack.c.l.b16 %v2098
        %v2115 = vunpack.c.l.b16 %v2099
        %v2116 = vunpack.c.l.b16 %v2100
        %v2117 = vunpack.c.l.b16 %v2101
        %v2118 = vunpack.c.l.b16 %v2102
        %v2119 = vunpack.c.l.b16 %v2103
        %v2120 = vpack.c.b16 %v2113, %v2112
        %v2121 = vpack.c.b16 %v2115, %v2114
        %v2122 = vpack.c.b16 %v2117, %v2116
        %v2123 = vpack.c.b16 %v2119, %v2118
        %2128 = vmatprep.subr.bf16.mxu0 0
        %2129 = vmatpush1.bf16.msra.mxu0 %v2120
        %2130 = vmatprep.subr.bf16.mxu0 0
        %2131 = vmatpush1.bf16.msra.mxu0 %v2121
        %2132 = vmatprep.subr.bf16.mxu0 0
        %2133 = vmatpush1.bf16.msra.mxu0 %v2122
        %2134 = vmatprep.subr.bf16.mxu0 0
        %2135 = vmatpush1.bf16.msra.mxu0 %v2123
        %2136 = vmatprep.subr.bf16.mxu0 0
        %2137 = vmatpush1.bf16.msra.mxu0 0
        %2138 = vmatprep.subr.bf16.mxu0 0
        %2139 = vmatpush1.bf16.msra.mxu0 0
        %2140 = vmatprep.subr.bf16.mxu0 0
        %2141 = vmatpush1.bf16.msra.mxu0 0
        %2142 = vmatprep.subr.bf16.mxu0 0
        %2143 = vmatpush1.bf16.msra.mxu0 0
        %2144 = vmatprep.subr.bf16.mxu0 0
        %2145 = vmatpush1.bf16.msra.mxu0 0
        %2146 = vmatprep.subr.bf16.mxu0 0
        %2147 = vmatpush1.bf16.msra.mxu0 0
        %2148 = vmatprep.subr.bf16.mxu0 0
        %2149 = vmatpush1.bf16.msra.mxu0 0
        %2150 = vmatprep.subr.bf16.mxu0 0
        %2151 = vmatpush1.bf16.msra.mxu0 0
        %2152 = vmatprep.subr.bf16.mxu0 0
        %2153 = vmatpush1.bf16.msra.mxu0 0
        %2154 = vmatprep.subr.bf16.mxu0 0
        %2155 = vmatpush1.bf16.msra.mxu0 0
        %2156 = vmatprep.subr.bf16.mxu0 0
        %2157 = vmatpush1.bf16.msra.mxu0 0
        %2158 = vmatprep.subr.bf16.mxu0 0
        %2159 = vmatpush1.bf16.msra.mxu0 0
        %2160 = vmatprep.mubr.bf16.mxu0 0
        %2161 = vmatmul.mubr.bf16.gmra.mrb[0].mxu0 %v1980
        %v2162 = vpop.f32.mrb[0].mxu0
        %v2163 = vadd.f32 0.0, %v2162
        %v2164 = vpop.f32.mrb[0].mxu0
        %v2165 = vpop.f32.mrb[0].mxu0
        %v2166 = vpop.f32.mrb[0].mxu0
        %2167 = vdwg.mxu0
        %v2168 = vpack.c.bf16 %v2017, %v2017
        %v2169 = vpack.c.bf16 %v2090, %v2090
        %v2170 = vpack.c.bf16 %v2163, %v2163
        %s2171 = scalar_lea.vmem %s6, 32
        %v2172 = vld [vmem:[%s2171] sm:$0xf]
        %v2173 = vld [vmem:[%s2171 + $0x4] sm:$0xf]
        %v2174 = vld [vmem:[%s2171 + $0x8] sm:$0xf]
        %v2175 = vld [vmem:[%s2171 + $0xc] sm:$0xf]
        %v2176 = vld [vmem:[%s2171 + $0x10] sm:$0xf]
        %v2177 = vld [vmem:[%s2171 + $0x14] sm:$0xf]
        %v2178 = vld [vmem:[%s2171 + $0x18] sm:$0xf]
        %v2179 = vld [vmem:[%s2171 + $0x1c] sm:$0xf]
        %v2181 = vsel %vm949, %v2168, 0
        %v2184 = vsel %vm949, %v2169, 0
        %2186 = vmatprep.subr.bf16.mxu0 0
        %2187 = vmatpush1.bf16.xpose.msra.mxu0 %v2184
        %2188 = vmatprep.subr.bf16.mxu0 0
        %2189 = vmatpush1.bf16.xpose.msra.mxu0 0
        %2190 = vmatprep.subr.bf16.mxu0 0
        %2191 = vmatpush1.bf16.xpose.msra.mxu0 0
        %2192 = vmatprep.subr.bf16.mxu0 0
        %2193 = vmatpush1.bf16.xpose.msra.mxu0 0
        %2194 = vmatprep.subr.bf16.mxu0 0
        %2195 = vmatpush1.bf16.xpose.msra.mxu0 0
        %2196 = vmatprep.subr.bf16.mxu0 0
        %2197 = vmatpush1.bf16.xpose.msra.mxu0 0
        %2198 = vmatprep.subr.bf16.mxu0 0
        %2199 = vmatpush1.bf16.xpose.msra.mxu0 0
        %2200 = vmatprep.subr.bf16.mxu0 0
        %2201 = vmatpush1.bf16.xpose.msra.mxu0 0
        %2202 = vmatprep.subr.bf16.mxu0 0
        %2203 = vmatpush1.bf16.xpose.msra.mxu0 0
        %2204 = vmatprep.subr.bf16.mxu0 0
        %2205 = vmatpush1.bf16.xpose.msra.mxu0 0
        %2206 = vmatprep.subr.bf16.mxu0 0
        %2207 = vmatpush1.bf16.xpose.msra.mxu0 0
        %2208 = vmatprep.subr.bf16.mxu0 0
        %2209 = vmatpush1.bf16.xpose.msra.mxu0 0
        %2210 = vmatprep.subr.bf16.mxu0 0
        %2211 = vmatpush1.bf16.xpose.msra.mxu0 0
        %2212 = vmatprep.subr.bf16.mxu0 0
        %2213 = vmatpush1.bf16.xpose.msra.mxu0 0
        %2214 = vmatprep.subr.bf16.mxu0 0
        %2215 = vmatpush1.bf16.xpose.msra.mxu0 0
        %2216 = vmatprep.subr.bf16.mxu0 0
        %2217 = vmatpush1.bf16.xpose.msra.mxu0 0
        %2218 = vmatprep.mubr.bf16.mxu0 0
        %2219 = vmatmul.mubr.bf16.gmra.mrb[0].mxu0 %v2181
        %v2220 = vpop.f32.mrb[0].mxu0
        %v2221 = vadd.f32 %v686, %v2220
        %v2222 = vpop.f32.mrb[0].mxu0
        %v2223 = vpop.f32.mrb[0].mxu0
        %v2224 = vpop.f32.mrb[0].mxu0
        %2225 = vdwg.mxu0
        %v2226 = vsel %vm996, %v2221, -inf
        %2227 = vmax.xlane.f32.xlu0 %v2226
        %v2228 = vpop.xlane.xlu0 %2227
        %v2229 = vsub.f32 %v2221, %v2228
        %v2230 = vmul.f32 %v2229, 1.442695
        %v2231 = vpow.pop %v2230
        %v2232 = vsel %vm996, %v2231, 0.0
        %2233 = vadd.xlane.f32.xlu0 %v2232
        %v2234 = vpop.xlane.xlu0 %2233
        %v2235 = vrcp.pop %v2234
        %v2236 = vmul.f32 %v2231, %v2235
        %v2237 = vpack.c.bf16 %v2236, %v2236
        %v2239 = vsel %vm996, %v2237, 0
        %v2242 = vsel %vm1012, %v2170, 0
        %2244 = vmatprep.subr.bf16.mxu0 0
        %2245 = vmatpush1.bf16.msra.mxu0 %v2242
        %2246 = vmatprep.subr.bf16.mxu0 0
        %2247 = vmatpush1.bf16.msra.mxu0 0
        %2248 = vmatprep.subr.bf16.mxu0 0
        %2249 = vmatpush1.bf16.msra.mxu0 0
        %2250 = vmatprep.subr.bf16.mxu0 0
        %2251 = vmatpush1.bf16.msra.mxu0 0
        %2252 = vmatprep.subr.bf16.mxu0 0
        %2253 = vmatpush1.bf16.msra.mxu0 0
        %2254 = vmatprep.subr.bf16.mxu0 0
        %2255 = vmatpush1.bf16.msra.mxu0 0
        %2256 = vmatprep.subr.bf16.mxu0 0
        %2257 = vmatpush1.bf16.msra.mxu0 0
        %2258 = vmatprep.subr.bf16.mxu0 0
        %2259 = vmatpush1.bf16.msra.mxu0 0
        %2260 = vmatprep.subr.bf16.mxu0 0
        %2261 = vmatpush1.bf16.msra.mxu0 0
        %2262 = vmatprep.subr.bf16.mxu0 0
        %2263 = vmatpush1.bf16.msra.mxu0 0
        %2264 = vmatprep.subr.bf16.mxu0 0
        %2265 = vmatpush1.bf16.msra.mxu0 0
        %2266 = vmatprep.subr.bf16.mxu0 0
        %2267 = vmatpush1.bf16.msra.mxu0 0
        %2268 = vmatprep.subr.bf16.mxu0 0
        %2269 = vmatpush1.bf16.msra.mxu0 0
        %2270 = vmatprep.subr.bf16.mxu0 0
        %2271 = vmatpush1.bf16.msra.mxu0 0
        %2272 = vmatprep.subr.bf16.mxu0 0
        %2273 = vmatpush1.bf16.msra.mxu0 0
        %2274 = vmatprep.subr.bf16.mxu0 0
        %2275 = vmatpush1.bf16.msra.mxu0 0
        %2276 = vmatprep.mubr.bf16.mxu0 0
        %2277 = vmatmul.mubr.bf16.gmra.mrb[0].mxu0 %v2239
        %v2278 = vpop.f32.mrb[0].mxu0
        %v2279 = vadd.f32 0.0, %v2278
        %v2280 = vpop.f32.mrb[0].mxu0
        %v2281 = vpop.f32.mrb[0].mxu0
        %v2282 = vpop.f32.mrb[0].mxu0
        %2283 = vdwg.mxu0
        %v2284 = vpack.c.bf16 %v2279, %v2279
        %2286 = vrot.lane.b32.xlu0 %v2168, 112
        %v2287 = vpop.permute.xlu0 %2286
        %2289 = vrot.lane.b32.xlu0 %v2169, 112
        %v2290 = vpop.permute.xlu0 %2289
        %v2292 = vsel %vm949, %v2287, 0
        %v2295 = vsel %vm949, %v2290, 0
        %2297 = vmatprep.subr.bf16.mxu0 0
        %2298 = vmatpush1.bf16.xpose.msra.mxu0 %v2295
        %2299 = vmatprep.subr.bf16.mxu0 0
        %2300 = vmatpush1.bf16.xpose.msra.mxu0 0
        %2301 = vmatprep.subr.bf16.mxu0 0
        %2302 = vmatpush1.bf16.xpose.msra.mxu0 0
        %2303 = vmatprep.subr.bf16.mxu0 0
        %2304 = vmatpush1.bf16.xpose.msra.mxu0 0
        %2305 = vmatprep.subr.bf16.mxu0 0
        %2306 = vmatpush1.bf16.xpose.msra.mxu0 0
        %2307 = vmatprep.subr.bf16.mxu0 0
        %2308 = vmatpush1.bf16.xpose.msra.mxu0 0
        %2309 = vmatprep.subr.bf16.mxu0 0
        %2310 = vmatpush1.bf16.xpose.msra.mxu0 0
        %2311 = vmatprep.subr.bf16.mxu0 0
        %2312 = vmatpush1.bf16.xpose.msra.mxu0 0
        %2313 = vmatprep.subr.bf16.mxu0 0
        %2314 = vmatpush1.bf16.xpose.msra.mxu0 0
        %2315 = vmatprep.subr.bf16.mxu0 0
        %2316 = vmatpush1.bf16.xpose.msra.mxu0 0
        %2317 = vmatprep.subr.bf16.mxu0 0
        %2318 = vmatpush1.bf16.xpose.msra.mxu0 0
        %2319 = vmatprep.subr.bf16.mxu0 0
        %2320 = vmatpush1.bf16.xpose.msra.mxu0 0
        %2321 = vmatprep.subr.bf16.mxu0 0
        %2322 = vmatpush1.bf16.xpose.msra.mxu0 0
        %2323 = vmatprep.subr.bf16.mxu0 0
        %2324 = vmatpush1.bf16.xpose.msra.mxu0 0
        %2325 = vmatprep.subr.bf16.mxu0 0
        %2326 = vmatpush1.bf16.xpose.msra.mxu0 0
        %2327 = vmatprep.subr.bf16.mxu0 0
        %2328 = vmatpush1.bf16.xpose.msra.mxu0 0
        %2329 = vmatprep.mubr.bf16.mxu0 0
        %2330 = vmatmul.mubr.bf16.gmra.mrb[0].mxu0 %v2292
        %v2331 = vpop.f32.mrb[0].mxu0
        %v2332 = vadd.f32 %v686, %v2331
        %v2333 = vpop.f32.mrb[0].mxu0
        %v2334 = vpop.f32.mrb[0].mxu0
        %v2335 = vpop.f32.mrb[0].mxu0
        %2336 = vdwg.mxu0
        %v2337 = vsel %vm996, %v2332, -inf
        %2338 = vmax.xlane.f32.xlu0 %v2337
        %v2339 = vpop.xlane.xlu0 %2338
        %v2340 = vsub.f32 %v2332, %v2339
        %v2341 = vmul.f32 %v2340, 1.442695
        %v2342 = vpow.pop %v2341
        %v2343 = vsel %vm996, %v2342, 0.0
        %2344 = vadd.xlane.f32.xlu0 %v2343
        %v2345 = vpop.xlane.xlu0 %2344
        %v2346 = vrcp.pop %v2345
        %v2347 = vmul.f32 %v2342, %v2346
        %v2348 = vpack.c.bf16 %v2347, %v2347
        %2350 = vrot.lane.b32.xlu0 %v2170, 112
        %v2351 = vpop.permute.xlu0 %2350
        %v2353 = vsel %vm996, %v2348, 0
        %v2356 = vsel %vm1012, %v2351, 0
        %2358 = vmatprep.subr.bf16.mxu0 0
        %2359 = vmatpush1.bf16.msra.mxu0 %v2356
        %2360 = vmatprep.subr.bf16.mxu0 0
        %2361 = vmatpush1.bf16.msra.mxu0 0
        %2362 = vmatprep.subr.bf16.mxu0 0
        %2363 = vmatpush1.bf16.msra.mxu0 0
        %2364 = vmatprep.subr.bf16.mxu0 0
        %2365 = vmatpush1.bf16.msra.mxu0 0
        %2366 = vmatprep.subr.bf16.mxu0 0
        %2367 = vmatpush1.bf16.msra.mxu0 0
        %2368 = vmatprep.subr.bf16.mxu0 0
        %2369 = vmatpush1.bf16.msra.mxu0 0
        %2370 = vmatprep.subr.bf16.mxu0 0
        %2371 = vmatpush1.bf16.msra.mxu0 0
        %2372 = vmatprep.subr.bf16.mxu0 0
        %2373 = vmatpush1.bf16.msra.mxu0 0
        %2374 = vmatprep.subr.bf16.mxu0 0
        %2375 = vmatpush1.bf16.msra.mxu0 0
        %2376 = vmatprep.subr.bf16.mxu0 0
        %2377 = vmatpush1.bf16.msra.mxu0 0
        %2378 = vmatprep.subr.bf16.mxu0 0
        %2379 = vmatpush1.bf16.msra.mxu0 0
        %2380 = vmatprep.subr.bf16.mxu0 0
        %2381 = vmatpush1.bf16.msra.mxu0 0
        %2382 = vmatprep.subr.bf16.mxu0 0
        %2383 = vmatpush1.bf16.msra.mxu0 0
        %2384 = vmatprep.subr.bf16.mxu0 0
        %2385 = vmatpush1.bf16.msra.mxu0 0
        %2386 = vmatprep.subr.bf16.mxu0 0
        %2387 = vmatpush1.bf16.msra.mxu0 0
        %2388 = vmatprep.subr.bf16.mxu0 0
        %2389 = vmatpush1.bf16.msra.mxu0 0
        %2390 = vmatprep.mubr.bf16.mxu0 0
        %2391 = vmatmul.mubr.bf16.gmra.mrb[0].mxu0 %v2353
        %v2392 = vpop.f32.mrb[0].mxu0
        %v2393 = vadd.f32 0.0, %v2392
        %v2394 = vpop.f32.mrb[0].mxu0
        %v2395 = vpop.f32.mrb[0].mxu0
        %v2396 = vpop.f32.mrb[0].mxu0
        %2397 = vdwg.mxu0
        %v2398 = vpack.c.bf16 %v2393, %v2393
        %v2401 = vunpack.c.l.b16 %v2174
        %v2402 = vunpack.c.l.b16 %v2175
        %v2403 = vpack.c.b16 %v2402, %v2401
        %v2406 = vsel %vm949, %v2398, 0
        %2408 = vmatprep.subr.bf16.mxu0 0
        %2409 = vmatpush1.bf16.msra.mxu0 %v2403
        %2410 = vmatprep.subr.bf16.mxu0 0
        %2411 = vmatpush1.bf16.msra.mxu0 0
        %2412 = vmatprep.subr.bf16.mxu0 0
        %2413 = vmatpush1.bf16.msra.mxu0 0
        %2414 = vmatprep.subr.bf16.mxu0 0
        %2415 = vmatpush1.bf16.msra.mxu0 0
        %2416 = vmatprep.subr.bf16.mxu0 0
        %2417 = vmatpush1.bf16.msra.mxu0 0
        %2418 = vmatprep.subr.bf16.mxu0 0
        %2419 = vmatpush1.bf16.msra.mxu0 0
        %2420 = vmatprep.subr.bf16.mxu0 0
        %2421 = vmatpush1.bf16.msra.mxu0 0
        %2422 = vmatprep.subr.bf16.mxu0 0
        %2423 = vmatpush1.bf16.msra.mxu0 0
        %2424 = vmatprep.subr.bf16.mxu0 0
        %2425 = vmatpush1.bf16.msra.mxu0 0
        %2426 = vmatprep.subr.bf16.mxu0 0
        %2427 = vmatpush1.bf16.msra.mxu0 0
        %2428 = vmatprep.subr.bf16.mxu0 0
        %2429 = vmatpush1.bf16.msra.mxu0 0
        %2430 = vmatprep.subr.bf16.mxu0 0
        %2431 = vmatpush1.bf16.msra.mxu0 0
        %2432 = vmatprep.subr.bf16.mxu0 0
        %2433 = vmatpush1.bf16.msra.mxu0 0
        %2434 = vmatprep.subr.bf16.mxu0 0
        %2435 = vmatpush1.bf16.msra.mxu0 0
        %2436 = vmatprep.subr.bf16.mxu0 0
        %2437 = vmatpush1.bf16.msra.mxu0 0
        %2438 = vmatprep.subr.bf16.mxu0 0
        %2439 = vmatpush1.bf16.msra.mxu0 0
        %2440 = vmatprep.mubr.bf16.mxu0 0
        %2441 = vmatmul.mubr.bf16.gmra.mrb[0].mxu0 %v2406
        %v2442 = vpop.f32.mrb[0].mxu0
        %v2443 = vadd.f32 0.0, %v2442
        %v2444 = vpop.f32.mrb[0].mxu0
        %v2445 = vpop.f32.mrb[0].mxu0
        %v2446 = vpop.f32.mrb[0].mxu0
        %2447 = vdwg.mxu0
        %v2450 = vunpack.c.l.b16 %v2172
        %v2451 = vunpack.c.l.b16 %v2173
        %v2452 = vpack.c.b16 %v2451, %v2450
        %v2455 = vsel %vm949, %v2284, 0
        %2457 = vmatprep.subr.bf16.mxu0 0
        %2458 = vmatpush1.bf16.msra.mxu0 %v2452
        %2459 = vmatprep.subr.bf16.mxu0 0
        %2460 = vmatpush1.bf16.msra.mxu0 0
        %2461 = vmatprep.subr.bf16.mxu0 0
        %2462 = vmatpush1.bf16.msra.mxu0 0
        %2463 = vmatprep.subr.bf16.mxu0 0
        %2464 = vmatpush1.bf16.msra.mxu0 0
        %2465 = vmatprep.subr.bf16.mxu0 0
        %2466 = vmatpush1.bf16.msra.mxu0 0
        %2467 = vmatprep.subr.bf16.mxu0 0
        %2468 = vmatpush1.bf16.msra.mxu0 0
        %2469 = vmatprep.subr.bf16.mxu0 0
        %2470 = vmatpush1.bf16.msra.mxu0 0
        %2471 = vmatprep.subr.bf16.mxu0 0
        %2472 = vmatpush1.bf16.msra.mxu0 0
        %2473 = vmatprep.subr.bf16.mxu0 0
        %2474 = vmatpush1.bf16.msra.mxu0 0
        %2475 = vmatprep.subr.bf16.mxu0 0
        %2476 = vmatpush1.bf16.msra.mxu0 0
        %2477 = vmatprep.subr.bf16.mxu0 0
        %2478 = vmatpush1.bf16.msra.mxu0 0
        %2479 = vmatprep.subr.bf16.mxu0 0
        %2480 = vmatpush1.bf16.msra.mxu0 0
        %2481 = vmatprep.subr.bf16.mxu0 0
        %2482 = vmatpush1.bf16.msra.mxu0 0
        %2483 = vmatprep.subr.bf16.mxu0 0
        %2484 = vmatpush1.bf16.msra.mxu0 0
        %2485 = vmatprep.subr.bf16.mxu0 0
        %2486 = vmatpush1.bf16.msra.mxu0 0
        %2487 = vmatprep.subr.bf16.mxu0 0
        %2488 = vmatpush1.bf16.msra.mxu0 0
        %2489 = vmatprep.mubr.bf16.mxu0 0
        %2490 = vmatmul.mubr.bf16.gmra.mrb[0].mxu0 %v2455
        %v2491 = vpop.f32.mrb[0].mxu0
        %v2492 = vadd.f32 %v2443, %v2491
        %v2493 = vpop.f32.mrb[0].mxu0
        %v2494 = vpop.f32.mrb[0].mxu0
        %v2495 = vpop.f32.mrb[0].mxu0
        %2496 = vdwg.mxu0
        %2497 = vrot.lane.b32.xlu0 %v2168, 96
        %v2498 = vpop.permute.xlu0 %2497
        %2499 = vrot.lane.b32.xlu0 %v2169, 96
        %v2500 = vpop.permute.xlu0 %2499
        %v2502 = vsel %vm949, %v2498, 0
        %v2505 = vsel %vm949, %v2500, 0
        %2507 = vmatprep.subr.bf16.mxu0 0
        %2508 = vmatpush1.bf16.xpose.msra.mxu0 %v2505
        %2509 = vmatprep.subr.bf16.mxu0 0
        %2510 = vmatpush1.bf16.xpose.msra.mxu0 0
        %2511 = vmatprep.subr.bf16.mxu0 0
        %2512 = vmatpush1.bf16.xpose.msra.mxu0 0
        %2513 = vmatprep.subr.bf16.mxu0 0
        %2514 = vmatpush1.bf16.xpose.msra.mxu0 0
        %2515 = vmatprep.subr.bf16.mxu0 0
        %2516 = vmatpush1.bf16.xpose.msra.mxu0 0
        %2517 = vmatprep.subr.bf16.mxu0 0
        %2518 = vmatpush1.bf16.xpose.msra.mxu0 0
        %2519 = vmatprep.subr.bf16.mxu0 0
        %2520 = vmatpush1.bf16.xpose.msra.mxu0 0
        %2521 = vmatprep.subr.bf16.mxu0 0
        %2522 = vmatpush1.bf16.xpose.msra.mxu0 0
        %2523 = vmatprep.subr.bf16.mxu0 0
        %2524 = vmatpush1.bf16.xpose.msra.mxu0 0
        %2525 = vmatprep.subr.bf16.mxu0 0
        %2526 = vmatpush1.bf16.xpose.msra.mxu0 0
        %2527 = vmatprep.subr.bf16.mxu0 0
        %2528 = vmatpush1.bf16.xpose.msra.mxu0 0
        %2529 = vmatprep.subr.bf16.mxu0 0
        %2530 = vmatpush1.bf16.xpose.msra.mxu0 0
        %2531 = vmatprep.subr.bf16.mxu0 0
        %2532 = vmatpush1.bf16.xpose.msra.mxu0 0
        %2533 = vmatprep.subr.bf16.mxu0 0
        %2534 = vmatpush1.bf16.xpose.msra.mxu0 0
        %2535 = vmatprep.subr.bf16.mxu0 0
        %2536 = vmatpush1.bf16.xpose.msra.mxu0 0
        %2537 = vmatprep.subr.bf16.mxu0 0
        %2538 = vmatpush1.bf16.xpose.msra.mxu0 0
        %2539 = vmatprep.mubr.bf16.mxu0 0
        %2540 = vmatmul.mubr.bf16.gmra.mrb[0].mxu0 %v2502
        %v2541 = vpop.f32.mrb[0].mxu0
        %v2542 = vadd.f32 %v686, %v2541
        %v2543 = vpop.f32.mrb[0].mxu0
        %v2544 = vpop.f32.mrb[0].mxu0
        %v2545 = vpop.f32.mrb[0].mxu0
        %2546 = vdwg.mxu0
        %v2547 = vsel %vm996, %v2542, -inf
        %2548 = vmax.xlane.f32.xlu0 %v2547
        %v2549 = vpop.xlane.xlu0 %2548
        %v2550 = vsub.f32 %v2542, %v2549
        %v2551 = vmul.f32 %v2550, 1.442695
        %v2552 = vpow.pop %v2551
        %v2553 = vsel %vm996, %v2552, 0.0
        %2554 = vadd.xlane.f32.xlu0 %v2553
        %v2555 = vpop.xlane.xlu0 %2554
        %v2556 = vrcp.pop %v2555
        %v2557 = vmul.f32 %v2552, %v2556
        %v2558 = vpack.c.bf16 %v2557, %v2557
        %2559 = vrot.lane.b32.xlu0 %v2170, 96
        %v2560 = vpop.permute.xlu0 %2559
        %v2562 = vsel %vm996, %v2558, 0
        %v2565 = vsel %vm1012, %v2560, 0
        %2567 = vmatprep.subr.bf16.mxu0 0
        %2568 = vmatpush1.bf16.msra.mxu0 %v2565
        %2569 = vmatprep.subr.bf16.mxu0 0
        %2570 = vmatpush1.bf16.msra.mxu0 0
        %2571 = vmatprep.subr.bf16.mxu0 0
        %2572 = vmatpush1.bf16.msra.mxu0 0
        %2573 = vmatprep.subr.bf16.mxu0 0
        %2574 = vmatpush1.bf16.msra.mxu0 0
        %2575 = vmatprep.subr.bf16.mxu0 0
        %2576 = vmatpush1.bf16.msra.mxu0 0
        %2577 = vmatprep.subr.bf16.mxu0 0
        %2578 = vmatpush1.bf16.msra.mxu0 0
        %2579 = vmatprep.subr.bf16.mxu0 0
        %2580 = vmatpush1.bf16.msra.mxu0 0
        %2581 = vmatprep.subr.bf16.mxu0 0
        %2582 = vmatpush1.bf16.msra.mxu0 0
        %2583 = vmatprep.subr.bf16.mxu0 0
        %2584 = vmatpush1.bf16.msra.mxu0 0
        %2585 = vmatprep.subr.bf16.mxu0 0
        %2586 = vmatpush1.bf16.msra.mxu0 0
        %2587 = vmatprep.subr.bf16.mxu0 0
        %2588 = vmatpush1.bf16.msra.mxu0 0
        %2589 = vmatprep.subr.bf16.mxu0 0
        %2590 = vmatpush1.bf16.msra.mxu0 0
        %2591 = vmatprep.subr.bf16.mxu0 0
        %2592 = vmatpush1.bf16.msra.mxu0 0
        %2593 = vmatprep.subr.bf16.mxu0 0
        %2594 = vmatpush1.bf16.msra.mxu0 0
        %2595 = vmatprep.subr.bf16.mxu0 0
        %2596 = vmatpush1.bf16.msra.mxu0 0
        %2597 = vmatprep.subr.bf16.mxu0 0
        %2598 = vmatpush1.bf16.msra.mxu0 0
        %2599 = vmatprep.mubr.bf16.mxu0 0
        %2600 = vmatmul.mubr.bf16.gmra.mrb[0].mxu0 %v2562
        %v2601 = vpop.f32.mrb[0].mxu0
        %v2602 = vadd.f32 0.0, %v2601
        %v2603 = vpop.f32.mrb[0].mxu0
        %v2604 = vpop.f32.mrb[0].mxu0
        %v2605 = vpop.f32.mrb[0].mxu0
        %2606 = vdwg.mxu0
        %v2607 = vpack.c.bf16 %v2602, %v2602
        %v2610 = vunpack.c.l.b16 %v2176
        %v2611 = vunpack.c.l.b16 %v2177
        %v2612 = vpack.c.b16 %v2611, %v2610
        %v2615 = vsel %vm949, %v2607, 0
        %2617 = vmatprep.subr.bf16.mxu0 0
        %2618 = vmatpush1.bf16.msra.mxu0 %v2612
        %2619 = vmatprep.subr.bf16.mxu0 0
        %2620 = vmatpush1.bf16.msra.mxu0 0
        %2621 = vmatprep.subr.bf16.mxu0 0
        %2622 = vmatpush1.bf16.msra.mxu0 0
        %2623 = vmatprep.subr.bf16.mxu0 0
        %2624 = vmatpush1.bf16.msra.mxu0 0
        %2625 = vmatprep.subr.bf16.mxu0 0
        %2626 = vmatpush1.bf16.msra.mxu0 0
        %2627 = vmatprep.subr.bf16.mxu0 0
        %2628 = vmatpush1.bf16.msra.mxu0 0
        %2629 = vmatprep.subr.bf16.mxu0 0
        %2630 = vmatpush1.bf16.msra.mxu0 0
        %2631 = vmatprep.subr.bf16.mxu0 0
        %2632 = vmatpush1.bf16.msra.mxu0 0
        %2633 = vmatprep.subr.bf16.mxu0 0
        %2634 = vmatpush1.bf16.msra.mxu0 0
        %2635 = vmatprep.subr.bf16.mxu0 0
        %2636 = vmatpush1.bf16.msra.mxu0 0
        %2637 = vmatprep.subr.bf16.mxu0 0
        %2638 = vmatpush1.bf16.msra.mxu0 0
        %2639 = vmatprep.subr.bf16.mxu0 0
        %2640 = vmatpush1.bf16.msra.mxu0 0
        %2641 = vmatprep.subr.bf16.mxu0 0
        %2642 = vmatpush1.bf16.msra.mxu0 0
        %2643 = vmatprep.subr.bf16.mxu0 0
        %2644 = vmatpush1.bf16.msra.mxu0 0
        %2645 = vmatprep.subr.bf16.mxu0 0
        %2646 = vmatpush1.bf16.msra.mxu0 0
        %2647 = vmatprep.subr.bf16.mxu0 0
        %2648 = vmatpush1.bf16.msra.mxu0 0
        %2649 = vmatprep.mubr.bf16.mxu0 0
        %2650 = vmatmul.mubr.bf16.gmra.mrb[0].mxu0 %v2615
        %v2651 = vpop.f32.mrb[0].mxu0
        %v2652 = vadd.f32 0.0, %v2651
        %v2653 = vpop.f32.mrb[0].mxu0
        %v2654 = vpop.f32.mrb[0].mxu0
        %v2655 = vpop.f32.mrb[0].mxu0
        %2656 = vdwg.mxu0
        %v2657 = vadd.f32 %v2492, %v2652
        %2658 = vrot.lane.b32.xlu0 %v2168, 80
        %v2659 = vpop.permute.xlu0 %2658
        %2660 = vrot.lane.b32.xlu0 %v2169, 80
        %v2661 = vpop.permute.xlu0 %2660
        %v2663 = vsel %vm949, %v2659, 0
        %v2666 = vsel %vm949, %v2661, 0
        %2668 = vmatprep.subr.bf16.mxu0 0
        %2669 = vmatpush1.bf16.xpose.msra.mxu0 %v2666
        %2670 = vmatprep.subr.bf16.mxu0 0
        %2671 = vmatpush1.bf16.xpose.msra.mxu0 0
        %2672 = vmatprep.subr.bf16.mxu0 0
        %2673 = vmatpush1.bf16.xpose.msra.mxu0 0
        %2674 = vmatprep.subr.bf16.mxu0 0
        %2675 = vmatpush1.bf16.xpose.msra.mxu0 0
        %2676 = vmatprep.subr.bf16.mxu0 0
        %2677 = vmatpush1.bf16.xpose.msra.mxu0 0
        %2678 = vmatprep.subr.bf16.mxu0 0
        %2679 = vmatpush1.bf16.xpose.msra.mxu0 0
        %2680 = vmatprep.subr.bf16.mxu0 0
        %2681 = vmatpush1.bf16.xpose.msra.mxu0 0
        %2682 = vmatprep.subr.bf16.mxu0 0
        %2683 = vmatpush1.bf16.xpose.msra.mxu0 0
        %2684 = vmatprep.subr.bf16.mxu0 0
        %2685 = vmatpush1.bf16.xpose.msra.mxu0 0
        %2686 = vmatprep.subr.bf16.mxu0 0
        %2687 = vmatpush1.bf16.xpose.msra.mxu0 0
        %2688 = vmatprep.subr.bf16.mxu0 0
        %2689 = vmatpush1.bf16.xpose.msra.mxu0 0
        %2690 = vmatprep.subr.bf16.mxu0 0
        %2691 = vmatpush1.bf16.xpose.msra.mxu0 0
        %2692 = vmatprep.subr.bf16.mxu0 0
        %2693 = vmatpush1.bf16.xpose.msra.mxu0 0
        %2694 = vmatprep.subr.bf16.mxu0 0
        %2695 = vmatpush1.bf16.xpose.msra.mxu0 0
        %2696 = vmatprep.subr.bf16.mxu0 0
        %2697 = vmatpush1.bf16.xpose.msra.mxu0 0
        %2698 = vmatprep.subr.bf16.mxu0 0
        %2699 = vmatpush1.bf16.xpose.msra.mxu0 0
        %2700 = vmatprep.mubr.bf16.mxu0 0
        %2701 = vmatmul.mubr.bf16.gmra.mrb[0].mxu0 %v2663
        %v2702 = vpop.f32.mrb[0].mxu0
        %v2703 = vadd.f32 %v686, %v2702
        %v2704 = vpop.f32.mrb[0].mxu0
        %v2705 = vpop.f32.mrb[0].mxu0
        %v2706 = vpop.f32.mrb[0].mxu0
        %2707 = vdwg.mxu0
        %v2708 = vsel %vm996, %v2703, -inf
        %2709 = vmax.xlane.f32.xlu0 %v2708
        %v2710 = vpop.xlane.xlu0 %2709
        %v2711 = vsub.f32 %v2703, %v2710
        %v2712 = vmul.f32 %v2711, 1.442695
        %v2713 = vpow.pop %v2712
        %v2714 = vsel %vm996, %v2713, 0.0
        %2715 = vadd.xlane.f32.xlu0 %v2714
        %v2716 = vpop.xlane.xlu0 %2715
        %v2717 = vrcp.pop %v2716
        %v2718 = vmul.f32 %v2713, %v2717
        %v2719 = vpack.c.bf16 %v2718, %v2718
        %2720 = vrot.lane.b32.xlu0 %v2170, 80
        %v2721 = vpop.permute.xlu0 %2720
        %v2723 = vsel %vm996, %v2719, 0
        %v2726 = vsel %vm1012, %v2721, 0
        %2728 = vmatprep.subr.bf16.mxu0 0
        %2729 = vmatpush1.bf16.msra.mxu0 %v2726
        %2730 = vmatprep.subr.bf16.mxu0 0
        %2731 = vmatpush1.bf16.msra.mxu0 0
        %2732 = vmatprep.subr.bf16.mxu0 0
        %2733 = vmatpush1.bf16.msra.mxu0 0
        %2734 = vmatprep.subr.bf16.mxu0 0
        %2735 = vmatpush1.bf16.msra.mxu0 0
        %2736 = vmatprep.subr.bf16.mxu0 0
        %2737 = vmatpush1.bf16.msra.mxu0 0
        %2738 = vmatprep.subr.bf16.mxu0 0
        %2739 = vmatpush1.bf16.msra.mxu0 0
        %2740 = vmatprep.subr.bf16.mxu0 0
        %2741 = vmatpush1.bf16.msra.mxu0 0
        %2742 = vmatprep.subr.bf16.mxu0 0
        %2743 = vmatpush1.bf16.msra.mxu0 0
        %2744 = vmatprep.subr.bf16.mxu0 0
        %2745 = vmatpush1.bf16.msra.mxu0 0
        %2746 = vmatprep.subr.bf16.mxu0 0
        %2747 = vmatpush1.bf16.msra.mxu0 0
        %2748 = vmatprep.subr.bf16.mxu0 0
        %2749 = vmatpush1.bf16.msra.mxu0 0
        %2750 = vmatprep.subr.bf16.mxu0 0
        %2751 = vmatpush1.bf16.msra.mxu0 0
        %2752 = vmatprep.subr.bf16.mxu0 0
        %2753 = vmatpush1.bf16.msra.mxu0 0
        %2754 = vmatprep.subr.bf16.mxu0 0
        %2755 = vmatpush1.bf16.msra.mxu0 0
        %2756 = vmatprep.subr.bf16.mxu0 0
        %2757 = vmatpush1.bf16.msra.mxu0 0
        %2758 = vmatprep.subr.bf16.mxu0 0
        %2759 = vmatpush1.bf16.msra.mxu0 0
        %2760 = vmatprep.mubr.bf16.mxu0 0
        %2761 = vmatmul.mubr.bf16.gmra.mrb[0].mxu0 %v2723
        %v2762 = vpop.f32.mrb[0].mxu0
        %v2763 = vadd.f32 0.0, %v2762
        %v2764 = vpop.f32.mrb[0].mxu0
        %v2765 = vpop.f32.mrb[0].mxu0
        %v2766 = vpop.f32.mrb[0].mxu0
        %2767 = vdwg.mxu0
        %v2768 = vpack.c.bf16 %v2763, %v2763
        %v2771 = vunpack.c.l.b16 %v2178
        %v2772 = vunpack.c.l.b16 %v2179
        %v2773 = vpack.c.b16 %v2772, %v2771
        %v2776 = vsel %vm949, %v2768, 0
        %2778 = vmatprep.subr.bf16.mxu0 0
        %2779 = vmatpush1.bf16.msra.mxu0 %v2773
        %2780 = vmatprep.subr.bf16.mxu0 0
        %2781 = vmatpush1.bf16.msra.mxu0 0
        %2782 = vmatprep.subr.bf16.mxu0 0
        %2783 = vmatpush1.bf16.msra.mxu0 0
        %2784 = vmatprep.subr.bf16.mxu0 0
        %2785 = vmatpush1.bf16.msra.mxu0 0
        %2786 = vmatprep.subr.bf16.mxu0 0
        %2787 = vmatpush1.bf16.msra.mxu0 0
        %2788 = vmatprep.subr.bf16.mxu0 0
        %2789 = vmatpush1.bf16.msra.mxu0 0
        %2790 = vmatprep.subr.bf16.mxu0 0
        %2791 = vmatpush1.bf16.msra.mxu0 0
        %2792 = vmatprep.subr.bf16.mxu0 0
        %2793 = vmatpush1.bf16.msra.mxu0 0
        %2794 = vmatprep.subr.bf16.mxu0 0
        %2795 = vmatpush1.bf16.msra.mxu0 0
        %2796 = vmatprep.subr.bf16.mxu0 0
        %2797 = vmatpush1.bf16.msra.mxu0 0
        %2798 = vmatprep.subr.bf16.mxu0 0
        %2799 = vmatpush1.bf16.msra.mxu0 0
        %2800 = vmatprep.subr.bf16.mxu0 0
        %2801 = vmatpush1.bf16.msra.mxu0 0
        %2802 = vmatprep.subr.bf16.mxu0 0
        %2803 = vmatpush1.bf16.msra.mxu0 0
        %2804 = vmatprep.subr.bf16.mxu0 0
        %2805 = vmatpush1.bf16.msra.mxu0 0
        %2806 = vmatprep.subr.bf16.mxu0 0
        %2807 = vmatpush1.bf16.msra.mxu0 0
        %2808 = vmatprep.subr.bf16.mxu0 0
        %2809 = vmatpush1.bf16.msra.mxu0 0
        %2810 = vmatprep.mubr.bf16.mxu0 0
        %2811 = vmatmul.mubr.bf16.gmra.mrb[0].mxu0 %v2776
        %v2812 = vpop.f32.mrb[0].mxu0
        %v2813 = vadd.f32 0.0, %v2812
        %v2814 = vpop.f32.mrb[0].mxu0
        %v2815 = vpop.f32.mrb[0].mxu0
        %v2816 = vpop.f32.mrb[0].mxu0
        %2817 = vdwg.mxu0
        %v2818 = vadd.f32 %v2657, %v2813
        %v2819 = vadd.f32 %v1913, %v2818
        %s2820 = scalar_lea.vmem [#allocation8], 1
        %v2821 = vld [vmem:[%s2820] sm:$0x1]
        %v2823 = vlaneseq
        %v2824 = vshrl.u32 %v2823, 7
        %v2825 = vsub.s32 0, %v2824
        %v2826 = vrot.slane %v2821, %v2825
        %v2828 = vadd.f32 %v2819, %v2826
        %s2829 = scalar_lea.vmem [#allocation10], 1
        %v2830 = vld [vmem:[%s2829] sm:$0x1]
        %s2831 = scalar_lea.vmem [#allocation11], 1
        %v2832 = vld [vmem:[%s2831] sm:$0x1]
        %v2833 = vsel %vm689, %v2828, 0.0
        %2834 = vadd.xlane.f32.xlu0 %v2833
        %v2835 = vpop.xlane.xlu0 %2834
        %v2836 = vmul.f32 %v2835, %v693
        %v2837 = vsub.f32 %v2828, %v2836
        %v2838 = vmul.f32 %v2837, %v2837
        %v2839 = vsel %vm689, %v2838, 0.0
        %2840 = vadd.xlane.f32.xlu0 %v2839
        %v2841 = vpop.xlane.xlu0 %2840
        %v2842 = vmul.f32 %v2841, %v693
        %v2843 = vadd.f32 %v2842, 1e-05
        %v2844 = vrsqrt.pop %v2843
        %v2845 = vmul.f32 %v2837, %v2844
        %v2847 = vlaneseq
        %v2848 = vshrl.u32 %v2847, 7
        %v2849 = vsub.s32 0, %v2848
        %v2850 = vrot.slane %v2830, %v2849
        %v2852 = vmul.f32 %v2845, %v2850
        %v2854 = vlaneseq
        %v2855 = vshrl.u32 %v2854, 7
        %v2856 = vsub.s32 0, %v2855
        %v2857 = vrot.slane %v2832, %v2856
        %v2859 = vadd.f32 %v2852, %v2857
        %v2860 = vpack.c.bf16 %v2859, %v2859
        %s2861 = scalar_lea.vmem %s10, 64
        %v2862 = vld [vmem:[%s2861] sm:$0xff]
        %v2863 = vld [vmem:[%s2861 + $0x8] sm:$0xff]
        %v2864 = vld [vmem:[%s2861 + $0x10] sm:$0xff]
        %v2865 = vld [vmem:[%s2861 + $0x18] sm:$0xff]
        %v2866 = vld [vmem:[%s2861 + $0x20] sm:$0xff]
        %v2867 = vld [vmem:[%s2861 + $0x28] sm:$0xff]
        %v2868 = vld [vmem:[%s2861 + $0x30] sm:$0xff]
        %v2869 = vld [vmem:[%s2861 + $0x38] sm:$0xff]
        %s2870 = scalar_lea.vmem [#allocation13], 2
        %v2871 = vld [vmem:[%s2870] sm:$0x3]
        %v2873 = vlaneseq
        %v2874 = vshrl.u32 %v2873, 7
        %v2875 = vsub.s32 0, %v2874
        %v2876 = vrot.slane %v2871, %v2875
        %v2877 = vlaneseq
        %v2878 = vshrl.u32 %v2877, 7
        %v2879 = vsub.s32 1, %v2878
        %v2880 = vrot.slane %v2871, %v2879
        %v2891 = vunpack.c.l.b16 %v2862
        %v2892 = vunpack.c.h.b16 %v2862
        %v2893 = vunpack.c.l.b16 %v2863
        %v2894 = vunpack.c.h.b16 %v2863
        %v2895 = vunpack.c.l.b16 %v2864
        %v2896 = vunpack.c.h.b16 %v2864
        %v2897 = vunpack.c.l.b16 %v2865
        %v2898 = vunpack.c.h.b16 %v2865
        %v2899 = vunpack.c.l.b16 %v2866
        %v2900 = vunpack.c.h.b16 %v2866
        %v2901 = vunpack.c.l.b16 %v2867
        %v2902 = vunpack.c.h.b16 %v2867
        %v2903 = vunpack.c.l.b16 %v2868
        %v2904 = vunpack.c.h.b16 %v2868
        %v2905 = vunpack.c.l.b16 %v2869
        %v2906 = vunpack.c.h.b16 %v2869
        %v2907 = vpack.c.b16 %v2893, %v2891
        %v2908 = vpack.c.b16 %v2894, %v2892
        %v2909 = vpack.c.b16 %v2897, %v2895
        %v2910 = vpack.c.b16 %v2898, %v2896
        %v2911 = vpack.c.b16 %v2901, %v2899
        %v2912 = vpack.c.b16 %v2902, %v2900
        %v2913 = vpack.c.b16 %v2905, %v2903
        %v2914 = vpack.c.b16 %v2906, %v2904
        %v2924 = vsel %vm689, %v2860, 0
        %2926 = vmatprep.subr.bf16.mxu0 %v2908
        %2927 = vmatpush1.bf16.msra.mxu0 %v2907
        %2928 = vmatprep.subr.bf16.mxu0 %v2910
        %2929 = vmatpush1.bf16.msra.mxu0 %v2909
        %2930 = vmatprep.subr.bf16.mxu0 %v2912
        %2931 = vmatpush1.bf16.msra.mxu0 %v2911
        %2932 = vmatprep.subr.bf16.mxu0 %v2914
        %2933 = vmatpush1.bf16.msra.mxu0 %v2913
        %2934 = vmatprep.subr.bf16.mxu0 0
        %2935 = vmatpush1.bf16.msra.mxu0 0
        %2936 = vmatprep.subr.bf16.mxu0 0
        %2937 = vmatpush1.bf16.msra.mxu0 0
        %2938 = vmatprep.subr.bf16.mxu0 0
        %2939 = vmatpush1.bf16.msra.mxu0 0
        %2940 = vmatprep.subr.bf16.mxu0 0
        %2941 = vmatpush1.bf16.msra.mxu0 0
        %2942 = vmatprep.subr.bf16.mxu0 0
        %2943 = vmatpush1.bf16.msra.mxu0 0
        %2944 = vmatprep.subr.bf16.mxu0 0
        %2945 = vmatpush1.bf16.msra.mxu0 0
        %2946 = vmatprep.subr.bf16.mxu0 0
        %2947 = vmatpush1.bf16.msra.mxu0 0
        %2948 = vmatprep.subr.bf16.mxu0 0
        %2949 = vmatpush1.bf16.msra.mxu0 0
        %2950 = vmatprep.subr.bf16.mxu0 0
        %2951 = vmatpush1.bf16.msra.mxu0 0
        %2952 = vmatprep.subr.bf16.mxu0 0
        %2953 = vmatpush1.bf16.msra.mxu0 0
        %2954 = vmatprep.subr.bf16.mxu0 0
        %2955 = vmatpush1.bf16.msra.mxu0 0
        %2956 = vmatprep.subr.bf16.mxu0 0
        %2957 = vmatpush1.bf16.msra.mxu0 0
        %2958 = vmatprep.mubr.bf16.mxu0 0
        %2959 = vmatmul.mubr.bf16.gmra.mrb[0].mxu0 %v2924
        %v2960 = vpop.f32.mrb[0].mxu0
        %v2961 = vadd.f32 %v2876, %v2960
        %v2962 = vpop.f32.mrb[0].mxu0
        %v2963 = vadd.f32 %v2880, %v2962
        %v2964 = vpop.f32.mrb[0].mxu0
        %v2965 = vpop.f32.mrb[0].mxu0
        %2966 = vdwg.mxu0
        %v2967 = vmax.f32 %v2961, 0.0
        %v2968 = vmax.f32 %v2963, 0.0
        %v2969 = vpack.c.bf16 %v2967, %v2967
        %v2970 = vpack.c.bf16 %v2968, %v2968
        %s2971 = scalar_lea.vmem %s12, 128
        %v2972 = vld [vmem:[%s2971] sm:$0xf]
        %v2973 = vld [vmem:[%s2971 + $0x4] sm:$0xf]
        %v2974 = vld [vmem:[%s2971 + $0x8] sm:$0xf]
        %v2975 = vld [vmem:[%s2971 + $0xc] sm:$0xf]
        %v2976 = vld [vmem:[%s2971 + $0x10] sm:$0xf]
        %v2977 = vld [vmem:[%s2971 + $0x14] sm:$0xf]
        %v2978 = vld [vmem:[%s2971 + $0x18] sm:$0xf]
        %v2979 = vld [vmem:[%s2971 + $0x1c] sm:$0xf]
        %v2980 = vld [vmem:[%s2971 + $0x20] sm:$0xf]
        %v2981 = vld [vmem:[%s2971 + $0x24] sm:$0xf]
        %v2982 = vld [vmem:[%s2971 + $0x28] sm:$0xf]
        %v2983 = vld [vmem:[%s2971 + $0x2c] sm:$0xf]
        %v2984 = vld [vmem:[%s2971 + $0x30] sm:$0xf]
        %v2985 = vld [vmem:[%s2971 + $0x34] sm:$0xf]
        %v2986 = vld [vmem:[%s2971 + $0x38] sm:$0xf]
        %v2987 = vld [vmem:[%s2971 + $0x3c] sm:$0xf]
        %v2988 = vld [vmem:[%s2971 + $0x40] sm:$0xf]
        %v2989 = vld [vmem:[%s2971 + $0x44] sm:$0xf]
        %v2990 = vld [vmem:[%s2971 + $0x48] sm:$0xf]
        %v2991 = vld [vmem:[%s2971 + $0x4c] sm:$0xf]
        %v2992 = vld [vmem:[%s2971 + $0x50] sm:$0xf]
        %v2993 = vld [vmem:[%s2971 + $0x54] sm:$0xf]
        %v2994 = vld [vmem:[%s2971 + $0x58] sm:$0xf]
        %v2995 = vld [vmem:[%s2971 + $0x5c] sm:$0xf]
        %v2996 = vld [vmem:[%s2971 + $0x60] sm:$0xf]
        %v2997 = vld [vmem:[%s2971 + $0x64] sm:$0xf]
        %v2998 = vld [vmem:[%s2971 + $0x68] sm:$0xf]
        %v2999 = vld [vmem:[%s2971 + $0x6c] sm:$0xf]
        %v3000 = vld [vmem:[%s2971 + $0x70] sm:$0xf]
        %v3001 = vld [vmem:[%s2971 + $0x74] sm:$0xf]
        %v3002 = vld [vmem:[%s2971 + $0x78] sm:$0xf]
        %v3003 = vld [vmem:[%s2971 + $0x7c] sm:$0xf]
        %s3004 = scalar_lea.vmem %s13, 1
        %v3005 = vld [vmem:[%s3004] sm:$0x1]
        %v3007 = vlaneseq
        %v3008 = vshrl.u32 %v3007, 7
        %v3009 = vsub.s32 0, %v3008
        %v3010 = vrot.slane %v3005, %v3009
        %v3044 = vunpack.c.l.b16 %v2972
        %v3045 = vunpack.c.l.b16 %v2973
        %v3046 = vunpack.c.l.b16 %v2974
        %v3047 = vunpack.c.l.b16 %v2975
        %v3048 = vunpack.c.l.b16 %v2976
        %v3049 = vunpack.c.l.b16 %v2977
        %v3050 = vunpack.c.l.b16 %v2978
        %v3051 = vunpack.c.l.b16 %v2979
        %v3052 = vunpack.c.l.b16 %v2980
        %v3053 = vunpack.c.l.b16 %v2981
        %v3054 = vunpack.c.l.b16 %v2982
        %v3055 = vunpack.c.l.b16 %v2983
        %v3056 = vunpack.c.l.b16 %v2984
        %v3057 = vunpack.c.l.b16 %v2985
        %v3058 = vunpack.c.l.b16 %v2986
        %v3059 = vunpack.c.l.b16 %v2987
        %v3060 = vunpack.c.l.b16 %v2988
        %v3061 = vunpack.c.l.b16 %v2989
        %v3062 = vunpack.c.l.b16 %v2990
        %v3063 = vunpack.c.l.b16 %v2991
        %v3064 = vunpack.c.l.b16 %v2992
        %v3065 = vunpack.c.l.b16 %v2993
        %v3066 = vunpack.c.l.b16 %v2994
        %v3067 = vunpack.c.l.b16 %v2995
        %v3068 = vunpack.c.l.b16 %v2996
        %v3069 = vunpack.c.l.b16 %v2997
        %v3070 = vunpack.c.l.b16 %v2998
        %v3071 = vunpack.c.l.b16 %v2999
        %v3072 = vunpack.c.l.b16 %v3000
        %v3073 = vunpack.c.l.b16 %v3001
        %v3074 = vunpack.c.l.b16 %v3002
        %v3075 = vunpack.c.l.b16 %v3003
        %v3076 = vpack.c.b16 %v3045, %v3044
        %v3077 = vpack.c.b16 %v3047, %v3046
        %v3078 = vpack.c.b16 %v3049, %v3048
        %v3079 = vpack.c.b16 %v3051, %v3050
        %v3080 = vpack.c.b16 %v3053, %v3052
        %v3081 = vpack.c.b16 %v3055, %v3054
        %v3082 = vpack.c.b16 %v3057, %v3056
        %v3083 = vpack.c.b16 %v3059, %v3058
        %v3084 = vpack.c.b16 %v3061, %v3060
        %v3085 = vpack.c.b16 %v3063, %v3062
        %v3086 = vpack.c.b16 %v3065, %v3064
        %v3087 = vpack.c.b16 %v3067, %v3066
        %v3088 = vpack.c.b16 %v3069, %v3068
        %v3089 = vpack.c.b16 %v3071, %v3070
        %v3090 = vpack.c.b16 %v3073, %v3072
        %v3091 = vpack.c.b16 %v3075, %v3074
        %3108 = vmatprep.subr.bf16.mxu0 0
        %3109 = vmatpush1.bf16.msra.mxu0 %v3076
        %3110 = vmatprep.subr.bf16.mxu0 0
        %3111 = vmatpush1.bf16.msra.mxu0 %v3077
        %3112 = vmatprep.subr.bf16.mxu0 0
        %3113 = vmatpush1.bf16.msra.mxu0 %v3078
        %3114 = vmatprep.subr.bf16.mxu0 0
        %3115 = vmatpush1.bf16.msra.mxu0 %v3079
        %3116 = vmatprep.subr.bf16.mxu0 0
        %3117 = vmatpush1.bf16.msra.mxu0 %v3080
        %3118 = vmatprep.subr.bf16.mxu0 0
        %3119 = vmatpush1.bf16.msra.mxu0 %v3081
        %3120 = vmatprep.subr.bf16.mxu0 0
        %3121 = vmatpush1.bf16.msra.mxu0 %v3082
        %3122 = vmatprep.subr.bf16.mxu0 0
        %3123 = vmatpush1.bf16.msra.mxu0 %v3083
        %3124 = vmatprep.subr.bf16.mxu0 0
        %3125 = vmatpush1.bf16.msra.mxu0 %v3084
        %3126 = vmatprep.subr.bf16.mxu0 0
        %3127 = vmatpush1.bf16.msra.mxu0 %v3085
        %3128 = vmatprep.subr.bf16.mxu0 0
        %3129 = vmatpush1.bf16.msra.mxu0 %v3086
        %3130 = vmatprep.subr.bf16.mxu0 0
        %3131 = vmatpush1.bf16.msra.mxu0 %v3087
        %3132 = vmatprep.subr.bf16.mxu0 0
        %3133 = vmatpush1.bf16.msra.mxu0 %v3088
        %3134 = vmatprep.subr.bf16.mxu0 0
        %3135 = vmatpush1.bf16.msra.mxu0 %v3089
        %3136 = vmatprep.subr.bf16.mxu0 0
        %3137 = vmatpush1.bf16.msra.mxu0 %v3090
        %3138 = vmatprep.subr.bf16.mxu0 0
        %3139 = vmatpush1.bf16.msra.mxu0 %v3091
        %3140 = vmatprep.mubr.bf16.mxu0 %v2970
        %3141 = vmatmul.mubr.bf16.gmra.mrb[0].mxu0 %v2969
        %v3142 = vpop.f32.mrb[0].mxu0
        %v3143 = vadd.f32 %v3010, %v3142
        %v3144 = vpop.f32.mrb[0].mxu0
        %v3145 = vpop.f32.mrb[0].mxu0
        %v3146 = vpop.f32.mrb[0].mxu0
        %3147 = vdwg.mxu0
        %v3148 = vadd.f32 %v2828, %v3143
        %s3149 = scalar_lea.vmem [#allocation5], 2
        %v3150 = vld [vmem:[%s3149] sm:$0x1]
        %s3151 = scalar_lea.vmem [#allocation7], 2
        %v3152 = vld [vmem:[%s3151] sm:$0x1]
        %v3153 = vsel %vm689, %v3148, 0.0
        %3154 = vadd.xlane.f32.xlu0 %v3153
        %v3155 = vpop.xlane.xlu0 %3154
        %v3156 = vmul.f32 %v3155, %v693
        %v3157 = vsub.f32 %v3148, %v3156
        %v3158 = vmul.f32 %v3157, %v3157
        %v3159 = vsel %vm689, %v3158, 0.0
        %3160 = vadd.xlane.f32.xlu0 %v3159
        %v3161 = vpop.xlane.xlu0 %3160
        %v3162 = vmul.f32 %v3161, %v693
        %v3163 = vadd.f32 %v3162, 1e-05
        %v3164 = vrsqrt.pop %v3163
        %v3165 = vmul.f32 %v3157, %v3164
        %v3167 = vlaneseq
        %v3168 = vshrl.u32 %v3167, 7
        %v3169 = vsub.s32 0, %v3168
        %v3170 = vrot.slane %v3150, %v3169
        %v3172 = vmul.f32 %v3165, %v3170
        %v3174 = vlaneseq
        %v3175 = vshrl.u32 %v3174, 7
        %v3176 = vsub.s32 0, %v3175
        %v3177 = vrot.slane %v3152, %v3176
        %v3179 = vadd.f32 %v3172, %v3177
        %v3180 = vpack.c.bf16 %v3179, %v3179
        %s3181 = scalar_lea.vmem %s3, 64
        %v3182 = vld [vmem:[%s3181] sm:$0xf]
        %v3183 = vld [vmem:[%s3181 + $0x4] sm:$0xf]
        %v3184 = vld [vmem:[%s3181 + $0x8] sm:$0xf]
        %v3185 = vld [vmem:[%s3181 + $0xc] sm:$0xf]
        %v3186 = vld [vmem:[%s3181 + $0x10] sm:$0xf]
        %v3187 = vld [vmem:[%s3181 + $0x14] sm:$0xf]
        %v3188 = vld [vmem:[%s3181 + $0x18] sm:$0xf]
        %v3189 = vld [vmem:[%s3181 + $0x1c] sm:$0xf]
        %v3198 = vunpack.c.l.b16 %v3182
        %v3199 = vunpack.c.l.b16 %v3183
        %v3200 = vunpack.c.l.b16 %v3184
        %v3201 = vunpack.c.l.b16 %v3185
        %v3202 = vunpack.c.l.b16 %v3186
        %v3203 = vunpack.c.l.b16 %v3187
        %v3204 = vunpack.c.l.b16 %v3188
        %v3205 = vunpack.c.l.b16 %v3189
        %v3206 = vpack.c.b16 %v3199, %v3198
        %v3207 = vpack.c.b16 %v3201, %v3200
        %v3208 = vpack.c.b16 %v3203, %v3202
        %v3209 = vpack.c.b16 %v3205, %v3204
        %v3215 = vsel %vm689, %v3180, 0
        %3217 = vmatprep.subr.bf16.mxu0 0
        %3218 = vmatpush1.bf16.msra.mxu0 %v3206
        %3219 = vmatprep.subr.bf16.mxu0 0
        %3220 = vmatpush1.bf16.msra.mxu0 %v3207
        %3221 = vmatprep.subr.bf16.mxu0 0
        %3222 = vmatpush1.bf16.msra.mxu0 %v3208
        %3223 = vmatprep.subr.bf16.mxu0 0
        %3224 = vmatpush1.bf16.msra.mxu0 %v3209
        %3225 = vmatprep.subr.bf16.mxu0 0
        %3226 = vmatpush1.bf16.msra.mxu0 0
        %3227 = vmatprep.subr.bf16.mxu0 0
        %3228 = vmatpush1.bf16.msra.mxu0 0
        %3229 = vmatprep.subr.bf16.mxu0 0
        %3230 = vmatpush1.bf16.msra.mxu0 0
        %3231 = vmatprep.subr.bf16.mxu0 0
        %3232 = vmatpush1.bf16.msra.mxu0 0
        %3233 = vmatprep.subr.bf16.mxu0 0
        %3234 = vmatpush1.bf16.msra.mxu0 0
        %3235 = vmatprep.subr.bf16.mxu0 0
        %3236 = vmatpush1.bf16.msra.mxu0 0
        %3237 = vmatprep.subr.bf16.mxu0 0
        %3238 = vmatpush1.bf16.msra.mxu0 0
        %3239 = vmatprep.subr.bf16.mxu0 0
        %3240 = vmatpush1.bf16.msra.mxu0 0
        %3241 = vmatprep.subr.bf16.mxu0 0
        %3242 = vmatpush1.bf16.msra.mxu0 0
        %3243 = vmatprep.subr.bf16.mxu0 0
        %3244 = vmatpush1.bf16.msra.mxu0 0
        %3245 = vmatprep.subr.bf16.mxu0 0
        %3246 = vmatpush1.bf16.msra.mxu0 0
        %3247 = vmatprep.subr.bf16.mxu0 0
        %3248 = vmatpush1.bf16.msra.mxu0 0
        %3249 = vmatprep.mubr.bf16.mxu0 0
        %3250 = vmatmul.mubr.bf16.gmra.mrb[0].mxu0 %v3215
        %v3251 = vpop.f32.mrb[0].mxu0
        %v3252 = vadd.f32 0.0, %v3251
        %v3253 = vpop.f32.mrb[0].mxu0
        %v3254 = vpop.f32.mrb[0].mxu0
        %v3255 = vpop.f32.mrb[0].mxu0
        %3256 = vdwg.mxu0
        %s3257 = scalar_lea.vmem %s4, 64
        %v3258 = vld [vmem:[%s3257] sm:$0xf]
        %v3259 = vld [vmem:[%s3257 + $0x4] sm:$0xf]
        %v3260 = vld [vmem:[%s3257 + $0x8] sm:$0xf]
        %v3261 = vld [vmem:[%s3257 + $0xc] sm:$0xf]
        %v3262 = vld [vmem:[%s3257 + $0x10] sm:$0xf]
        %v3263 = vld [vmem:[%s3257 + $0x14] sm:$0xf]
        %v3264 = vld [vmem:[%s3257 + $0x18] sm:$0xf]
        %v3265 = vld [vmem:[%s3257 + $0x1c] sm:$0xf]
        %v3274 = vunpack.c.l.b16 %v3258
        %v3275 = vunpack.c.l.b16 %v3259
        %v3276 = vunpack.c.l.b16 %v3260
        %v3277 = vunpack.c.l.b16 %v3261
        %v3278 = vunpack.c.l.b16 %v3262
        %v3279 = vunpack.c.l.b16 %v3263
        %v3280 = vunpack.c.l.b16 %v3264
        %v3281 = vunpack.c.l.b16 %v3265
        %v3282 = vpack.c.b16 %v3275, %v3274
        %v3283 = vpack.c.b16 %v3277, %v3276
        %v3284 = vpack.c.b16 %v3279, %v3278
        %v3285 = vpack.c.b16 %v3281, %v3280
        %3290 = vmatprep.subr.bf16.mxu0 0
        %3291 = vmatpush1.bf16.msra.mxu0 %v3282
        %3292 = vmatprep.subr.bf16.mxu0 0
        %3293 = vmatpush1.bf16.msra.mxu0 %v3283
        %3294 = vmatprep.subr.bf16.mxu0 0
        %3295 = vmatpush1.bf16.msra.mxu0 %v3284
        %3296 = vmatprep.subr.bf16.mxu0 0
        %3297 = vmatpush1.bf16.msra.mxu0 %v3285
        %3298 = vmatprep.subr.bf16.mxu0 0
        %3299 = vmatpush1.bf16.msra.mxu0 0
        %3300 = vmatprep.subr.bf16.mxu0 0
        %3301 = vmatpush1.bf16.msra.mxu0 0
        %3302 = vmatprep.subr.bf16.mxu0 0
        %3303 = vmatpush1.bf16.msra.mxu0 0
        %3304 = vmatprep.subr.bf16.mxu0 0
        %3305 = vmatpush1.bf16.msra.mxu0 0
        %3306 = vmatprep.subr.bf16.mxu0 0
        %3307 = vmatpush1.bf16.msra.mxu0 0
        %3308 = vmatprep.subr.bf16.mxu0 0
        %3309 = vmatpush1.bf16.msra.mxu0 0
        %3310 = vmatprep.subr.bf16.mxu0 0
        %3311 = vmatpush1.bf16.msra.mxu0 0
        %3312 = vmatprep.subr.bf16.mxu0 0
        %3313 = vmatpush1.bf16.msra.mxu0 0
        %3314 = vmatprep.subr.bf16.mxu0 0
        %3315 = vmatpush1.bf16.msra.mxu0 0
        %3316 = vmatprep.subr.bf16.mxu0 0
        %3317 = vmatpush1.bf16.msra.mxu0 0
        %3318 = vmatprep.subr.bf16.mxu0 0
        %3319 = vmatpush1.bf16.msra.mxu0 0
        %3320 = vmatprep.subr.bf16.mxu0 0
        %3321 = vmatpush1.bf16.msra.mxu0 0
        %3322 = vmatprep.mubr.bf16.mxu0 0
        %3323 = vmatmul.mubr.bf16.gmra.mrb[0].mxu0 %v3215
        %v3324 = vpop.f32.mrb[0].mxu0
        %v3325 = vadd.f32 0.0, %v3324
        %v3326 = vpop.f32.mrb[0].mxu0
        %v3327 = vpop.f32.mrb[0].mxu0
        %v3328 = vpop.f32.mrb[0].mxu0
        %3329 = vdwg.mxu0
        %s3330 = scalar_lea.vmem %s5, 64
        %v3331 = vld [vmem:[%s3330] sm:$0xf]
        %v3332 = vld [vmem:[%s3330 + $0x4] sm:$0xf]
        %v3333 = vld [vmem:[%s3330 + $0x8] sm:$0xf]
        %v3334 = vld [vmem:[%s3330 + $0xc] sm:$0xf]
        %v3335 = vld [vmem:[%s3330 + $0x10] sm:$0xf]
        %v3336 = vld [vmem:[%s3330 + $0x14] sm:$0xf]
        %v3337 = vld [vmem:[%s3330 + $0x18] sm:$0xf]
        %v3338 = vld [vmem:[%s3330 + $0x1c] sm:$0xf]
        %v3347 = vunpack.c.l.b16 %v3331
        %v3348 = vunpack.c.l.b16 %v3332
        %v3349 = vunpack.c.l.b16 %v3333
        %v3350 = vunpack.c.l.b16 %v3334
        %v3351 = vunpack.c.l.b16 %v3335
        %v3352 = vunpack.c.l.b16 %v3336
        %v3353 = vunpack.c.l.b16 %v3337
        %v3354 = vunpack.c.l.b16 %v3338
        %v3355 = vpack.c.b16 %v3348, %v3347
        %v3356 = vpack.c.b16 %v3350, %v3349
        %v3357 = vpack.c.b16 %v3352, %v3351
        %v3358 = vpack.c.b16 %v3354, %v3353
        %3363 = vmatprep.subr.bf16.mxu0 0
        %3364 = vmatpush1.bf16.msra.mxu0 %v3355
        %3365 = vmatprep.subr.bf16.mxu0 0
        %3366 = vmatpush1.bf16.msra.mxu0 %v3356
        %3367 = vmatprep.subr.bf16.mxu0 0
        %3368 = vmatpush1.bf16.msra.mxu0 %v3357
        %3369 = vmatprep.subr.bf16.mxu0 0
        %3370 = vmatpush1.bf16.msra.mxu0 %v3358
        %3371 = vmatprep.subr.bf16.mxu0 0
        %3372 = vmatpush1.bf16.msra.mxu0 0
        %3373 = vmatprep.subr.bf16.mxu0 0
        %3374 = vmatpush1.bf16.msra.mxu0 0
        %3375 = vmatprep.subr.bf16.mxu0 0
        %3376 = vmatpush1.bf16.msra.mxu0 0
        %3377 = vmatprep.subr.bf16.mxu0 0
        %3378 = vmatpush1.bf16.msra.mxu0 0
        %3379 = vmatprep.subr.bf16.mxu0 0
        %3380 = vmatpush1.bf16.msra.mxu0 0
        %3381 = vmatprep.subr.bf16.mxu0 0
        %3382 = vmatpush1.bf16.msra.mxu0 0
        %3383 = vmatprep.subr.bf16.mxu0 0
        %3384 = vmatpush1.bf16.msra.mxu0 0
        %3385 = vmatprep.subr.bf16.mxu0 0
        %3386 = vmatpush1.bf16.msra.mxu0 0
        %3387 = vmatprep.subr.bf16.mxu0 0
        %3388 = vmatpush1.bf16.msra.mxu0 0
        %3389 = vmatprep.subr.bf16.mxu0 0
        %3390 = vmatpush1.bf16.msra.mxu0 0
        %3391 = vmatprep.subr.bf16.mxu0 0
        %3392 = vmatpush1.bf16.msra.mxu0 0
        %3393 = vmatprep.subr.bf16.mxu0 0
        %3394 = vmatpush1.bf16.msra.mxu0 0
        %3395 = vmatprep.mubr.bf16.mxu0 0
        %3396 = vmatmul.mubr.bf16.gmra.mrb[0].mxu0 %v3215
        %v3397 = vpop.f32.mrb[0].mxu0
        %v3398 = vadd.f32 0.0, %v3397
        %v3399 = vpop.f32.mrb[0].mxu0
        %v3400 = vpop.f32.mrb[0].mxu0
        %v3401 = vpop.f32.mrb[0].mxu0
        %3402 = vdwg.mxu0
        %v3403 = vpack.c.bf16 %v3252, %v3252
        %v3404 = vpack.c.bf16 %v3325, %v3325
        %v3405 = vpack.c.bf16 %v3398, %v3398
        %s3406 = scalar_lea.vmem %s6, 64
        %v3407 = vld [vmem:[%s3406] sm:$0xf]
        %v3408 = vld [vmem:[%s3406 + $0x4] sm:$0xf]
        %v3409 = vld [vmem:[%s3406 + $0x8] sm:$0xf]
        %v3410 = vld [vmem:[%s3406 + $0xc] sm:$0xf]
        %v3411 = vld [vmem:[%s3406 + $0x10] sm:$0xf]
        %v3412 = vld [vmem:[%s3406 + $0x14] sm:$0xf]
        %v3413 = vld [vmem:[%s3406 + $0x18] sm:$0xf]
        %v3414 = vld [vmem:[%s3406 + $0x1c] sm:$0xf]
        %v3416 = vsel %vm949, %v3403, 0
        %v3419 = vsel %vm949, %v3404, 0
        %3421 = vmatprep.subr.bf16.mxu0 0
        %3422 = vmatpush1.bf16.xpose.msra.mxu0 %v3419
        %3423 = vmatprep.subr.bf16.mxu0 0
        %3424 = vmatpush1.bf16.xpose.msra.mxu0 0
        %3425 = vmatprep.subr.bf16.mxu0 0
        %3426 = vmatpush1.bf16.xpose.msra.mxu0 0
        %3427 = vmatprep.subr.bf16.mxu0 0
        %3428 = vmatpush1.bf16.xpose.msra.mxu0 0
        %3429 = vmatprep.subr.bf16.mxu0 0
        %3430 = vmatpush1.bf16.xpose.msra.mxu0 0
        %3431 = vmatprep.subr.bf16.mxu0 0
        %3432 = vmatpush1.bf16.xpose.msra.mxu0 0
        %3433 = vmatprep.subr.bf16.mxu0 0
        %3434 = vmatpush1.bf16.xpose.msra.mxu0 0
        %3435 = vmatprep.subr.bf16.mxu0 0
        %3436 = vmatpush1.bf16.xpose.msra.mxu0 0
        %3437 = vmatprep.subr.bf16.mxu0 0
        %3438 = vmatpush1.bf16.xpose.msra.mxu0 0
        %3439 = vmatprep.subr.bf16.mxu0 0
        %3440 = vmatpush1.bf16.xpose.msra.mxu0 0
        %3441 = vmatprep.subr.bf16.mxu0 0
        %3442 = vmatpush1.bf16.xpose.msra.mxu0 0
        %3443 = vmatprep.subr.bf16.mxu0 0
        %3444 = vmatpush1.bf16.xpose.msra.mxu0 0
        %3445 = vmatprep.subr.bf16.mxu0 0
        %3446 = vmatpush1.bf16.xpose.msra.mxu0 0
        %3447 = vmatprep.subr.bf16.mxu0 0
        %3448 = vmatpush1.bf16.xpose.msra.mxu0 0
        %3449 = vmatprep.subr.bf16.mxu0 0
        %3450 = vmatpush1.bf16.xpose.msra.mxu0 0
        %3451 = vmatprep.subr.bf16.mxu0 0
        %3452 = vmatpush1.bf16.xpose.msra.mxu0 0
        %3453 = vmatprep.mubr.bf16.mxu0 0
        %3454 = vmatmul.mubr.bf16.gmra.mrb[0].mxu0 %v3416
        %v3455 = vpop.f32.mrb[0].mxu0
        %v3456 = vadd.f32 %v686, %v3455
        %v3457 = vpop.f32.mrb[0].mxu0
        %v3458 = vpop.f32.mrb[0].mxu0
        %v3459 = vpop.f32.mrb[0].mxu0
        %3460 = vdwg.mxu0
        %v3461 = vsel %vm996, %v3456, -inf
        %3462 = vmax.xlane.f32.xlu0 %v3461
        %v3463 = vpop.xlane.xlu0 %3462
        %v3464 = vsub.f32 %v3456, %v3463
        %v3465 = vmul.f32 %v3464, 1.442695
        %v3466 = vpow.pop %v3465
        %v3467 = vsel %vm996, %v3466, 0.0
        %3468 = vadd.xlane.f32.xlu0 %v3467
        %v3469 = vpop.xlane.xlu0 %3468
        %v3470 = vrcp.pop %v3469
        %v3471 = vmul.f32 %v3466, %v3470
        %v3472 = vpack.c.bf16 %v3471, %v3471
        %v3474 = vsel %vm996, %v3472, 0
        %v3477 = vsel %vm1012, %v3405, 0
        %3479 = vmatprep.subr.bf16.mxu0 0
        %3480 = vmatpush1.bf16.msra.mxu0 %v3477
        %3481 = vmatprep.subr.bf16.mxu0 0
        %3482 = vmatpush1.bf16.msra.mxu0 0
        %3483 = vmatprep.subr.bf16.mxu0 0
        %3484 = vmatpush1.bf16.msra.mxu0 0
        %3485 = vmatprep.subr.bf16.mxu0 0
        %3486 = vmatpush1.bf16.msra.mxu0 0
        %3487 = vmatprep.subr.bf16.mxu0 0
        %3488 = vmatpush1.bf16.msra.mxu0 0
        %3489 = vmatprep.subr.bf16.mxu0 0
        %3490 = vmatpush1.bf16.msra.mxu0 0
        %3491 = vmatprep.subr.bf16.mxu0 0
        %3492 = vmatpush1.bf16.msra.mxu0 0
        %3493 = vmatprep.subr.bf16.mxu0 0
        %3494 = vmatpush1.bf16.msra.mxu0 0
        %3495 = vmatprep.subr.bf16.mxu0 0
        %3496 = vmatpush1.bf16.msra.mxu0 0
        %3497 = vmatprep.subr.bf16.mxu0 0
        %3498 = vmatpush1.bf16.msra.mxu0 0
        %3499 = vmatprep.subr.bf16.mxu0 0
        %3500 = vmatpush1.bf16.msra.mxu0 0
        %3501 = vmatprep.subr.bf16.mxu0 0
        %3502 = vmatpush1.bf16.msra.mxu0 0
        %3503 = vmatprep.subr.bf16.mxu0 0
        %3504 = vmatpush1.bf16.msra.mxu0 0
        %3505 = vmatprep.subr.bf16.mxu0 0
        %3506 = vmatpush1.bf16.msra.mxu0 0
        %3507 = vmatprep.subr.bf16.mxu0 0
        %3508 = vmatpush1.bf16.msra.mxu0 0
        %3509 = vmatprep.subr.bf16.mxu0 0
        %3510 = vmatpush1.bf16.msra.mxu0 0
        %3511 = vmatprep.mubr.bf16.mxu0 0
        %3512 = vmatmul.mubr.bf16.gmra.mrb[0].mxu0 %v3474
        %v3513 = vpop.f32.mrb[0].mxu0
        %v3514 = vadd.f32 0.0, %v3513
        %v3515 = vpop.f32.mrb[0].mxu0
        %v3516 = vpop.f32.mrb[0].mxu0
        %v3517 = vpop.f32.mrb[0].mxu0
        %3518 = vdwg.mxu0
        %v3519 = vpack.c.bf16 %v3514, %v3514
        %3521 = vrot.lane.b32.xlu0 %v3403, 112
        %v3522 = vpop.permute.xlu0 %3521
        %3524 = vrot.lane.b32.xlu0 %v3404, 112
        %v3525 = vpop.permute.xlu0 %3524
        %v3527 = vsel %vm949, %v3522, 0
        %v3530 = vsel %vm949, %v3525, 0
        %3532 = vmatprep.subr.bf16.mxu0 0
        %3533 = vmatpush1.bf16.xpose.msra.mxu0 %v3530
        %3534 = vmatprep.subr.bf16.mxu0 0
        %3535 = vmatpush1.bf16.xpose.msra.mxu0 0
        %3536 = vmatprep.subr.bf16.mxu0 0
        %3537 = vmatpush1.bf16.xpose.msra.mxu0 0
        %3538 = vmatprep.subr.bf16.mxu0 0
        %3539 = vmatpush1.bf16.xpose.msra.mxu0 0
        %3540 = vmatprep.subr.bf16.mxu0 0
        %3541 = vmatpush1.bf16.xpose.msra.mxu0 0
        %3542 = vmatprep.subr.bf16.mxu0 0
        %3543 = vmatpush1.bf16.xpose.msra.mxu0 0
        %3544 = vmatprep.subr.bf16.mxu0 0
        %3545 = vmatpush1.bf16.xpose.msra.mxu0 0
        %3546 = vmatprep.subr.bf16.mxu0 0
        %3547 = vmatpush1.bf16.xpose.msra.mxu0 0
        %3548 = vmatprep.subr.bf16.mxu0 0
        %3549 = vmatpush1.bf16.xpose.msra.mxu0 0
        %3550 = vmatprep.subr.bf16.mxu0 0
        %3551 = vmatpush1.bf16.xpose.msra.mxu0 0
        %3552 = vmatprep.subr.bf16.mxu0 0
        %3553 = vmatpush1.bf16.xpose.msra.mxu0 0
        %3554 = vmatprep.subr.bf16.mxu0 0
        %3555 = vmatpush1.bf16.xpose.msra.mxu0 0
        %3556 = vmatprep.subr.bf16.mxu0 0
        %3557 = vmatpush1.bf16.xpose.msra.mxu0 0
        %3558 = vmatprep.subr.bf16.mxu0 0
        %3559 = vmatpush1.bf16.xpose.msra.mxu0 0
        %3560 = vmatprep.subr.bf16.mxu0 0
        %3561 = vmatpush1.bf16.xpose.msra.mxu0 0
        %3562 = vmatprep.subr.bf16.mxu0 0
        %3563 = vmatpush1.bf16.xpose.msra.mxu0 0
        %3564 = vmatprep.mubr.bf16.mxu0 0
        %3565 = vmatmul.mubr.bf16.gmra.mrb[0].mxu0 %v3527
        %v3566 = vpop.f32.mrb[0].mxu0
        %v3567 = vadd.f32 %v686, %v3566
        %v3568 = vpop.f32.mrb[0].mxu0
        %v3569 = vpop.f32.mrb[0].mxu0
        %v3570 = vpop.f32.mrb[0].mxu0
        %3571 = vdwg.mxu0
        %v3572 = vsel %vm996, %v3567, -inf
        %3573 = vmax.xlane.f32.xlu0 %v3572
        %v3574 = vpop.xlane.xlu0 %3573
        %v3575 = vsub.f32 %v3567, %v3574
        %v3576 = vmul.f32 %v3575, 1.442695
        %v3577 = vpow.pop %v3576
        %v3578 = vsel %vm996, %v3577, 0.0
        %3579 = vadd.xlane.f32.xlu0 %v3578
        %v3580 = vpop.xlane.xlu0 %3579
        %v3581 = vrcp.pop %v3580
        %v3582 = vmul.f32 %v3577, %v3581
        %v3583 = vpack.c.bf16 %v3582, %v3582
        %3585 = vrot.lane.b32.xlu0 %v3405, 112
        %v3586 = vpop.permute.xlu0 %3585
        %v3588 = vsel %vm996, %v3583, 0
        %v3591 = vsel %vm1012, %v3586, 0
        %3593 = vmatprep.subr.bf16.mxu0 0
        %3594 = vmatpush1.bf16.msra.mxu0 %v3591
        %3595 = vmatprep.subr.bf16.mxu0 0
        %3596 = vmatpush1.bf16.msra.mxu0 0
        %3597 = vmatprep.subr.bf16.mxu0 0
        %3598 = vmatpush1.bf16.msra.mxu0 0
        %3599 = vmatprep.subr.bf16.mxu0 0
        %3600 = vmatpush1.bf16.msra.mxu0 0
        %3601 = vmatprep.subr.bf16.mxu0 0
        %3602 = vmatpush1.bf16.msra.mxu0 0
        %3603 = vmatprep.subr.bf16.mxu0 0
        %3604 = vmatpush1.bf16.msra.mxu0 0
        %3605 = vmatprep.subr.bf16.mxu0 0
        %3606 = vmatpush1.bf16.msra.mxu0 0
        %3607 = vmatprep.subr.bf16.mxu0 0
        %3608 = vmatpush1.bf16.msra.mxu0 0
        %3609 = vmatprep.subr.bf16.mxu0 0
        %3610 = vmatpush1.bf16.msra.mxu0 0
        %3611 = vmatprep.subr.bf16.mxu0 0
        %3612 = vmatpush1.bf16.msra.mxu0 0
        %3613 = vmatprep.subr.bf16.mxu0 0
        %3614 = vmatpush1.bf16.msra.mxu0 0
        %3615 = vmatprep.subr.bf16.mxu0 0
        %3616 = vmatpush1.bf16.msra.mxu0 0
        %3617 = vmatprep.subr.bf16.mxu0 0
        %3618 = vmatpush1.bf16.msra.mxu0 0
        %3619 = vmatprep.subr.bf16.mxu0 0
        %3620 = vmatpush1.bf16.msra.mxu0 0
        %3621 = vmatprep.subr.bf16.mxu0 0
        %3622 = vmatpush1.bf16.msra.mxu0 0
        %3623 = vmatprep.subr.bf16.mxu0 0
        %3624 = vmatpush1.bf16.msra.mxu0 0
        %3625 = vmatprep.mubr.bf16.mxu0 0
        %3626 = vmatmul.mubr.bf16.gmra.mrb[0].mxu0 %v3588
        %v3627 = vpop.f32.mrb[0].mxu0
        %v3628 = vadd.f32 0.0, %v3627
        %v3629 = vpop.f32.mrb[0].mxu0
        %v3630 = vpop.f32.mrb[0].mxu0
        %v3631 = vpop.f32.mrb[0].mxu0
        %3632 = vdwg.mxu0
        %v3633 = vpack.c.bf16 %v3628, %v3628
        %v3636 = vunpack.c.l.b16 %v3409
        %v3637 = vunpack.c.l.b16 %v3410
        %v3638 = vpack.c.b16 %v3637, %v3636
        %v3641 = vsel %vm949, %v3633, 0
        %3643 = vmatprep.subr.bf16.mxu0 0
        %3644 = vmatpush1.bf16.msra.mxu0 %v3638
        %3645 = vmatprep.subr.bf16.mxu0 0
        %3646 = vmatpush1.bf16.msra.mxu0 0
        %3647 = vmatprep.subr.bf16.mxu0 0
        %3648 = vmatpush1.bf16.msra.mxu0 0
        %3649 = vmatprep.subr.bf16.mxu0 0
        %3650 = vmatpush1.bf16.msra.mxu0 0
        %3651 = vmatprep.subr.bf16.mxu0 0
        %3652 = vmatpush1.bf16.msra.mxu0 0
        %3653 = vmatprep.subr.bf16.mxu0 0
        %3654 = vmatpush1.bf16.msra.mxu0 0
        %3655 = vmatprep.subr.bf16.mxu0 0
        %3656 = vmatpush1.bf16.msra.mxu0 0
        %3657 = vmatprep.subr.bf16.mxu0 0
        %3658 = vmatpush1.bf16.msra.mxu0 0
        %3659 = vmatprep.subr.bf16.mxu0 0
        %3660 = vmatpush1.bf16.msra.mxu0 0
        %3661 = vmatprep.subr.bf16.mxu0 0
        %3662 = vmatpush1.bf16.msra.mxu0 0
        %3663 = vmatprep.subr.bf16.mxu0 0
        %3664 = vmatpush1.bf16.msra.mxu0 0
        %3665 = vmatprep.subr.bf16.mxu0 0
        %3666 = vmatpush1.bf16.msra.mxu0 0
        %3667 = vmatprep.subr.bf16.mxu0 0
        %3668 = vmatpush1.bf16.msra.mxu0 0
        %3669 = vmatprep.subr.bf16.mxu0 0
        %3670 = vmatpush1.bf16.msra.mxu0 0
        %3671 = vmatprep.subr.bf16.mxu0 0
        %3672 = vmatpush1.bf16.msra.mxu0 0
        %3673 = vmatprep.subr.bf16.mxu0 0
        %3674 = vmatpush1.bf16.msra.mxu0 0
        %3675 = vmatprep.mubr.bf16.mxu0 0
        %3676 = vmatmul.mubr.bf16.gmra.mrb[0].mxu0 %v3641
        %v3677 = vpop.f32.mrb[0].mxu0
        %v3678 = vadd.f32 0.0, %v3677
        %v3679 = vpop.f32.mrb[0].mxu0
        %v3680 = vpop.f32.mrb[0].mxu0
        %v3681 = vpop.f32.mrb[0].mxu0
        %3682 = vdwg.mxu0
        %v3685 = vunpack.c.l.b16 %v3407
        %v3686 = vunpack.c.l.b16 %v3408
        %v3687 = vpack.c.b16 %v3686, %v3685
        %v3690 = vsel %vm949, %v3519, 0
        %3692 = vmatprep.subr.bf16.mxu0 0
        %3693 = vmatpush1.bf16.msra.mxu0 %v3687
        %3694 = vmatprep.subr.bf16.mxu0 0
        %3695 = vmatpush1.bf16.msra.mxu0 0
        %3696 = vmatprep.subr.bf16.mxu0 0
        %3697 = vmatpush1.bf16.msra.mxu0 0
        %3698 = vmatprep.subr.bf16.mxu0 0
        %3699 = vmatpush1.bf16.msra.mxu0 0
        %3700 = vmatprep.subr.bf16.mxu0 0
        %3701 = vmatpush1.bf16.msra.mxu0 0
        %3702 = vmatprep.subr.bf16.mxu0 0
        %3703 = vmatpush1.bf16.msra.mxu0 0
        %3704 = vmatprep.subr.bf16.mxu0 0
        %3705 = vmatpush1.bf16.msra.mxu0 0
        %3706 = vmatprep.subr.bf16.mxu0 0
        %3707 = vmatpush1.bf16.msra.mxu0 0
        %3708 = vmatprep.subr.bf16.mxu0 0
        %3709 = vmatpush1.bf16.msra.mxu0 0
        %3710 = vmatprep.subr.bf16.mxu0 0
        %3711 = vmatpush1.bf16.msra.mxu0 0
        %3712 = vmatprep.subr.bf16.mxu0 0
        %3713 = vmatpush1.bf16.msra.mxu0 0
        %3714 = vmatprep.subr.bf16.mxu0 0
        %3715 = vmatpush1.bf16.msra.mxu0 0
        %3716 = vmatprep.subr.bf16.mxu0 0
        %3717 = vmatpush1.bf16.msra.mxu0 0
        %3718 = vmatprep.subr.bf16.mxu0 0
        %3719 = vmatpush1.bf16.msra.mxu0 0
        %3720 = vmatprep.subr.bf16.mxu0 0
        %3721 = vmatpush1.bf16.msra.mxu0 0
        %3722 = vmatprep.subr.bf16.mxu0 0
        %3723 = vmatpush1.bf16.msra.mxu0 0
        %3724 = vmatprep.mubr.bf16.mxu0 0
        %3725 = vmatmul.mubr.bf16.gmra.mrb[0].mxu0 %v3690
        %v3726 = vpop.f32.mrb[0].mxu0
        %v3727 = vadd.f32 %v3678, %v3726
        %v3728 = vpop.f32.mrb[0].mxu0
        %v3729 = vpop.f32.mrb[0].mxu0
        %v3730 = vpop.f32.mrb[0].mxu0
        %3731 = vdwg.mxu0
        %3732 = vrot.lane.b32.xlu0 %v3403, 96
        %v3733 = vpop.permute.xlu0 %3732
        %3734 = vrot.lane.b32.xlu0 %v3404, 96
        %v3735 = vpop.permute.xlu0 %3734
        %v3737 = vsel %vm949, %v3733, 0
        %v3740 = vsel %vm949, %v3735, 0
        %3742 = vmatprep.subr.bf16.mxu0 0
        %3743 = vmatpush1.bf16.xpose.msra.mxu0 %v3740
        %3744 = vmatprep.subr.bf16.mxu0 0
        %3745 = vmatpush1.bf16.xpose.msra.mxu0 0
        %3746 = vmatprep.subr.bf16.mxu0 0
        %3747 = vmatpush1.bf16.xpose.msra.mxu0 0
        %3748 = vmatprep.subr.bf16.mxu0 0
        %3749 = vmatpush1.bf16.xpose.msra.mxu0 0
        %3750 = vmatprep.subr.bf16.mxu0 0
        %3751 = vmatpush1.bf16.xpose.msra.mxu0 0
        %3752 = vmatprep.subr.bf16.mxu0 0
        %3753 = vmatpush1.bf16.xpose.msra.mxu0 0
        %3754 = vmatprep.subr.bf16.mxu0 0
        %3755 = vmatpush1.bf16.xpose.msra.mxu0 0
        %3756 = vmatprep.subr.bf16.mxu0 0
        %3757 = vmatpush1.bf16.xpose.msra.mxu0 0
        %3758 = vmatprep.subr.bf16.mxu0 0
        %3759 = vmatpush1.bf16.xpose.msra.mxu0 0
        %3760 = vmatprep.subr.bf16.mxu0 0
        %3761 = vmatpush1.bf16.xpose.msra.mxu0 0
        %3762 = vmatprep.subr.bf16.mxu0 0
        %3763 = vmatpush1.bf16.xpose.msra.mxu0 0
        %3764 = vmatprep.subr.bf16.mxu0 0
        %3765 = vmatpush1.bf16.xpose.msra.mxu0 0
        %3766 = vmatprep.subr.bf16.mxu0 0
        %3767 = vmatpush1.bf16.xpose.msra.mxu0 0
        %3768 = vmatprep.subr.bf16.mxu0 0
        %3769 = vmatpush1.bf16.xpose.msra.mxu0 0
        %3770 = vmatprep.subr.bf16.mxu0 0
        %3771 = vmatpush1.bf16.xpose.msra.mxu0 0
        %3772 = vmatprep.subr.bf16.mxu0 0
        %3773 = vmatpush1.bf16.xpose.msra.mxu0 0
        %3774 = vmatprep.mubr.bf16.mxu0 0
        %3775 = vmatmul.mubr.bf16.gmra.mrb[0].mxu0 %v3737
        %v3776 = vpop.f32.mrb[0].mxu0
        %v3777 = vadd.f32 %v686, %v3776
        %v3778 = vpop.f32.mrb[0].mxu0
        %v3779 = vpop.f32.mrb[0].mxu0
        %v3780 = vpop.f32.mrb[0].mxu0
        %3781 = vdwg.mxu0
        %v3782 = vsel %vm996, %v3777, -inf
        %3783 = vmax.xlane.f32.xlu0 %v3782
        %v3784 = vpop.xlane.xlu0 %3783
        %v3785 = vsub.f32 %v3777, %v3784
        %v3786 = vmul.f32 %v3785, 1.442695
        %v3787 = vpow.pop %v3786
        %v3788 = vsel %vm996, %v3787, 0.0
        %3789 = vadd.xlane.f32.xlu0 %v3788
        %v3790 = vpop.xlane.xlu0 %3789
        %v3791 = vrcp.pop %v3790
        %v3792 = vmul.f32 %v3787, %v3791
        %v3793 = vpack.c.bf16 %v3792, %v3792
        %3794 = vrot.lane.b32.xlu0 %v3405, 96
        %v3795 = vpop.permute.xlu0 %3794
        %v3797 = vsel %vm996, %v3793, 0
        %v3800 = vsel %vm1012, %v3795, 0
        %3802 = vmatprep.subr.bf16.mxu0 0
        %3803 = vmatpush1.bf16.msra.mxu0 %v3800
        %3804 = vmatprep.subr.bf16.mxu0 0
        %3805 = vmatpush1.bf16.msra.mxu0 0
        %3806 = vmatprep.subr.bf16.mxu0 0
        %3807 = vmatpush1.bf16.msra.mxu0 0
        %3808 = vmatprep.subr.bf16.mxu0 0
        %3809 = vmatpush1.bf16.msra.mxu0 0
        %3810 = vmatprep.subr.bf16.mxu0 0
        %3811 = vmatpush1.bf16.msra.mxu0 0
        %3812 = vmatprep.subr.bf16.mxu0 0
        %3813 = vmatpush1.bf16.msra.mxu0 0
        %3814 = vmatprep.subr.bf16.mxu0 0
        %3815 = vmatpush1.bf16.msra.mxu0 0
        %3816 = vmatprep.subr.bf16.mxu0 0
        %3817 = vmatpush1.bf16.msra.mxu0 0
        %3818 = vmatprep.subr.bf16.mxu0 0
        %3819 = vmatpush1.bf16.msra.mxu0 0
        %3820 = vmatprep.subr.bf16.mxu0 0
        %3821 = vmatpush1.bf16.msra.mxu0 0
        %3822 = vmatprep.subr.bf16.mxu0 0
        %3823 = vmatpush1.bf16.msra.mxu0 0
        %3824 = vmatprep.subr.bf16.mxu0 0
        %3825 = vmatpush1.bf16.msra.mxu0 0
        %3826 = vmatprep.subr.bf16.mxu0 0
        %3827 = vmatpush1.bf16.msra.mxu0 0
        %3828 = vmatprep.subr.bf16.mxu0 0
        %3829 = vmatpush1.bf16.msra.mxu0 0
        %3830 = vmatprep.subr.bf16.mxu0 0
        %3831 = vmatpush1.bf16.msra.mxu0 0
        %3832 = vmatprep.subr.bf16.mxu0 0
        %3833 = vmatpush1.bf16.msra.mxu0 0
        %3834 = vmatprep.mubr.bf16.mxu0 0
        %3835 = vmatmul.mubr.bf16.gmra.mrb[0].mxu0 %v3797
        %v3836 = vpop.f32.mrb[0].mxu0
        %v3837 = vadd.f32 0.0, %v3836
        %v3838 = vpop.f32.mrb[0].mxu0
        %v3839 = vpop.f32.mrb[0].mxu0
        %v3840 = vpop.f32.mrb[0].mxu0
        %3841 = vdwg.mxu0
        %v3842 = vpack.c.bf16 %v3837, %v3837
        %v3845 = vunpack.c.l.b16 %v3411
        %v3846 = vunpack.c.l.b16 %v3412
        %v3847 = vpack.c.b16 %v3846, %v3845
        %v3850 = vsel %vm949, %v3842, 0
        %3852 = vmatprep.subr.bf16.mxu0 0
        %3853 = vmatpush1.bf16.msra.mxu0 %v3847
        %3854 = vmatprep.subr.bf16.mxu0 0
        %3855 = vmatpush1.bf16.msra.mxu0 0
        %3856 = vmatprep.subr.bf16.mxu0 0
        %3857 = vmatpush1.bf16.msra.mxu0 0
        %3858 = vmatprep.subr.bf16.mxu0 0
        %3859 = vmatpush1.bf16.msra.mxu0 0
        %3860 = vmatprep.subr.bf16.mxu0 0
        %3861 = vmatpush1.bf16.msra.mxu0 0
        %3862 = vmatprep.subr.bf16.mxu0 0
        %3863 = vmatpush1.bf16.msra.mxu0 0
        %3864 = vmatprep.subr.bf16.mxu0 0
        %3865 = vmatpush1.bf16.msra.mxu0 0
        %3866 = vmatprep.subr.bf16.mxu0 0
        %3867 = vmatpush1.bf16.msra.mxu0 0
        %3868 = vmatprep.subr.bf16.mxu0 0
        %3869 = vmatpush1.bf16.msra.mxu0 0
        %3870 = vmatprep.subr.bf16.mxu0 0
        %3871 = vmatpush1.bf16.msra.mxu0 0
        %3872 = vmatprep.subr.bf16.mxu0 0
        %3873 = vmatpush1.bf16.msra.mxu0 0
        %3874 = vmatprep.subr.bf16.mxu0 0
        %3875 = vmatpush1.bf16.msra.mxu0 0
        %3876 = vmatprep.subr.bf16.mxu0 0
        %3877 = vmatpush1.bf16.msra.mxu0 0
        %3878 = vmatprep.subr.bf16.mxu0 0
        %3879 = vmatpush1.bf16.msra.mxu0 0
        %3880 = vmatprep.subr.bf16.mxu0 0
        %3881 = vmatpush1.bf16.msra.mxu0 0
        %3882 = vmatprep.subr.bf16.mxu0 0
        %3883 = vmatpush1.bf16.msra.mxu0 0
        %3884 = vmatprep.mubr.bf16.mxu0 0
        %3885 = vmatmul.mubr.bf16.gmra.mrb[0].mxu0 %v3850
        %v3886 = vpop.f32.mrb[0].mxu0
        %v3887 = vadd.f32 0.0, %v3886
        %v3888 = vpop.f32.mrb[0].mxu0
        %v3889 = vpop.f32.mrb[0].mxu0
        %v3890 = vpop.f32.mrb[0].mxu0
        %3891 = vdwg.mxu0
        %v3892 = vadd.f32 %v3727, %v3887
        %3893 = vrot.lane.b32.xlu0 %v3403, 80
        %v3894 = vpop.permute.xlu0 %3893
        %3895 = vrot.lane.b32.xlu0 %v3404, 80
        %v3896 = vpop.permute.xlu0 %3895
        %v3898 = vsel %vm949, %v3894, 0
        %v3901 = vsel %vm949, %v3896, 0
        %3903 = vmatprep.subr.bf16.mxu0 0
        %3904 = vmatpush1.bf16.xpose.msra.mxu0 %v3901
        %3905 = vmatprep.subr.bf16.mxu0 0
        %3906 = vmatpush1.bf16.xpose.msra.mxu0 0
        %3907 = vmatprep.subr.bf16.mxu0 0
        %3908 = vmatpush1.bf16.xpose.msra.mxu0 0
        %3909 = vmatprep.subr.bf16.mxu0 0
        %3910 = vmatpush1.bf16.xpose.msra.mxu0 0
        %3911 = vmatprep.subr.bf16.mxu0 0
        %3912 = vmatpush1.bf16.xpose.msra.mxu0 0
        %3913 = vmatprep.subr.bf16.mxu0 0
        %3914 = vmatpush1.bf16.xpose.msra.mxu0 0
        %3915 = vmatprep.subr.bf16.mxu0 0
        %3916 = vmatpush1.bf16.xpose.msra.mxu0 0
        %3917 = vmatprep.subr.bf16.mxu0 0
        %3918 = vmatpush1.bf16.xpose.msra.mxu0 0
        %3919 = vmatprep.subr.bf16.mxu0 0
        %3920 = vmatpush1.bf16.xpose.msra.mxu0 0
        %3921 = vmatprep.subr.bf16.mxu0 0
        %3922 = vmatpush1.bf16.xpose.msra.mxu0 0
        %3923 = vmatprep.subr.bf16.mxu0 0
        %3924 = vmatpush1.bf16.xpose.msra.mxu0 0
        %3925 = vmatprep.subr.bf16.mxu0 0
        %3926 = vmatpush1.bf16.xpose.msra.mxu0 0
        %3927 = vmatprep.subr.bf16.mxu0 0
        %3928 = vmatpush1.bf16.xpose.msra.mxu0 0
        %3929 = vmatprep.subr.bf16.mxu0 0
        %3930 = vmatpush1.bf16.xpose.msra.mxu0 0
        %3931 = vmatprep.subr.bf16.mxu0 0
        %3932 = vmatpush1.bf16.xpose.msra.mxu0 0
        %3933 = vmatprep.subr.bf16.mxu0 0
        %3934 = vmatpush1.bf16.xpose.msra.mxu0 0
        %3935 = vmatprep.mubr.bf16.mxu0 0
        %3936 = vmatmul.mubr.bf16.gmra.mrb[0].mxu0 %v3898
        %v3937 = vpop.f32.mrb[0].mxu0
        %v3938 = vadd.f32 %v686, %v3937
        %v3939 = vpop.f32.mrb[0].mxu0
        %v3940 = vpop.f32.mrb[0].mxu0
        %v3941 = vpop.f32.mrb[0].mxu0
        %3942 = vdwg.mxu0
        %v3943 = vsel %vm996, %v3938, -inf
        %3944 = vmax.xlane.f32.xlu0 %v3943
        %v3945 = vpop.xlane.xlu0 %3944
        %v3946 = vsub.f32 %v3938, %v3945
        %v3947 = vmul.f32 %v3946, 1.442695
        %v3948 = vpow.pop %v3947
        %v3949 = vsel %vm996, %v3948, 0.0
        %3950 = vadd.xlane.f32.xlu0 %v3949
        %v3951 = vpop.xlane.xlu0 %3950
        %v3952 = vrcp.pop %v3951
        %v3953 = vmul.f32 %v3948, %v3952
        %v3954 = vpack.c.bf16 %v3953, %v3953
        %3955 = vrot.lane.b32.xlu0 %v3405, 80
        %v3956 = vpop.permute.xlu0 %3955
        %v3958 = vsel %vm996, %v3954, 0
        %v3961 = vsel %vm1012, %v3956, 0
        %3963 = vmatprep.subr.bf16.mxu0 0
        %3964 = vmatpush1.bf16.msra.mxu0 %v3961
        %3965 = vmatprep.subr.bf16.mxu0 0
        %3966 = vmatpush1.bf16.msra.mxu0 0
        %3967 = vmatprep.subr.bf16.mxu0 0
        %3968 = vmatpush1.bf16.msra.mxu0 0
        %3969 = vmatprep.subr.bf16.mxu0 0
        %3970 = vmatpush1.bf16.msra.mxu0 0
        %3971 = vmatprep.subr.bf16.mxu0 0
        %3972 = vmatpush1.bf16.msra.mxu0 0
        %3973 = vmatprep.subr.bf16.mxu0 0
        %3974 = vmatpush1.bf16.msra.mxu0 0
        %3975 = vmatprep.subr.bf16.mxu0 0
        %3976 = vmatpush1.bf16.msra.mxu0 0
        %3977 = vmatprep.subr.bf16.mxu0 0
        %3978 = vmatpush1.bf16.msra.mxu0 0
        %3979 = vmatprep.subr.bf16.mxu0 0
        %3980 = vmatpush1.bf16.msra.mxu0 0
        %3981 = vmatprep.subr.bf16.mxu0 0
        %3982 = vmatpush1.bf16.msra.mxu0 0
        %3983 = vmatprep.subr.bf16.mxu0 0
        %3984 = vmatpush1.bf16.msra.mxu0 0
        %3985 = vmatprep.subr.bf16.mxu0 0
        %3986 = vmatpush1.bf16.msra.mxu0 0
        %3987 = vmatprep.subr.bf16.mxu0 0
        %3988 = vmatpush1.bf16.msra.mxu0 0
        %3989 = vmatprep.subr.bf16.mxu0 0
        %3990 = vmatpush1.bf16.msra.mxu0 0
        %3991 = vmatprep.subr.bf16.mxu0 0
        %3992 = vmatpush1.bf16.msra.mxu0 0
        %3993 = vmatprep.subr.bf16.mxu0 0
        %3994 = vmatpush1.bf16.msra.mxu0 0
        %3995 = vmatprep.mubr.bf16.mxu0 0
        %3996 = vmatmul.mubr.bf16.gmra.mrb[0].mxu0 %v3958
        %v3997 = vpop.f32.mrb[0].mxu0
        %v3998 = vadd.f32 0.0, %v3997
        %v3999 = vpop.f32.mrb[0].mxu0
        %v4000 = vpop.f32.mrb[0].mxu0
        %v4001 = vpop.f32.mrb[0].mxu0
        %4002 = vdwg.mxu0
        %v4003 = vpack.c.bf16 %v3998, %v3998
        %v4006 = vunpack.c.l.b16 %v3413
        %v4007 = vunpack.c.l.b16 %v3414
        %v4008 = vpack.c.b16 %v4007, %v4006
        %v4011 = vsel %vm949, %v4003, 0
        %4013 = vmatprep.subr.bf16.mxu0 0
        %4014 = vmatpush1.bf16.msra.mxu0 %v4008
        %4015 = vmatprep.subr.bf16.mxu0 0
        %4016 = vmatpush1.bf16.msra.mxu0 0
        %4017 = vmatprep.subr.bf16.mxu0 0
        %4018 = vmatpush1.bf16.msra.mxu0 0
        %4019 = vmatprep.subr.bf16.mxu0 0
        %4020 = vmatpush1.bf16.msra.mxu0 0
        %4021 = vmatprep.subr.bf16.mxu0 0
        %4022 = vmatpush1.bf16.msra.mxu0 0
        %4023 = vmatprep.subr.bf16.mxu0 0
        %4024 = vmatpush1.bf16.msra.mxu0 0
        %4025 = vmatprep.subr.bf16.mxu0 0
        %4026 = vmatpush1.bf16.msra.mxu0 0
        %4027 = vmatprep.subr.bf16.mxu0 0
        %4028 = vmatpush1.bf16.msra.mxu0 0
        %4029 = vmatprep.subr.bf16.mxu0 0
        %4030 = vmatpush1.bf16.msra.mxu0 0
        %4031 = vmatprep.subr.bf16.mxu0 0
        %4032 = vmatpush1.bf16.msra.mxu0 0
        %4033 = vmatprep.subr.bf16.mxu0 0
        %4034 = vmatpush1.bf16.msra.mxu0 0
        %4035 = vmatprep.subr.bf16.mxu0 0
        %4036 = vmatpush1.bf16.msra.mxu0 0
        %4037 = vmatprep.subr.bf16.mxu0 0
        %4038 = vmatpush1.bf16.msra.mxu0 0
        %4039 = vmatprep.subr.bf16.mxu0 0
        %4040 = vmatpush1.bf16.msra.mxu0 0
        %4041 = vmatprep.subr.bf16.mxu0 0
        %4042 = vmatpush1.bf16.msra.mxu0 0
        %4043 = vmatprep.subr.bf16.mxu0 0
        %4044 = vmatpush1.bf16.msra.mxu0 0
        %4045 = vmatprep.mubr.bf16.mxu0 0
        %4046 = vmatmul.mubr.bf16.gmra.mrb[0].mxu0 %v4011
        %v4047 = vpop.f32.mrb[0].mxu0
        %v4048 = vadd.f32 0.0, %v4047
        %v4049 = vpop.f32.mrb[0].mxu0
        %v4050 = vpop.f32.mrb[0].mxu0
        %v4051 = vpop.f32.mrb[0].mxu0
        %4052 = vdwg.mxu0
        %v4053 = vadd.f32 %v3892, %v4048
        %v4054 = vadd.f32 %v3148, %v4053
        %s4055 = scalar_lea.vmem [#allocation8], 2
        %v4056 = vld [vmem:[%s4055] sm:$0x1]
        %v4058 = vlaneseq
        %v4059 = vshrl.u32 %v4058, 7
        %v4060 = vsub.s32 0, %v4059
        %v4061 = vrot.slane %v4056, %v4060
        %v4063 = vadd.f32 %v4054, %v4061
        %s4064 = scalar_lea.vmem [#allocation10], 2
        %v4065 = vld [vmem:[%s4064] sm:$0x1]
        %s4066 = scalar_lea.vmem [#allocation11], 2
        %v4067 = vld [vmem:[%s4066] sm:$0x1]
        %v4068 = vsel %vm689, %v4063, 0.0
        %4069 = vadd.xlane.f32.xlu0 %v4068
        %v4070 = vpop.xlane.xlu0 %4069
        %v4071 = vmul.f32 %v4070, %v693
        %v4072 = vsub.f32 %v4063, %v4071
        %v4073 = vmul.f32 %v4072, %v4072
        %v4074 = vsel %vm689, %v4073, 0.0
        %4075 = vadd.xlane.f32.xlu0 %v4074
        %v4076 = vpop.xlane.xlu0 %4075
        %v4077 = vmul.f32 %v4076, %v693
        %v4078 = vadd.f32 %v4077, 1e-05
        %v4079 = vrsqrt.pop %v4078
        %v4080 = vmul.f32 %v4072, %v4079
        %v4082 = vlaneseq
        %v4083 = vshrl.u32 %v4082, 7
        %v4084 = vsub.s32 0, %v4083
        %v4085 = vrot.slane %v4065, %v4084
        %v4087 = vmul.f32 %v4080, %v4085
        %v4089 = vlaneseq
        %v4090 = vshrl.u32 %v4089, 7
        %v4091 = vsub.s32 0, %v4090
        %v4092 = vrot.slane %v4067, %v4091
        %v4094 = vadd.f32 %v4087, %v4092
        %v4095 = vpack.c.bf16 %v4094, %v4094
        %s4096 = scalar_lea.vmem %s10, 128
        %v4097 = vld [vmem:[%s4096] sm:$0xff]
        %v4098 = vld [vmem:[%s4096 + $0x8] sm:$0xff]
        %v4099 = vld [vmem:[%s4096 + $0x10] sm:$0xff]
        %v4100 = vld [vmem:[%s4096 + $0x18] sm:$0xff]
        %v4101 = vld [vmem:[%s4096 + $0x20] sm:$0xff]
        %v4102 = vld [vmem:[%s4096 + $0x28] sm:$0xff]
        %v4103 = vld [vmem:[%s4096 + $0x30] sm:$0xff]
        %v4104 = vld [vmem:[%s4096 + $0x38] sm:$0xff]
        %s4105 = scalar_lea.vmem [#allocation13], 4
        %v4106 = vld [vmem:[%s4105] sm:$0x3]
        %v4108 = vlaneseq
        %v4109 = vshrl.u32 %v4108, 7
        %v4110 = vsub.s32 0, %v4109
        %v4111 = vrot.slane %v4106, %v4110
        %v4112 = vlaneseq
        %v4113 = vshrl.u32 %v4112, 7
        %v4114 = vsub.s32 1, %v4113
        %v4115 = vrot.slane %v4106, %v4114
        %v4126 = vunpack.c.l.b16 %v4097
        %v4127 = vunpack.c.h.b16 %v4097
        %v4128 = vunpack.c.l.b16 %v4098
        %v4129 = vunpack.c.h.b16 %v4098
        %v4130 = vunpack.c.l.b16 %v4099
        %v4131 = vunpack.c.h.b16 %v4099
        %v4132 = vunpack.c.l.b16 %v4100
        %v4133 = vunpack.c.h.b16 %v4100
        %v4134 = vunpack.c.l.b16 %v4101
        %v4135 = vunpack.c.h.b16 %v4101
        %v4136 = vunpack.c.l.b16 %v4102
        %v4137 = vunpack.c.h.b16 %v4102
        %v4138 = vunpack.c.l.b16 %v4103
        %v4139 = vunpack.c.h.b16 %v4103
        %v4140 = vunpack.c.l.b16 %v4104
        %v4141 = vunpack.c.h.b16 %v4104
        %v4142 = vpack.c.b16 %v4128, %v4126
        %v4143 = vpack.c.b16 %v4129, %v4127
        %v4144 = vpack.c.b16 %v4132, %v4130
        %v4145 = vpack.c.b16 %v4133, %v4131
        %v4146 = vpack.c.b16 %v4136, %v4134
        %v4147 = vpack.c.b16 %v4137, %v4135
        %v4148 = vpack.c.b16 %v4140, %v4138
        %v4149 = vpack.c.b16 %v4141, %v4139
        %v4159 = vsel %vm689, %v4095, 0
        %4161 = vmatprep.subr.bf16.mxu0 %v4143
        %4162 = vmatpush1.bf16.msra.mxu0 %v4142
        %4163 = vmatprep.subr.bf16.mxu0 %v4145
        %4164 = vmatpush1.bf16.msra.mxu0 %v4144
        %4165 = vmatprep.subr.bf16.mxu0 %v4147
        %4166 = vmatpush1.bf16.msra.mxu0 %v4146
        %4167 = vmatprep.subr.bf16.mxu0 %v4149
        %4168 = vmatpush1.bf16.msra.mxu0 %v4148
        %4169 = vmatprep.subr.bf16.mxu0 0
        %4170 = vmatpush1.bf16.msra.mxu0 0
        %4171 = vmatprep.subr.bf16.mxu0 0
        %4172 = vmatpush1.bf16.msra.mxu0 0
        %4173 = vmatprep.subr.bf16.mxu0 0
        %4174 = vmatpush1.bf16.msra.mxu0 0
        %4175 = vmatprep.subr.bf16.mxu0 0
        %4176 = vmatpush1.bf16.msra.mxu0 0
        %4177 = vmatprep.subr.bf16.mxu0 0
        %4178 = vmatpush1.bf16.msra.mxu0 0
        %4179 = vmatprep.subr.bf16.mxu0 0
        %4180 = vmatpush1.bf16.msra.mxu0 0
        %4181 = vmatprep.subr.bf16.mxu0 0
        %4182 = vmatpush1.bf16.msra.mxu0 0
        %4183 = vmatprep.subr.bf16.mxu0 0
        %4184 = vmatpush1.bf16.msra.mxu0 0
        %4185 = vmatprep.subr.bf16.mxu0 0
        %4186 = vmatpush1.bf16.msra.mxu0 0
        %4187 = vmatprep.subr.bf16.mxu0 0
        %4188 = vmatpush1.bf16.msra.mxu0 0
        %4189 = vmatprep.subr.bf16.mxu0 0
        %4190 = vmatpush1.bf16.msra.mxu0 0
        %4191 = vmatprep.subr.bf16.mxu0 0
        %4192 = vmatpush1.bf16.msra.mxu0 0
        %4193 = vmatprep.mubr.bf16.mxu0 0
        %4194 = vmatmul.mubr.bf16.gmra.mrb[0].mxu0 %v4159
        %v4195 = vpop.f32.mrb[0].mxu0
        %v4196 = vadd.f32 %v4111, %v4195
        %v4197 = vpop.f32.mrb[0].mxu0
        %v4198 = vadd.f32 %v4115, %v4197
        %v4199 = vpop.f32.mrb[0].mxu0
        %v4200 = vpop.f32.mrb[0].mxu0
        %4201 = vdwg.mxu0
        %v4202 = vmax.f32 %v4196, 0.0
        %v4203 = vmax.f32 %v4198, 0.0
        %v4204 = vpack.c.bf16 %v4202, %v4202
        %v4205 = vpack.c.bf16 %v4203, %v4203
        %s4206 = scalar_lea.vmem %s12, 256
        %v4207 = vld [vmem:[%s4206] sm:$0xf]
        %v4208 = vld [vmem:[%s4206 + $0x4] sm:$0xf]
        %v4209 = vld [vmem:[%s4206 + $0x8] sm:$0xf]
        %v4210 = vld [vmem:[%s4206 + $0xc] sm:$0xf]
        %v4211 = vld [vmem:[%s4206 + $0x10] sm:$0xf]
        %v4212 = vld [vmem:[%s4206 + $0x14] sm:$0xf]
        %v4213 = vld [vmem:[%s4206 + $0x18] sm:$0xf]
        %v4214 = vld [vmem:[%s4206 + $0x1c] sm:$0xf]
        %v4215 = vld [vmem:[%s4206 + $0x20] sm:$0xf]
        %v4216 = vld [vmem:[%s4206 + $0x24] sm:$0xf]
        %v4217 = vld [vmem:[%s4206 + $0x28] sm:$0xf]
        %v4218 = vld [vmem:[%s4206 + $0x2c] sm:$0xf]
        %v4219 = vld [vmem:[%s4206 + $0x30] sm:$0xf]
        %v4220 = vld [vmem:[%s4206 + $0x34] sm:$0xf]
        %v4221 = vld [vmem:[%s4206 + $0x38] sm:$0xf]
        %v4222 = vld [vmem:[%s4206 + $0x3c] sm:$0xf]
        %v4223 = vld [vmem:[%s4206 + $0x40] sm:$0xf]
        %v4224 = vld [vmem:[%s4206 + $0x44] sm:$0xf]
        %v4225 = vld [vmem:[%s4206 + $0x48] sm:$0xf]
        %v4226 = vld [vmem:[%s4206 + $0x4c] sm:$0xf]
        %v4227 = vld [vmem:[%s4206 + $0x50] sm:$0xf]
        %v4228 = vld [vmem:[%s4206 + $0x54] sm:$0xf]
        %v4229 = vld [vmem:[%s4206 + $0x58] sm:$0xf]
        %v4230 = vld [vmem:[%s4206 + $0x5c] sm:$0xf]
        %v4231 = vld [vmem:[%s4206 + $0x60] sm:$0xf]
        %v4232 = vld [vmem:[%s4206 + $0x64] sm:$0xf]
        %v4233 = vld [vmem:[%s4206 + $0x68] sm:$0xf]
        %v4234 = vld [vmem:[%s4206 + $0x6c] sm:$0xf]
        %v4235 = vld [vmem:[%s4206 + $0x70] sm:$0xf]
        %v4236 = vld [vmem:[%s4206 + $0x74] sm:$0xf]
        %v4237 = vld [vmem:[%s4206 + $0x78] sm:$0xf]
        %v4238 = vld [vmem:[%s4206 + $0x7c] sm:$0xf]
        %s4239 = scalar_lea.vmem %s13, 2
        %v4240 = vld [vmem:[%s4239] sm:$0x1]
        %v4242 = vlaneseq
        %v4243 = vshrl.u32 %v4242, 7
        %v4244 = vsub.s32 0, %v4243
        %v4245 = vrot.slane %v4240, %v4244
        %v4279 = vunpack.c.l.b16 %v4207
        %v4280 = vunpack.c.l.b16 %v4208
        %v4281 = vunpack.c.l.b16 %v4209
        %v4282 = vunpack.c.l.b16 %v4210
        %v4283 = vunpack.c.l.b16 %v4211
        %v4284 = vunpack.c.l.b16 %v4212
        %v4285 = vunpack.c.l.b16 %v4213
        %v4286 = vunpack.c.l.b16 %v4214
        %v4287 = vunpack.c.l.b16 %v4215
        %v4288 = vunpack.c.l.b16 %v4216
        %v4289 = vunpack.c.l.b16 %v4217
        %v4290 = vunpack.c.l.b16 %v4218
        %v4291 = vunpack.c.l.b16 %v4219
        %v4292 = vunpack.c.l.b16 %v4220
        %v4293 = vunpack.c.l.b16 %v4221
        %v4294 = vunpack.c.l.b16 %v4222
        %v4295 = vunpack.c.l.b16 %v4223
        %v4296 = vunpack.c.l.b16 %v4224
        %v4297 = vunpack.c.l.b16 %v4225
        %v4298 = vunpack.c.l.b16 %v4226
        %v4299 = vunpack.c.l.b16 %v4227
        %v4300 = vunpack.c.l.b16 %v4228
        %v4301 = vunpack.c.l.b16 %v4229
        %v4302 = vunpack.c.l.b16 %v4230
        %v4303 = vunpack.c.l.b16 %v4231
        %v4304 = vunpack.c.l.b16 %v4232
        %v4305 = vunpack.c.l.b16 %v4233
        %v4306 = vunpack.c.l.b16 %v4234
        %v4307 = vunpack.c.l.b16 %v4235
        %v4308 = vunpack.c.l.b16 %v4236
        %v4309 = vunpack.c.l.b16 %v4237
        %v4310 = vunpack.c.l.b16 %v4238
        %v4311 = vpack.c.b16 %v4280, %v4279
        %v4312 = vpack.c.b16 %v4282, %v4281
        %v4313 = vpack.c.b16 %v4284, %v4283
        %v4314 = vpack.c.b16 %v4286, %v4285
        %v4315 = vpack.c.b16 %v4288, %v4287
        %v4316 = vpack.c.b16 %v4290, %v4289
        %v4317 = vpack.c.b16 %v4292, %v4291
        %v4318 = vpack.c.b16 %v4294, %v4293
        %v4319 = vpack.c.b16 %v4296, %v4295
        %v4320 = vpack.c.b16 %v4298, %v4297
        %v4321 = vpack.c.b16 %v4300, %v4299
        %v4322 = vpack.c.b16 %v4302, %v4301
        %v4323 = vpack.c.b16 %v4304, %v4303
        %v4324 = vpack.c.b16 %v4306, %v4305
        %v4325 = vpack.c.b16 %v4308, %v4307
        %v4326 = vpack.c.b16 %v4310, %v4309
        %4343 = vmatprep.subr.bf16.mxu0 0
        %4344 = vmatpush1.bf16.msra.mxu0 %v4311
        %4345 = vmatprep.subr.bf16.mxu0 0
        %4346 = vmatpush1.bf16.msra.mxu0 %v4312
        %4347 = vmatprep.subr.bf16.mxu0 0
        %4348 = vmatpush1.bf16.msra.mxu0 %v4313
        %4349 = vmatprep.subr.bf16.mxu0 0
        %4350 = vmatpush1.bf16.msra.mxu0 %v4314
        %4351 = vmatprep.subr.bf16.mxu0 0
        %4352 = vmatpush1.bf16.msra.mxu0 %v4315
        %4353 = vmatprep.subr.bf16.mxu0 0
        %4354 = vmatpush1.bf16.msra.mxu0 %v4316
        %4355 = vmatprep.subr.bf16.mxu0 0
        %4356 = vmatpush1.bf16.msra.mxu0 %v4317
        %4357 = vmatprep.subr.bf16.mxu0 0
        %4358 = vmatpush1.bf16.msra.mxu0 %v4318
        %4359 = vmatprep.subr.bf16.mxu0 0
        %4360 = vmatpush1.bf16.msra.mxu0 %v4319
        %4361 = vmatprep.subr.bf16.mxu0 0
        %4362 = vmatpush1.bf16.msra.mxu0 %v4320
        %4363 = vmatprep.subr.bf16.mxu0 0
        %4364 = vmatpush1.bf16.msra.mxu0 %v4321
        %4365 = vmatprep.subr.bf16.mxu0 0
        %4366 = vmatpush1.bf16.msra.mxu0 %v4322
        %4367 = vmatprep.subr.bf16.mxu0 0
        %4368 = vmatpush1.bf16.msra.mxu0 %v4323
        %4369 = vmatprep.subr.bf16.mxu0 0
        %4370 = vmatpush1.bf16.msra.mxu0 %v4324
        %4371 = vmatprep.subr.bf16.mxu0 0
        %4372 = vmatpush1.bf16.msra.mxu0 %v4325
        %4373 = vmatprep.subr.bf16.mxu0 0
        %4374 = vmatpush1.bf16.msra.mxu0 %v4326
        %4375 = vmatprep.mubr.bf16.mxu0 %v4205
        %4376 = vmatmul.mubr.bf16.gmra.mrb[0].mxu0 %v4204
        %v4377 = vpop.f32.mrb[0].mxu0
        %v4378 = vadd.f32 %v4245, %v4377
        %v4379 = vpop.f32.mrb[0].mxu0
        %v4380 = vpop.f32.mrb[0].mxu0
        %v4381 = vpop.f32.mrb[0].mxu0
        %4382 = vdwg.mxu0
        %v4383 = vadd.f32 %v4063, %v4378
        %s4384 = scalar_lea.vmem [#allocation5], 3
        %v4385 = vld [vmem:[%s4384] sm:$0x1]
        %s4386 = scalar_lea.vmem [#allocation7], 3
        %v4387 = vld [vmem:[%s4386] sm:$0x1]
        %v4388 = vsel %vm689, %v4383, 0.0
        %4389 = vadd.xlane.f32.xlu0 %v4388
        %v4390 = vpop.xlane.xlu0 %4389
        %v4391 = vmul.f32 %v4390, %v693
        %v4392 = vsub.f32 %v4383, %v4391
        %v4393 = vmul.f32 %v4392, %v4392
        %v4394 = vsel %vm689, %v4393, 0.0
        %4395 = vadd.xlane.f32.xlu0 %v4394
        %v4396 = vpop.xlane.xlu0 %4395
        %v4397 = vmul.f32 %v4396, %v693
        %v4398 = vadd.f32 %v4397, 1e-05
        %v4399 = vrsqrt.pop %v4398
        %v4400 = vmul.f32 %v4392, %v4399
        %v4402 = vlaneseq
        %v4403 = vshrl.u32 %v4402, 7
        %v4404 = vsub.s32 0, %v4403
        %v4405 = vrot.slane %v4385, %v4404
        %v4407 = vmul.f32 %v4400, %v4405
        %v4409 = vlaneseq
        %v4410 = vshrl.u32 %v4409, 7
        %v4411 = vsub.s32 0, %v4410
        %v4412 = vrot.slane %v4387, %v4411
        %v4414 = vadd.f32 %v4407, %v4412
        %v4415 = vpack.c.bf16 %v4414, %v4414
        %s4416 = scalar_lea.vmem %s3, 96
        %v4417 = vld [vmem:[%s4416] sm:$0xf]
        %v4418 = vld [vmem:[%s4416 + $0x4] sm:$0xf]
        %v4419 = vld [vmem:[%s4416 + $0x8] sm:$0xf]
        %v4420 = vld [vmem:[%s4416 + $0xc] sm:$0xf]
        %v4421 = vld [vmem:[%s4416 + $0x10] sm:$0xf]
        %v4422 = vld [vmem:[%s4416 + $0x14] sm:$0xf]
        %v4423 = vld [vmem:[%s4416 + $0x18] sm:$0xf]
        %v4424 = vld [vmem:[%s4416 + $0x1c] sm:$0xf]
        %v4433 = vunpack.c.l.b16 %v4417
        %v4434 = vunpack.c.l.b16 %v4418
        %v4435 = vunpack.c.l.b16 %v4419
        %v4436 = vunpack.c.l.b16 %v4420
        %v4437 = vunpack.c.l.b16 %v4421
        %v4438 = vunpack.c.l.b16 %v4422
        %v4439 = vunpack.c.l.b16 %v4423
        %v4440 = vunpack.c.l.b16 %v4424
        %v4441 = vpack.c.b16 %v4434, %v4433
        %v4442 = vpack.c.b16 %v4436, %v4435
        %v4443 = vpack.c.b16 %v4438, %v4437
        %v4444 = vpack.c.b16 %v4440, %v4439
        %v4450 = vsel %vm689, %v4415, 0
        %4452 = vmatprep.subr.bf16.mxu0 0
        %4453 = vmatpush1.bf16.msra.mxu0 %v4441
        %4454 = vmatprep.subr.bf16.mxu0 0
        %4455 = vmatpush1.bf16.msra.mxu0 %v4442
        %4456 = vmatprep.subr.bf16.mxu0 0
        %4457 = vmatpush1.bf16.msra.mxu0 %v4443
        %4458 = vmatprep.subr.bf16.mxu0 0
        %4459 = vmatpush1.bf16.msra.mxu0 %v4444
        %4460 = vmatprep.subr.bf16.mxu0 0
        %4461 = vmatpush1.bf16.msra.mxu0 0
        %4462 = vmatprep.subr.bf16.mxu0 0
        %4463 = vmatpush1.bf16.msra.mxu0 0
        %4464 = vmatprep.subr.bf16.mxu0 0
        %4465 = vmatpush1.bf16.msra.mxu0 0
        %4466 = vmatprep.subr.bf16.mxu0 0
        %4467 = vmatpush1.bf16.msra.mxu0 0
        %4468 = vmatprep.subr.bf16.mxu0 0
        %4469 = vmatpush1.bf16.msra.mxu0 0
        %4470 = vmatprep.subr.bf16.mxu0 0
        %4471 = vmatpush1.bf16.msra.mxu0 0
        %4472 = vmatprep.subr.bf16.mxu0 0
        %4473 = vmatpush1.bf16.msra.mxu0 0
        %4474 = vmatprep.subr.bf16.mxu0 0
        %4475 = vmatpush1.bf16.msra.mxu0 0
        %4476 = vmatprep.subr.bf16.mxu0 0
        %4477 = vmatpush1.bf16.msra.mxu0 0
        %4478 = vmatprep.subr.bf16.mxu0 0
        %4479 = vmatpush1.bf16.msra.mxu0 0
        %4480 = vmatprep.subr.bf16.mxu0 0
        %4481 = vmatpush1.bf16.msra.mxu0 0
        %4482 = vmatprep.subr.bf16.mxu0 0
        %4483 = vmatpush1.bf16.msra.mxu0 0
        %4484 = vmatprep.mubr.bf16.mxu0 0
        %4485 = vmatmul.mubr.bf16.gmra.mrb[0].mxu0 %v4450
        %v4486 = vpop.f32.mrb[0].mxu0
        %v4487 = vadd.f32 0.0, %v4486
        %v4488 = vpop.f32.mrb[0].mxu0
        %v4489 = vpop.f32.mrb[0].mxu0
        %v4490 = vpop.f32.mrb[0].mxu0
        %4491 = vdwg.mxu0
        %s4492 = scalar_lea.vmem %s4, 96
        %v4493 = vld [vmem:[%s4492] sm:$0xf]
        %v4494 = vld [vmem:[%s4492 + $0x4] sm:$0xf]
        %v4495 = vld [vmem:[%s4492 + $0x8] sm:$0xf]
        %v4496 = vld [vmem:[%s4492 + $0xc] sm:$0xf]
        %v4497 = vld [vmem:[%s4492 + $0x10] sm:$0xf]
        %v4498 = vld [vmem:[%s4492 + $0x14] sm:$0xf]
        %v4499 = vld [vmem:[%s4492 + $0x18] sm:$0xf]
        %v4500 = vld [vmem:[%s4492 + $0x1c] sm:$0xf]
        %v4509 = vunpack.c.l.b16 %v4493
        %v4510 = vunpack.c.l.b16 %v4494
        %v4511 = vunpack.c.l.b16 %v4495
        %v4512 = vunpack.c.l.b16 %v4496
        %v4513 = vunpack.c.l.b16 %v4497
        %v4514 = vunpack.c.l.b16 %v4498
        %v4515 = vunpack.c.l.b16 %v4499
        %v4516 = vunpack.c.l.b16 %v4500
        %v4517 = vpack.c.b16 %v4510, %v4509
        %v4518 = vpack.c.b16 %v4512, %v4511
        %v4519 = vpack.c.b16 %v4514, %v4513
        %v4520 = vpack.c.b16 %v4516, %v4515
        %4525 = vmatprep.subr.bf16.mxu0 0
        %4526 = vmatpush1.bf16.msra.mxu0 %v4517
        %4527 = vmatprep.subr.bf16.mxu0 0
        %4528 = vmatpush1.bf16.msra.mxu0 %v4518
        %4529 = vmatprep.subr.bf16.mxu0 0
        %4530 = vmatpush1.bf16.msra.mxu0 %v4519
        %4531 = vmatprep.subr.bf16.mxu0 0
        %4532 = vmatpush1.bf16.msra.mxu0 %v4520
        %4533 = vmatprep.subr.bf16.mxu0 0
        %4534 = vmatpush1.bf16.msra.mxu0 0
        %4535 = vmatprep.subr.bf16.mxu0 0
        %4536 = vmatpush1.bf16.msra.mxu0 0
        %4537 = vmatprep.subr.bf16.mxu0 0
        %4538 = vmatpush1.bf16.msra.mxu0 0
        %4539 = vmatprep.subr.bf16.mxu0 0
        %4540 = vmatpush1.bf16.msra.mxu0 0
        %4541 = vmatprep.subr.bf16.mxu0 0
        %4542 = vmatpush1.bf16.msra.mxu0 0
        %4543 = vmatprep.subr.bf16.mxu0 0
        %4544 = vmatpush1.bf16.msra.mxu0 0
        %4545 = vmatprep.subr.bf16.mxu0 0
        %4546 = vmatpush1.bf16.msra.mxu0 0
        %4547 = vmatprep.subr.bf16.mxu0 0
        %4548 = vmatpush1.bf16.msra.mxu0 0
        %4549 = vmatprep.subr.bf16.mxu0 0
        %4550 = vmatpush1.bf16.msra.mxu0 0
        %4551 = vmatprep.subr.bf16.mxu0 0
        %4552 = vmatpush1.bf16.msra.mxu0 0
        %4553 = vmatprep.subr.bf16.mxu0 0
        %4554 = vmatpush1.bf16.msra.mxu0 0
        %4555 = vmatprep.subr.bf16.mxu0 0
        %4556 = vmatpush1.bf16.msra.mxu0 0
        %4557 = vmatprep.mubr.bf16.mxu0 0
        %4558 = vmatmul.mubr.bf16.gmra.mrb[0].mxu0 %v4450
        %v4559 = vpop.f32.mrb[0].mxu0
        %v4560 = vadd.f32 0.0, %v4559
        %v4561 = vpop.f32.mrb[0].mxu0
        %v4562 = vpop.f32.mrb[0].mxu0
        %v4563 = vpop.f32.mrb[0].mxu0
        %4564 = vdwg.mxu0
        %s4565 = scalar_lea.vmem %s5, 96
        %v4566 = vld [vmem:[%s4565] sm:$0xf]
        %v4567 = vld [vmem:[%s4565 + $0x4] sm:$0xf]
        %v4568 = vld [vmem:[%s4565 + $0x8] sm:$0xf]
        %v4569 = vld [vmem:[%s4565 + $0xc] sm:$0xf]
        %v4570 = vld [vmem:[%s4565 + $0x10] sm:$0xf]
        %v4571 = vld [vmem:[%s4565 + $0x14] sm:$0xf]
        %v4572 = vld [vmem:[%s4565 + $0x18] sm:$0xf]
        %v4573 = vld [vmem:[%s4565 + $0x1c] sm:$0xf]
        %v4582 = vunpack.c.l.b16 %v4566
        %v4583 = vunpack.c.l.b16 %v4567
        %v4584 = vunpack.c.l.b16 %v4568
        %v4585 = vunpack.c.l.b16 %v4569
        %v4586 = vunpack.c.l.b16 %v4570
        %v4587 = vunpack.c.l.b16 %v4571
        %v4588 = vunpack.c.l.b16 %v4572
        %v4589 = vunpack.c.l.b16 %v4573
        %v4590 = vpack.c.b16 %v4583, %v4582
        %v4591 = vpack.c.b16 %v4585, %v4584
        %v4592 = vpack.c.b16 %v4587, %v4586
        %v4593 = vpack.c.b16 %v4589, %v4588
        %4598 = vmatprep.subr.bf16.mxu0 0
        %4599 = vmatpush1.bf16.msra.mxu0 %v4590
        %4600 = vmatprep.subr.bf16.mxu0 0
        %4601 = vmatpush1.bf16.msra.mxu0 %v4591
        %4602 = vmatprep.subr.bf16.mxu0 0
        %4603 = vmatpush1.bf16.msra.mxu0 %v4592
        %4604 = vmatprep.subr.bf16.mxu0 0
        %4605 = vmatpush1.bf16.msra.mxu0 %v4593
        %4606 = vmatprep.subr.bf16.mxu0 0
        %4607 = vmatpush1.bf16.msra.mxu0 0
        %4608 = vmatprep.subr.bf16.mxu0 0
        %4609 = vmatpush1.bf16.msra.mxu0 0
        %4610 = vmatprep.subr.bf16.mxu0 0
        %4611 = vmatpush1.bf16.msra.mxu0 0
        %4612 = vmatprep.subr.bf16.mxu0 0
        %4613 = vmatpush1.bf16.msra.mxu0 0
        %4614 = vmatprep.subr.bf16.mxu0 0
        %4615 = vmatpush1.bf16.msra.mxu0 0
        %4616 = vmatprep.subr.bf16.mxu0 0
        %4617 = vmatpush1.bf16.msra.mxu0 0
        %4618 = vmatprep.subr.bf16.mxu0 0
        %4619 = vmatpush1.bf16.msra.mxu0 0
        %4620 = vmatprep.subr.bf16.mxu0 0
        %4621 = vmatpush1.bf16.msra.mxu0 0
        %4622 = vmatprep.subr.bf16.mxu0 0
        %4623 = vmatpush1.bf16.msra.mxu0 0
        %4624 = vmatprep.subr.bf16.mxu0 0
        %4625 = vmatpush1.bf16.msra.mxu0 0
        %4626 = vmatprep.subr.bf16.mxu0 0
        %4627 = vmatpush1.bf16.msra.mxu0 0
        %4628 = vmatprep.subr.bf16.mxu0 0
        %4629 = vmatpush1.bf16.msra.mxu0 0
        %4630 = vmatprep.mubr.bf16.mxu0 0
        %4631 = vmatmul.mubr.bf16.gmra.mrb[0].mxu0 %v4450
        %v4632 = vpop.f32.mrb[0].mxu0
        %v4633 = vadd.f32 0.0, %v4632
        %v4634 = vpop.f32.mrb[0].mxu0
        %v4635 = vpop.f32.mrb[0].mxu0
        %v4636 = vpop.f32.mrb[0].mxu0
        %4637 = vdwg.mxu0
        %v4638 = vpack.c.bf16 %v4487, %v4487
        %v4639 = vpack.c.bf16 %v4560, %v4560
        %v4640 = vpack.c.bf16 %v4633, %v4633
        %s4641 = scalar_lea.vmem %s6, 96
        %v4642 = vld [vmem:[%s4641] sm:$0xf]
        %v4643 = vld [vmem:[%s4641 + $0x4] sm:$0xf]
        %v4644 = vld [vmem:[%s4641 + $0x8] sm:$0xf]
        %v4645 = vld [vmem:[%s4641 + $0xc] sm:$0xf]
        %v4646 = vld [vmem:[%s4641 + $0x10] sm:$0xf]
        %v4647 = vld [vmem:[%s4641 + $0x14] sm:$0xf]
        %v4648 = vld [vmem:[%s4641 + $0x18] sm:$0xf]
        %v4649 = vld [vmem:[%s4641 + $0x1c] sm:$0xf]
        %v4651 = vsel %vm949, %v4638, 0
        %v4654 = vsel %vm949, %v4639, 0
        %4656 = vmatprep.subr.bf16.mxu0 0
        %4657 = vmatpush1.bf16.xpose.msra.mxu0 %v4654
        %4658 = vmatprep.subr.bf16.mxu0 0
        %4659 = vmatpush1.bf16.xpose.msra.mxu0 0
        %4660 = vmatprep.subr.bf16.mxu0 0
        %4661 = vmatpush1.bf16.xpose.msra.mxu0 0
        %4662 = vmatprep.subr.bf16.mxu0 0
        %4663 = vmatpush1.bf16.xpose.msra.mxu0 0
        %4664 = vmatprep.subr.bf16.mxu0 0
        %4665 = vmatpush1.bf16.xpose.msra.mxu0 0
        %4666 = vmatprep.subr.bf16.mxu0 0
        %4667 = vmatpush1.bf16.xpose.msra.mxu0 0
        %4668 = vmatprep.subr.bf16.mxu0 0
        %4669 = vmatpush1.bf16.xpose.msra.mxu0 0
        %4670 = vmatprep.subr.bf16.mxu0 0
        %4671 = vmatpush1.bf16.xpose.msra.mxu0 0
        %4672 = vmatprep.subr.bf16.mxu0 0
        %4673 = vmatpush1.bf16.xpose.msra.mxu0 0
        %4674 = vmatprep.subr.bf16.mxu0 0
        %4675 = vmatpush1.bf16.xpose.msra.mxu0 0
        %4676 = vmatprep.subr.bf16.mxu0 0
        %4677 = vmatpush1.bf16.xpose.msra.mxu0 0
        %4678 = vmatprep.subr.bf16.mxu0 0
        %4679 = vmatpush1.bf16.xpose.msra.mxu0 0
        %4680 = vmatprep.subr.bf16.mxu0 0
        %4681 = vmatpush1.bf16.xpose.msra.mxu0 0
        %4682 = vmatprep.subr.bf16.mxu0 0
        %4683 = vmatpush1.bf16.xpose.msra.mxu0 0
        %4684 = vmatprep.subr.bf16.mxu0 0
        %4685 = vmatpush1.bf16.xpose.msra.mxu0 0
        %4686 = vmatprep.subr.bf16.mxu0 0
        %4687 = vmatpush1.bf16.xpose.msra.mxu0 0
        %4688 = vmatprep.mubr.bf16.mxu0 0
        %4689 = vmatmul.mubr.bf16.gmra.mrb[0].mxu0 %v4651
        %v4690 = vpop.f32.mrb[0].mxu0
        %v4691 = vadd.f32 %v686, %v4690
        %v4692 = vpop.f32.mrb[0].mxu0
        %v4693 = vpop.f32.mrb[0].mxu0
        %v4694 = vpop.f32.mrb[0].mxu0
        %4695 = vdwg.mxu0
        %v4696 = vsel %vm996, %v4691, -inf
        %4697 = vmax.xlane.f32.xlu0 %v4696
        %v4698 = vpop.xlane.xlu0 %4697
        %v4699 = vsub.f32 %v4691, %v4698
        %v4700 = vmul.f32 %v4699, 1.442695
        %v4701 = vpow.pop %v4700
        %v4702 = vsel %vm996, %v4701, 0.0
        %4703 = vadd.xlane.f32.xlu0 %v4702
        %v4704 = vpop.xlane.xlu0 %4703
        %v4705 = vrcp.pop %v4704
        %v4706 = vmul.f32 %v4701, %v4705
        %v4707 = vpack.c.bf16 %v4706, %v4706
        %v4709 = vsel %vm996, %v4707, 0
        %v4712 = vsel %vm1012, %v4640, 0
        %4714 = vmatprep.subr.bf16.mxu0 0
        %4715 = vmatpush1.bf16.msra.mxu0 %v4712
        %4716 = vmatprep.subr.bf16.mxu0 0
        %4717 = vmatpush1.bf16.msra.mxu0 0
        %4718 = vmatprep.subr.bf16.mxu0 0
        %4719 = vmatpush1.bf16.msra.mxu0 0
        %4720 = vmatprep.subr.bf16.mxu0 0
        %4721 = vmatpush1.bf16.msra.mxu0 0
        %4722 = vmatprep.subr.bf16.mxu0 0
        %4723 = vmatpush1.bf16.msra.mxu0 0
        %4724 = vmatprep.subr.bf16.mxu0 0
        %4725 = vmatpush1.bf16.msra.mxu0 0
        %4726 = vmatprep.subr.bf16.mxu0 0
        %4727 = vmatpush1.bf16.msra.mxu0 0
        %4728 = vmatprep.subr.bf16.mxu0 0
        %4729 = vmatpush1.bf16.msra.mxu0 0
        %4730 = vmatprep.subr.bf16.mxu0 0
        %4731 = vmatpush1.bf16.msra.mxu0 0
        %4732 = vmatprep.subr.bf16.mxu0 0
        %4733 = vmatpush1.bf16.msra.mxu0 0
        %4734 = vmatprep.subr.bf16.mxu0 0
        %4735 = vmatpush1.bf16.msra.mxu0 0
        %4736 = vmatprep.subr.bf16.mxu0 0
        %4737 = vmatpush1.bf16.msra.mxu0 0
        %4738 = vmatprep.subr.bf16.mxu0 0
        %4739 = vmatpush1.bf16.msra.mxu0 0
        %4740 = vmatprep.subr.bf16.mxu0 0
        %4741 = vmatpush1.bf16.msra.mxu0 0
        %4742 = vmatprep.subr.bf16.mxu0 0
        %4743 = vmatpush1.bf16.msra.mxu0 0
        %4744 = vmatprep.subr.bf16.mxu0 0
        %4745 = vmatpush1.bf16.msra.mxu0 0
        %4746 = vmatprep.mubr.bf16.mxu0 0
        %4747 = vmatmul.mubr.bf16.gmra.mrb[0].mxu0 %v4709
        %v4748 = vpop.f32.mrb[0].mxu0
        %v4749 = vadd.f32 0.0, %v4748
        %v4750 = vpop.f32.mrb[0].mxu0
        %v4751 = vpop.f32.mrb[0].mxu0
        %v4752 = vpop.f32.mrb[0].mxu0
        %4753 = vdwg.mxu0
        %v4754 = vpack.c.bf16 %v4749, %v4749
        %4756 = vrot.lane.b32.xlu0 %v4638, 112
        %v4757 = vpop.permute.xlu0 %4756
        %4759 = vrot.lane.b32.xlu0 %v4639, 112
        %v4760 = vpop.permute.xlu0 %4759
        %v4762 = vsel %vm949, %v4757, 0
        %v4765 = vsel %vm949, %v4760, 0
        %4767 = vmatprep.subr.bf16.mxu0 0
        %4768 = vmatpush1.bf16.xpose.msra.mxu0 %v4765
        %4769 = vmatprep.subr.bf16.mxu0 0
        %4770 = vmatpush1.bf16.xpose.msra.mxu0 0
        %4771 = vmatprep.subr.bf16.mxu0 0
        %4772 = vmatpush1.bf16.xpose.msra.mxu0 0
        %4773 = vmatprep.subr.bf16.mxu0 0
        %4774 = vmatpush1.bf16.xpose.msra.mxu0 0
        %4775 = vmatprep.subr.bf16.mxu0 0
        %4776 = vmatpush1.bf16.xpose.msra.mxu0 0
        %4777 = vmatprep.subr.bf16.mxu0 0
        %4778 = vmatpush1.bf16.xpose.msra.mxu0 0
        %4779 = vmatprep.subr.bf16.mxu0 0
        %4780 = vmatpush1.bf16.xpose.msra.mxu0 0
        %4781 = vmatprep.subr.bf16.mxu0 0
        %4782 = vmatpush1.bf16.xpose.msra.mxu0 0
        %4783 = vmatprep.subr.bf16.mxu0 0
        %4784 = vmatpush1.bf16.xpose.msra.mxu0 0
        %4785 = vmatprep.subr.bf16.mxu0 0
        %4786 = vmatpush1.bf16.xpose.msra.mxu0 0
        %4787 = vmatprep.subr.bf16.mxu0 0
        %4788 = vmatpush1.bf16.xpose.msra.mxu0 0
        %4789 = vmatprep.subr.bf16.mxu0 0
        %4790 = vmatpush1.bf16.xpose.msra.mxu0 0
        %4791 = vmatprep.subr.bf16.mxu0 0
        %4792 = vmatpush1.bf16.xpose.msra.mxu0 0
        %4793 = vmatprep.subr.bf16.mxu0 0
        %4794 = vmatpush1.bf16.xpose.msra.mxu0 0
        %4795 = vmatprep.subr.bf16.mxu0 0
        %4796 = vmatpush1.bf16.xpose.msra.mxu0 0
        %4797 = vmatprep.subr.bf16.mxu0 0
        %4798 = vmatpush1.bf16.xpose.msra.mxu0 0
        %4799 = vmatprep.mubr.bf16.mxu0 0
        %4800 = vmatmul.mubr.bf16.gmra.mrb[0].mxu0 %v4762
        %v4801 = vpop.f32.mrb[0].mxu0
        %v4802 = vadd.f32 %v686, %v4801
        %v4803 = vpop.f32.mrb[0].mxu0
        %v4804 = vpop.f32.mrb[0].mxu0
        %v4805 = vpop.f32.mrb[0].mxu0
        %4806 = vdwg.mxu0
        %v4807 = vsel %vm996, %v4802, -inf
        %4808 = vmax.xlane.f32.xlu0 %v4807
        %v4809 = vpop.xlane.xlu0 %4808
        %v4810 = vsub.f32 %v4802, %v4809
        %v4811 = vmul.f32 %v4810, 1.442695
        %v4812 = vpow.pop %v4811
        %v4813 = vsel %vm996, %v4812, 0.0
        %4814 = vadd.xlane.f32.xlu0 %v4813
        %v4815 = vpop.xlane.xlu0 %4814
        %v4816 = vrcp.pop %v4815
        %v4817 = vmul.f32 %v4812, %v4816
        %v4818 = vpack.c.bf16 %v4817, %v4817
        %4820 = vrot.lane.b32.xlu0 %v4640, 112
        %v4821 = vpop.permute.xlu0 %4820
        %v4823 = vsel %vm996, %v4818, 0
        %v4826 = vsel %vm1012, %v4821, 0
        %4828 = vmatprep.subr.bf16.mxu0 0
        %4829 = vmatpush1.bf16.msra.mxu0 %v4826
        %4830 = vmatprep.subr.bf16.mxu0 0
        %4831 = vmatpush1.bf16.msra.mxu0 0
        %4832 = vmatprep.subr.bf16.mxu0 0
        %4833 = vmatpush1.bf16.msra.mxu0 0
        %4834 = vmatprep.subr.bf16.mxu0 0
        %4835 = vmatpush1.bf16.msra.mxu0 0
        %4836 = vmatprep.subr.bf16.mxu0 0
        %4837 = vmatpush1.bf16.msra.mxu0 0
        %4838 = vmatprep.subr.bf16.mxu0 0
        %4839 = vmatpush1.bf16.msra.mxu0 0
        %4840 = vmatprep.subr.bf16.mxu0 0
        %4841 = vmatpush1.bf16.msra.mxu0 0
        %4842 = vmatprep.subr.bf16.mxu0 0
        %4843 = vmatpush1.bf16.msra.mxu0 0
        %4844 = vmatprep.subr.bf16.mxu0 0
        %4845 = vmatpush1.bf16.msra.mxu0 0
        %4846 = vmatprep.subr.bf16.mxu0 0
        %4847 = vmatpush1.bf16.msra.mxu0 0
        %4848 = vmatprep.subr.bf16.mxu0 0
        %4849 = vmatpush1.bf16.msra.mxu0 0
        %4850 = vmatprep.subr.bf16.mxu0 0
        %4851 = vmatpush1.bf16.msra.mxu0 0
        %4852 = vmatprep.subr.bf16.mxu0 0
        %4853 = vmatpush1.bf16.msra.mxu0 0
        %4854 = vmatprep.subr.bf16.mxu0 0
        %4855 = vmatpush1.bf16.msra.mxu0 0
        %4856 = vmatprep.subr.bf16.mxu0 0
        %4857 = vmatpush1.bf16.msra.mxu0 0
        %4858 = vmatprep.subr.bf16.mxu0 0
        %4859 = vmatpush1.bf16.msra.mxu0 0
        %4860 = vmatprep.mubr.bf16.mxu0 0
        %4861 = vmatmul.mubr.bf16.gmra.mrb[0].mxu0 %v4823
        %v4862 = vpop.f32.mrb[0].mxu0
        %v4863 = vadd.f32 0.0, %v4862
        %v4864 = vpop.f32.mrb[0].mxu0
        %v4865 = vpop.f32.mrb[0].mxu0
        %v4866 = vpop.f32.mrb[0].mxu0
        %4867 = vdwg.mxu0
        %v4868 = vpack.c.bf16 %v4863, %v4863
        %v4871 = vunpack.c.l.b16 %v4644
        %v4872 = vunpack.c.l.b16 %v4645
        %v4873 = vpack.c.b16 %v4872, %v4871
        %v4876 = vsel %vm949, %v4868, 0
        %4878 = vmatprep.subr.bf16.mxu0 0
        %4879 = vmatpush1.bf16.msra.mxu0 %v4873
        %4880 = vmatprep.subr.bf16.mxu0 0
        %4881 = vmatpush1.bf16.msra.mxu0 0
        %4882 = vmatprep.subr.bf16.mxu0 0
        %4883 = vmatpush1.bf16.msra.mxu0 0
        %4884 = vmatprep.subr.bf16.mxu0 0
        %4885 = vmatpush1.bf16.msra.mxu0 0
        %4886 = vmatprep.subr.bf16.mxu0 0
        %4887 = vmatpush1.bf16.msra.mxu0 0
        %4888 = vmatprep.subr.bf16.mxu0 0
        %4889 = vmatpush1.bf16.msra.mxu0 0
        %4890 = vmatprep.subr.bf16.mxu0 0
        %4891 = vmatpush1.bf16.msra.mxu0 0
        %4892 = vmatprep.subr.bf16.mxu0 0
        %4893 = vmatpush1.bf16.msra.mxu0 0
        %4894 = vmatprep.subr.bf16.mxu0 0
        %4895 = vmatpush1.bf16.msra.mxu0 0
        %4896 = vmatprep.subr.bf16.mxu0 0
        %4897 = vmatpush1.bf16.msra.mxu0 0
        %4898 = vmatprep.subr.bf16.mxu0 0
        %4899 = vmatpush1.bf16.msra.mxu0 0
        %4900 = vmatprep.subr.bf16.mxu0 0
        %4901 = vmatpush1.bf16.msra.mxu0 0
        %4902 = vmatprep.subr.bf16.mxu0 0
        %4903 = vmatpush1.bf16.msra.mxu0 0
        %4904 = vmatprep.subr.bf16.mxu0 0
        %4905 = vmatpush1.bf16.msra.mxu0 0
        %4906 = vmatprep.subr.bf16.mxu0 0
        %4907 = vmatpush1.bf16.msra.mxu0 0
        %4908 = vmatprep.subr.bf16.mxu0 0
        %4909 = vmatpush1.bf16.msra.mxu0 0
        %4910 = vmatprep.mubr.bf16.mxu0 0
        %4911 = vmatmul.mubr.bf16.gmra.mrb[0].mxu0 %v4876
        %v4912 = vpop.f32.mrb[0].mxu0
        %v4913 = vadd.f32 0.0, %v4912
        %v4914 = vpop.f32.mrb[0].mxu0
        %v4915 = vpop.f32.mrb[0].mxu0
        %v4916 = vpop.f32.mrb[0].mxu0
        %4917 = vdwg.mxu0
        %v4920 = vunpack.c.l.b16 %v4642
        %v4921 = vunpack.c.l.b16 %v4643
        %v4922 = vpack.c.b16 %v4921, %v4920
        %v4925 = vsel %vm949, %v4754, 0
        %4927 = vmatprep.subr.bf16.mxu0 0
        %4928 = vmatpush1.bf16.msra.mxu0 %v4922
        %4929 = vmatprep.subr.bf16.mxu0 0
        %4930 = vmatpush1.bf16.msra.mxu0 0
        %4931 = vmatprep.subr.bf16.mxu0 0
        %4932 = vmatpush1.bf16.msra.mxu0 0
        %4933 = vmatprep.subr.bf16.mxu0 0
        %4934 = vmatpush1.bf16.msra.mxu0 0
        %4935 = vmatprep.subr.bf16.mxu0 0
        %4936 = vmatpush1.bf16.msra.mxu0 0
        %4937 = vmatprep.subr.bf16.mxu0 0
        %4938 = vmatpush1.bf16.msra.mxu0 0
        %4939 = vmatprep.subr.bf16.mxu0 0
        %4940 = vmatpush1.bf16.msra.mxu0 0
        %4941 = vmatprep.subr.bf16.mxu0 0
        %4942 = vmatpush1.bf16.msra.mxu0 0
        %4943 = vmatprep.subr.bf16.mxu0 0
        %4944 = vmatpush1.bf16.msra.mxu0 0
        %4945 = vmatprep.subr.bf16.mxu0 0
        %4946 = vmatpush1.bf16.msra.mxu0 0
        %4947 = vmatprep.subr.bf16.mxu0 0
        %4948 = vmatpush1.bf16.msra.mxu0 0
        %4949 = vmatprep.subr.bf16.mxu0 0
        %4950 = vmatpush1.bf16.msra.mxu0 0
        %4951 = vmatprep.subr.bf16.mxu0 0
        %4952 = vmatpush1.bf16.msra.mxu0 0
        %4953 = vmatprep.subr.bf16.mxu0 0
        %4954 = vmatpush1.bf16.msra.mxu0 0
        %4955 = vmatprep.subr.bf16.mxu0 0
        %4956 = vmatpush1.bf16.msra.mxu0 0
        %4957 = vmatprep.subr.bf16.mxu0 0
        %4958 = vmatpush1.bf16.msra.mxu0 0
        %4959 = vmatprep.mubr.bf16.mxu0 0
        %4960 = vmatmul.mubr.bf16.gmra.mrb[0].mxu0 %v4925
        %v4961 = vpop.f32.mrb[0].mxu0
        %v4962 = vadd.f32 %v4913, %v4961
        %v4963 = vpop.f32.mrb[0].mxu0
        %v4964 = vpop.f32.mrb[0].mxu0
        %v4965 = vpop.f32.mrb[0].mxu0
        %4966 = vdwg.mxu0
        %4967 = vrot.lane.b32.xlu0 %v4638, 96
        %v4968 = vpop.permute.xlu0 %4967
        %4969 = vrot.lane.b32.xlu0 %v4639, 96
        %v4970 = vpop.permute.xlu0 %4969
        %v4972 = vsel %vm949, %v4968, 0
        %v4975 = vsel %vm949, %v4970, 0
        %4977 = vmatprep.subr.bf16.mxu0 0
        %4978 = vmatpush1.bf16.xpose.msra.mxu0 %v4975
        %4979 = vmatprep.subr.bf16.mxu0 0
        %4980 = vmatpush1.bf16.xpose.msra.mxu0 0
        %4981 = vmatprep.subr.bf16.mxu0 0
        %4982 = vmatpush1.bf16.xpose.msra.mxu0 0
        %4983 = vmatprep.subr.bf16.mxu0 0
        %4984 = vmatpush1.bf16.xpose.msra.mxu0 0
        %4985 = vmatprep.subr.bf16.mxu0 0
        %4986 = vmatpush1.bf16.xpose.msra.mxu0 0
        %4987 = vmatprep.subr.bf16.mxu0 0
        %4988 = vmatpush1.bf16.xpose.msra.mxu0 0
        %4989 = vmatprep.subr.bf16.mxu0 0
        %4990 = vmatpush1.bf16.xpose.msra.mxu0 0
        %4991 = vmatprep.subr.bf16.mxu0 0
        %4992 = vmatpush1.bf16.xpose.msra.mxu0 0
        %4993 = vmatprep.subr.bf16.mxu0 0
        %4994 = vmatpush1.bf16.xpose.msra.mxu0 0
        %4995 = vmatprep.subr.bf16.mxu0 0
        %4996 = vmatpush1.bf16.xpose.msra.mxu0 0
        %4997 = vmatprep.subr.bf16.mxu0 0
        %4998 = vmatpush1.bf16.xpose.msra.mxu0 0
        %4999 = vmatprep.subr.bf16.mxu0 0
        %5000 = vmatpush1.bf16.xpose.msra.mxu0 0
        %5001 = vmatprep.subr.bf16.mxu0 0
        %5002 = vmatpush1.bf16.xpose.msra.mxu0 0
        %5003 = vmatprep.subr.bf16.mxu0 0
        %5004 = vmatpush1.bf16.xpose.msra.mxu0 0
        %5005 = vmatprep.subr.bf16.mxu0 0
        %5006 = vmatpush1.bf16.xpose.msra.mxu0 0
        %5007 = vmatprep.subr.bf16.mxu0 0
        %5008 = vmatpush1.bf16.xpose.msra.mxu0 0
        %5009 = vmatprep.mubr.bf16.mxu0 0
        %5010 = vmatmul.mubr.bf16.gmra.mrb[0].mxu0 %v4972
        %v5011 = vpop.f32.mrb[0].mxu0
        %v5012 = vadd.f32 %v686, %v5011
        %v5013 = vpop.f32.mrb[0].mxu0
        %v5014 = vpop.f32.mrb[0].mxu0
        %v5015 = vpop.f32.mrb[0].mxu0
        %5016 = vdwg.mxu0
        %v5017 = vsel %vm996, %v5012, -inf
        %5018 = vmax.xlane.f32.xlu0 %v5017
        %v5019 = vpop.xlane.xlu0 %5018
        %v5020 = vsub.f32 %v5012, %v5019
        %v5021 = vmul.f32 %v5020, 1.442695
        %v5022 = vpow.pop %v5021
        %v5023 = vsel %vm996, %v5022, 0.0
        %5024 = vadd.xlane.f32.xlu0 %v5023
        %v5025 = vpop.xlane.xlu0 %5024
        %v5026 = vrcp.pop %v5025
        %v5027 = vmul.f32 %v5022, %v5026
        %v5028 = vpack.c.bf16 %v5027, %v5027
        %5029 = vrot.lane.b32.xlu0 %v4640, 96
        %v5030 = vpop.permute.xlu0 %5029
        %v5032 = vsel %vm996, %v5028, 0
        %v5035 = vsel %vm1012, %v5030, 0
        %5037 = vmatprep.subr.bf16.mxu0 0
        %5038 = vmatpush1.bf16.msra.mxu0 %v5035
        %5039 = vmatprep.subr.bf16.mxu0 0
        %5040 = vmatpush1.bf16.msra.mxu0 0
        %5041 = vmatprep.subr.bf16.mxu0 0
        %5042 = vmatpush1.bf16.msra.mxu0 0
        %5043 = vmatprep.subr.bf16.mxu0 0
        %5044 = vmatpush1.bf16.msra.mxu0 0
        %5045 = vmatprep.subr.bf16.mxu0 0
        %5046 = vmatpush1.bf16.msra.mxu0 0
        %5047 = vmatprep.subr.bf16.mxu0 0
        %5048 = vmatpush1.bf16.msra.mxu0 0
        %5049 = vmatprep.subr.bf16.mxu0 0
        %5050 = vmatpush1.bf16.msra.mxu0 0
        %5051 = vmatprep.subr.bf16.mxu0 0
        %5052 = vmatpush1.bf16.msra.mxu0 0
        %5053 = vmatprep.subr.bf16.mxu0 0
        %5054 = vmatpush1.bf16.msra.mxu0 0
        %5055 = vmatprep.subr.bf16.mxu0 0
        %5056 = vmatpush1.bf16.msra.mxu0 0
        %5057 = vmatprep.subr.bf16.mxu0 0
        %5058 = vmatpush1.bf16.msra.mxu0 0
        %5059 = vmatprep.subr.bf16.mxu0 0
        %5060 = vmatpush1.bf16.msra.mxu0 0
        %5061 = vmatprep.subr.bf16.mxu0 0
        %5062 = vmatpush1.bf16.msra.mxu0 0
        %5063 = vmatprep.subr.bf16.mxu0 0
        %5064 = vmatpush1.bf16.msra.mxu0 0
        %5065 = vmatprep.subr.bf16.mxu0 0
        %5066 = vmatpush1.bf16.msra.mxu0 0
        %5067 = vmatprep.subr.bf16.mxu0 0
        %5068 = vmatpush1.bf16.msra.mxu0 0
        %5069 = vmatprep.mubr.bf16.mxu0 0
        %5070 = vmatmul.mubr.bf16.gmra.mrb[0].mxu0 %v5032
        %v5071 = vpop.f32.mrb[0].mxu0
        %v5072 = vadd.f32 0.0, %v5071
        %v5073 = vpop.f32.mrb[0].mxu0
        %v5074 = vpop.f32.mrb[0].mxu0
        %v5075 = vpop.f32.mrb[0].mxu0
        %5076 = vdwg.mxu0
        %v5077 = vpack.c.bf16 %v5072, %v5072
        %v5080 = vunpack.c.l.b16 %v4646
        %v5081 = vunpack.c.l.b16 %v4647
        %v5082 = vpack.c.b16 %v5081, %v5080
        %v5085 = vsel %vm949, %v5077, 0
        %5087 = vmatprep.subr.bf16.mxu0 0
        %5088 = vmatpush1.bf16.msra.mxu0 %v5082
        %5089 = vmatprep.subr.bf16.mxu0 0
        %5090 = vmatpush1.bf16.msra.mxu0 0
        %5091 = vmatprep.subr.bf16.mxu0 0
        %5092 = vmatpush1.bf16.msra.mxu0 0
        %5093 = vmatprep.subr.bf16.mxu0 0
        %5094 = vmatpush1.bf16.msra.mxu0 0
        %5095 = vmatprep.subr.bf16.mxu0 0
        %5096 = vmatpush1.bf16.msra.mxu0 0
        %5097 = vmatprep.subr.bf16.mxu0 0
        %5098 = vmatpush1.bf16.msra.mxu0 0
        %5099 = vmatprep.subr.bf16.mxu0 0
        %5100 = vmatpush1.bf16.msra.mxu0 0
        %5101 = vmatprep.subr.bf16.mxu0 0
        %5102 = vmatpush1.bf16.msra.mxu0 0
        %5103 = vmatprep.subr.bf16.mxu0 0
        %5104 = vmatpush1.bf16.msra.mxu0 0
        %5105 = vmatprep.subr.bf16.mxu0 0
        %5106 = vmatpush1.bf16.msra.mxu0 0
        %5107 = vmatprep.subr.bf16.mxu0 0
        %5108 = vmatpush1.bf16.msra.mxu0 0
        %5109 = vmatprep.subr.bf16.mxu0 0
        %5110 = vmatpush1.bf16.msra.mxu0 0
        %5111 = vmatprep.subr.bf16.mxu0 0
        %5112 = vmatpush1.bf16.msra.mxu0 0
        %5113 = vmatprep.subr.bf16.mxu0 0
        %5114 = vmatpush1.bf16.msra.mxu0 0
        %5115 = vmatprep.subr.bf16.mxu0 0
        %5116 = vmatpush1.bf16.msra.mxu0 0
        %5117 = vmatprep.subr.bf16.mxu0 0
        %5118 = vmatpush1.bf16.msra.mxu0 0
        %5119 = vmatprep.mubr.bf16.mxu0 0
        %5120 = vmatmul.mubr.bf16.gmra.mrb[0].mxu0 %v5085
        %v5121 = vpop.f32.mrb[0].mxu0
        %v5122 = vadd.f32 0.0, %v5121
        %v5123 = vpop.f32.mrb[0].mxu0
        %v5124 = vpop.f32.mrb[0].mxu0
        %v5125 = vpop.f32.mrb[0].mxu0
        %5126 = vdwg.mxu0
        %v5127 = vadd.f32 %v4962, %v5122
        %5128 = vrot.lane.b32.xlu0 %v4638, 80
        %v5129 = vpop.permute.xlu0 %5128
        %5130 = vrot.lane.b32.xlu0 %v4639, 80
        %v5131 = vpop.permute.xlu0 %5130
        %v5133 = vsel %vm949, %v5129, 0
        %v5136 = vsel %vm949, %v5131, 0
        %5138 = vmatprep.subr.bf16.mxu0 0
        %5139 = vmatpush1.bf16.xpose.msra.mxu0 %v5136
        %5140 = vmatprep.subr.bf16.mxu0 0
        %5141 = vmatpush1.bf16.xpose.msra.mxu0 0
        %5142 = vmatprep.subr.bf16.mxu0 0
        %5143 = vmatpush1.bf16.xpose.msra.mxu0 0
        %5144 = vmatprep.subr.bf16.mxu0 0
        %5145 = vmatpush1.bf16.xpose.msra.mxu0 0
        %5146 = vmatprep.subr.bf16.mxu0 0
        %5147 = vmatpush1.bf16.xpose.msra.mxu0 0
        %5148 = vmatprep.subr.bf16.mxu0 0
        %5149 = vmatpush1.bf16.xpose.msra.mxu0 0
        %5150 = vmatprep.subr.bf16.mxu0 0
        %5151 = vmatpush1.bf16.xpose.msra.mxu0 0
        %5152 = vmatprep.subr.bf16.mxu0 0
        %5153 = vmatpush1.bf16.xpose.msra.mxu0 0
        %5154 = vmatprep.subr.bf16.mxu0 0
        %5155 = vmatpush1.bf16.xpose.msra.mxu0 0
        %5156 = vmatprep.subr.bf16.mxu0 0
        %5157 = vmatpush1.bf16.xpose.msra.mxu0 0
        %5158 = vmatprep.subr.bf16.mxu0 0
        %5159 = vmatpush1.bf16.xpose.msra.mxu0 0
        %5160 = vmatprep.subr.bf16.mxu0 0
        %5161 = vmatpush1.bf16.xpose.msra.mxu0 0
        %5162 = vmatprep.subr.bf16.mxu0 0
        %5163 = vmatpush1.bf16.xpose.msra.mxu0 0
        %5164 = vmatprep.subr.bf16.mxu0 0
        %5165 = vmatpush1.bf16.xpose.msra.mxu0 0
        %5166 = vmatprep.subr.bf16.mxu0 0
        %5167 = vmatpush1.bf16.xpose.msra.mxu0 0
        %5168 = vmatprep.subr.bf16.mxu0 0
        %5169 = vmatpush1.bf16.xpose.msra.mxu0 0
        %5170 = vmatprep.mubr.bf16.mxu0 0
        %5171 = vmatmul.mubr.bf16.gmra.mrb[0].mxu0 %v5133
        %v5172 = vpop.f32.mrb[0].mxu0
        %v5173 = vadd.f32 %v686, %v5172
        %v5174 = vpop.f32.mrb[0].mxu0
        %v5175 = vpop.f32.mrb[0].mxu0
        %v5176 = vpop.f32.mrb[0].mxu0
        %5177 = vdwg.mxu0
        %v5178 = vsel %vm996, %v5173, -inf
        %5179 = vmax.xlane.f32.xlu0 %v5178
        %v5180 = vpop.xlane.xlu0 %5179
        %v5181 = vsub.f32 %v5173, %v5180
        %v5182 = vmul.f32 %v5181, 1.442695
        %v5183 = vpow.pop %v5182
        %v5184 = vsel %vm996, %v5183, 0.0
        %5185 = vadd.xlane.f32.xlu0 %v5184
        %v5186 = vpop.xlane.xlu0 %5185
        %v5187 = vrcp.pop %v5186
        %v5188 = vmul.f32 %v5183, %v5187
        %v5189 = vpack.c.bf16 %v5188, %v5188
        %5190 = vrot.lane.b32.xlu0 %v4640, 80
        %v5191 = vpop.permute.xlu0 %5190
        %v5193 = vsel %vm996, %v5189, 0
        %v5196 = vsel %vm1012, %v5191, 0
        %5198 = vmatprep.subr.bf16.mxu0 0
        %5199 = vmatpush1.bf16.msra.mxu0 %v5196
        %5200 = vmatprep.subr.bf16.mxu0 0
        %5201 = vmatpush1.bf16.msra.mxu0 0
        %5202 = vmatprep.subr.bf16.mxu0 0
        %5203 = vmatpush1.bf16.msra.mxu0 0
        %5204 = vmatprep.subr.bf16.mxu0 0
        %5205 = vmatpush1.bf16.msra.mxu0 0
        %5206 = vmatprep.subr.bf16.mxu0 0
        %5207 = vmatpush1.bf16.msra.mxu0 0
        %5208 = vmatprep.subr.bf16.mxu0 0
        %5209 = vmatpush1.bf16.msra.mxu0 0
        %5210 = vmatprep.subr.bf16.mxu0 0
        %5211 = vmatpush1.bf16.msra.mxu0 0
        %5212 = vmatprep.subr.bf16.mxu0 0
        %5213 = vmatpush1.bf16.msra.mxu0 0
        %5214 = vmatprep.subr.bf16.mxu0 0
        %5215 = vmatpush1.bf16.msra.mxu0 0
        %5216 = vmatprep.subr.bf16.mxu0 0
        %5217 = vmatpush1.bf16.msra.mxu0 0
        %5218 = vmatprep.subr.bf16.mxu0 0
        %5219 = vmatpush1.bf16.msra.mxu0 0
        %5220 = vmatprep.subr.bf16.mxu0 0
        %5221 = vmatpush1.bf16.msra.mxu0 0
        %5222 = vmatprep.subr.bf16.mxu0 0
        %5223 = vmatpush1.bf16.msra.mxu0 0
        %5224 = vmatprep.subr.bf16.mxu0 0
        %5225 = vmatpush1.bf16.msra.mxu0 0
        %5226 = vmatprep.subr.bf16.mxu0 0
        %5227 = vmatpush1.bf16.msra.mxu0 0
        %5228 = vmatprep.subr.bf16.mxu0 0
        %5229 = vmatpush1.bf16.msra.mxu0 0
        %5230 = vmatprep.mubr.bf16.mxu0 0
        %5231 = vmatmul.mubr.bf16.gmra.mrb[0].mxu0 %v5193
        %v5232 = vpop.f32.mrb[0].mxu0
        %v5233 = vadd.f32 0.0, %v5232
        %v5234 = vpop.f32.mrb[0].mxu0
        %v5235 = vpop.f32.mrb[0].mxu0
        %v5236 = vpop.f32.mrb[0].mxu0
        %5237 = vdwg.mxu0
        %v5238 = vpack.c.bf16 %v5233, %v5233
        %v5241 = vunpack.c.l.b16 %v4648
        %v5242 = vunpack.c.l.b16 %v4649
        %v5243 = vpack.c.b16 %v5242, %v5241
        %v5246 = vsel %vm949, %v5238, 0
        %5248 = vmatprep.subr.bf16.mxu0 0
        %5249 = vmatpush1.bf16.msra.mxu0 %v5243
        %5250 = vmatprep.subr.bf16.mxu0 0
        %5251 = vmatpush1.bf16.msra.mxu0 0
        %5252 = vmatprep.subr.bf16.mxu0 0
        %5253 = vmatpush1.bf16.msra.mxu0 0
        %5254 = vmatprep.subr.bf16.mxu0 0
        %5255 = vmatpush1.bf16.msra.mxu0 0
        %5256 = vmatprep.subr.bf16.mxu0 0
        %5257 = vmatpush1.bf16.msra.mxu0 0
        %5258 = vmatprep.subr.bf16.mxu0 0
        %5259 = vmatpush1.bf16.msra.mxu0 0
        %5260 = vmatprep.subr.bf16.mxu0 0
        %5261 = vmatpush1.bf16.msra.mxu0 0
        %5262 = vmatprep.subr.bf16.mxu0 0
        %5263 = vmatpush1.bf16.msra.mxu0 0
        %5264 = vmatprep.subr.bf16.mxu0 0
        %5265 = vmatpush1.bf16.msra.mxu0 0
        %5266 = vmatprep.subr.bf16.mxu0 0
        %5267 = vmatpush1.bf16.msra.mxu0 0
        %5268 = vmatprep.subr.bf16.mxu0 0
        %5269 = vmatpush1.bf16.msra.mxu0 0
        %5270 = vmatprep.subr.bf16.mxu0 0
        %5271 = vmatpush1.bf16.msra.mxu0 0
        %5272 = vmatprep.subr.bf16.mxu0 0
        %5273 = vmatpush1.bf16.msra.mxu0 0
        %5274 = vmatprep.subr.bf16.mxu0 0
        %5275 = vmatpush1.bf16.msra.mxu0 0
        %5276 = vmatprep.subr.bf16.mxu0 0
        %5277 = vmatpush1.bf16.msra.mxu0 0
        %5278 = vmatprep.subr.bf16.mxu0 0
        %5279 = vmatpush1.bf16.msra.mxu0 0
        %5280 = vmatprep.mubr.bf16.mxu0 0
        %5281 = vmatmul.mubr.bf16.gmra.mrb[0].mxu0 %v5246
        %v5282 = vpop.f32.mrb[0].mxu0
        %v5283 = vadd.f32 0.0, %v5282
        %v5284 = vpop.f32.mrb[0].mxu0
        %v5285 = vpop.f32.mrb[0].mxu0
        %v5286 = vpop.f32.mrb[0].mxu0
        %5287 = vdwg.mxu0
        %v5288 = vadd.f32 %v5127, %v5283
        %v5289 = vadd.f32 %v4383, %v5288
        %s5290 = scalar_lea.vmem [#allocation8], 3
        %v5291 = vld [vmem:[%s5290] sm:$0x1]
        %v5293 = vlaneseq
        %v5294 = vshrl.u32 %v5293, 7
        %v5295 = vsub.s32 0, %v5294
        %v5296 = vrot.slane %v5291, %v5295
        %v5298 = vadd.f32 %v5289, %v5296
        %s5299 = scalar_lea.vmem [#allocation10], 3
        %v5300 = vld [vmem:[%s5299] sm:$0x1]
        %s5301 = scalar_lea.vmem [#allocation11], 3
        %v5302 = vld [vmem:[%s5301] sm:$0x1]
        %v5303 = vsel %vm689, %v5298, 0.0
        %5304 = vadd.xlane.f32.xlu0 %v5303
        %v5305 = vpop.xlane.xlu0 %5304
        %v5306 = vmul.f32 %v5305, %v693
        %v5307 = vsub.f32 %v5298, %v5306
        %v5308 = vmul.f32 %v5307, %v5307
        %v5309 = vsel %vm689, %v5308, 0.0
        %5310 = vadd.xlane.f32.xlu0 %v5309
        %v5311 = vpop.xlane.xlu0 %5310
        %v5312 = vmul.f32 %v5311, %v693
        %v5313 = vadd.f32 %v5312, 1e-05
        %v5314 = vrsqrt.pop %v5313
        %v5315 = vmul.f32 %v5307, %v5314
        %v5317 = vlaneseq
        %v5318 = vshrl.u32 %v5317, 7
        %v5319 = vsub.s32 0, %v5318
        %v5320 = vrot.slane %v5300, %v5319
        %v5322 = vmul.f32 %v5315, %v5320
        %v5324 = vlaneseq
        %v5325 = vshrl.u32 %v5324, 7
        %v5326 = vsub.s32 0, %v5325
        %v5327 = vrot.slane %v5302, %v5326
        %v5329 = vadd.f32 %v5322, %v5327
        %v5330 = vpack.c.bf16 %v5329, %v5329
        %s5331 = scalar_lea.vmem %s10, 192
        %v5332 = vld [vmem:[%s5331] sm:$0xff]
        %v5333 = vld [vmem:[%s5331 + $0x8] sm:$0xff]
        %v5334 = vld [vmem:[%s5331 + $0x10] sm:$0xff]
        %v5335 = vld [vmem:[%s5331 + $0x18] sm:$0xff]
        %v5336 = vld [vmem:[%s5331 + $0x20] sm:$0xff]
        %v5337 = vld [vmem:[%s5331 + $0x28] sm:$0xff]
        %v5338 = vld [vmem:[%s5331 + $0x30] sm:$0xff]
        %v5339 = vld [vmem:[%s5331 + $0x38] sm:$0xff]
        %s5340 = scalar_lea.vmem [#allocation13], 6
        %v5341 = vld [vmem:[%s5340] sm:$0x3]
        %v5343 = vlaneseq
        %v5344 = vshrl.u32 %v5343, 7
        %v5345 = vsub.s32 0, %v5344
        %v5346 = vrot.slane %v5341, %v5345
        %v5347 = vlaneseq
        %v5348 = vshrl.u32 %v5347, 7
        %v5349 = vsub.s32 1, %v5348
        %v5350 = vrot.slane %v5341, %v5349
        %v5361 = vunpack.c.l.b16 %v5332
        %v5362 = vunpack.c.h.b16 %v5332
        %v5363 = vunpack.c.l.b16 %v5333
        %v5364 = vunpack.c.h.b16 %v5333
        %v5365 = vunpack.c.l.b16 %v5334
        %v5366 = vunpack.c.h.b16 %v5334
        %v5367 = vunpack.c.l.b16 %v5335
        %v5368 = vunpack.c.h.b16 %v5335
        %v5369 = vunpack.c.l.b16 %v5336
        %v5370 = vunpack.c.h.b16 %v5336
        %v5371 = vunpack.c.l.b16 %v5337
        %v5372 = vunpack.c.h.b16 %v5337
        %v5373 = vunpack.c.l.b16 %v5338
        %v5374 = vunpack.c.h.b16 %v5338
        %v5375 = vunpack.c.l.b16 %v5339
        %v5376 = vunpack.c.h.b16 %v5339
        %v5377 = vpack.c.b16 %v5363, %v5361
        %v5378 = vpack.c.b16 %v5364, %v5362
        %v5379 = vpack.c.b16 %v5367, %v5365
        %v5380 = vpack.c.b16 %v5368, %v5366
        %v5381 = vpack.c.b16 %v5371, %v5369
        %v5382 = vpack.c.b16 %v5372, %v5370
        %v5383 = vpack.c.b16 %v5375, %v5373
        %v5384 = vpack.c.b16 %v5376, %v5374
        %v5394 = vsel %vm689, %v5330, 0
        %5396 = vmatprep.subr.bf16.mxu0 %v5378
        %5397 = vmatpush1.bf16.msra.mxu0 %v5377
        %5398 = vmatprep.subr.bf16.mxu0 %v5380
        %5399 = vmatpush1.bf16.msra.mxu0 %v5379
        %5400 = vmatprep.subr.bf16.mxu0 %v5382
        %5401 = vmatpush1.bf16.msra.mxu0 %v5381
        %5402 = vmatprep.subr.bf16.mxu0 %v5384
        %5403 = vmatpush1.bf16.msra.mxu0 %v5383
        %5404 = vmatprep.subr.bf16.mxu0 0
        %5405 = vmatpush1.bf16.msra.mxu0 0
        %5406 = vmatprep.subr.bf16.mxu0 0
        %5407 = vmatpush1.bf16.msra.mxu0 0
        %5408 = vmatprep.subr.bf16.mxu0 0
        %5409 = vmatpush1.bf16.msra.mxu0 0
        %5410 = vmatprep.subr.bf16.mxu0 0
        %5411 = vmatpush1.bf16.msra.mxu0 0
        %5412 = vmatprep.subr.bf16.mxu0 0
        %5413 = vmatpush1.bf16.msra.mxu0 0
        %5414 = vmatprep.subr.bf16.mxu0 0
        %5415 = vmatpush1.bf16.msra.mxu0 0
        %5416 = vmatprep.subr.bf16.mxu0 0
        %5417 = vmatpush1.bf16.msra.mxu0 0
        %5418 = vmatprep.subr.bf16.mxu0 0
        %5419 = vmatpush1.bf16.msra.mxu0 0
        %5420 = vmatprep.subr.bf16.mxu0 0
        %5421 = vmatpush1.bf16.msra.mxu0 0
        %5422 = vmatprep.subr.bf16.mxu0 0
        %5423 = vmatpush1.bf16.msra.mxu0 0
        %5424 = vmatprep.subr.bf16.mxu0 0
        %5425 = vmatpush1.bf16.msra.mxu0 0
        %5426 = vmatprep.subr.bf16.mxu0 0
        %5427 = vmatpush1.bf16.msra.mxu0 0
        %5428 = vmatprep.mubr.bf16.mxu0 0
        %5429 = vmatmul.mubr.bf16.gmra.mrb[0].mxu0 %v5394
        %v5430 = vpop.f32.mrb[0].mxu0
        %v5431 = vadd.f32 %v5346, %v5430
        %v5432 = vpop.f32.mrb[0].mxu0
        %v5433 = vadd.f32 %v5350, %v5432
        %v5434 = vpop.f32.mrb[0].mxu0
        %v5435 = vpop.f32.mrb[0].mxu0
        %5436 = vdwg.mxu0
        %v5437 = vmax.f32 %v5431, 0.0
        %v5438 = vmax.f32 %v5433, 0.0
        %v5439 = vpack.c.bf16 %v5437, %v5437
        %v5440 = vpack.c.bf16 %v5438, %v5438
        %s5441 = scalar_lea.vmem %s12, 384
        %v5442 = vld [vmem:[%s5441] sm:$0xf]
        %v5443 = vld [vmem:[%s5441 + $0x4] sm:$0xf]
        %v5444 = vld [vmem:[%s5441 + $0x8] sm:$0xf]
        %v5445 = vld [vmem:[%s5441 + $0xc] sm:$0xf]
        %v5446 = vld [vmem:[%s5441 + $0x10] sm:$0xf]
        %v5447 = vld [vmem:[%s5441 + $0x14] sm:$0xf]
        %v5448 = vld [vmem:[%s5441 + $0x18] sm:$0xf]
        %v5449 = vld [vmem:[%s5441 + $0x1c] sm:$0xf]
        %v5450 = vld [vmem:[%s5441 + $0x20] sm:$0xf]
        %v5451 = vld [vmem:[%s5441 + $0x24] sm:$0xf]
        %v5452 = vld [vmem:[%s5441 + $0x28] sm:$0xf]
        %v5453 = vld [vmem:[%s5441 + $0x2c] sm:$0xf]
        %v5454 = vld [vmem:[%s5441 + $0x30] sm:$0xf]
        %v5455 = vld [vmem:[%s5441 + $0x34] sm:$0xf]
        %v5456 = vld [vmem:[%s5441 + $0x38] sm:$0xf]
        %v5457 = vld [vmem:[%s5441 + $0x3c] sm:$0xf]
        %v5458 = vld [vmem:[%s5441 + $0x40] sm:$0xf]
        %v5459 = vld [vmem:[%s5441 + $0x44] sm:$0xf]
        %v5460 = vld [vmem:[%s5441 + $0x48] sm:$0xf]
        %v5461 = vld [vmem:[%s5441 + $0x4c] sm:$0xf]
        %v5462 = vld [vmem:[%s5441 + $0x50] sm:$0xf]
        %v5463 = vld [vmem:[%s5441 + $0x54] sm:$0xf]
        %v5464 = vld [vmem:[%s5441 + $0x58] sm:$0xf]
        %v5465 = vld [vmem:[%s5441 + $0x5c] sm:$0xf]
        %v5466 = vld [vmem:[%s5441 + $0x60] sm:$0xf]
        %v5467 = vld [vmem:[%s5441 + $0x64] sm:$0xf]
        %v5468 = vld [vmem:[%s5441 + $0x68] sm:$0xf]
        %v5469 = vld [vmem:[%s5441 + $0x6c] sm:$0xf]
        %v5470 = vld [vmem:[%s5441 + $0x70] sm:$0xf]
        %v5471 = vld [vmem:[%s5441 + $0x74] sm:$0xf]
        %v5472 = vld [vmem:[%s5441 + $0x78] sm:$0xf]
        %v5473 = vld [vmem:[%s5441 + $0x7c] sm:$0xf]
        %s5474 = scalar_lea.vmem %s13, 3
        %v5475 = vld [vmem:[%s5474] sm:$0x1]
        %v5477 = vlaneseq
        %v5478 = vshrl.u32 %v5477, 7
        %v5479 = vsub.s32 0, %v5478
        %v5480 = vrot.slane %v5475, %v5479
        %v5514 = vunpack.c.l.b16 %v5442
        %v5515 = vunpack.c.l.b16 %v5443
        %v5516 = vunpack.c.l.b16 %v5444
        %v5517 = vunpack.c.l.b16 %v5445
        %v5518 = vunpack.c.l.b16 %v5446
        %v5519 = vunpack.c.l.b16 %v5447
        %v5520 = vunpack.c.l.b16 %v5448
        %v5521 = vunpack.c.l.b16 %v5449
        %v5522 = vunpack.c.l.b16 %v5450
        %v5523 = vunpack.c.l.b16 %v5451
        %v5524 = vunpack.c.l.b16 %v5452
        %v5525 = vunpack.c.l.b16 %v5453
        %v5526 = vunpack.c.l.b16 %v5454
        %v5527 = vunpack.c.l.b16 %v5455
        %v5528 = vunpack.c.l.b16 %v5456
        %v5529 = vunpack.c.l.b16 %v5457
        %v5530 = vunpack.c.l.b16 %v5458
        %v5531 = vunpack.c.l.b16 %v5459
        %v5532 = vunpack.c.l.b16 %v5460
        %v5533 = vunpack.c.l.b16 %v5461
        %v5534 = vunpack.c.l.b16 %v5462
        %v5535 = vunpack.c.l.b16 %v5463
        %v5536 = vunpack.c.l.b16 %v5464
        %v5537 = vunpack.c.l.b16 %v5465
        %v5538 = vunpack.c.l.b16 %v5466
        %v5539 = vunpack.c.l.b16 %v5467
        %v5540 = vunpack.c.l.b16 %v5468
        %v5541 = vunpack.c.l.b16 %v5469
        %v5542 = vunpack.c.l.b16 %v5470
        %v5543 = vunpack.c.l.b16 %v5471
        %v5544 = vunpack.c.l.b16 %v5472
        %v5545 = vunpack.c.l.b16 %v5473
        %v5546 = vpack.c.b16 %v5515, %v5514
        %v5547 = vpack.c.b16 %v5517, %v5516
        %v5548 = vpack.c.b16 %v5519, %v5518
        %v5549 = vpack.c.b16 %v5521, %v5520
        %v5550 = vpack.c.b16 %v5523, %v5522
        %v5551 = vpack.c.b16 %v5525, %v5524
        %v5552 = vpack.c.b16 %v5527, %v5526
        %v5553 = vpack.c.b16 %v5529, %v5528
        %v5554 = vpack.c.b16 %v5531, %v5530
        %v5555 = vpack.c.b16 %v5533, %v5532
        %v5556 = vpack.c.b16 %v5535, %v5534
        %v5557 = vpack.c.b16 %v5537, %v5536
        %v5558 = vpack.c.b16 %v5539, %v5538
        %v5559 = vpack.c.b16 %v5541, %v5540
        %v5560 = vpack.c.b16 %v5543, %v5542
        %v5561 = vpack.c.b16 %v5545, %v5544
        %5578 = vmatprep.subr.bf16.mxu0 0
        %5579 = vmatpush1.bf16.msra.mxu0 %v5546
        %5580 = vmatprep.subr.bf16.mxu0 0
        %5581 = vmatpush1.bf16.msra.mxu0 %v5547
        %5582 = vmatprep.subr.bf16.mxu0 0
        %5583 = vmatpush1.bf16.msra.mxu0 %v5548
        %5584 = vmatprep.subr.bf16.mxu0 0
        %5585 = vmatpush1.bf16.msra.mxu0 %v5549
        %5586 = vmatprep.subr.bf16.mxu0 0
        %5587 = vmatpush1.bf16.msra.mxu0 %v5550
        %5588 = vmatprep.subr.bf16.mxu0 0
        %5589 = vmatpush1.bf16.msra.mxu0 %v5551
        %5590 = vmatprep.subr.bf16.mxu0 0
        %5591 = vmatpush1.bf16.msra.mxu0 %v5552
        %5592 = vmatprep.subr.bf16.mxu0 0
        %5593 = vmatpush1.bf16.msra.mxu0 %v5553
        %5594 = vmatprep.subr.bf16.mxu0 0
        %5595 = vmatpush1.bf16.msra.mxu0 %v5554
        %5596 = vmatprep.subr.bf16.mxu0 0
        %5597 = vmatpush1.bf16.msra.mxu0 %v5555
        %5598 = vmatprep.subr.bf16.mxu0 0
        %5599 = vmatpush1.bf16.msra.mxu0 %v5556
        %5600 = vmatprep.subr.bf16.mxu0 0
        %5601 = vmatpush1.bf16.msra.mxu0 %v5557
        %5602 = vmatprep.subr.bf16.mxu0 0
        %5603 = vmatpush1.bf16.msra.mxu0 %v5558
        %5604 = vmatprep.subr.bf16.mxu0 0
        %5605 = vmatpush1.bf16.msra.mxu0 %v5559
        %5606 = vmatprep.subr.bf16.mxu0 0
        %5607 = vmatpush1.bf16.msra.mxu0 %v5560
        %5608 = vmatprep.subr.bf16.mxu0 0
        %5609 = vmatpush1.bf16.msra.mxu0 %v5561
        %5610 = vmatprep.mubr.bf16.mxu0 %v5440
        %5611 = vmatmul.mubr.bf16.gmra.mrb[0].mxu0 %v5439
        %v5612 = vpop.f32.mrb[0].mxu0
        %v5613 = vadd.f32 %v5480, %v5612
        %v5614 = vpop.f32.mrb[0].mxu0
        %v5615 = vpop.f32.mrb[0].mxu0
        %v5616 = vpop.f32.mrb[0].mxu0
        %5617 = vdwg.mxu0
        %v5618 = vadd.f32 %v5298, %v5613
        %v5619 = vld [vmem:[%s14] sm:$0x1]
        %v5620 = vld [vmem:[%s15] sm:$0x1]
        %v5621 = vsel %vm689, %v5618, 0.0
        %5622 = vadd.xlane.f32.xlu0 %v5621
        %v5623 = vpop.xlane.xlu0 %5622
        %v5624 = vmul.f32 %v5623, %v693
        %v5625 = vsub.f32 %v5618, %v5624
        %v5626 = vmul.f32 %v5625, %v5625
        %v5627 = vsel %vm689, %v5626, 0.0
        %5628 = vadd.xlane.f32.xlu0 %v5627
        %v5629 = vpop.xlane.xlu0 %5628
        %v5630 = vmul.f32 %v5629, %v693
        %v5631 = vadd.f32 %v5630, 1e-05
        %v5632 = vrsqrt.pop %v5631
        %v5633 = vmul.f32 %v5625, %v5632
        %v5635 = vlaneseq
        %v5636 = vshrl.u32 %v5635, 7
        %v5637 = vsub.s32 0, %v5636
        %v5638 = vrot.slane %v5619, %v5637
        %v5640 = vmul.f32 %v5633, %v5638
        %v5642 = vlaneseq
        %v5643 = vshrl.u32 %v5642, 7
        %v5644 = vsub.s32 0, %v5643
        %v5645 = vrot.slane %v5620, %v5644
        %v5647 = vadd.f32 %v5640, %v5645
        %v5648 = vpack.c.bf16 %v5647, %v5647
        %v5649 = vld [vmem:[%s16] sm:$0xf]
        %v5650 = vld [vmem:[%s16 + $0x4] sm:$0xf]
        %v5651 = vld [vmem:[%s16 + $0x8] sm:$0xf]
        %v5652 = vld [vmem:[%s16 + $0xc] sm:$0xf]
        %v5653 = vld [vmem:[%s16 + $0x10] sm:$0xf]
        %v5654 = vld [vmem:[%s16 + $0x14] sm:$0xf]
        %v5655 = vld [vmem:[%s16 + $0x18] sm:$0xf]
        %v5656 = vld [vmem:[%s16 + $0x1c] sm:$0xf]
        %v5657 = vld [vmem:[%s17] sm:$0x1]
        %v5659 = vlaneseq
        %v5660 = vshrl.u32 %v5659, 7
        %v5661 = vsub.s32 0, %v5660
        %v5662 = vrot.slane %v5657, %v5661
        %v5672 = vunpack.c.l.b16 %v5649
        %v5673 = vunpack.c.l.b16 %v5650
        %v5674 = vunpack.c.l.b16 %v5651
        %v5675 = vunpack.c.l.b16 %v5652
        %v5676 = vunpack.c.l.b16 %v5653
        %v5677 = vunpack.c.l.b16 %v5654
        %v5678 = vunpack.c.l.b16 %v5655
        %v5679 = vunpack.c.l.b16 %v5656
        %v5680 = vpack.c.b16 %v5673, %v5672
        %v5681 = vpack.c.b16 %v5675, %v5674
        %v5682 = vpack.c.b16 %v5677, %v5676
        %v5683 = vpack.c.b16 %v5679, %v5678
        %v5689 = vsel %vm689, %v5648, 0
        %5691 = vmatprep.subr.bf16.mxu0 0
        %5692 = vmatpush1.bf16.msra.mxu0 %v5680
        %5693 = vmatprep.subr.bf16.mxu0 0
        %5694 = vmatpush1.bf16.msra.mxu0 %v5681
        %5695 = vmatprep.subr.bf16.mxu0 0
        %5696 = vmatpush1.bf16.msra.mxu0 %v5682
        %5697 = vmatprep.subr.bf16.mxu0 0
        %5698 = vmatpush1.bf16.msra.mxu0 %v5683
        %5699 = vmatprep.subr.bf16.mxu0 0
        %5700 = vmatpush1.bf16.msra.mxu0 0
        %5701 = vmatprep.subr.bf16.mxu0 0
        %5702 = vmatpush1.bf16.msra.mxu0 0
        %5703 = vmatprep.subr.bf16.mxu0 0
        %5704 = vmatpush1.bf16.msra.mxu0 0
        %5705 = vmatprep.subr.bf16.mxu0 0
        %5706 = vmatpush1.bf16.msra.mxu0 0
        %5707 = vmatprep.subr.bf16.mxu0 0
        %5708 = vmatpush1.bf16.msra.mxu0 0
        %5709 = vmatprep.subr.bf16.mxu0 0
        %5710 = vmatpush1.bf16.msra.mxu0 0
        %5711 = vmatprep.subr.bf16.mxu0 0
        %5712 = vmatpush1.bf16.msra.mxu0 0
        %5713 = vmatprep.subr.bf16.mxu0 0
        %5714 = vmatpush1.bf16.msra.mxu0 0
        %5715 = vmatprep.subr.bf16.mxu0 0
        %5716 = vmatpush1.bf16.msra.mxu0 0
        %5717 = vmatprep.subr.bf16.mxu0 0
        %5718 = vmatpush1.bf16.msra.mxu0 0
        %5719 = vmatprep.subr.bf16.mxu0 0
        %5720 = vmatpush1.bf16.msra.mxu0 0
        %5721 = vmatprep.subr.bf16.mxu0 0
        %5722 = vmatpush1.bf16.msra.mxu0 0
        %5723 = vmatprep.mubr.bf16.mxu0 0
        %5724 = vmatmul.mubr.bf16.gmra.mrb[0].mxu0 %v5689
        %v5725 = vpop.f32.mrb[0].mxu0
        %v5726 = vadd.f32 %v5662, %v5725
        %v5727 = vpop.f32.mrb[0].mxu0
        %v5728 = vpop.f32.mrb[0].mxu0
        %v5729 = vpop.f32.mrb[0].mxu0
        %5730 = vdwg.mxu0
        %v5731 = vpack.c.bf16 %v5726, %v5726
        %5732 = vst [vmem:[%s677] sm:$0xf] %v5731
        %s5733 = sand.u32 %s429, 1
        %s5734 = scalar_lea.sflag [#allocation4], %s5733
        %s5735 = sand.u32 %s429, 1
        %s5736 = smul.addr %s5735, 4
        %s5737 = scalar_lea.vmem [#allocation14], %s5736
        // Predicated region
        $region121: #{tpu_custom_call.1} parent=91 // pred_check
          %p5738 = pneg %p439
        $region122: #{tpu_custom_call.1} parent=91 // pred_check_branch
          %5740 = sbr.rel (%p5738) target = $region124
        $region123: #{tpu_custom_call.1} parent=91 // pred_region
          %s5742 = ssub.s32 64, 64
          %5743 = vsyncadd %s5734, %s5742
          %s5744 = smul.addr %s38, 64
          %s5745 = scalar_lea.hbm %s18, %s5744
          %s5747 = sshll.u32 %s5737, 4
          %s5748 = int_to_ptr.vmem [resolvable:$true] %s5747
          %5750 = dma.vmem_to_hbm [thread:$0]  %s5748, 64, %s5745, %s5734
        $region124: #{tpu_custom_call.1} parent=91 // pred_fallthru
          _
      $region92: #{tpu_custom_call.1} parent=5 // pred_fallthru
        _
      %p5751 = scmp.le.s32.totalorder 2, %s33
      // Predicated region
      $region125: #{tpu_custom_call.1} parent=5 // pred_check
        %p5752 = pneg %p5751
      $region126: #{tpu_custom_call.1} parent=5 // pred_check_branch
        %5754 = sbr.rel (%p5752) target = $region128
      $region127: #{tpu_custom_call.1} parent=5 // pred_region
        %s5755 = ssub.s32 %s33, 2
        // Predicated region
        $region129: #{tpu_custom_call.1} parent=127 // pred_check
          %p5756 = pneg %p445
        $region130: #{tpu_custom_call.1} parent=127 // pred_check_branch
          %5758 = sbr.rel (%p5756) target = $region132
        $region131: #{tpu_custom_call.1} parent=127 // pred_region
          %s5759 = sand.u32 %s430, 1
          %s5760 = scalar_lea.sflag [#allocation4], %s5759
          %s5761 = sand.u32 %s430, 1
          %s5762 = smul.addr %s5761, 4
          %s5763 = scalar_lea.vmem [#allocation14], %s5762
          %5764 = dma.done %s5760, 64
        $region132: #{tpu_custom_call.1} parent=127 // pred_fallthru
          _
      $region128: #{tpu_custom_call.1} parent=5 // pred_fallthru
        _
    $region6: #{tpu_custom_call.1} parent=1 // loop_footer
      %s37 = sadd.s32 1, %s33
    $region7: #{tpu_custom_call.1} parent=1 // loop_footer_branch
      %32 = sbr.rel target = $region3
    $region8: #{tpu_custom_call.1} parent=1 // loop_exit
      _
    %5765 = vsyncpa [#allocation3], 1
    %s5766 = scalar_lea.sflag [#allocation3], 1
    %5767 = vsyncpa %s5766, 1
    %5768 = vsyncpa [#allocation6], 1
    %5769 = vsyncpa [#allocation9], 1
    %5770 = vsyncpa [#allocation12], 1
    %5771 = vsyncpa [#allocation4], 1
    %s5772 = scalar_lea.sflag [#allocation4], 1
    %5773 = vsyncpa %s5772, 1

</llo_original>
